<compile_context>
chip_gen: v7x
topology: tpu7x:2x2x1
jax: 0.10.0
libtpu: 0.0.40
codegen_flags: <defaults>
</compile_context>

<pallas_src>
import functools
import math

import jax
import jax.numpy as jnp
from jax.experimental import pallas as pl
from jax.experimental.pallas import tpu as pltpu


def _convlstm_kernel(xh_ref, c_ref, m_ref, w_ref, b_ref,
                     h_out_ref, c_out_ref, slab_ref,
                     *, ksize, H, W, Bt, cp):
    # xh_ref   : (Bt, H*W, ct)      bf16, flattened NHWC [x | h]
    # c_ref    : (Bt, H*W, hid)     f32, previous cell state
    # m_ref    : (Bt*H*W, k*k)      f32, lane-dense per-tap boundary masks
    # w_ref    : (k*k*cp, 4*hid)    bf16, im2col weights (rows ct..cp zeroed)
    # b_ref    : (1, 4*hid)         f32 bias
    # h_out_ref: (Bt, H*W, hid)     new hidden state (x.dtype)
    # c_out_ref: (Bt, H*W, hid)     new cell state (always f32)
    # slab_ref : (Bt*H*W, k*k*cp)   bf16 VMEM scratch, lane-aligned im2col slab
    HW = H * W
    M = Bt * HW
    ct = xh_ref.shape[2]
    hid = c_ref.shape[2]
    p = ksize // 2

    # Combined [x|h] activations, zero lane-padded to cp (a multiple of 128) so
    # every per-tap slab store below is a full-width, 128-lane-aligned store.
    comb = xh_ref[...].reshape(M, ct).astype(jnp.float32)
    if cp > ct:
        comb = jnp.concatenate(
            [comb, jnp.zeros((M, cp - ct), jnp.float32)], axis=1)

    # im2col: one sublane roll + boundary mask per conv tap, downcast to bf16
    # and stored into the scratch slab at static, 128-aligned lane offsets.
    for t in range(ksize * ksize):
        kh, kw = t // ksize, t % ksize
        off = (kh - p) * W + (kw - p)
        shift = (-off) % M
        rolled = comb if shift == 0 else pltpu.roll(comb, shift, axis=0)
        patch = rolled * m_ref[:, t:t + 1]        # zero the "same"-padding taps
        slab_ref[:, t * cp:(t + 1) * cp] = patch.astype(jnp.bfloat16)

    # One fused MXU matmul for all four gates, f32 accumulation + bias.
    acc = jnp.dot(slab_ref[...], w_ref[...], preferred_element_type=jnp.float32)
    acc = acc + b_ref[...]                                      # (M, 4*hid)

    # Gate nonlinearities, lane-packed over all 4*hid gate channels:
    # sigmoid(x) == 0.5 * (1 + tanh(x/2)), so one tanh pass covers the three
    # sigmoid gates and the candidate tanh gate (gate order i, f, o, g).
    lane = jax.lax.broadcasted_iota(jnp.int32, (1, 4 * hid), 1)
    is_cand = lane >= 3 * hid
    t_all = jnp.tanh(acc * jnp.where(is_cand, 1.0, 0.5))
    gates = jnp.where(is_cand, t_all, 0.5 * (t_all + 1.0))

    i_g = gates[:, 0 * hid:1 * hid]
    f_g = gates[:, 1 * hid:2 * hid]
    o_g = gates[:, 2 * hid:3 * hid]
    g_g = gates[:, 3 * hid:4 * hid]

    # Cell / hidden update directly in the (M, hid) layout the matmul produced.
    c_old = c_ref[...].reshape(M, hid)
    new_c = f_g * c_old + i_g * g_g
    new_h = o_g * jnp.tanh(new_c)

    c_out_ref[...] = new_c.reshape(Bt, HW, hid)                 # f32 always
    h_out_ref[...] = new_h.reshape(Bt, HW, hid).astype(h_out_ref.dtype)


@functools.partial(jax.jit, static_argnames=("ksize",))
def convlstm_step_pallas(x, h, c, weight, bias, ksize):
    """One ConvLSTM step. x:(B,Cin,H,W), h/c:(B,hid,H,W), weight:(4*hid,Cin+hid,k,k)."""
    B, Cin, H, W = x.shape
    hid = h.shape[1]
    p = ksize // 2
    ct = Cin + hid
    HW = H * W
    kk = ksize * ksize
    cp = ((ct + 127) // 128) * 128       # per-tap channel count, 128-lane padded

    # Fold a few batch elements per grid step (amortizes per-step overhead and
    # fills the MXU M dim); only when the flattening stays layout-preserving.
    max_bt = max(1, 512 // HW) if HW % 8 == 0 else 1
    Bt = max(d for d in range(1, B + 1) if B % d == 0 and d <= max_bt)
    M = Bt * HW

    # NCHW -> flattened channels-last; x|h concatenated once here (one fused
    # XLA op) so the kernel never concatenates at a non-128 lane offset.
    x_f = jnp.transpose(x, (0, 2, 3, 1)).reshape(B, HW, Cin)
    h_f = jnp.transpose(h, (0, 2, 3, 1)).reshape(B, HW, hid)
    xh = jnp.concatenate([x_f, h_f], axis=-1).astype(jnp.bfloat16)   # (B,HW,ct)
    c_f = jnp.transpose(c, (0, 2, 3, 1)).reshape(B, HW, hid).astype(jnp.float32)

    # Conv weights (O, I, kh, kw) -> im2col order with zero rows for the lane
    # padding: (kh, kw, I->cp, O) -> (kk*cp, 4*hid), bf16.
    w_t = jnp.transpose(weight, (2, 3, 1, 0))
    w_t = jnp.pad(w_t, ((0, 0), (0, 0), (0, cp - ct), (0, 0)))
    w_slab = w_t.reshape(kk * cp, 4 * hid).astype(jnp.bfloat16)
    b2 = bias.reshape(1, 4 * hid).astype(jnp.float32)

    # Lane-dense per-tap "same" zero-padding masks over the folded (M,) rows.
    # They also zero every row where the folded roll wraps across a batch or
    # image boundary, which keeps the batch folding exact.
    ridx = jnp.arange(M, dtype=jnp.int32)
    q = ridx % HW                        # image position within each folded batch
    hh, ww = q // W, q % W
    cols = []
    for kh in range(ksize):
        for kw in range(ksize):
            dh, dw = kh - p, kw - p
            cols.append((hh + dh >= 0) & (hh + dh < H) &
                        (ww + dw >= 0) & (ww + dw < W))
    masks = jnp.stack(cols, axis=1).astype(jnp.float32)              # (M, kk)

    kernel = functools.partial(_convlstm_kernel,
                               ksize=ksize, H=H, W=W, Bt=Bt, cp=cp)

    # Realistic VMEM footprint (double-buffered I/O + slab + temporaries) with
    # headroom, capped below v7x's 64 MiB physical per-core VMEM.
    h_bytes = jnp.dtype(x.dtype).itemsize
    vmem_est = (2 * Bt * HW * ct * 2             # xh (bf16)
                + 2 * Bt * HW * hid * 4          # c_prev (f32)
                + 2 * M * 128 * 4                # masks (lane-padded)
                + 2 * kk * cp * 4 * hid * 2      # weights (bf16)
                + 2 * Bt * HW * hid * h_bytes    # h_out
                + 2 * Bt * HW * hid * 4          # c_out (f32)
                + M * kk * cp * 2                # im2col slab scratch (bf16)
                + 6 * M * cp * 4                 # comb / patch temporaries
                + 4 * M * 4 * hid * 4)           # acc / gate temporaries
    vmem_limit = int(min(max(2 * vmem_est, 16 * 1024 * 1024), 48 * 1024 * 1024))

    new_h, new_c = pl.pallas_call(
        kernel,
        out_shape=(jax.ShapeDtypeStruct((B, HW, hid), x.dtype),
                   jax.ShapeDtypeStruct((B, HW, hid), jnp.float32)),
        grid_spec=pltpu.PrefetchScalarGridSpec(
            num_scalar_prefetch=0,
            grid=(B // Bt,),
            in_specs=[
                pl.BlockSpec((Bt, HW, ct), lambda b: (b, 0, 0)),
                pl.BlockSpec((Bt, HW, hid), lambda b: (b, 0, 0)),
                pl.BlockSpec((M, kk), lambda b: (0, 0)),
                pl.BlockSpec((kk * cp, 4 * hid), lambda b: (0, 0)),
                pl.BlockSpec((1, 4 * hid), lambda b: (0, 0)),
            ],
            out_specs=(
                pl.BlockSpec((Bt, HW, hid), lambda b: (b, 0, 0)),
                pl.BlockSpec((Bt, HW, hid), lambda b: (b, 0, 0)),
            ),
            scratch_shapes=[pltpu.VMEM((M, kk * cp), jnp.bfloat16)],
        ),
        compiler_params=pltpu.CompilerParams(
            dimension_semantics=("parallel",),
            vmem_limit_bytes=vmem_limit,
        ),
    )(xh, c_f, masks, w_slab, b2)

    # Back to NCHW (PyTorch convention); the cell state stays f32.
    new_h = jnp.transpose(new_h.reshape(B, H, W, hid), (0, 3, 1, 2))
    new_c = jnp.transpose(new_c.reshape(B, H, W, hid), (0, 3, 1, 2))
    return new_h, new_c


class ConvLSTM2dPallas:
    """Mirror of the PyTorch ConvLSTM2d module (single-step forward)."""

    def __init__(self, input_dim, hidden_dim, kernel_size=3, *, key):
        self.input_dim = input_dim
        self.hidden_dim = hidden_dim
        self.kernel_size = kernel_size
        ct = input_dim + hidden_dim
        # Deterministic init mimicking nn.Conv2d's default (kaiming-uniform bound).
        fan_in = ct * kernel_size * kernel_size
        bound = 1.0 / math.sqrt(fan_in)
        kw_, kb_ = jax.random.split(key)
        self.weight = jax.random.uniform(
            kw_, (4 * hidden_dim, ct, kernel_size, kernel_size),
            dtype=jnp.float32, minval=-bound, maxval=bound)
        self.bias = jax.random.uniform(
            kb_, (4 * hidden_dim,), dtype=jnp.float32, minval=-bound, maxval=bound)

    def __call__(self, x, hidden_state=None):
        B, _, H, W = x.shape
        if hidden_state is None:
            h = jnp.zeros((B, self.hidden_dim, H, W), x.dtype)
            c = jnp.zeros_like(h)
        else:
            h, c = hidden_state
        new_h, new_c = convlstm_step_pallas(x, h, c, self.weight, self.bias,
                                            ksize=self.kernel_size)
        return new_h, (new_h, new_c)


def _reference_step(x, h, c, weight, bias):
    """Pure-JAX/XLA reference matching the PyTorch forward (NCHW, f32)."""
    combined = jnp.concatenate([x, h], axis=1)
    gates = jax.lax.conv_general_dilated(
        combined, weight, window_strides=(1, 1), padding="SAME",
        dimension_numbers=("NCHW", "OIHW", "NCHW"))
    gates = gates + bias[None, :, None, None]
    i_g, f_g, o_g, g_g = jnp.split(gates, 4, axis=1)
    i = jax.nn.sigmoid(i_g)
    f = jax.nn.sigmoid(f_g)
    o = jax.nn.sigmoid(o_g)
    g = jnp.tanh(g_g)
    new_c = f * c + i * g
    new_h = o * jnp.tanh(new_c)
    return new_h, new_c


if __name__ == "__main__":
    key = jax.random.PRNGKey(0)
    k_param, k_x, k_h, k_c = jax.random.split(key, 4)

    B, Cin, H, W = 2, 4, 16, 16
    hidden_dim = 32
    model = ConvLSTM2dPallas(Cin, hidden_dim, kernel_size=3, key=k_param)

    x = jax.random.normal(k_x, (B, Cin, H, W), dtype=jnp.float32)

    # Case 1: no hidden state (zeros, like the PyTorch default path).
    out_h, (nh1, nc1) = model(x, hidden_state=None)
    jax.block_until_ready((out_h, nh1, nc1))

    # Case 2: provided hidden state.
    h0 = jax.random.normal(k_h, (B, hidden_dim, H, W), dtype=jnp.float32)
    c0 = jax.random.normal(k_c, (B, hidden_dim, H, W), dtype=jnp.float32)
    out_h2, (nh2, nc2) = model(x, hidden_state=(h0, c0))
    jax.block_until_ready((out_h2, nh2, nc2))

    # Verify against a pure-JAX reference of the PyTorch forward
    # (kernel feeds bf16 operands to the MXU -> slightly looser tolerance).
    ref_h1, ref_c1 = _reference_step(x, jnp.zeros_like(h0), jnp.zeros_like(c0),
                                     model.weight, model.bias)
    ref_h2, ref_c2 = _reference_step(x, h0, c0, model.weight, model.bias)
    assert jnp.allclose(nh1, ref_h1, atol=2e-2, rtol=2e-2)
    assert jnp.allclose(nc1, ref_c1, atol=2e-2, rtol=2e-2)
    assert jnp.allclose(nh2, ref_h2, atol=2e-2, rtol=2e-2)
    assert jnp.allclose(nc2, ref_c2, atol=2e-2, rtol=2e-2)
    assert out_h2.shape == (B, hidden_dim, H, W)
    assert nc2.dtype == jnp.float32   # cell state pinned to f32

    print("KERNEL_OK")
</pallas_src>

<mosaic_0001>
module attributes {stable_mosaic.version = 11 : i64} {
  func.func @_convlstm_kernel(%arg0: i32, %arg1: memref<2x256x36xbf16, #tpu.memory_space<vmem>>, %arg2: memref<2x256x32xf32, #tpu.memory_space<vmem>>, %arg3: memref<512x9xf32, #tpu.memory_space<vmem>>, %arg4: memref<1152x128xbf16, #tpu.memory_space<vmem>>, %arg5: memref<1x128xf32, #tpu.memory_space<vmem>>, %arg6: memref<2x256x32xf32, #tpu.memory_space<vmem>>, %arg7: memref<2x256x32xf32, #tpu.memory_space<vmem>>, %arg8: memref<512x1152xbf16, #tpu.memory_space<vmem>>) attributes {dimension_semantics = [#tpu.dimension_semantics<parallel>], iteration_bounds = array<i64: 1>, scalar_prefetch = 0 : i64, scratch_operands = 1 : i64, tpu.core_type = #tpu.core_type<tc>, window_params = [{transform_indices = @transform_0, window_bounds = array<i64: 2, 256, 36>}, {transform_indices = @transform_1, window_bounds = array<i64: 2, 256, 32>}, {pipeline_mode = #tpu.pipeline_mode<synchronous>, transform_indices = @transform_2, window_bounds = array<i64: 512, 9>}, {pipeline_mode = #tpu.pipeline_mode<synchronous>, transform_indices = @transform_3, window_bounds = array<i64: 1152, 128>}, {pipeline_mode = #tpu.pipeline_mode<synchronous>, transform_indices = @transform_4, window_bounds = array<i64: 1, 128>}, {transform_indices = @transform_5, window_bounds = array<i64: 2, 256, 32>}, {transform_indices = @transform_6, window_bounds = array<i64: 2, 256, 32>}]} {
    %c0 = arith.constant 0 : index
    %c0_0 = arith.constant 0 : index
    %c0_1 = arith.constant 0 : index
    %0 = vector.load %arg1[%c0, %c0_0, %c0_1] : memref<2x256x36xbf16, #tpu.memory_space<vmem>>, vector<2x256x36xbf16>
    %1 = vector.shape_cast %0 : vector<2x256x36xbf16> to vector<512x36xbf16>
    %2 = arith.extf %1 : vector<512x36xbf16> to vector<512x36xf32>
    %cst = arith.constant 0.000000e+00 : f32
    %3 = vector.broadcast %cst : f32 to vector<512x92xf32>
    %4 = tpu.concatenate %2, %3 in 1 : vector<512x36xf32>, vector<512x92xf32> -> vector<512x128xf32>
    %c17_i32 = arith.constant 17 : i32
    %5 = tpu.dynamic_rotate %4 by %c17_i32 dim 0 : vector<512x128xf32>, i32 -> vector<512x128xf32>
    %c0_2 = arith.constant 0 : index
    %c0_3 = arith.constant 0 : index
    %6 = vector.load %arg3[%c0_2, %c0_3] : memref<512x9xf32, #tpu.memory_space<vmem>>, vector<512x1xf32>
    %7 = vector.broadcast %6 : vector<512x1xf32> to vector<512x128xf32>
    %8 = arith.mulf %5, %7 : vector<512x128xf32>
    %9 = arith.truncf %8 : vector<512x128xf32> to vector<512x128xbf16>
    %c0_4 = arith.constant 0 : index
    %c0_5 = arith.constant 0 : index
    %10 = vector.load %arg8[%c0_4, %c0_5] : memref<512x1152xbf16, #tpu.memory_space<vmem>>, vector<512x128xbf16>
    tpu.vector_store %arg8[%c0_4, %c0_5], %9 {strides = array<i32>} : memref<512x1152xbf16, #tpu.memory_space<vmem>>, vector<512x128xbf16>,
    %c16_i32 = arith.constant 16 : i32
    %11 = tpu.dynamic_rotate %4 by %c16_i32 dim 0 : vector<512x128xf32>, i32 -> vector<512x128xf32>
    %c0_6 = arith.constant 0 : index
    %c1 = arith.constant 1 : index
    %12 = vector.load %arg3[%c0_6, %c1] : memref<512x9xf32, #tpu.memory_space<vmem>>, vector<512x1xf32>
    %13 = vector.broadcast %12 : vector<512x1xf32> to vector<512x128xf32>
    %14 = arith.mulf %11, %13 : vector<512x128xf32>
    %15 = arith.truncf %14 : vector<512x128xf32> to vector<512x128xbf16>
    %c0_7 = arith.constant 0 : index
    %c128 = arith.constant 128 : index
    %16 = vector.load %arg8[%c0_7, %c128] : memref<512x1152xbf16, #tpu.memory_space<vmem>>, vector<512x128xbf16>
    tpu.vector_store %arg8[%c0_7, %c128], %15 {strides = array<i32>} : memref<512x1152xbf16, #tpu.memory_space<vmem>>, vector<512x128xbf16>,
    %c15_i32 = arith.constant 15 : i32
    %17 = tpu.dynamic_rotate %4 by %c15_i32 dim 0 : vector<512x128xf32>, i32 -> vector<512x128xf32>
    %c0_8 = arith.constant 0 : index
    %c2 = arith.constant 2 : index
    %18 = vector.load %arg3[%c0_8, %c2] : memref<512x9xf32, #tpu.memory_space<vmem>>, vector<512x1xf32>
    %19 = vector.broadcast %18 : vector<512x1xf32> to vector<512x128xf32>
    %20 = arith.mulf %17, %19 : vector<512x128xf32>
    %21 = arith.truncf %20 : vector<512x128xf32> to vector<512x128xbf16>
    %c0_9 = arith.constant 0 : index
    %c256 = arith.constant 256 : index
    %22 = vector.load %arg8[%c0_9, %c256] : memref<512x1152xbf16, #tpu.memory_space<vmem>>, vector<512x128xbf16>
    tpu.vector_store %arg8[%c0_9, %c256], %21 {strides = array<i32>} : memref<512x1152xbf16, #tpu.memory_space<vmem>>, vector<512x128xbf16>,
    %c1_i32 = arith.constant 1 : i32
    %23 = tpu.dynamic_rotate %4 by %c1_i32 dim 0 : vector<512x128xf32>, i32 -> vector<512x128xf32>
    %c0_10 = arith.constant 0 : index
    %c3 = arith.constant 3 : index
    %24 = vector.load %arg3[%c0_10, %c3] : memref<512x9xf32, #tpu.memory_space<vmem>>, vector<512x1xf32>
    %25 = vector.broadcast %24 : vector<512x1xf32> to vector<512x128xf32>
    %26 = arith.mulf %23, %25 : vector<512x128xf32>
    %27 = arith.truncf %26 : vector<512x128xf32> to vector<512x128xbf16>
    %c0_11 = arith.constant 0 : index
    %c384 = arith.constant 384 : index
    %28 = vector.load %arg8[%c0_11, %c384] : memref<512x1152xbf16, #tpu.memory_space<vmem>>, vector<512x128xbf16>
    tpu.vector_store %arg8[%c0_11, %c384], %27 {strides = array<i32>} : memref<512x1152xbf16, #tpu.memory_space<vmem>>, vector<512x128xbf16>,
    %c0_12 = arith.constant 0 : index
    %c4 = arith.constant 4 : index
    %29 = vector.load %arg3[%c0_12, %c4] : memref<512x9xf32, #tpu.memory_space<vmem>>, vector<512x1xf32>
    %30 = vector.broadcast %29 : vector<512x1xf32> to vector<512x128xf32>
    %31 = arith.mulf %4, %30 : vector<512x128xf32>
    %32 = arith.truncf %31 : vector<512x128xf32> to vector<512x128xbf16>
    %c0_13 = arith.constant 0 : index
    %c512 = arith.constant 512 : index
    %33 = vector.load %arg8[%c0_13, %c512] : memref<512x1152xbf16, #tpu.memory_space<vmem>>, vector<512x128xbf16>
    tpu.vector_store %arg8[%c0_13, %c512], %32 {strides = array<i32>} : memref<512x1152xbf16, #tpu.memory_space<vmem>>, vector<512x128xbf16>,
    %c511_i32 = arith.constant 511 : i32
    %34 = tpu.dynamic_rotate %4 by %c511_i32 dim 0 : vector<512x128xf32>, i32 -> vector<512x128xf32>
    %c0_14 = arith.constant 0 : index
    %c5 = arith.constant 5 : index
    %35 = vector.load %arg3[%c0_14, %c5] : memref<512x9xf32, #tpu.memory_space<vmem>>, vector<512x1xf32>
    %36 = vector.broadcast %35 : vector<512x1xf32> to vector<512x128xf32>
    %37 = arith.mulf %34, %36 : vector<512x128xf32>
    %38 = arith.truncf %37 : vector<512x128xf32> to vector<512x128xbf16>
    %c0_15 = arith.constant 0 : index
    %c640 = arith.constant 640 : index
    %39 = vector.load %arg8[%c0_15, %c640] : memref<512x1152xbf16, #tpu.memory_space<vmem>>, vector<512x128xbf16>
    tpu.vector_store %arg8[%c0_15, %c640], %38 {strides = array<i32>} : memref<512x1152xbf16, #tpu.memory_space<vmem>>, vector<512x128xbf16>,
    %c497_i32 = arith.constant 497 : i32
    %40 = tpu.dynamic_rotate %4 by %c497_i32 dim 0 : vector<512x128xf32>, i32 -> vector<512x128xf32>
    %c0_16 = arith.constant 0 : index
    %c6 = arith.constant 6 : index
    %41 = vector.load %arg3[%c0_16, %c6] : memref<512x9xf32, #tpu.memory_space<vmem>>, vector<512x1xf32>
    %42 = vector.broadcast %41 : vector<512x1xf32> to vector<512x128xf32>
    %43 = arith.mulf %40, %42 : vector<512x128xf32>
    %44 = arith.truncf %43 : vector<512x128xf32> to vector<512x128xbf16>
    %c0_17 = arith.constant 0 : index
    %c768 = arith.constant 768 : index
    %45 = vector.load %arg8[%c0_17, %c768] : memref<512x1152xbf16, #tpu.memory_space<vmem>>, vector<512x128xbf16>
    tpu.vector_store %arg8[%c0_17, %c768], %44 {strides = array<i32>} : memref<512x1152xbf16, #tpu.memory_space<vmem>>, vector<512x128xbf16>,
    %c496_i32 = arith.constant 496 : i32
    %46 = tpu.dynamic_rotate %4 by %c496_i32 dim 0 : vector<512x128xf32>, i32 -> vector<512x128xf32>
    %c0_18 = arith.constant 0 : index
    %c7 = arith.constant 7 : index
    %47 = vector.load %arg3[%c0_18, %c7] : memref<512x9xf32, #tpu.memory_space<vmem>>, vector<512x1xf32>
    %48 = vector.broadcast %47 : vector<512x1xf32> to vector<512x128xf32>
    %49 = arith.mulf %46, %48 : vector<512x128xf32>
    %50 = arith.truncf %49 : vector<512x128xf32> to vector<512x128xbf16>
    %c0_19 = arith.constant 0 : index
    %c896 = arith.constant 896 : index
    %51 = vector.load %arg8[%c0_19, %c896] : memref<512x1152xbf16, #tpu.memory_space<vmem>>, vector<512x128xbf16>
    tpu.vector_store %arg8[%c0_19, %c896], %50 {strides = array<i32>} : memref<512x1152xbf16, #tpu.memory_space<vmem>>, vector<512x128xbf16>,
    %c495_i32 = arith.constant 495 : i32
    %52 = tpu.dynamic_rotate %4 by %c495_i32 dim 0 : vector<512x128xf32>, i32 -> vector<512x128xf32>
    %c0_20 = arith.constant 0 : index
    %c8 = arith.constant 8 : index
    %53 = vector.load %arg3[%c0_20, %c8] : memref<512x9xf32, #tpu.memory_space<vmem>>, vector<512x1xf32>
    %54 = vector.broadcast %53 : vector<512x1xf32> to vector<512x128xf32>
    %55 = arith.mulf %52, %54 : vector<512x128xf32>
    %56 = arith.truncf %55 : vector<512x128xf32> to vector<512x128xbf16>
    %c0_21 = arith.constant 0 : index
    %c1024 = arith.constant 1024 : index
    %57 = vector.load %arg8[%c0_21, %c1024] : memref<512x1152xbf16, #tpu.memory_space<vmem>>, vector<512x128xbf16>
    tpu.vector_store %arg8[%c0_21, %c1024], %56 {strides = array<i32>} : memref<512x1152xbf16, #tpu.memory_space<vmem>>, vector<512x128xbf16>,
    %c0_22 = arith.constant 0 : index
    %c0_23 = arith.constant 0 : index
    %58 = vector.load %arg8[%c0_22, %c0_23] : memref<512x1152xbf16, #tpu.memory_space<vmem>>, vector<512x1152xbf16>
    %c0_24 = arith.constant 0 : index
    %c0_25 = arith.constant 0 : index
    %59 = vector.load %arg4[%c0_24, %c0_25] : memref<1152x128xbf16, #tpu.memory_space<vmem>>, vector<1152x128xbf16>
    %cst_26 = arith.constant dense<0.000000e+00> : vector<512x128xf32>
    %60 = tpu.matmul %58, %59, %cst_26 {dimension_numbers = #tpu.dot_dimension_numbers<[1], [0], [0], [1], [0, 0, 1, 1], [], []>} : vector<512x1152xbf16>, vector<1152x128xbf16>, vector<512x128xf32> -> vector<512x128xf32>
    %c0_27 = arith.constant 0 : index
    %c0_28 = arith.constant 0 : index
    %61 = vector.load %arg5[%c0_27, %c0_28] : memref<1x128xf32, #tpu.memory_space<vmem>>, vector<1x128xf32>
    %62 = vector.broadcast %61 : vector<1x128xf32> to vector<512x128xf32>
    %63 = arith.addf %60, %62 : vector<512x128xf32>
    %64 = tpu.iota {dimensions = array<i32: 1>} : vector<1x128xi32>
    %c96_i32 = arith.constant 96 : i32
    %65 = vector.broadcast %c96_i32 : i32 to vector<1x128xi32>
    %66 = arith.cmpi sge, %64, %65 : vector<1x128xi32>
    %cst_29 = arith.constant 1.000000e+00 : f32
    %cst_30 = arith.constant 5.000000e-01 : f32
    %67 = vector.broadcast %cst_29 : f32 to vector<1x128xf32>
    %68 = vector.broadcast %cst_30 : f32 to vector<1x128xf32>
    %69 = arith.select %66, %67, %68 : vector<1x128xi1>, vector<1x128xf32>
    %70 = vector.broadcast %69 : vector<1x128xf32> to vector<512x128xf32>
    %71 = arith.mulf %63, %70 : vector<512x128xf32>
    %72 = math.tanh %71 : vector<512x128xf32>
    %cst_31 = arith.constant 1.000000e+00 : f32
    %73 = vector.broadcast %cst_31 : f32 to vector<512x128xf32>
    %74 = arith.addf %72, %73 : vector<512x128xf32>
    %cst_32 = arith.constant 5.000000e-01 : f32
    %75 = vector.broadcast %cst_32 : f32 to vector<512x128xf32>
    %76 = arith.mulf %75, %74 : vector<512x128xf32>
    %77 = vector.shape_cast %66 : vector<1x128xi1> to vector<1x128xi1>
    %78 = vector.broadcast %77 : vector<1x128xi1> to vector<512x128xi1>
    %79 = arith.select %78, %72, %76 : vector<512x128xi1>, vector<512x128xf32>
    %80 = vector.extract_strided_slice %79 {offsets = [0, 0], sizes = [512, 32], strides = [1, 1]} : vector<512x128xf32> to vector<512x32xf32>
    %81 = vector.extract_strided_slice %79 {offsets = [0, 32], sizes = [512, 32], strides = [1, 1]} : vector<512x128xf32> to vector<512x32xf32>
    %82 = vector.extract_strided_slice %79 {offsets = [0, 64], sizes = [512, 32], strides = [1, 1]} : vector<512x128xf32> to vector<512x32xf32>
    %83 = vector.extract_strided_slice %79 {offsets = [0, 96], sizes = [512, 32], strides = [1, 1]} : vector<512x128xf32> to vector<512x32xf32>
    %c0_33 = arith.constant 0 : index
    %c0_34 = arith.constant 0 : index
    %c0_35 = arith.constant 0 : index
    %84 = vector.load %arg2[%c0_33, %c0_34, %c0_35] : memref<2x256x32xf32, #tpu.memory_space<vmem>>, vector<2x256x32xf32>
    %85 = vector.shape_cast %84 : vector<2x256x32xf32> to vector<512x32xf32>
    %86 = arith.mulf %81, %85 : vector<512x32xf32>
    %87 = arith.mulf %80, %83 : vector<512x32xf32>
    %88 = arith.addf %86, %87 : vector<512x32xf32>
    %89 = math.tanh %88 : vector<512x32xf32>
    %90 = arith.mulf %82, %89 : vector<512x32xf32>
    %91 = vector.shape_cast %88 : vector<512x32xf32> to vector<2x256x32xf32>
    %c0_36 = arith.constant 0 : index
    %c0_37 = arith.constant 0 : index
    %c0_38 = arith.constant 0 : index
    %92 = vector.load %arg7[%c0_36, %c0_37, %c0_38] : memref<2x256x32xf32, #tpu.memory_space<vmem>>, vector<2x256x32xf32>
    tpu.vector_store %arg7[%c0_36, %c0_37, %c0_38], %91 {strides = array<i32>} : memref<2x256x32xf32, #tpu.memory_space<vmem>>, vector<2x256x32xf32>,
    %93 = vector.shape_cast %90 : vector<512x32xf32> to vector<2x256x32xf32>
    %c0_39 = arith.constant 0 : index
    %c0_40 = arith.constant 0 : index
    %c0_41 = arith.constant 0 : index
    %94 = vector.load %arg6[%c0_39, %c0_40, %c0_41] : memref<2x256x32xf32, #tpu.memory_space<vmem>>, vector<2x256x32xf32>
    tpu.vector_store %arg6[%c0_39, %c0_40, %c0_41], %93 {strides = array<i32>} : memref<2x256x32xf32, #tpu.memory_space<vmem>>, vector<2x256x32xf32>,
    return
  }
  func.func @transform_0(%arg0: i32) -> (i32, i32, i32) {
    %c0_i32 = arith.constant 0 : i32
    %c0_i32_0 = arith.constant 0 : i32
    %c0_i32_1 = arith.constant 0 : i32
    return %arg0, %c0_i32, %c0_i32_0 : i32, i32, i32
  }
  func.func @transform_1(%arg0: i32) -> (i32, i32, i32) {
    %c0_i32 = arith.constant 0 : i32
    %c0_i32_0 = arith.constant 0 : i32
    %c0_i32_1 = arith.constant 0 : i32
    return %arg0, %c0_i32, %c0_i32_0 : i32, i32, i32
  }
  func.func @transform_2(%arg0: i32) -> (i32, i32) {
    %c0_i32 = arith.constant 0 : i32
    %c0_i32_0 = arith.constant 0 : i32
    %c0_i32_1 = arith.constant 0 : i32
    return %c0_i32, %c0_i32_0 : i32, i32
  }
  func.func @transform_3(%arg0: i32) -> (i32, i32) {
    %c0_i32 = arith.constant 0 : i32
    %c0_i32_0 = arith.constant 0 : i32
    %c0_i32_1 = arith.constant 0 : i32
    return %c0_i32, %c0_i32_0 : i32, i32
  }
  func.func @transform_4(%arg0: i32) -> (i32, i32) {
    %c0_i32 = arith.constant 0 : i32
    %c0_i32_0 = arith.constant 0 : i32
    %c0_i32_1 = arith.constant 0 : i32
    return %c0_i32, %c0_i32_0 : i32, i32
  }
  func.func @transform_5(%arg0: i32) -> (i32, i32, i32) {
    %c0_i32 = arith.constant 0 : i32
    %c0_i32_0 = arith.constant 0 : i32
    %c0_i32_1 = arith.constant 0 : i32
    return %arg0, %c0_i32, %c0_i32_0 : i32, i32, i32
  }
  func.func @transform_6(%arg0: i32) -> (i32, i32, i32) {
    %c0_i32 = arith.constant 0 : i32
    %c0_i32_0 = arith.constant 0 : i32
    %c0_i32_1 = arith.constant 0 : i32
    return %arg0, %c0_i32, %c0_i32_0 : i32, i32, i32
  }
}

</mosaic_0001>

<llo_original>
// kernel: convlstm_step_pallas.1
$region0: #{convlstm_step_pallas.1}
  #allocation0 [shape = 'u32[]', space=smem, size = 0x4, offset = 0x4, fixed_abs, tag = 'smem constant byte address 0x4 - core index']
  #allocation1 [shape = 'u32[144,128]{1,0:T(1,128)}', space=vmem, size = 0x12000, scoped, tag = 'internal scratch']
  #allocation2 [shape = 'bf16[512,1152]{1,0:T(16,128)(2,1)}', space=vmem, size = 0x120000, scoped, tag = 'scratch operand']
  %s0 = inlined_call_operand.vmem [shape: bf16[2,256,36], index: 0, kind: input, shape index: {}]
  %s1 = inlined_call_operand.vmem [shape: f32[2,256,32], index: 1, kind: input, shape index: {}]
  %s2 = inlined_call_operand.vmem [shape: f32[512,9], index: 2, kind: input, shape index: {}]
  %s3 = inlined_call_operand.vmem [shape: bf16[1152,128], index: 3, kind: input, shape index: {}]
  %s4 = inlined_call_operand.vmem [shape: f32[1,128], index: 4, kind: input, shape index: {}]
  %s5 = inlined_call_operand.hbm [shape: f32[2,256,32], index: 5, kind: output, shape index: {0}]
  %s6 = inlined_call_operand.hbm [shape: f32[2,256,32], index: 6, kind: output, shape index: {1}]
  %7 = xla_tuple %s5, %s6
  %s8 = sld [smem:[#allocation0]]
  $region38: #{convlstm_step_pallas.1} parent=0
    _
  %s10 = ssub.s32 1, %s8
  %s11 = scalar_select 0, %s10, %s8
  $region1: #{convlstm_step_pallas.1} parent=0
    #allocation3 [shape = 'u8[262144]{0}', space=vmem, size = 0x40000, scoped, tag = 'output window, operand 0, single buffered']
    #allocation4 [shape = 's32[1]{0}', space=sflag, size = 0x4, scoped, tag = 'scoped memory for convlstm_step_pallas.1']
    #allocation5 [shape = 'u8[262144]{0}', space=vmem, size = 0x40000, scoped, tag = 'output window, operand 1, single buffered']
    #allocation6 [shape = 's32[1]{0}', space=sflag, size = 0x4, scoped, tag = 'scoped memory for convlstm_step_pallas.1']
    %12 = vsyncpa [#allocation4], 0
    %13 = vsyncpa [#allocation6], 0
    // Predicated region
    $region2: #{convlstm_step_pallas.1} parent=1 // pred_check
      _
    $region3: #{convlstm_step_pallas.1} parent=1 // pred_check_branch
      %15 = sbr.rel (0) target = $region5
    $region4: #{convlstm_step_pallas.1} parent=1 // pred_region
      _
    $region5: #{convlstm_step_pallas.1} parent=1 // pred_fallthru
      _
    // Predicated region
    $region6: #{convlstm_step_pallas.1} parent=1 // pred_check
      _
    $region7: #{convlstm_step_pallas.1} parent=1 // pred_check_branch
      %17 = sbr.rel (0) target = $region9
    $region8: #{convlstm_step_pallas.1} parent=1 // pred_region
      _
    $region9: #{convlstm_step_pallas.1} parent=1 // pred_fallthru
      _
    // Predicated region
    $region10: #{convlstm_step_pallas.1} parent=1 // pred_check
      _
    $region11: #{convlstm_step_pallas.1} parent=1 // pred_check_branch
      %19 = sbr.rel (0) target = $region13
    $region12: #{convlstm_step_pallas.1} parent=1 // pred_region
      _
    $region13: #{convlstm_step_pallas.1} parent=1 // pred_fallthru
      _
    // Predicated region
    $region14: #{convlstm_step_pallas.1} parent=1 // pred_check
      _
    $region15: #{convlstm_step_pallas.1} parent=1 // pred_check_branch
      %21 = sbr.rel (0) target = $region17
    $region16: #{convlstm_step_pallas.1} parent=1 // pred_region
      _
    $region17: #{convlstm_step_pallas.1} parent=1 // pred_fallthru
      _
    // Predicated region
    $region18: #{convlstm_step_pallas.1} parent=1 // pred_check
      _
    $region19: #{convlstm_step_pallas.1} parent=1 // pred_check_branch
      %23 = sbr.rel (0) target = $region21
    $region20: #{convlstm_step_pallas.1} parent=1 // pred_region
      _
    $region21: #{convlstm_step_pallas.1} parent=1 // pred_fallthru
      _
    %v25 = vld [vmem:[%s0] sm:$0xf]
    %v26 = vld [vmem:[%s0 + $0x4] sm:$0xf]
    %v27 = vld [vmem:[%s0 + $0x8] sm:$0xf]
    %v28 = vld [vmem:[%s0 + $0xc] sm:$0xf]
    %v29 = vld [vmem:[%s0 + $0x10] sm:$0xf]
    %v30 = vld [vmem:[%s0 + $0x14] sm:$0xf]
    %v31 = vld [vmem:[%s0 + $0x18] sm:$0xf]
    %v32 = vld [vmem:[%s0 + $0x1c] sm:$0xf]
    %v33 = vld [vmem:[%s0 + $0x20] sm:$0xf]
    %v34 = vld [vmem:[%s0 + $0x24] sm:$0xf]
    %v35 = vld [vmem:[%s0 + $0x28] sm:$0xf]
    %v36 = vld [vmem:[%s0 + $0x2c] sm:$0xf]
    %v37 = vld [vmem:[%s0 + $0x30] sm:$0xf]
    %v38 = vld [vmem:[%s0 + $0x34] sm:$0xf]
    %v39 = vld [vmem:[%s0 + $0x38] sm:$0xf]
    %v40 = vld [vmem:[%s0 + $0x3c] sm:$0xf]
    %v41 = vld [vmem:[%s0 + $0x40] sm:$0xf]
    %v42 = vld [vmem:[%s0 + $0x44] sm:$0xf]
    %v43 = vld [vmem:[%s0 + $0x48] sm:$0xf]
    %v44 = vld [vmem:[%s0 + $0x4c] sm:$0xf]
    %v45 = vld [vmem:[%s0 + $0x50] sm:$0xf]
    %v46 = vld [vmem:[%s0 + $0x54] sm:$0xf]
    %v47 = vld [vmem:[%s0 + $0x58] sm:$0xf]
    %v48 = vld [vmem:[%s0 + $0x5c] sm:$0xf]
    %v49 = vld [vmem:[%s0 + $0x60] sm:$0xf]
    %v50 = vld [vmem:[%s0 + $0x64] sm:$0xf]
    %v51 = vld [vmem:[%s0 + $0x68] sm:$0xf]
    %v52 = vld [vmem:[%s0 + $0x6c] sm:$0xf]
    %v53 = vld [vmem:[%s0 + $0x70] sm:$0xf]
    %v54 = vld [vmem:[%s0 + $0x74] sm:$0xf]
    %v55 = vld [vmem:[%s0 + $0x78] sm:$0xf]
    %v56 = vld [vmem:[%s0 + $0x7c] sm:$0xf]
    %v57 = vld [vmem:[%s0 + $0x80] sm:$0xf]
    %v58 = vld [vmem:[%s0 + $0x84] sm:$0xf]
    %v59 = vld [vmem:[%s0 + $0x88] sm:$0xf]
    %v60 = vld [vmem:[%s0 + $0x8c] sm:$0xf]
    %v61 = vld [vmem:[%s0 + $0x90] sm:$0xf]
    %v62 = vld [vmem:[%s0 + $0x94] sm:$0xf]
    %v63 = vld [vmem:[%s0 + $0x98] sm:$0xf]
    %v64 = vld [vmem:[%s0 + $0x9c] sm:$0xf]
    %v65 = vld [vmem:[%s0 + $0xa0] sm:$0xf]
    %v66 = vld [vmem:[%s0 + $0xa4] sm:$0xf]
    %v67 = vld [vmem:[%s0 + $0xa8] sm:$0xf]
    %v68 = vld [vmem:[%s0 + $0xac] sm:$0xf]
    %v69 = vld [vmem:[%s0 + $0xb0] sm:$0xf]
    %v70 = vld [vmem:[%s0 + $0xb4] sm:$0xf]
    %v71 = vld [vmem:[%s0 + $0xb8] sm:$0xf]
    %v72 = vld [vmem:[%s0 + $0xbc] sm:$0xf]
    %v73 = vld [vmem:[%s0 + $0xc0] sm:$0xf]
    %v74 = vld [vmem:[%s0 + $0xc4] sm:$0xf]
    %v75 = vld [vmem:[%s0 + $0xc8] sm:$0xf]
    %v76 = vld [vmem:[%s0 + $0xcc] sm:$0xf]
    %v77 = vld [vmem:[%s0 + $0xd0] sm:$0xf]
    %v78 = vld [vmem:[%s0 + $0xd4] sm:$0xf]
    %v79 = vld [vmem:[%s0 + $0xd8] sm:$0xf]
    %v80 = vld [vmem:[%s0 + $0xdc] sm:$0xf]
    %v81 = vld [vmem:[%s0 + $0xe0] sm:$0xf]
    %v82 = vld [vmem:[%s0 + $0xe4] sm:$0xf]
    %v83 = vld [vmem:[%s0 + $0xe8] sm:$0xf]
    %v84 = vld [vmem:[%s0 + $0xec] sm:$0xf]
    %v85 = vld [vmem:[%s0 + $0xf0] sm:$0xf]
    %v86 = vld [vmem:[%s0 + $0xf4] sm:$0xf]
    %v87 = vld [vmem:[%s0 + $0xf8] sm:$0xf]
    %v88 = vld [vmem:[%s0 + $0xfc] sm:$0xf]
    %v89 = vunpack.c.l.bf16 %v25
    %v90 = vunpack.c.l.bf16 %v26
    %v91 = vunpack.c.l.bf16 %v27
    %v92 = vunpack.c.l.bf16 %v28
    %v93 = vunpack.c.l.bf16 %v29
    %v94 = vunpack.c.l.bf16 %v30
    %v95 = vunpack.c.l.bf16 %v31
    %v96 = vunpack.c.l.bf16 %v32
    %v97 = vunpack.c.l.bf16 %v33
    %v98 = vunpack.c.l.bf16 %v34
    %v99 = vunpack.c.l.bf16 %v35
    %v100 = vunpack.c.l.bf16 %v36
    %v101 = vunpack.c.l.bf16 %v37
    %v102 = vunpack.c.l.bf16 %v38
    %v103 = vunpack.c.l.bf16 %v39
    %v104 = vunpack.c.l.bf16 %v40
    %v105 = vunpack.c.l.bf16 %v41
    %v106 = vunpack.c.l.bf16 %v42
    %v107 = vunpack.c.l.bf16 %v43
    %v108 = vunpack.c.l.bf16 %v44
    %v109 = vunpack.c.l.bf16 %v45
    %v110 = vunpack.c.l.bf16 %v46
    %v111 = vunpack.c.l.bf16 %v47
    %v112 = vunpack.c.l.bf16 %v48
    %v113 = vunpack.c.l.bf16 %v49
    %v114 = vunpack.c.l.bf16 %v50
    %v115 = vunpack.c.l.bf16 %v51
    %v116 = vunpack.c.l.bf16 %v52
    %v117 = vunpack.c.l.bf16 %v53
    %v118 = vunpack.c.l.bf16 %v54
    %v119 = vunpack.c.l.bf16 %v55
    %v120 = vunpack.c.l.bf16 %v56
    %v121 = vunpack.c.l.bf16 %v57
    %v122 = vunpack.c.l.bf16 %v58
    %v123 = vunpack.c.l.bf16 %v59
    %v124 = vunpack.c.l.bf16 %v60
    %v125 = vunpack.c.l.bf16 %v61
    %v126 = vunpack.c.l.bf16 %v62
    %v127 = vunpack.c.l.bf16 %v63
    %v128 = vunpack.c.l.bf16 %v64
    %v129 = vunpack.c.l.bf16 %v65
    %v130 = vunpack.c.l.bf16 %v66
    %v131 = vunpack.c.l.bf16 %v67
    %v132 = vunpack.c.l.bf16 %v68
    %v133 = vunpack.c.l.bf16 %v69
    %v134 = vunpack.c.l.bf16 %v70
    %v135 = vunpack.c.l.bf16 %v71
    %v136 = vunpack.c.l.bf16 %v72
    %v137 = vunpack.c.l.bf16 %v73
    %v138 = vunpack.c.l.bf16 %v74
    %v139 = vunpack.c.l.bf16 %v75
    %v140 = vunpack.c.l.bf16 %v76
    %v141 = vunpack.c.l.bf16 %v77
    %v142 = vunpack.c.l.bf16 %v78
    %v143 = vunpack.c.l.bf16 %v79
    %v144 = vunpack.c.l.bf16 %v80
    %v145 = vunpack.c.l.bf16 %v81
    %v146 = vunpack.c.l.bf16 %v82
    %v147 = vunpack.c.l.bf16 %v83
    %v148 = vunpack.c.l.bf16 %v84
    %v149 = vunpack.c.l.bf16 %v85
    %v150 = vunpack.c.l.bf16 %v86
    %v151 = vunpack.c.l.bf16 %v87
    %v152 = vunpack.c.l.bf16 %v88
    %vm153 = vcmask 293888
    %v154 = vsel %vm153, %v89, 0.0
    %v155 = vsel %vm153, %v90, 0.0
    %v156 = vsel %vm153, %v91, 0.0
    %v157 = vsel %vm153, %v92, 0.0
    %v158 = vsel %vm153, %v93, 0.0
    %v159 = vsel %vm153, %v94, 0.0
    %v160 = vsel %vm153, %v95, 0.0
    %v161 = vsel %vm153, %v96, 0.0
    %v162 = vsel %vm153, %v97, 0.0
    %v163 = vsel %vm153, %v98, 0.0
    %v164 = vsel %vm153, %v99, 0.0
    %v165 = vsel %vm153, %v100, 0.0
    %v166 = vsel %vm153, %v101, 0.0
    %v167 = vsel %vm153, %v102, 0.0
    %v168 = vsel %vm153, %v103, 0.0
    %v169 = vsel %vm153, %v104, 0.0
    %v170 = vsel %vm153, %v105, 0.0
    %v171 = vsel %vm153, %v106, 0.0
    %v172 = vsel %vm153, %v107, 0.0
    %v173 = vsel %vm153, %v108, 0.0
    %v174 = vsel %vm153, %v109, 0.0
    %v175 = vsel %vm153, %v110, 0.0
    %v176 = vsel %vm153, %v111, 0.0
    %v177 = vsel %vm153, %v112, 0.0
    %v178 = vsel %vm153, %v113, 0.0
    %v179 = vsel %vm153, %v114, 0.0
    %v180 = vsel %vm153, %v115, 0.0
    %v181 = vsel %vm153, %v116, 0.0
    %v182 = vsel %vm153, %v117, 0.0
    %v183 = vsel %vm153, %v118, 0.0
    %v184 = vsel %vm153, %v119, 0.0
    %v185 = vsel %vm153, %v120, 0.0
    %v186 = vsel %vm153, %v121, 0.0
    %v187 = vsel %vm153, %v122, 0.0
    %v188 = vsel %vm153, %v123, 0.0
    %v189 = vsel %vm153, %v124, 0.0
    %v190 = vsel %vm153, %v125, 0.0
    %v191 = vsel %vm153, %v126, 0.0
    %v192 = vsel %vm153, %v127, 0.0
    %v193 = vsel %vm153, %v128, 0.0
    %v194 = vsel %vm153, %v129, 0.0
    %v195 = vsel %vm153, %v130, 0.0
    %v196 = vsel %vm153, %v131, 0.0
    %v197 = vsel %vm153, %v132, 0.0
    %v198 = vsel %vm153, %v133, 0.0
    %v199 = vsel %vm153, %v134, 0.0
    %v200 = vsel %vm153, %v135, 0.0
    %v201 = vsel %vm153, %v136, 0.0
    %v202 = vsel %vm153, %v137, 0.0
    %v203 = vsel %vm153, %v138, 0.0
    %v204 = vsel %vm153, %v139, 0.0
    %v205 = vsel %vm153, %v140, 0.0
    %v206 = vsel %vm153, %v141, 0.0
    %v207 = vsel %vm153, %v142, 0.0
    %v208 = vsel %vm153, %v143, 0.0
    %v209 = vsel %vm153, %v144, 0.0
    %v210 = vsel %vm153, %v145, 0.0
    %v211 = vsel %vm153, %v146, 0.0
    %v212 = vsel %vm153, %v147, 0.0
    %v213 = vsel %vm153, %v148, 0.0
    %v214 = vsel %vm153, %v149, 0.0
    %v215 = vsel %vm153, %v150, 0.0
    %v216 = vsel %vm153, %v151, 0.0
    %v217 = vsel %vm153, %v152, 0.0
    %v218 = vrot.slane %v154, 7
    %v219 = vrot.slane %v155, 7
    %v220 = vrot.slane %v156, 7
    %v221 = vrot.slane %v157, 7
    %v222 = vrot.slane %v158, 7
    %v223 = vrot.slane %v159, 7
    %v224 = vrot.slane %v160, 7
    %v225 = vrot.slane %v161, 7
    %v226 = vrot.slane %v162, 7
    %v227 = vrot.slane %v163, 7
    %v228 = vrot.slane %v164, 7
    %v229 = vrot.slane %v165, 7
    %v230 = vrot.slane %v166, 7
    %v231 = vrot.slane %v167, 7
    %v232 = vrot.slane %v168, 7
    %v233 = vrot.slane %v169, 7
    %v234 = vrot.slane %v170, 7
    %v235 = vrot.slane %v171, 7
    %v236 = vrot.slane %v172, 7
    %v237 = vrot.slane %v173, 7
    %v238 = vrot.slane %v174, 7
    %v239 = vrot.slane %v175, 7
    %v240 = vrot.slane %v176, 7
    %v241 = vrot.slane %v177, 7
    %v242 = vrot.slane %v178, 7
    %v243 = vrot.slane %v179, 7
    %v244 = vrot.slane %v180, 7
    %v245 = vrot.slane %v181, 7
    %v246 = vrot.slane %v182, 7
    %v247 = vrot.slane %v183, 7
    %v248 = vrot.slane %v184, 7
    %v249 = vrot.slane %v185, 7
    %v250 = vrot.slane %v186, 7
    %v251 = vrot.slane %v187, 7
    %v252 = vrot.slane %v188, 7
    %v253 = vrot.slane %v189, 7
    %v254 = vrot.slane %v190, 7
    %v255 = vrot.slane %v191, 7
    %v256 = vrot.slane %v192, 7
    %v257 = vrot.slane %v193, 7
    %v258 = vrot.slane %v194, 7
    %v259 = vrot.slane %v195, 7
    %v260 = vrot.slane %v196, 7
    %v261 = vrot.slane %v197, 7
    %v262 = vrot.slane %v198, 7
    %v263 = vrot.slane %v199, 7
    %v264 = vrot.slane %v200, 7
    %v265 = vrot.slane %v201, 7
    %v266 = vrot.slane %v202, 7
    %v267 = vrot.slane %v203, 7
    %v268 = vrot.slane %v204, 7
    %v269 = vrot.slane %v205, 7
    %v270 = vrot.slane %v206, 7
    %v271 = vrot.slane %v207, 7
    %v272 = vrot.slane %v208, 7
    %v273 = vrot.slane %v209, 7
    %v274 = vrot.slane %v210, 7
    %v275 = vrot.slane %v211, 7
    %v276 = vrot.slane %v212, 7
    %v277 = vrot.slane %v213, 7
    %v278 = vrot.slane %v214, 7
    %v279 = vrot.slane %v215, 7
    %v280 = vrot.slane %v216, 7
    %v281 = vrot.slane %v217, 7
    %v282 = vlaneseq
    %v283 = vshrl.u32 %v282, 7
    %vm284 = vcmp.lt.s32.totalorder %v283, 1
    %v285 = vsel %vm284, %v280, %v281
    %v286 = vsel %vm284, %v279, %v280
    %v287 = vsel %vm284, %v278, %v279
    %v288 = vsel %vm284, %v277, %v278
    %v289 = vsel %vm284, %v276, %v277
    %v290 = vsel %vm284, %v275, %v276
    %v291 = vsel %vm284, %v274, %v275
    %v292 = vsel %vm284, %v273, %v274
    %v293 = vsel %vm284, %v272, %v273
    %v294 = vsel %vm284, %v271, %v272
    %v295 = vsel %vm284, %v270, %v271
    %v296 = vsel %vm284, %v269, %v270
    %v297 = vsel %vm284, %v268, %v269
    %v298 = vsel %vm284, %v267, %v268
    %v299 = vsel %vm284, %v266, %v267
    %v300 = vsel %vm284, %v265, %v266
    %v301 = vsel %vm284, %v264, %v265
    %v302 = vsel %vm284, %v263, %v264
    %v303 = vsel %vm284, %v262, %v263
    %v304 = vsel %vm284, %v261, %v262
    %v305 = vsel %vm284, %v260, %v261
    %v306 = vsel %vm284, %v259, %v260
    %v307 = vsel %vm284, %v258, %v259
    %v308 = vsel %vm284, %v257, %v258
    %v309 = vsel %vm284, %v256, %v257
    %v310 = vsel %vm284, %v255, %v256
    %v311 = vsel %vm284, %v254, %v255
    %v312 = vsel %vm284, %v253, %v254
    %v313 = vsel %vm284, %v252, %v253
    %v314 = vsel %vm284, %v251, %v252
    %v315 = vsel %vm284, %v250, %v251
    %v316 = vsel %vm284, %v249, %v250
    %v317 = vsel %vm284, %v248, %v249
    %v318 = vsel %vm284, %v247, %v248
    %v319 = vsel %vm284, %v246, %v247
    %v320 = vsel %vm284, %v245, %v246
    %v321 = vsel %vm284, %v244, %v245
    %v322 = vsel %vm284, %v243, %v244
    %v323 = vsel %vm284, %v242, %v243
    %v324 = vsel %vm284, %v241, %v242
    %v325 = vsel %vm284, %v240, %v241
    %v326 = vsel %vm284, %v239, %v240
    %v327 = vsel %vm284, %v238, %v239
    %v328 = vsel %vm284, %v237, %v238
    %v329 = vsel %vm284, %v236, %v237
    %v330 = vsel %vm284, %v235, %v236
    %v331 = vsel %vm284, %v234, %v235
    %v332 = vsel %vm284, %v233, %v234
    %v333 = vsel %vm284, %v232, %v233
    %v334 = vsel %vm284, %v231, %v232
    %v335 = vsel %vm284, %v230, %v231
    %v336 = vsel %vm284, %v229, %v230
    %v337 = vsel %vm284, %v228, %v229
    %v338 = vsel %vm284, %v227, %v228
    %v339 = vsel %vm284, %v226, %v227
    %v340 = vsel %vm284, %v225, %v226
    %v341 = vsel %vm284, %v224, %v225
    %v342 = vsel %vm284, %v223, %v224
    %v343 = vsel %vm284, %v222, %v223
    %v344 = vsel %vm284, %v221, %v222
    %v345 = vsel %vm284, %v220, %v221
    %v346 = vsel %vm284, %v219, %v220
    %v347 = vsel %vm284, %v218, %v219
    %v348 = vsel %vm284, %v281, %v218
    %v349 = vld [vmem:[%s2] sm:$0xff]
    %v350 = vld [vmem:[%s2 + $0x8] sm:$0xff]
    %v351 = vld [vmem:[%s2 + $0x10] sm:$0xff]
    %v352 = vld [vmem:[%s2 + $0x18] sm:$0xff]
    %v353 = vld [vmem:[%s2 + $0x20] sm:$0xff]
    %v354 = vld [vmem:[%s2 + $0x28] sm:$0xff]
    %v355 = vld [vmem:[%s2 + $0x30] sm:$0xff]
    %v356 = vld [vmem:[%s2 + $0x38] sm:$0xff]
    %v357 = vld [vmem:[%s2 + $0x40] sm:$0xff]
    %v358 = vld [vmem:[%s2 + $0x48] sm:$0xff]
    %v359 = vld [vmem:[%s2 + $0x50] sm:$0xff]
    %v360 = vld [vmem:[%s2 + $0x58] sm:$0xff]
    %v361 = vld [vmem:[%s2 + $0x60] sm:$0xff]
    %v362 = vld [vmem:[%s2 + $0x68] sm:$0xff]
    %v363 = vld [vmem:[%s2 + $0x70] sm:$0xff]
    %v364 = vld [vmem:[%s2 + $0x78] sm:$0xff]
    %v365 = vld [vmem:[%s2 + $0x80] sm:$0xff]
    %v366 = vld [vmem:[%s2 + $0x88] sm:$0xff]
    %v367 = vld [vmem:[%s2 + $0x90] sm:$0xff]
    %v368 = vld [vmem:[%s2 + $0x98] sm:$0xff]
    %v369 = vld [vmem:[%s2 + $0xa0] sm:$0xff]
    %v370 = vld [vmem:[%s2 + $0xa8] sm:$0xff]
    %v371 = vld [vmem:[%s2 + $0xb0] sm:$0xff]
    %v372 = vld [vmem:[%s2 + $0xb8] sm:$0xff]
    %v373 = vld [vmem:[%s2 + $0xc0] sm:$0xff]
    %v374 = vld [vmem:[%s2 + $0xc8] sm:$0xff]
    %v375 = vld [vmem:[%s2 + $0xd0] sm:$0xff]
    %v376 = vld [vmem:[%s2 + $0xd8] sm:$0xff]
    %v377 = vld [vmem:[%s2 + $0xe0] sm:$0xff]
    %v378 = vld [vmem:[%s2 + $0xe8] sm:$0xff]
    %v379 = vld [vmem:[%s2 + $0xf0] sm:$0xff]
    %v380 = vld [vmem:[%s2 + $0xf8] sm:$0xff]
    %v381 = vld [vmem:[%s2 + $0x100] sm:$0xff]
    %v382 = vld [vmem:[%s2 + $0x108] sm:$0xff]
    %v383 = vld [vmem:[%s2 + $0x110] sm:$0xff]
    %v384 = vld [vmem:[%s2 + $0x118] sm:$0xff]
    %v385 = vld [vmem:[%s2 + $0x120] sm:$0xff]
    %v386 = vld [vmem:[%s2 + $0x128] sm:$0xff]
    %v387 = vld [vmem:[%s2 + $0x130] sm:$0xff]
    %v388 = vld [vmem:[%s2 + $0x138] sm:$0xff]
    %v389 = vld [vmem:[%s2 + $0x140] sm:$0xff]
    %v390 = vld [vmem:[%s2 + $0x148] sm:$0xff]
    %v391 = vld [vmem:[%s2 + $0x150] sm:$0xff]
    %v392 = vld [vmem:[%s2 + $0x158] sm:$0xff]
    %v393 = vld [vmem:[%s2 + $0x160] sm:$0xff]
    %v394 = vld [vmem:[%s2 + $0x168] sm:$0xff]
    %v395 = vld [vmem:[%s2 + $0x170] sm:$0xff]
    %v396 = vld [vmem:[%s2 + $0x178] sm:$0xff]
    %v397 = vld [vmem:[%s2 + $0x180] sm:$0xff]
    %v398 = vld [vmem:[%s2 + $0x188] sm:$0xff]
    %v399 = vld [vmem:[%s2 + $0x190] sm:$0xff]
    %v400 = vld [vmem:[%s2 + $0x198] sm:$0xff]
    %v401 = vld [vmem:[%s2 + $0x1a0] sm:$0xff]
    %v402 = vld [vmem:[%s2 + $0x1a8] sm:$0xff]
    %v403 = vld [vmem:[%s2 + $0x1b0] sm:$0xff]
    %v404 = vld [vmem:[%s2 + $0x1b8] sm:$0xff]
    %v405 = vld [vmem:[%s2 + $0x1c0] sm:$0xff]
    %v406 = vld [vmem:[%s2 + $0x1c8] sm:$0xff]
    %v407 = vld [vmem:[%s2 + $0x1d0] sm:$0xff]
    %v408 = vld [vmem:[%s2 + $0x1d8] sm:$0xff]
    %v409 = vld [vmem:[%s2 + $0x1e0] sm:$0xff]
    %v410 = vld [vmem:[%s2 + $0x1e8] sm:$0xff]
    %v411 = vld [vmem:[%s2 + $0x1f0] sm:$0xff]
    %v412 = vld [vmem:[%s2 + $0x1f8] sm:$0xff]
    %414 = vset.pattern.permute.xlu0 0
    %415 = vperm.xlu0 %414, %v349
    %v416 = vpop.permute.xlu0 %415
    %419 = vset.pattern.permute.xlu0 0
    %420 = vperm.xlu0 %419, %v350
    %v421 = vpop.permute.xlu0 %420
    %424 = vset.pattern.permute.xlu0 0
    %425 = vperm.xlu0 %424, %v351
    %v426 = vpop.permute.xlu0 %425
    %429 = vset.pattern.permute.xlu0 0
    %430 = vperm.xlu0 %429, %v352
    %v431 = vpop.permute.xlu0 %430
    %434 = vset.pattern.permute.xlu0 0
    %435 = vperm.xlu0 %434, %v353
    %v436 = vpop.permute.xlu0 %435
    %439 = vset.pattern.permute.xlu0 0
    %440 = vperm.xlu0 %439, %v354
    %v441 = vpop.permute.xlu0 %440
    %444 = vset.pattern.permute.xlu0 0
    %445 = vperm.xlu0 %444, %v355
    %v446 = vpop.permute.xlu0 %445
    %449 = vset.pattern.permute.xlu0 0
    %450 = vperm.xlu0 %449, %v356
    %v451 = vpop.permute.xlu0 %450
    %454 = vset.pattern.permute.xlu0 0
    %455 = vperm.xlu0 %454, %v357
    %v456 = vpop.permute.xlu0 %455
    %459 = vset.pattern.permute.xlu0 0
    %460 = vperm.xlu0 %459, %v358
    %v461 = vpop.permute.xlu0 %460
    %464 = vset.pattern.permute.xlu0 0
    %465 = vperm.xlu0 %464, %v359
    %v466 = vpop.permute.xlu0 %465
    %469 = vset.pattern.permute.xlu0 0
    %470 = vperm.xlu0 %469, %v360
    %v471 = vpop.permute.xlu0 %470
    %474 = vset.pattern.permute.xlu0 0
    %475 = vperm.xlu0 %474, %v361
    %v476 = vpop.permute.xlu0 %475
    %479 = vset.pattern.permute.xlu0 0
    %480 = vperm.xlu0 %479, %v362
    %v481 = vpop.permute.xlu0 %480
    %484 = vset.pattern.permute.xlu0 0
    %485 = vperm.xlu0 %484, %v363
    %v486 = vpop.permute.xlu0 %485
    %489 = vset.pattern.permute.xlu0 0
    %490 = vperm.xlu0 %489, %v364
    %v491 = vpop.permute.xlu0 %490
    %494 = vset.pattern.permute.xlu0 0
    %495 = vperm.xlu0 %494, %v365
    %v496 = vpop.permute.xlu0 %495
    %499 = vset.pattern.permute.xlu0 0
    %500 = vperm.xlu0 %499, %v366
    %v501 = vpop.permute.xlu0 %500
    %504 = vset.pattern.permute.xlu0 0
    %505 = vperm.xlu0 %504, %v367
    %v506 = vpop.permute.xlu0 %505
    %509 = vset.pattern.permute.xlu0 0
    %510 = vperm.xlu0 %509, %v368
    %v511 = vpop.permute.xlu0 %510
    %514 = vset.pattern.permute.xlu0 0
    %515 = vperm.xlu0 %514, %v369
    %v516 = vpop.permute.xlu0 %515
    %519 = vset.pattern.permute.xlu0 0
    %520 = vperm.xlu0 %519, %v370
    %v521 = vpop.permute.xlu0 %520
    %524 = vset.pattern.permute.xlu0 0
    %525 = vperm.xlu0 %524, %v371
    %v526 = vpop.permute.xlu0 %525
    %529 = vset.pattern.permute.xlu0 0
    %530 = vperm.xlu0 %529, %v372
    %v531 = vpop.permute.xlu0 %530
    %534 = vset.pattern.permute.xlu0 0
    %535 = vperm.xlu0 %534, %v373
    %v536 = vpop.permute.xlu0 %535
    %539 = vset.pattern.permute.xlu0 0
    %540 = vperm.xlu0 %539, %v374
    %v541 = vpop.permute.xlu0 %540
    %544 = vset.pattern.permute.xlu0 0
    %545 = vperm.xlu0 %544, %v375
    %v546 = vpop.permute.xlu0 %545
    %549 = vset.pattern.permute.xlu0 0
    %550 = vperm.xlu0 %549, %v376
    %v551 = vpop.permute.xlu0 %550
    %554 = vset.pattern.permute.xlu0 0
    %555 = vperm.xlu0 %554, %v377
    %v556 = vpop.permute.xlu0 %555
    %559 = vset.pattern.permute.xlu0 0
    %560 = vperm.xlu0 %559, %v378
    %v561 = vpop.permute.xlu0 %560
    %564 = vset.pattern.permute.xlu0 0
    %565 = vperm.xlu0 %564, %v379
    %v566 = vpop.permute.xlu0 %565
    %569 = vset.pattern.permute.xlu0 0
    %570 = vperm.xlu0 %569, %v380
    %v571 = vpop.permute.xlu0 %570
    %574 = vset.pattern.permute.xlu0 0
    %575 = vperm.xlu0 %574, %v381
    %v576 = vpop.permute.xlu0 %575
    %579 = vset.pattern.permute.xlu0 0
    %580 = vperm.xlu0 %579, %v382
    %v581 = vpop.permute.xlu0 %580
    %584 = vset.pattern.permute.xlu0 0
    %585 = vperm.xlu0 %584, %v383
    %v586 = vpop.permute.xlu0 %585
    %589 = vset.pattern.permute.xlu0 0
    %590 = vperm.xlu0 %589, %v384
    %v591 = vpop.permute.xlu0 %590
    %594 = vset.pattern.permute.xlu0 0
    %595 = vperm.xlu0 %594, %v385
    %v596 = vpop.permute.xlu0 %595
    %599 = vset.pattern.permute.xlu0 0
    %600 = vperm.xlu0 %599, %v386
    %v601 = vpop.permute.xlu0 %600
    %604 = vset.pattern.permute.xlu0 0
    %605 = vperm.xlu0 %604, %v387
    %v606 = vpop.permute.xlu0 %605
    %609 = vset.pattern.permute.xlu0 0
    %610 = vperm.xlu0 %609, %v388
    %v611 = vpop.permute.xlu0 %610
    %614 = vset.pattern.permute.xlu0 0
    %615 = vperm.xlu0 %614, %v389
    %v616 = vpop.permute.xlu0 %615
    %619 = vset.pattern.permute.xlu0 0
    %620 = vperm.xlu0 %619, %v390
    %v621 = vpop.permute.xlu0 %620
    %624 = vset.pattern.permute.xlu0 0
    %625 = vperm.xlu0 %624, %v391
    %v626 = vpop.permute.xlu0 %625
    %629 = vset.pattern.permute.xlu0 0
    %630 = vperm.xlu0 %629, %v392
    %v631 = vpop.permute.xlu0 %630
    %634 = vset.pattern.permute.xlu0 0
    %635 = vperm.xlu0 %634, %v393
    %v636 = vpop.permute.xlu0 %635
    %639 = vset.pattern.permute.xlu0 0
    %640 = vperm.xlu0 %639, %v394
    %v641 = vpop.permute.xlu0 %640
    %644 = vset.pattern.permute.xlu0 0
    %645 = vperm.xlu0 %644, %v395
    %v646 = vpop.permute.xlu0 %645
    %649 = vset.pattern.permute.xlu0 0
    %650 = vperm.xlu0 %649, %v396
    %v651 = vpop.permute.xlu0 %650
    %654 = vset.pattern.permute.xlu0 0
    %655 = vperm.xlu0 %654, %v397
    %v656 = vpop.permute.xlu0 %655
    %659 = vset.pattern.permute.xlu0 0
    %660 = vperm.xlu0 %659, %v398
    %v661 = vpop.permute.xlu0 %660
    %664 = vset.pattern.permute.xlu0 0
    %665 = vperm.xlu0 %664, %v399
    %v666 = vpop.permute.xlu0 %665
    %669 = vset.pattern.permute.xlu0 0
    %670 = vperm.xlu0 %669, %v400
    %v671 = vpop.permute.xlu0 %670
    %674 = vset.pattern.permute.xlu0 0
    %675 = vperm.xlu0 %674, %v401
    %v676 = vpop.permute.xlu0 %675
    %679 = vset.pattern.permute.xlu0 0
    %680 = vperm.xlu0 %679, %v402
    %v681 = vpop.permute.xlu0 %680
    %684 = vset.pattern.permute.xlu0 0
    %685 = vperm.xlu0 %684, %v403
    %v686 = vpop.permute.xlu0 %685
    %689 = vset.pattern.permute.xlu0 0
    %690 = vperm.xlu0 %689, %v404
    %v691 = vpop.permute.xlu0 %690
    %694 = vset.pattern.permute.xlu0 0
    %695 = vperm.xlu0 %694, %v405
    %v696 = vpop.permute.xlu0 %695
    %699 = vset.pattern.permute.xlu0 0
    %700 = vperm.xlu0 %699, %v406
    %v701 = vpop.permute.xlu0 %700
    %704 = vset.pattern.permute.xlu0 0
    %705 = vperm.xlu0 %704, %v407
    %v706 = vpop.permute.xlu0 %705
    %709 = vset.pattern.permute.xlu0 0
    %710 = vperm.xlu0 %709, %v408
    %v711 = vpop.permute.xlu0 %710
    %714 = vset.pattern.permute.xlu0 0
    %715 = vperm.xlu0 %714, %v409
    %v716 = vpop.permute.xlu0 %715
    %719 = vset.pattern.permute.xlu0 0
    %720 = vperm.xlu0 %719, %v410
    %v721 = vpop.permute.xlu0 %720
    %724 = vset.pattern.permute.xlu0 0
    %725 = vperm.xlu0 %724, %v411
    %v726 = vpop.permute.xlu0 %725
    %729 = vset.pattern.permute.xlu0 0
    %730 = vperm.xlu0 %729, %v412
    %v731 = vpop.permute.xlu0 %730
    %v733 = vmul.f32 %v286, %v416
    %v734 = vmul.f32 %v285, %v421
    %v735 = vmul.f32 %v348, %v426
    %v736 = vmul.f32 %v347, %v431
    %v737 = vmul.f32 %v346, %v436
    %v738 = vmul.f32 %v345, %v441
    %v739 = vmul.f32 %v344, %v446
    %v740 = vmul.f32 %v343, %v451
    %v741 = vmul.f32 %v342, %v456
    %v742 = vmul.f32 %v341, %v461
    %v743 = vmul.f32 %v340, %v466
    %v744 = vmul.f32 %v339, %v471
    %v745 = vmul.f32 %v338, %v476
    %v746 = vmul.f32 %v337, %v481
    %v747 = vmul.f32 %v336, %v486
    %v748 = vmul.f32 %v335, %v491
    %v749 = vmul.f32 %v334, %v496
    %v750 = vmul.f32 %v333, %v501
    %v751 = vmul.f32 %v332, %v506
    %v752 = vmul.f32 %v331, %v511
    %v753 = vmul.f32 %v330, %v516
    %v754 = vmul.f32 %v329, %v521
    %v755 = vmul.f32 %v328, %v526
    %v756 = vmul.f32 %v327, %v531
    %v757 = vmul.f32 %v326, %v536
    %v758 = vmul.f32 %v325, %v541
    %v759 = vmul.f32 %v324, %v546
    %v760 = vmul.f32 %v323, %v551
    %v761 = vmul.f32 %v322, %v556
    %v762 = vmul.f32 %v321, %v561
    %v763 = vmul.f32 %v320, %v566
    %v764 = vmul.f32 %v319, %v571
    %v765 = vmul.f32 %v318, %v576
    %v766 = vmul.f32 %v317, %v581
    %v767 = vmul.f32 %v316, %v586
    %v768 = vmul.f32 %v315, %v591
    %v769 = vmul.f32 %v314, %v596
    %v770 = vmul.f32 %v313, %v601
    %v771 = vmul.f32 %v312, %v606
    %v772 = vmul.f32 %v311, %v611
    %v773 = vmul.f32 %v310, %v616
    %v774 = vmul.f32 %v309, %v621
    %v775 = vmul.f32 %v308, %v626
    %v776 = vmul.f32 %v307, %v631
    %v777 = vmul.f32 %v306, %v636
    %v778 = vmul.f32 %v305, %v641
    %v779 = vmul.f32 %v304, %v646
    %v780 = vmul.f32 %v303, %v651
    %v781 = vmul.f32 %v302, %v656
    %v782 = vmul.f32 %v301, %v661
    %v783 = vmul.f32 %v300, %v666
    %v784 = vmul.f32 %v299, %v671
    %v785 = vmul.f32 %v298, %v676
    %v786 = vmul.f32 %v297, %v681
    %v787 = vmul.f32 %v296, %v686
    %v788 = vmul.f32 %v295, %v691
    %v789 = vmul.f32 %v294, %v696
    %v790 = vmul.f32 %v293, %v701
    %v791 = vmul.f32 %v292, %v706
    %v792 = vmul.f32 %v291, %v711
    %v793 = vmul.f32 %v290, %v716
    %v794 = vmul.f32 %v289, %v721
    %v795 = vmul.f32 %v288, %v726
    %v796 = vmul.f32 %v287, %v731
    %v797 = vpack.c.bf16 %v734, %v733
    %v798 = vpack.c.bf16 %v736, %v735
    %v799 = vpack.c.bf16 %v738, %v737
    %v800 = vpack.c.bf16 %v740, %v739
    %v801 = vpack.c.bf16 %v742, %v741
    %v802 = vpack.c.bf16 %v744, %v743
    %v803 = vpack.c.bf16 %v746, %v745
    %v804 = vpack.c.bf16 %v748, %v747
    %v805 = vpack.c.bf16 %v750, %v749
    %v806 = vpack.c.bf16 %v752, %v751
    %v807 = vpack.c.bf16 %v754, %v753
    %v808 = vpack.c.bf16 %v756, %v755
    %v809 = vpack.c.bf16 %v758, %v757
    %v810 = vpack.c.bf16 %v760, %v759
    %v811 = vpack.c.bf16 %v762, %v761
    %v812 = vpack.c.bf16 %v764, %v763
    %v813 = vpack.c.bf16 %v766, %v765
    %v814 = vpack.c.bf16 %v768, %v767
    %v815 = vpack.c.bf16 %v770, %v769
    %v816 = vpack.c.bf16 %v772, %v771
    %v817 = vpack.c.bf16 %v774, %v773
    %v818 = vpack.c.bf16 %v776, %v775
    %v819 = vpack.c.bf16 %v778, %v777
    %v820 = vpack.c.bf16 %v780, %v779
    %v821 = vpack.c.bf16 %v782, %v781
    %v822 = vpack.c.bf16 %v784, %v783
    %v823 = vpack.c.bf16 %v786, %v785
    %v824 = vpack.c.bf16 %v788, %v787
    %v825 = vpack.c.bf16 %v790, %v789
    %v826 = vpack.c.bf16 %v792, %v791
    %v827 = vpack.c.bf16 %v794, %v793
    %v828 = vpack.c.bf16 %v796, %v795
    %829 = vst [vmem:[#allocation2] sm:$0xff] %v797
    %830 = vst [vmem:[#allocation2 + $0x48] sm:$0xff] %v798
    %831 = vst [vmem:[#allocation2 + $0x90] sm:$0xff] %v799
    %832 = vst [vmem:[#allocation2 + $0xd8] sm:$0xff] %v800
    %833 = vst [vmem:[#allocation2 + $0x120] sm:$0xff] %v801
    %834 = vst [vmem:[#allocation2 + $0x168] sm:$0xff] %v802
    %835 = vst [vmem:[#allocation2 + $0x1b0] sm:$0xff] %v803
    %836 = vst [vmem:[#allocation2 + $0x1f8] sm:$0xff] %v804
    %837 = vst [vmem:[#allocation2 + $0x240] sm:$0xff] %v805
    %838 = vst [vmem:[#allocation2 + $0x288] sm:$0xff] %v806
    %839 = vst [vmem:[#allocation2 + $0x2d0] sm:$0xff] %v807
    %840 = vst [vmem:[#allocation2 + $0x318] sm:$0xff] %v808
    %841 = vst [vmem:[#allocation2 + $0x360] sm:$0xff] %v809
    %842 = vst [vmem:[#allocation2 + $0x3a8] sm:$0xff] %v810
    %843 = vst [vmem:[#allocation2 + $0x3f0] sm:$0xff] %v811
    %844 = vst [vmem:[#allocation2 + $0x438] sm:$0xff] %v812
    %845 = vst [vmem:[#allocation2 + $0x480] sm:$0xff] %v813
    %846 = vst [vmem:[#allocation2 + $0x4c8] sm:$0xff] %v814
    %847 = vst [vmem:[#allocation2 + $0x510] sm:$0xff] %v815
    %848 = vst [vmem:[#allocation2 + $0x558] sm:$0xff] %v816
    %849 = vst [vmem:[#allocation2 + $0x5a0] sm:$0xff] %v817
    %850 = vst [vmem:[#allocation2 + $0x5e8] sm:$0xff] %v818
    %851 = vst [vmem:[#allocation2 + $0x630] sm:$0xff] %v819
    %852 = vst [vmem:[#allocation2 + $0x678] sm:$0xff] %v820
    %853 = vst [vmem:[#allocation2 + $0x6c0] sm:$0xff] %v821
    %854 = vst [vmem:[#allocation2 + $0x708] sm:$0xff] %v822
    %855 = vst [vmem:[#allocation2 + $0x750] sm:$0xff] %v823
    %856 = vst [vmem:[#allocation2 + $0x798] sm:$0xff] %v824
    %857 = vst [vmem:[#allocation2 + $0x7e0] sm:$0xff] %v825
    %858 = vst [vmem:[#allocation2 + $0x828] sm:$0xff] %v826
    %859 = vst [vmem:[#allocation2 + $0x870] sm:$0xff] %v827
    %860 = vst [vmem:[#allocation2 + $0x8b8] sm:$0xff] %v828
    %v861 = vld [vmem:[%s2] sm:$0xff]
    %v862 = vld [vmem:[%s2 + $0x8] sm:$0xff]
    %v863 = vld [vmem:[%s2 + $0x10] sm:$0xff]
    %v864 = vld [vmem:[%s2 + $0x18] sm:$0xff]
    %v865 = vld [vmem:[%s2 + $0x20] sm:$0xff]
    %v866 = vld [vmem:[%s2 + $0x28] sm:$0xff]
    %v867 = vld [vmem:[%s2 + $0x30] sm:$0xff]
    %v868 = vld [vmem:[%s2 + $0x38] sm:$0xff]
    %v869 = vld [vmem:[%s2 + $0x40] sm:$0xff]
    %v870 = vld [vmem:[%s2 + $0x48] sm:$0xff]
    %v871 = vld [vmem:[%s2 + $0x50] sm:$0xff]
    %v872 = vld [vmem:[%s2 + $0x58] sm:$0xff]
    %v873 = vld [vmem:[%s2 + $0x60] sm:$0xff]
    %v874 = vld [vmem:[%s2 + $0x68] sm:$0xff]
    %v875 = vld [vmem:[%s2 + $0x70] sm:$0xff]
    %v876 = vld [vmem:[%s2 + $0x78] sm:$0xff]
    %v877 = vld [vmem:[%s2 + $0x80] sm:$0xff]
    %v878 = vld [vmem:[%s2 + $0x88] sm:$0xff]
    %v879 = vld [vmem:[%s2 + $0x90] sm:$0xff]
    %v880 = vld [vmem:[%s2 + $0x98] sm:$0xff]
    %v881 = vld [vmem:[%s2 + $0xa0] sm:$0xff]
    %v882 = vld [vmem:[%s2 + $0xa8] sm:$0xff]
    %v883 = vld [vmem:[%s2 + $0xb0] sm:$0xff]
    %v884 = vld [vmem:[%s2 + $0xb8] sm:$0xff]
    %v885 = vld [vmem:[%s2 + $0xc0] sm:$0xff]
    %v886 = vld [vmem:[%s2 + $0xc8] sm:$0xff]
    %v887 = vld [vmem:[%s2 + $0xd0] sm:$0xff]
    %v888 = vld [vmem:[%s2 + $0xd8] sm:$0xff]
    %v889 = vld [vmem:[%s2 + $0xe0] sm:$0xff]
    %v890 = vld [vmem:[%s2 + $0xe8] sm:$0xff]
    %v891 = vld [vmem:[%s2 + $0xf0] sm:$0xff]
    %v892 = vld [vmem:[%s2 + $0xf8] sm:$0xff]
    %v893 = vld [vmem:[%s2 + $0x100] sm:$0xff]
    %v894 = vld [vmem:[%s2 + $0x108] sm:$0xff]
    %v895 = vld [vmem:[%s2 + $0x110] sm:$0xff]
    %v896 = vld [vmem:[%s2 + $0x118] sm:$0xff]
    %v897 = vld [vmem:[%s2 + $0x120] sm:$0xff]
    %v898 = vld [vmem:[%s2 + $0x128] sm:$0xff]
    %v899 = vld [vmem:[%s2 + $0x130] sm:$0xff]
    %v900 = vld [vmem:[%s2 + $0x138] sm:$0xff]
    %v901 = vld [vmem:[%s2 + $0x140] sm:$0xff]
    %v902 = vld [vmem:[%s2 + $0x148] sm:$0xff]
    %v903 = vld [vmem:[%s2 + $0x150] sm:$0xff]
    %v904 = vld [vmem:[%s2 + $0x158] sm:$0xff]
    %v905 = vld [vmem:[%s2 + $0x160] sm:$0xff]
    %v906 = vld [vmem:[%s2 + $0x168] sm:$0xff]
    %v907 = vld [vmem:[%s2 + $0x170] sm:$0xff]
    %v908 = vld [vmem:[%s2 + $0x178] sm:$0xff]
    %v909 = vld [vmem:[%s2 + $0x180] sm:$0xff]
    %v910 = vld [vmem:[%s2 + $0x188] sm:$0xff]
    %v911 = vld [vmem:[%s2 + $0x190] sm:$0xff]
    %v912 = vld [vmem:[%s2 + $0x198] sm:$0xff]
    %v913 = vld [vmem:[%s2 + $0x1a0] sm:$0xff]
    %v914 = vld [vmem:[%s2 + $0x1a8] sm:$0xff]
    %v915 = vld [vmem:[%s2 + $0x1b0] sm:$0xff]
    %v916 = vld [vmem:[%s2 + $0x1b8] sm:$0xff]
    %v917 = vld [vmem:[%s2 + $0x1c0] sm:$0xff]
    %v918 = vld [vmem:[%s2 + $0x1c8] sm:$0xff]
    %v919 = vld [vmem:[%s2 + $0x1d0] sm:$0xff]
    %v920 = vld [vmem:[%s2 + $0x1d8] sm:$0xff]
    %v921 = vld [vmem:[%s2 + $0x1e0] sm:$0xff]
    %v922 = vld [vmem:[%s2 + $0x1e8] sm:$0xff]
    %v923 = vld [vmem:[%s2 + $0x1f0] sm:$0xff]
    %v924 = vld [vmem:[%s2 + $0x1f8] sm:$0xff]
    %926 = vset.pattern.permute.xlu0 1
    %927 = vperm.xlu0 %926, %v861
    %v928 = vpop.permute.xlu0 %927
    %931 = vset.pattern.permute.xlu0 1
    %932 = vperm.xlu0 %931, %v862
    %v933 = vpop.permute.xlu0 %932
    %936 = vset.pattern.permute.xlu0 1
    %937 = vperm.xlu0 %936, %v863
    %v938 = vpop.permute.xlu0 %937
    %941 = vset.pattern.permute.xlu0 1
    %942 = vperm.xlu0 %941, %v864
    %v943 = vpop.permute.xlu0 %942
    %946 = vset.pattern.permute.xlu0 1
    %947 = vperm.xlu0 %946, %v865
    %v948 = vpop.permute.xlu0 %947
    %951 = vset.pattern.permute.xlu0 1
    %952 = vperm.xlu0 %951, %v866
    %v953 = vpop.permute.xlu0 %952
    %956 = vset.pattern.permute.xlu0 1
    %957 = vperm.xlu0 %956, %v867
    %v958 = vpop.permute.xlu0 %957
    %961 = vset.pattern.permute.xlu0 1
    %962 = vperm.xlu0 %961, %v868
    %v963 = vpop.permute.xlu0 %962
    %966 = vset.pattern.permute.xlu0 1
    %967 = vperm.xlu0 %966, %v869
    %v968 = vpop.permute.xlu0 %967
    %971 = vset.pattern.permute.xlu0 1
    %972 = vperm.xlu0 %971, %v870
    %v973 = vpop.permute.xlu0 %972
    %976 = vset.pattern.permute.xlu0 1
    %977 = vperm.xlu0 %976, %v871
    %v978 = vpop.permute.xlu0 %977
    %981 = vset.pattern.permute.xlu0 1
    %982 = vperm.xlu0 %981, %v872
    %v983 = vpop.permute.xlu0 %982
    %986 = vset.pattern.permute.xlu0 1
    %987 = vperm.xlu0 %986, %v873
    %v988 = vpop.permute.xlu0 %987
    %991 = vset.pattern.permute.xlu0 1
    %992 = vperm.xlu0 %991, %v874
    %v993 = vpop.permute.xlu0 %992
    %996 = vset.pattern.permute.xlu0 1
    %997 = vperm.xlu0 %996, %v875
    %v998 = vpop.permute.xlu0 %997
    %1001 = vset.pattern.permute.xlu0 1
    %1002 = vperm.xlu0 %1001, %v876
    %v1003 = vpop.permute.xlu0 %1002
    %1006 = vset.pattern.permute.xlu0 1
    %1007 = vperm.xlu0 %1006, %v877
    %v1008 = vpop.permute.xlu0 %1007
    %1011 = vset.pattern.permute.xlu0 1
    %1012 = vperm.xlu0 %1011, %v878
    %v1013 = vpop.permute.xlu0 %1012
    %1016 = vset.pattern.permute.xlu0 1
    %1017 = vperm.xlu0 %1016, %v879
    %v1018 = vpop.permute.xlu0 %1017
    %1021 = vset.pattern.permute.xlu0 1
    %1022 = vperm.xlu0 %1021, %v880
    %v1023 = vpop.permute.xlu0 %1022
    %1026 = vset.pattern.permute.xlu0 1
    %1027 = vperm.xlu0 %1026, %v881
    %v1028 = vpop.permute.xlu0 %1027
    %1031 = vset.pattern.permute.xlu0 1
    %1032 = vperm.xlu0 %1031, %v882
    %v1033 = vpop.permute.xlu0 %1032
    %1036 = vset.pattern.permute.xlu0 1
    %1037 = vperm.xlu0 %1036, %v883
    %v1038 = vpop.permute.xlu0 %1037
    %1041 = vset.pattern.permute.xlu0 1
    %1042 = vperm.xlu0 %1041, %v884
    %v1043 = vpop.permute.xlu0 %1042
    %1046 = vset.pattern.permute.xlu0 1
    %1047 = vperm.xlu0 %1046, %v885
    %v1048 = vpop.permute.xlu0 %1047
    %1051 = vset.pattern.permute.xlu0 1
    %1052 = vperm.xlu0 %1051, %v886
    %v1053 = vpop.permute.xlu0 %1052
    %1056 = vset.pattern.permute.xlu0 1
    %1057 = vperm.xlu0 %1056, %v887
    %v1058 = vpop.permute.xlu0 %1057
    %1061 = vset.pattern.permute.xlu0 1
    %1062 = vperm.xlu0 %1061, %v888
    %v1063 = vpop.permute.xlu0 %1062
    %1066 = vset.pattern.permute.xlu0 1
    %1067 = vperm.xlu0 %1066, %v889
    %v1068 = vpop.permute.xlu0 %1067
    %1071 = vset.pattern.permute.xlu0 1
    %1072 = vperm.xlu0 %1071, %v890
    %v1073 = vpop.permute.xlu0 %1072
    %1076 = vset.pattern.permute.xlu0 1
    %1077 = vperm.xlu0 %1076, %v891
    %v1078 = vpop.permute.xlu0 %1077
    %1081 = vset.pattern.permute.xlu0 1
    %1082 = vperm.xlu0 %1081, %v892
    %v1083 = vpop.permute.xlu0 %1082
    %1086 = vset.pattern.permute.xlu0 1
    %1087 = vperm.xlu0 %1086, %v893
    %v1088 = vpop.permute.xlu0 %1087
    %1091 = vset.pattern.permute.xlu0 1
    %1092 = vperm.xlu0 %1091, %v894
    %v1093 = vpop.permute.xlu0 %1092
    %1096 = vset.pattern.permute.xlu0 1
    %1097 = vperm.xlu0 %1096, %v895
    %v1098 = vpop.permute.xlu0 %1097
    %1101 = vset.pattern.permute.xlu0 1
    %1102 = vperm.xlu0 %1101, %v896
    %v1103 = vpop.permute.xlu0 %1102
    %1106 = vset.pattern.permute.xlu0 1
    %1107 = vperm.xlu0 %1106, %v897
    %v1108 = vpop.permute.xlu0 %1107
    %1111 = vset.pattern.permute.xlu0 1
    %1112 = vperm.xlu0 %1111, %v898
    %v1113 = vpop.permute.xlu0 %1112
    %1116 = vset.pattern.permute.xlu0 1
    %1117 = vperm.xlu0 %1116, %v899
    %v1118 = vpop.permute.xlu0 %1117
    %1121 = vset.pattern.permute.xlu0 1
    %1122 = vperm.xlu0 %1121, %v900
    %v1123 = vpop.permute.xlu0 %1122
    %1126 = vset.pattern.permute.xlu0 1
    %1127 = vperm.xlu0 %1126, %v901
    %v1128 = vpop.permute.xlu0 %1127
    %1131 = vset.pattern.permute.xlu0 1
    %1132 = vperm.xlu0 %1131, %v902
    %v1133 = vpop.permute.xlu0 %1132
    %1136 = vset.pattern.permute.xlu0 1
    %1137 = vperm.xlu0 %1136, %v903
    %v1138 = vpop.permute.xlu0 %1137
    %1141 = vset.pattern.permute.xlu0 1
    %1142 = vperm.xlu0 %1141, %v904
    %v1143 = vpop.permute.xlu0 %1142
    %1146 = vset.pattern.permute.xlu0 1
    %1147 = vperm.xlu0 %1146, %v905
    %v1148 = vpop.permute.xlu0 %1147
    %1151 = vset.pattern.permute.xlu0 1
    %1152 = vperm.xlu0 %1151, %v906
    %v1153 = vpop.permute.xlu0 %1152
    %1156 = vset.pattern.permute.xlu0 1
    %1157 = vperm.xlu0 %1156, %v907
    %v1158 = vpop.permute.xlu0 %1157
    %1161 = vset.pattern.permute.xlu0 1
    %1162 = vperm.xlu0 %1161, %v908
    %v1163 = vpop.permute.xlu0 %1162
    %1166 = vset.pattern.permute.xlu0 1
    %1167 = vperm.xlu0 %1166, %v909
    %v1168 = vpop.permute.xlu0 %1167
    %1171 = vset.pattern.permute.xlu0 1
    %1172 = vperm.xlu0 %1171, %v910
    %v1173 = vpop.permute.xlu0 %1172
    %1176 = vset.pattern.permute.xlu0 1
    %1177 = vperm.xlu0 %1176, %v911
    %v1178 = vpop.permute.xlu0 %1177
    %1181 = vset.pattern.permute.xlu0 1
    %1182 = vperm.xlu0 %1181, %v912
    %v1183 = vpop.permute.xlu0 %1182
    %1186 = vset.pattern.permute.xlu0 1
    %1187 = vperm.xlu0 %1186, %v913
    %v1188 = vpop.permute.xlu0 %1187
    %1191 = vset.pattern.permute.xlu0 1
    %1192 = vperm.xlu0 %1191, %v914
    %v1193 = vpop.permute.xlu0 %1192
    %1196 = vset.pattern.permute.xlu0 1
    %1197 = vperm.xlu0 %1196, %v915
    %v1198 = vpop.permute.xlu0 %1197
    %1201 = vset.pattern.permute.xlu0 1
    %1202 = vperm.xlu0 %1201, %v916
    %v1203 = vpop.permute.xlu0 %1202
    %1206 = vset.pattern.permute.xlu0 1
    %1207 = vperm.xlu0 %1206, %v917
    %v1208 = vpop.permute.xlu0 %1207
    %1211 = vset.pattern.permute.xlu0 1
    %1212 = vperm.xlu0 %1211, %v918
    %v1213 = vpop.permute.xlu0 %1212
    %1216 = vset.pattern.permute.xlu0 1
    %1217 = vperm.xlu0 %1216, %v919
    %v1218 = vpop.permute.xlu0 %1217
    %1221 = vset.pattern.permute.xlu0 1
    %1222 = vperm.xlu0 %1221, %v920
    %v1223 = vpop.permute.xlu0 %1222
    %1226 = vset.pattern.permute.xlu0 1
    %1227 = vperm.xlu0 %1226, %v921
    %v1228 = vpop.permute.xlu0 %1227
    %1231 = vset.pattern.permute.xlu0 1
    %1232 = vperm.xlu0 %1231, %v922
    %v1233 = vpop.permute.xlu0 %1232
    %1236 = vset.pattern.permute.xlu0 1
    %1237 = vperm.xlu0 %1236, %v923
    %v1238 = vpop.permute.xlu0 %1237
    %1241 = vset.pattern.permute.xlu0 1
    %1242 = vperm.xlu0 %1241, %v924
    %v1243 = vpop.permute.xlu0 %1242
    %v1245 = vmul.f32 %v216, %v928
    %v1246 = vmul.f32 %v217, %v933
    %v1247 = vmul.f32 %v154, %v938
    %v1248 = vmul.f32 %v155, %v943
    %v1249 = vmul.f32 %v156, %v948
    %v1250 = vmul.f32 %v157, %v953
    %v1251 = vmul.f32 %v158, %v958
    %v1252 = vmul.f32 %v159, %v963
    %v1253 = vmul.f32 %v160, %v968
    %v1254 = vmul.f32 %v161, %v973
    %v1255 = vmul.f32 %v162, %v978
    %v1256 = vmul.f32 %v163, %v983
    %v1257 = vmul.f32 %v164, %v988
    %v1258 = vmul.f32 %v165, %v993
    %v1259 = vmul.f32 %v166, %v998
    %v1260 = vmul.f32 %v167, %v1003
    %v1261 = vmul.f32 %v168, %v1008
    %v1262 = vmul.f32 %v169, %v1013
    %v1263 = vmul.f32 %v170, %v1018
    %v1264 = vmul.f32 %v171, %v1023
    %v1265 = vmul.f32 %v172, %v1028
    %v1266 = vmul.f32 %v173, %v1033
    %v1267 = vmul.f32 %v174, %v1038
    %v1268 = vmul.f32 %v175, %v1043
    %v1269 = vmul.f32 %v176, %v1048
    %v1270 = vmul.f32 %v177, %v1053
    %v1271 = vmul.f32 %v178, %v1058
    %v1272 = vmul.f32 %v179, %v1063
    %v1273 = vmul.f32 %v180, %v1068
    %v1274 = vmul.f32 %v181, %v1073
    %v1275 = vmul.f32 %v182, %v1078
    %v1276 = vmul.f32 %v183, %v1083
    %v1277 = vmul.f32 %v184, %v1088
    %v1278 = vmul.f32 %v185, %v1093
    %v1279 = vmul.f32 %v186, %v1098
    %v1280 = vmul.f32 %v187, %v1103
    %v1281 = vmul.f32 %v188, %v1108
    %v1282 = vmul.f32 %v189, %v1113
    %v1283 = vmul.f32 %v190, %v1118
    %v1284 = vmul.f32 %v191, %v1123
    %v1285 = vmul.f32 %v192, %v1128
    %v1286 = vmul.f32 %v193, %v1133
    %v1287 = vmul.f32 %v194, %v1138
    %v1288 = vmul.f32 %v195, %v1143
    %v1289 = vmul.f32 %v196, %v1148
    %v1290 = vmul.f32 %v197, %v1153
    %v1291 = vmul.f32 %v198, %v1158
    %v1292 = vmul.f32 %v199, %v1163
    %v1293 = vmul.f32 %v200, %v1168
    %v1294 = vmul.f32 %v201, %v1173
    %v1295 = vmul.f32 %v202, %v1178
    %v1296 = vmul.f32 %v203, %v1183
    %v1297 = vmul.f32 %v204, %v1188
    %v1298 = vmul.f32 %v205, %v1193
    %v1299 = vmul.f32 %v206, %v1198
    %v1300 = vmul.f32 %v207, %v1203
    %v1301 = vmul.f32 %v208, %v1208
    %v1302 = vmul.f32 %v209, %v1213
    %v1303 = vmul.f32 %v210, %v1218
    %v1304 = vmul.f32 %v211, %v1223
    %v1305 = vmul.f32 %v212, %v1228
    %v1306 = vmul.f32 %v213, %v1233
    %v1307 = vmul.f32 %v214, %v1238
    %v1308 = vmul.f32 %v215, %v1243
    %v1309 = vpack.c.bf16 %v1246, %v1245
    %v1310 = vpack.c.bf16 %v1248, %v1247
    %v1311 = vpack.c.bf16 %v1250, %v1249
    %v1312 = vpack.c.bf16 %v1252, %v1251
    %v1313 = vpack.c.bf16 %v1254, %v1253
    %v1314 = vpack.c.bf16 %v1256, %v1255
    %v1315 = vpack.c.bf16 %v1258, %v1257
    %v1316 = vpack.c.bf16 %v1260, %v1259
    %v1317 = vpack.c.bf16 %v1262, %v1261
    %v1318 = vpack.c.bf16 %v1264, %v1263
    %v1319 = vpack.c.bf16 %v1266, %v1265
    %v1320 = vpack.c.bf16 %v1268, %v1267
    %v1321 = vpack.c.bf16 %v1270, %v1269
    %v1322 = vpack.c.bf16 %v1272, %v1271
    %v1323 = vpack.c.bf16 %v1274, %v1273
    %v1324 = vpack.c.bf16 %v1276, %v1275
    %v1325 = vpack.c.bf16 %v1278, %v1277
    %v1326 = vpack.c.bf16 %v1280, %v1279
    %v1327 = vpack.c.bf16 %v1282, %v1281
    %v1328 = vpack.c.bf16 %v1284, %v1283
    %v1329 = vpack.c.bf16 %v1286, %v1285
    %v1330 = vpack.c.bf16 %v1288, %v1287
    %v1331 = vpack.c.bf16 %v1290, %v1289
    %v1332 = vpack.c.bf16 %v1292, %v1291
    %v1333 = vpack.c.bf16 %v1294, %v1293
    %v1334 = vpack.c.bf16 %v1296, %v1295
    %v1335 = vpack.c.bf16 %v1298, %v1297
    %v1336 = vpack.c.bf16 %v1300, %v1299
    %v1337 = vpack.c.bf16 %v1302, %v1301
    %v1338 = vpack.c.bf16 %v1304, %v1303
    %v1339 = vpack.c.bf16 %v1306, %v1305
    %v1340 = vpack.c.bf16 %v1308, %v1307
    %1341 = vst [vmem:[#allocation2 + $0x8] sm:$0xff] %v1309
    %1342 = vst [vmem:[#allocation2 + $0x50] sm:$0xff] %v1310
    %1343 = vst [vmem:[#allocation2 + $0x98] sm:$0xff] %v1311
    %1344 = vst [vmem:[#allocation2 + $0xe0] sm:$0xff] %v1312
    %1345 = vst [vmem:[#allocation2 + $0x128] sm:$0xff] %v1313
    %1346 = vst [vmem:[#allocation2 + $0x170] sm:$0xff] %v1314
    %1347 = vst [vmem:[#allocation2 + $0x1b8] sm:$0xff] %v1315
    %1348 = vst [vmem:[#allocation2 + $0x200] sm:$0xff] %v1316
    %1349 = vst [vmem:[#allocation2 + $0x248] sm:$0xff] %v1317
    %1350 = vst [vmem:[#allocation2 + $0x290] sm:$0xff] %v1318
    %1351 = vst [vmem:[#allocation2 + $0x2d8] sm:$0xff] %v1319
    %1352 = vst [vmem:[#allocation2 + $0x320] sm:$0xff] %v1320
    %1353 = vst [vmem:[#allocation2 + $0x368] sm:$0xff] %v1321
    %1354 = vst [vmem:[#allocation2 + $0x3b0] sm:$0xff] %v1322
    %1355 = vst [vmem:[#allocation2 + $0x3f8] sm:$0xff] %v1323
    %1356 = vst [vmem:[#allocation2 + $0x440] sm:$0xff] %v1324
    %1357 = vst [vmem:[#allocation2 + $0x488] sm:$0xff] %v1325
    %1358 = vst [vmem:[#allocation2 + $0x4d0] sm:$0xff] %v1326
    %1359 = vst [vmem:[#allocation2 + $0x518] sm:$0xff] %v1327
    %1360 = vst [vmem:[#allocation2 + $0x560] sm:$0xff] %v1328
    %1361 = vst [vmem:[#allocation2 + $0x5a8] sm:$0xff] %v1329
    %1362 = vst [vmem:[#allocation2 + $0x5f0] sm:$0xff] %v1330
    %1363 = vst [vmem:[#allocation2 + $0x638] sm:$0xff] %v1331
    %1364 = vst [vmem:[#allocation2 + $0x680] sm:$0xff] %v1332
    %1365 = vst [vmem:[#allocation2 + $0x6c8] sm:$0xff] %v1333
    %1366 = vst [vmem:[#allocation2 + $0x710] sm:$0xff] %v1334
    %1367 = vst [vmem:[#allocation2 + $0x758] sm:$0xff] %v1335
    %1368 = vst [vmem:[#allocation2 + $0x7a0] sm:$0xff] %v1336
    %1369 = vst [vmem:[#allocation2 + $0x7e8] sm:$0xff] %v1337
    %1370 = vst [vmem:[#allocation2 + $0x830] sm:$0xff] %v1338
    %1371 = vst [vmem:[#allocation2 + $0x878] sm:$0xff] %v1339
    %1372 = vst [vmem:[#allocation2 + $0x8c0] sm:$0xff] %v1340
    %v1373 = vrot.slane %v154, 1
    %v1374 = vrot.slane %v155, 1
    %v1375 = vrot.slane %v156, 1
    %v1376 = vrot.slane %v157, 1
    %v1377 = vrot.slane %v158, 1
    %v1378 = vrot.slane %v159, 1
    %v1379 = vrot.slane %v160, 1
    %v1380 = vrot.slane %v161, 1
    %v1381 = vrot.slane %v162, 1
    %v1382 = vrot.slane %v163, 1
    %v1383 = vrot.slane %v164, 1
    %v1384 = vrot.slane %v165, 1
    %v1385 = vrot.slane %v166, 1
    %v1386 = vrot.slane %v167, 1
    %v1387 = vrot.slane %v168, 1
    %v1388 = vrot.slane %v169, 1
    %v1389 = vrot.slane %v170, 1
    %v1390 = vrot.slane %v171, 1
    %v1391 = vrot.slane %v172, 1
    %v1392 = vrot.slane %v173, 1
    %v1393 = vrot.slane %v174, 1
    %v1394 = vrot.slane %v175, 1
    %v1395 = vrot.slane %v176, 1
    %v1396 = vrot.slane %v177, 1
    %v1397 = vrot.slane %v178, 1
    %v1398 = vrot.slane %v179, 1
    %v1399 = vrot.slane %v180, 1
    %v1400 = vrot.slane %v181, 1
    %v1401 = vrot.slane %v182, 1
    %v1402 = vrot.slane %v183, 1
    %v1403 = vrot.slane %v184, 1
    %v1404 = vrot.slane %v185, 1
    %v1405 = vrot.slane %v186, 1
    %v1406 = vrot.slane %v187, 1
    %v1407 = vrot.slane %v188, 1
    %v1408 = vrot.slane %v189, 1
    %v1409 = vrot.slane %v190, 1
    %v1410 = vrot.slane %v191, 1
    %v1411 = vrot.slane %v192, 1
    %v1412 = vrot.slane %v193, 1
    %v1413 = vrot.slane %v194, 1
    %v1414 = vrot.slane %v195, 1
    %v1415 = vrot.slane %v196, 1
    %v1416 = vrot.slane %v197, 1
    %v1417 = vrot.slane %v198, 1
    %v1418 = vrot.slane %v199, 1
    %v1419 = vrot.slane %v200, 1
    %v1420 = vrot.slane %v201, 1
    %v1421 = vrot.slane %v202, 1
    %v1422 = vrot.slane %v203, 1
    %v1423 = vrot.slane %v204, 1
    %v1424 = vrot.slane %v205, 1
    %v1425 = vrot.slane %v206, 1
    %v1426 = vrot.slane %v207, 1
    %v1427 = vrot.slane %v208, 1
    %v1428 = vrot.slane %v209, 1
    %v1429 = vrot.slane %v210, 1
    %v1430 = vrot.slane %v211, 1
    %v1431 = vrot.slane %v212, 1
    %v1432 = vrot.slane %v213, 1
    %v1433 = vrot.slane %v214, 1
    %v1434 = vrot.slane %v215, 1
    %v1435 = vrot.slane %v216, 1
    %v1436 = vrot.slane %v217, 1
    %vm1437 = vcmp.lt.s32.totalorder %v283, 7
    %v1438 = vsel %vm1437, %v1435, %v1436
    %v1439 = vsel %vm1437, %v1434, %v1435
    %v1440 = vsel %vm1437, %v1433, %v1434
    %v1441 = vsel %vm1437, %v1432, %v1433
    %v1442 = vsel %vm1437, %v1431, %v1432
    %v1443 = vsel %vm1437, %v1430, %v1431
    %v1444 = vsel %vm1437, %v1429, %v1430
    %v1445 = vsel %vm1437, %v1428, %v1429
    %v1446 = vsel %vm1437, %v1427, %v1428
    %v1447 = vsel %vm1437, %v1426, %v1427
    %v1448 = vsel %vm1437, %v1425, %v1426
    %v1449 = vsel %vm1437, %v1424, %v1425
    %v1450 = vsel %vm1437, %v1423, %v1424
    %v1451 = vsel %vm1437, %v1422, %v1423
    %v1452 = vsel %vm1437, %v1421, %v1422
    %v1453 = vsel %vm1437, %v1420, %v1421
    %v1454 = vsel %vm1437, %v1419, %v1420
    %v1455 = vsel %vm1437, %v1418, %v1419
    %v1456 = vsel %vm1437, %v1417, %v1418
    %v1457 = vsel %vm1437, %v1416, %v1417
    %v1458 = vsel %vm1437, %v1415, %v1416
    %v1459 = vsel %vm1437, %v1414, %v1415
    %v1460 = vsel %vm1437, %v1413, %v1414
    %v1461 = vsel %vm1437, %v1412, %v1413
    %v1462 = vsel %vm1437, %v1411, %v1412
    %v1463 = vsel %vm1437, %v1410, %v1411
    %v1464 = vsel %vm1437, %v1409, %v1410
    %v1465 = vsel %vm1437, %v1408, %v1409
    %v1466 = vsel %vm1437, %v1407, %v1408
    %v1467 = vsel %vm1437, %v1406, %v1407
    %v1468 = vsel %vm1437, %v1405, %v1406
    %v1469 = vsel %vm1437, %v1404, %v1405
    %v1470 = vsel %vm1437, %v1403, %v1404
    %v1471 = vsel %vm1437, %v1402, %v1403
    %v1472 = vsel %vm1437, %v1401, %v1402
    %v1473 = vsel %vm1437, %v1400, %v1401
    %v1474 = vsel %vm1437, %v1399, %v1400
    %v1475 = vsel %vm1437, %v1398, %v1399
    %v1476 = vsel %vm1437, %v1397, %v1398
    %v1477 = vsel %vm1437, %v1396, %v1397
    %v1478 = vsel %vm1437, %v1395, %v1396
    %v1479 = vsel %vm1437, %v1394, %v1395
    %v1480 = vsel %vm1437, %v1393, %v1394
    %v1481 = vsel %vm1437, %v1392, %v1393
    %v1482 = vsel %vm1437, %v1391, %v1392
    %v1483 = vsel %vm1437, %v1390, %v1391
    %v1484 = vsel %vm1437, %v1389, %v1390
    %v1485 = vsel %vm1437, %v1388, %v1389
    %v1486 = vsel %vm1437, %v1387, %v1388
    %v1487 = vsel %vm1437, %v1386, %v1387
    %v1488 = vsel %vm1437, %v1385, %v1386
    %v1489 = vsel %vm1437, %v1384, %v1385
    %v1490 = vsel %vm1437, %v1383, %v1384
    %v1491 = vsel %vm1437, %v1382, %v1383
    %v1492 = vsel %vm1437, %v1381, %v1382
    %v1493 = vsel %vm1437, %v1380, %v1381
    %v1494 = vsel %vm1437, %v1379, %v1380
    %v1495 = vsel %vm1437, %v1378, %v1379
    %v1496 = vsel %vm1437, %v1377, %v1378
    %v1497 = vsel %vm1437, %v1376, %v1377
    %v1498 = vsel %vm1437, %v1375, %v1376
    %v1499 = vsel %vm1437, %v1374, %v1375
    %v1500 = vsel %vm1437, %v1373, %v1374
    %v1501 = vsel %vm1437, %v1436, %v1373
    %v1502 = vld [vmem:[%s2] sm:$0xff]
    %v1503 = vld [vmem:[%s2 + $0x8] sm:$0xff]
    %v1504 = vld [vmem:[%s2 + $0x10] sm:$0xff]
    %v1505 = vld [vmem:[%s2 + $0x18] sm:$0xff]
    %v1506 = vld [vmem:[%s2 + $0x20] sm:$0xff]
    %v1507 = vld [vmem:[%s2 + $0x28] sm:$0xff]
    %v1508 = vld [vmem:[%s2 + $0x30] sm:$0xff]
    %v1509 = vld [vmem:[%s2 + $0x38] sm:$0xff]
    %v1510 = vld [vmem:[%s2 + $0x40] sm:$0xff]
    %v1511 = vld [vmem:[%s2 + $0x48] sm:$0xff]
    %v1512 = vld [vmem:[%s2 + $0x50] sm:$0xff]
    %v1513 = vld [vmem:[%s2 + $0x58] sm:$0xff]
    %v1514 = vld [vmem:[%s2 + $0x60] sm:$0xff]
    %v1515 = vld [vmem:[%s2 + $0x68] sm:$0xff]
    %v1516 = vld [vmem:[%s2 + $0x70] sm:$0xff]
    %v1517 = vld [vmem:[%s2 + $0x78] sm:$0xff]
    %v1518 = vld [vmem:[%s2 + $0x80] sm:$0xff]
    %v1519 = vld [vmem:[%s2 + $0x88] sm:$0xff]
    %v1520 = vld [vmem:[%s2 + $0x90] sm:$0xff]
    %v1521 = vld [vmem:[%s2 + $0x98] sm:$0xff]
    %v1522 = vld [vmem:[%s2 + $0xa0] sm:$0xff]
    %v1523 = vld [vmem:[%s2 + $0xa8] sm:$0xff]
    %v1524 = vld [vmem:[%s2 + $0xb0] sm:$0xff]
    %v1525 = vld [vmem:[%s2 + $0xb8] sm:$0xff]
    %v1526 = vld [vmem:[%s2 + $0xc0] sm:$0xff]
    %v1527 = vld [vmem:[%s2 + $0xc8] sm:$0xff]
    %v1528 = vld [vmem:[%s2 + $0xd0] sm:$0xff]
    %v1529 = vld [vmem:[%s2 + $0xd8] sm:$0xff]
    %v1530 = vld [vmem:[%s2 + $0xe0] sm:$0xff]
    %v1531 = vld [vmem:[%s2 + $0xe8] sm:$0xff]
    %v1532 = vld [vmem:[%s2 + $0xf0] sm:$0xff]
    %v1533 = vld [vmem:[%s2 + $0xf8] sm:$0xff]
    %v1534 = vld [vmem:[%s2 + $0x100] sm:$0xff]
    %v1535 = vld [vmem:[%s2 + $0x108] sm:$0xff]
    %v1536 = vld [vmem:[%s2 + $0x110] sm:$0xff]
    %v1537 = vld [vmem:[%s2 + $0x118] sm:$0xff]
    %v1538 = vld [vmem:[%s2 + $0x120] sm:$0xff]
    %v1539 = vld [vmem:[%s2 + $0x128] sm:$0xff]
    %v1540 = vld [vmem:[%s2 + $0x130] sm:$0xff]
    %v1541 = vld [vmem:[%s2 + $0x138] sm:$0xff]
    %v1542 = vld [vmem:[%s2 + $0x140] sm:$0xff]
    %v1543 = vld [vmem:[%s2 + $0x148] sm:$0xff]
    %v1544 = vld [vmem:[%s2 + $0x150] sm:$0xff]
    %v1545 = vld [vmem:[%s2 + $0x158] sm:$0xff]
    %v1546 = vld [vmem:[%s2 + $0x160] sm:$0xff]
    %v1547 = vld [vmem:[%s2 + $0x168] sm:$0xff]
    %v1548 = vld [vmem:[%s2 + $0x170] sm:$0xff]
    %v1549 = vld [vmem:[%s2 + $0x178] sm:$0xff]
    %v1550 = vld [vmem:[%s2 + $0x180] sm:$0xff]
    %v1551 = vld [vmem:[%s2 + $0x188] sm:$0xff]
    %v1552 = vld [vmem:[%s2 + $0x190] sm:$0xff]
    %v1553 = vld [vmem:[%s2 + $0x198] sm:$0xff]
    %v1554 = vld [vmem:[%s2 + $0x1a0] sm:$0xff]
    %v1555 = vld [vmem:[%s2 + $0x1a8] sm:$0xff]
    %v1556 = vld [vmem:[%s2 + $0x1b0] sm:$0xff]
    %v1557 = vld [vmem:[%s2 + $0x1b8] sm:$0xff]
    %v1558 = vld [vmem:[%s2 + $0x1c0] sm:$0xff]
    %v1559 = vld [vmem:[%s2 + $0x1c8] sm:$0xff]
    %v1560 = vld [vmem:[%s2 + $0x1d0] sm:$0xff]
    %v1561 = vld [vmem:[%s2 + $0x1d8] sm:$0xff]
    %v1562 = vld [vmem:[%s2 + $0x1e0] sm:$0xff]
    %v1563 = vld [vmem:[%s2 + $0x1e8] sm:$0xff]
    %v1564 = vld [vmem:[%s2 + $0x1f0] sm:$0xff]
    %v1565 = vld [vmem:[%s2 + $0x1f8] sm:$0xff]
    %1567 = vset.pattern.permute.xlu0 2
    %1568 = vperm.xlu0 %1567, %v1502
    %v1569 = vpop.permute.xlu0 %1568
    %1572 = vset.pattern.permute.xlu0 2
    %1573 = vperm.xlu0 %1572, %v1503
    %v1574 = vpop.permute.xlu0 %1573
    %1577 = vset.pattern.permute.xlu0 2
    %1578 = vperm.xlu0 %1577, %v1504
    %v1579 = vpop.permute.xlu0 %1578
    %1582 = vset.pattern.permute.xlu0 2
    %1583 = vperm.xlu0 %1582, %v1505
    %v1584 = vpop.permute.xlu0 %1583
    %1587 = vset.pattern.permute.xlu0 2
    %1588 = vperm.xlu0 %1587, %v1506
    %v1589 = vpop.permute.xlu0 %1588
    %1592 = vset.pattern.permute.xlu0 2
    %1593 = vperm.xlu0 %1592, %v1507
    %v1594 = vpop.permute.xlu0 %1593
    %1597 = vset.pattern.permute.xlu0 2
    %1598 = vperm.xlu0 %1597, %v1508
    %v1599 = vpop.permute.xlu0 %1598
    %1602 = vset.pattern.permute.xlu0 2
    %1603 = vperm.xlu0 %1602, %v1509
    %v1604 = vpop.permute.xlu0 %1603
    %1607 = vset.pattern.permute.xlu0 2
    %1608 = vperm.xlu0 %1607, %v1510
    %v1609 = vpop.permute.xlu0 %1608
    %1612 = vset.pattern.permute.xlu0 2
    %1613 = vperm.xlu0 %1612, %v1511
    %v1614 = vpop.permute.xlu0 %1613
    %1617 = vset.pattern.permute.xlu0 2
    %1618 = vperm.xlu0 %1617, %v1512
    %v1619 = vpop.permute.xlu0 %1618
    %1622 = vset.pattern.permute.xlu0 2
    %1623 = vperm.xlu0 %1622, %v1513
    %v1624 = vpop.permute.xlu0 %1623
    %1627 = vset.pattern.permute.xlu0 2
    %1628 = vperm.xlu0 %1627, %v1514
    %v1629 = vpop.permute.xlu0 %1628
    %1632 = vset.pattern.permute.xlu0 2
    %1633 = vperm.xlu0 %1632, %v1515
    %v1634 = vpop.permute.xlu0 %1633
    %1637 = vset.pattern.permute.xlu0 2
    %1638 = vperm.xlu0 %1637, %v1516
    %v1639 = vpop.permute.xlu0 %1638
    %1642 = vset.pattern.permute.xlu0 2
    %1643 = vperm.xlu0 %1642, %v1517
    %v1644 = vpop.permute.xlu0 %1643
    %1647 = vset.pattern.permute.xlu0 2
    %1648 = vperm.xlu0 %1647, %v1518
    %v1649 = vpop.permute.xlu0 %1648
    %1652 = vset.pattern.permute.xlu0 2
    %1653 = vperm.xlu0 %1652, %v1519
    %v1654 = vpop.permute.xlu0 %1653
    %1657 = vset.pattern.permute.xlu0 2
    %1658 = vperm.xlu0 %1657, %v1520
    %v1659 = vpop.permute.xlu0 %1658
    %1662 = vset.pattern.permute.xlu0 2
    %1663 = vperm.xlu0 %1662, %v1521
    %v1664 = vpop.permute.xlu0 %1663
    %1667 = vset.pattern.permute.xlu0 2
    %1668 = vperm.xlu0 %1667, %v1522
    %v1669 = vpop.permute.xlu0 %1668
    %1672 = vset.pattern.permute.xlu0 2
    %1673 = vperm.xlu0 %1672, %v1523
    %v1674 = vpop.permute.xlu0 %1673
    %1677 = vset.pattern.permute.xlu0 2
    %1678 = vperm.xlu0 %1677, %v1524
    %v1679 = vpop.permute.xlu0 %1678
    %1682 = vset.pattern.permute.xlu0 2
    %1683 = vperm.xlu0 %1682, %v1525
    %v1684 = vpop.permute.xlu0 %1683
    %1687 = vset.pattern.permute.xlu0 2
    %1688 = vperm.xlu0 %1687, %v1526
    %v1689 = vpop.permute.xlu0 %1688
    %1692 = vset.pattern.permute.xlu0 2
    %1693 = vperm.xlu0 %1692, %v1527
    %v1694 = vpop.permute.xlu0 %1693
    %1697 = vset.pattern.permute.xlu0 2
    %1698 = vperm.xlu0 %1697, %v1528
    %v1699 = vpop.permute.xlu0 %1698
    %1702 = vset.pattern.permute.xlu0 2
    %1703 = vperm.xlu0 %1702, %v1529
    %v1704 = vpop.permute.xlu0 %1703
    %1707 = vset.pattern.permute.xlu0 2
    %1708 = vperm.xlu0 %1707, %v1530
    %v1709 = vpop.permute.xlu0 %1708
    %1712 = vset.pattern.permute.xlu0 2
    %1713 = vperm.xlu0 %1712, %v1531
    %v1714 = vpop.permute.xlu0 %1713
    %1717 = vset.pattern.permute.xlu0 2
    %1718 = vperm.xlu0 %1717, %v1532
    %v1719 = vpop.permute.xlu0 %1718
    %1722 = vset.pattern.permute.xlu0 2
    %1723 = vperm.xlu0 %1722, %v1533
    %v1724 = vpop.permute.xlu0 %1723
    %1727 = vset.pattern.permute.xlu0 2
    %1728 = vperm.xlu0 %1727, %v1534
    %v1729 = vpop.permute.xlu0 %1728
    %1732 = vset.pattern.permute.xlu0 2
    %1733 = vperm.xlu0 %1732, %v1535
    %v1734 = vpop.permute.xlu0 %1733
    %1737 = vset.pattern.permute.xlu0 2
    %1738 = vperm.xlu0 %1737, %v1536
    %v1739 = vpop.permute.xlu0 %1738
    %1742 = vset.pattern.permute.xlu0 2
    %1743 = vperm.xlu0 %1742, %v1537
    %v1744 = vpop.permute.xlu0 %1743
    %1747 = vset.pattern.permute.xlu0 2
    %1748 = vperm.xlu0 %1747, %v1538
    %v1749 = vpop.permute.xlu0 %1748
    %1752 = vset.pattern.permute.xlu0 2
    %1753 = vperm.xlu0 %1752, %v1539
    %v1754 = vpop.permute.xlu0 %1753
    %1757 = vset.pattern.permute.xlu0 2
    %1758 = vperm.xlu0 %1757, %v1540
    %v1759 = vpop.permute.xlu0 %1758
    %1762 = vset.pattern.permute.xlu0 2
    %1763 = vperm.xlu0 %1762, %v1541
    %v1764 = vpop.permute.xlu0 %1763
    %1767 = vset.pattern.permute.xlu0 2
    %1768 = vperm.xlu0 %1767, %v1542
    %v1769 = vpop.permute.xlu0 %1768
    %1772 = vset.pattern.permute.xlu0 2
    %1773 = vperm.xlu0 %1772, %v1543
    %v1774 = vpop.permute.xlu0 %1773
    %1777 = vset.pattern.permute.xlu0 2
    %1778 = vperm.xlu0 %1777, %v1544
    %v1779 = vpop.permute.xlu0 %1778
    %1782 = vset.pattern.permute.xlu0 2
    %1783 = vperm.xlu0 %1782, %v1545
    %v1784 = vpop.permute.xlu0 %1783
    %1787 = vset.pattern.permute.xlu0 2
    %1788 = vperm.xlu0 %1787, %v1546
    %v1789 = vpop.permute.xlu0 %1788
    %1792 = vset.pattern.permute.xlu0 2
    %1793 = vperm.xlu0 %1792, %v1547
    %v1794 = vpop.permute.xlu0 %1793
    %1797 = vset.pattern.permute.xlu0 2
    %1798 = vperm.xlu0 %1797, %v1548
    %v1799 = vpop.permute.xlu0 %1798
    %1802 = vset.pattern.permute.xlu0 2
    %1803 = vperm.xlu0 %1802, %v1549
    %v1804 = vpop.permute.xlu0 %1803
    %1807 = vset.pattern.permute.xlu0 2
    %1808 = vperm.xlu0 %1807, %v1550
    %v1809 = vpop.permute.xlu0 %1808
    %1812 = vset.pattern.permute.xlu0 2
    %1813 = vperm.xlu0 %1812, %v1551
    %v1814 = vpop.permute.xlu0 %1813
    %1817 = vset.pattern.permute.xlu0 2
    %1818 = vperm.xlu0 %1817, %v1552
    %v1819 = vpop.permute.xlu0 %1818
    %1822 = vset.pattern.permute.xlu0 2
    %1823 = vperm.xlu0 %1822, %v1553
    %v1824 = vpop.permute.xlu0 %1823
    %1827 = vset.pattern.permute.xlu0 2
    %1828 = vperm.xlu0 %1827, %v1554
    %v1829 = vpop.permute.xlu0 %1828
    %1832 = vset.pattern.permute.xlu0 2
    %1833 = vperm.xlu0 %1832, %v1555
    %v1834 = vpop.permute.xlu0 %1833
    %1837 = vset.pattern.permute.xlu0 2
    %1838 = vperm.xlu0 %1837, %v1556
    %v1839 = vpop.permute.xlu0 %1838
    %1842 = vset.pattern.permute.xlu0 2
    %1843 = vperm.xlu0 %1842, %v1557
    %v1844 = vpop.permute.xlu0 %1843
    %1847 = vset.pattern.permute.xlu0 2
    %1848 = vperm.xlu0 %1847, %v1558
    %v1849 = vpop.permute.xlu0 %1848
    %1852 = vset.pattern.permute.xlu0 2
    %1853 = vperm.xlu0 %1852, %v1559
    %v1854 = vpop.permute.xlu0 %1853
    %1857 = vset.pattern.permute.xlu0 2
    %1858 = vperm.xlu0 %1857, %v1560
    %v1859 = vpop.permute.xlu0 %1858
    %1862 = vset.pattern.permute.xlu0 2
    %1863 = vperm.xlu0 %1862, %v1561
    %v1864 = vpop.permute.xlu0 %1863
    %1867 = vset.pattern.permute.xlu0 2
    %1868 = vperm.xlu0 %1867, %v1562
    %v1869 = vpop.permute.xlu0 %1868
    %1872 = vset.pattern.permute.xlu0 2
    %1873 = vperm.xlu0 %1872, %v1563
    %v1874 = vpop.permute.xlu0 %1873
    %1877 = vset.pattern.permute.xlu0 2
    %1878 = vperm.xlu0 %1877, %v1564
    %v1879 = vpop.permute.xlu0 %1878
    %1882 = vset.pattern.permute.xlu0 2
    %1883 = vperm.xlu0 %1882, %v1565
    %v1884 = vpop.permute.xlu0 %1883
    %v1886 = vmul.f32 %v1438, %v1569
    %v1887 = vmul.f32 %v1501, %v1574
    %v1888 = vmul.f32 %v1500, %v1579
    %v1889 = vmul.f32 %v1499, %v1584
    %v1890 = vmul.f32 %v1498, %v1589
    %v1891 = vmul.f32 %v1497, %v1594
    %v1892 = vmul.f32 %v1496, %v1599
    %v1893 = vmul.f32 %v1495, %v1604
    %v1894 = vmul.f32 %v1494, %v1609
    %v1895 = vmul.f32 %v1493, %v1614
    %v1896 = vmul.f32 %v1492, %v1619
    %v1897 = vmul.f32 %v1491, %v1624
    %v1898 = vmul.f32 %v1490, %v1629
    %v1899 = vmul.f32 %v1489, %v1634
    %v1900 = vmul.f32 %v1488, %v1639
    %v1901 = vmul.f32 %v1487, %v1644
    %v1902 = vmul.f32 %v1486, %v1649
    %v1903 = vmul.f32 %v1485, %v1654
    %v1904 = vmul.f32 %v1484, %v1659
    %v1905 = vmul.f32 %v1483, %v1664
    %v1906 = vmul.f32 %v1482, %v1669
    %v1907 = vmul.f32 %v1481, %v1674
    %v1908 = vmul.f32 %v1480, %v1679
    %v1909 = vmul.f32 %v1479, %v1684
    %v1910 = vmul.f32 %v1478, %v1689
    %v1911 = vmul.f32 %v1477, %v1694
    %v1912 = vmul.f32 %v1476, %v1699
    %v1913 = vmul.f32 %v1475, %v1704
    %v1914 = vmul.f32 %v1474, %v1709
    %v1915 = vmul.f32 %v1473, %v1714
    %v1916 = vmul.f32 %v1472, %v1719
    %v1917 = vmul.f32 %v1471, %v1724
    %v1918 = vmul.f32 %v1470, %v1729
    %v1919 = vmul.f32 %v1469, %v1734
    %v1920 = vmul.f32 %v1468, %v1739
    %v1921 = vmul.f32 %v1467, %v1744
    %v1922 = vmul.f32 %v1466, %v1749
    %v1923 = vmul.f32 %v1465, %v1754
    %v1924 = vmul.f32 %v1464, %v1759
    %v1925 = vmul.f32 %v1463, %v1764
    %v1926 = vmul.f32 %v1462, %v1769
    %v1927 = vmul.f32 %v1461, %v1774
    %v1928 = vmul.f32 %v1460, %v1779
    %v1929 = vmul.f32 %v1459, %v1784
    %v1930 = vmul.f32 %v1458, %v1789
    %v1931 = vmul.f32 %v1457, %v1794
    %v1932 = vmul.f32 %v1456, %v1799
    %v1933 = vmul.f32 %v1455, %v1804
    %v1934 = vmul.f32 %v1454, %v1809
    %v1935 = vmul.f32 %v1453, %v1814
    %v1936 = vmul.f32 %v1452, %v1819
    %v1937 = vmul.f32 %v1451, %v1824
    %v1938 = vmul.f32 %v1450, %v1829
    %v1939 = vmul.f32 %v1449, %v1834
    %v1940 = vmul.f32 %v1448, %v1839
    %v1941 = vmul.f32 %v1447, %v1844
    %v1942 = vmul.f32 %v1446, %v1849
    %v1943 = vmul.f32 %v1445, %v1854
    %v1944 = vmul.f32 %v1444, %v1859
    %v1945 = vmul.f32 %v1443, %v1864
    %v1946 = vmul.f32 %v1442, %v1869
    %v1947 = vmul.f32 %v1441, %v1874
    %v1948 = vmul.f32 %v1440, %v1879
    %v1949 = vmul.f32 %v1439, %v1884
    %v1950 = vpack.c.bf16 %v1887, %v1886
    %v1951 = vpack.c.bf16 %v1889, %v1888
    %v1952 = vpack.c.bf16 %v1891, %v1890
    %v1953 = vpack.c.bf16 %v1893, %v1892
    %v1954 = vpack.c.bf16 %v1895, %v1894
    %v1955 = vpack.c.bf16 %v1897, %v1896
    %v1956 = vpack.c.bf16 %v1899, %v1898
    %v1957 = vpack.c.bf16 %v1901, %v1900
    %v1958 = vpack.c.bf16 %v1903, %v1902
    %v1959 = vpack.c.bf16 %v1905, %v1904
    %v1960 = vpack.c.bf16 %v1907, %v1906
    %v1961 = vpack.c.bf16 %v1909, %v1908
    %v1962 = vpack.c.bf16 %v1911, %v1910
    %v1963 = vpack.c.bf16 %v1913, %v1912
    %v1964 = vpack.c.bf16 %v1915, %v1914
    %v1965 = vpack.c.bf16 %v1917, %v1916
    %v1966 = vpack.c.bf16 %v1919, %v1918
    %v1967 = vpack.c.bf16 %v1921, %v1920
    %v1968 = vpack.c.bf16 %v1923, %v1922
    %v1969 = vpack.c.bf16 %v1925, %v1924
    %v1970 = vpack.c.bf16 %v1927, %v1926
    %v1971 = vpack.c.bf16 %v1929, %v1928
    %v1972 = vpack.c.bf16 %v1931, %v1930
    %v1973 = vpack.c.bf16 %v1933, %v1932
    %v1974 = vpack.c.bf16 %v1935, %v1934
    %v1975 = vpack.c.bf16 %v1937, %v1936
    %v1976 = vpack.c.bf16 %v1939, %v1938
    %v1977 = vpack.c.bf16 %v1941, %v1940
    %v1978 = vpack.c.bf16 %v1943, %v1942
    %v1979 = vpack.c.bf16 %v1945, %v1944
    %v1980 = vpack.c.bf16 %v1947, %v1946
    %v1981 = vpack.c.bf16 %v1949, %v1948
    %1982 = vst [vmem:[#allocation2 + $0x10] sm:$0xff] %v1950
    %1983 = vst [vmem:[#allocation2 + $0x58] sm:$0xff] %v1951
    %1984 = vst [vmem:[#allocation2 + $0xa0] sm:$0xff] %v1952
    %1985 = vst [vmem:[#allocation2 + $0xe8] sm:$0xff] %v1953
    %1986 = vst [vmem:[#allocation2 + $0x130] sm:$0xff] %v1954
    %1987 = vst [vmem:[#allocation2 + $0x178] sm:$0xff] %v1955
    %1988 = vst [vmem:[#allocation2 + $0x1c0] sm:$0xff] %v1956
    %1989 = vst [vmem:[#allocation2 + $0x208] sm:$0xff] %v1957
    %1990 = vst [vmem:[#allocation2 + $0x250] sm:$0xff] %v1958
    %1991 = vst [vmem:[#allocation2 + $0x298] sm:$0xff] %v1959
    %1992 = vst [vmem:[#allocation2 + $0x2e0] sm:$0xff] %v1960
    %1993 = vst [vmem:[#allocation2 + $0x328] sm:$0xff] %v1961
    %1994 = vst [vmem:[#allocation2 + $0x370] sm:$0xff] %v1962
    %1995 = vst [vmem:[#allocation2 + $0x3b8] sm:$0xff] %v1963
    %1996 = vst [vmem:[#allocation2 + $0x400] sm:$0xff] %v1964
    %1997 = vst [vmem:[#allocation2 + $0x448] sm:$0xff] %v1965
    %1998 = vst [vmem:[#allocation2 + $0x490] sm:$0xff] %v1966
    %1999 = vst [vmem:[#allocation2 + $0x4d8] sm:$0xff] %v1967
    %2000 = vst [vmem:[#allocation2 + $0x520] sm:$0xff] %v1968
    %2001 = vst [vmem:[#allocation2 + $0x568] sm:$0xff] %v1969
    %2002 = vst [vmem:[#allocation2 + $0x5b0] sm:$0xff] %v1970
    %2003 = vst [vmem:[#allocation2 + $0x5f8] sm:$0xff] %v1971
    %2004 = vst [vmem:[#allocation2 + $0x640] sm:$0xff] %v1972
    %2005 = vst [vmem:[#allocation2 + $0x688] sm:$0xff] %v1973
    %2006 = vst [vmem:[#allocation2 + $0x6d0] sm:$0xff] %v1974
    %2007 = vst [vmem:[#allocation2 + $0x718] sm:$0xff] %v1975
    %2008 = vst [vmem:[#allocation2 + $0x760] sm:$0xff] %v1976
    %2009 = vst [vmem:[#allocation2 + $0x7a8] sm:$0xff] %v1977
    %2010 = vst [vmem:[#allocation2 + $0x7f0] sm:$0xff] %v1978
    %2011 = vst [vmem:[#allocation2 + $0x838] sm:$0xff] %v1979
    %2012 = vst [vmem:[#allocation2 + $0x880] sm:$0xff] %v1980
    %2013 = vst [vmem:[#allocation2 + $0x8c8] sm:$0xff] %v1981
    %v2014 = vld [vmem:[%s2] sm:$0xff]
    %v2015 = vld [vmem:[%s2 + $0x8] sm:$0xff]
    %v2016 = vld [vmem:[%s2 + $0x10] sm:$0xff]
    %v2017 = vld [vmem:[%s2 + $0x18] sm:$0xff]
    %v2018 = vld [vmem:[%s2 + $0x20] sm:$0xff]
    %v2019 = vld [vmem:[%s2 + $0x28] sm:$0xff]
    %v2020 = vld [vmem:[%s2 + $0x30] sm:$0xff]
    %v2021 = vld [vmem:[%s2 + $0x38] sm:$0xff]
    %v2022 = vld [vmem:[%s2 + $0x40] sm:$0xff]
    %v2023 = vld [vmem:[%s2 + $0x48] sm:$0xff]
    %v2024 = vld [vmem:[%s2 + $0x50] sm:$0xff]
    %v2025 = vld [vmem:[%s2 + $0x58] sm:$0xff]
    %v2026 = vld [vmem:[%s2 + $0x60] sm:$0xff]
    %v2027 = vld [vmem:[%s2 + $0x68] sm:$0xff]
    %v2028 = vld [vmem:[%s2 + $0x70] sm:$0xff]
    %v2029 = vld [vmem:[%s2 + $0x78] sm:$0xff]
    %v2030 = vld [vmem:[%s2 + $0x80] sm:$0xff]
    %v2031 = vld [vmem:[%s2 + $0x88] sm:$0xff]
    %v2032 = vld [vmem:[%s2 + $0x90] sm:$0xff]
    %v2033 = vld [vmem:[%s2 + $0x98] sm:$0xff]
    %v2034 = vld [vmem:[%s2 + $0xa0] sm:$0xff]
    %v2035 = vld [vmem:[%s2 + $0xa8] sm:$0xff]
    %v2036 = vld [vmem:[%s2 + $0xb0] sm:$0xff]
    %v2037 = vld [vmem:[%s2 + $0xb8] sm:$0xff]
    %v2038 = vld [vmem:[%s2 + $0xc0] sm:$0xff]
    %v2039 = vld [vmem:[%s2 + $0xc8] sm:$0xff]
    %v2040 = vld [vmem:[%s2 + $0xd0] sm:$0xff]
    %v2041 = vld [vmem:[%s2 + $0xd8] sm:$0xff]
    %v2042 = vld [vmem:[%s2 + $0xe0] sm:$0xff]
    %v2043 = vld [vmem:[%s2 + $0xe8] sm:$0xff]
    %v2044 = vld [vmem:[%s2 + $0xf0] sm:$0xff]
    %v2045 = vld [vmem:[%s2 + $0xf8] sm:$0xff]
    %v2046 = vld [vmem:[%s2 + $0x100] sm:$0xff]
    %v2047 = vld [vmem:[%s2 + $0x108] sm:$0xff]
    %v2048 = vld [vmem:[%s2 + $0x110] sm:$0xff]
    %v2049 = vld [vmem:[%s2 + $0x118] sm:$0xff]
    %v2050 = vld [vmem:[%s2 + $0x120] sm:$0xff]
    %v2051 = vld [vmem:[%s2 + $0x128] sm:$0xff]
    %v2052 = vld [vmem:[%s2 + $0x130] sm:$0xff]
    %v2053 = vld [vmem:[%s2 + $0x138] sm:$0xff]
    %v2054 = vld [vmem:[%s2 + $0x140] sm:$0xff]
    %v2055 = vld [vmem:[%s2 + $0x148] sm:$0xff]
    %v2056 = vld [vmem:[%s2 + $0x150] sm:$0xff]
    %v2057 = vld [vmem:[%s2 + $0x158] sm:$0xff]
    %v2058 = vld [vmem:[%s2 + $0x160] sm:$0xff]
    %v2059 = vld [vmem:[%s2 + $0x168] sm:$0xff]
    %v2060 = vld [vmem:[%s2 + $0x170] sm:$0xff]
    %v2061 = vld [vmem:[%s2 + $0x178] sm:$0xff]
    %v2062 = vld [vmem:[%s2 + $0x180] sm:$0xff]
    %v2063 = vld [vmem:[%s2 + $0x188] sm:$0xff]
    %v2064 = vld [vmem:[%s2 + $0x190] sm:$0xff]
    %v2065 = vld [vmem:[%s2 + $0x198] sm:$0xff]
    %v2066 = vld [vmem:[%s2 + $0x1a0] sm:$0xff]
    %v2067 = vld [vmem:[%s2 + $0x1a8] sm:$0xff]
    %v2068 = vld [vmem:[%s2 + $0x1b0] sm:$0xff]
    %v2069 = vld [vmem:[%s2 + $0x1b8] sm:$0xff]
    %v2070 = vld [vmem:[%s2 + $0x1c0] sm:$0xff]
    %v2071 = vld [vmem:[%s2 + $0x1c8] sm:$0xff]
    %v2072 = vld [vmem:[%s2 + $0x1d0] sm:$0xff]
    %v2073 = vld [vmem:[%s2 + $0x1d8] sm:$0xff]
    %v2074 = vld [vmem:[%s2 + $0x1e0] sm:$0xff]
    %v2075 = vld [vmem:[%s2 + $0x1e8] sm:$0xff]
    %v2076 = vld [vmem:[%s2 + $0x1f0] sm:$0xff]
    %v2077 = vld [vmem:[%s2 + $0x1f8] sm:$0xff]
    %2079 = vset.pattern.permute.xlu0 3
    %2080 = vperm.xlu0 %2079, %v2014
    %v2081 = vpop.permute.xlu0 %2080
    %2084 = vset.pattern.permute.xlu0 3
    %2085 = vperm.xlu0 %2084, %v2015
    %v2086 = vpop.permute.xlu0 %2085
    %2089 = vset.pattern.permute.xlu0 3
    %2090 = vperm.xlu0 %2089, %v2016
    %v2091 = vpop.permute.xlu0 %2090
    %2094 = vset.pattern.permute.xlu0 3
    %2095 = vperm.xlu0 %2094, %v2017
    %v2096 = vpop.permute.xlu0 %2095
    %2099 = vset.pattern.permute.xlu0 3
    %2100 = vperm.xlu0 %2099, %v2018
    %v2101 = vpop.permute.xlu0 %2100
    %2104 = vset.pattern.permute.xlu0 3
    %2105 = vperm.xlu0 %2104, %v2019
    %v2106 = vpop.permute.xlu0 %2105
    %2109 = vset.pattern.permute.xlu0 3
    %2110 = vperm.xlu0 %2109, %v2020
    %v2111 = vpop.permute.xlu0 %2110
    %2114 = vset.pattern.permute.xlu0 3
    %2115 = vperm.xlu0 %2114, %v2021
    %v2116 = vpop.permute.xlu0 %2115
    %2119 = vset.pattern.permute.xlu0 3
    %2120 = vperm.xlu0 %2119, %v2022
    %v2121 = vpop.permute.xlu0 %2120
    %2124 = vset.pattern.permute.xlu0 3
    %2125 = vperm.xlu0 %2124, %v2023
    %v2126 = vpop.permute.xlu0 %2125
    %2129 = vset.pattern.permute.xlu0 3
    %2130 = vperm.xlu0 %2129, %v2024
    %v2131 = vpop.permute.xlu0 %2130
    %2134 = vset.pattern.permute.xlu0 3
    %2135 = vperm.xlu0 %2134, %v2025
    %v2136 = vpop.permute.xlu0 %2135
    %2139 = vset.pattern.permute.xlu0 3
    %2140 = vperm.xlu0 %2139, %v2026
    %v2141 = vpop.permute.xlu0 %2140
    %2144 = vset.pattern.permute.xlu0 3
    %2145 = vperm.xlu0 %2144, %v2027
    %v2146 = vpop.permute.xlu0 %2145
    %2149 = vset.pattern.permute.xlu0 3
    %2150 = vperm.xlu0 %2149, %v2028
    %v2151 = vpop.permute.xlu0 %2150
    %2154 = vset.pattern.permute.xlu0 3
    %2155 = vperm.xlu0 %2154, %v2029
    %v2156 = vpop.permute.xlu0 %2155
    %2159 = vset.pattern.permute.xlu0 3
    %2160 = vperm.xlu0 %2159, %v2030
    %v2161 = vpop.permute.xlu0 %2160
    %2164 = vset.pattern.permute.xlu0 3
    %2165 = vperm.xlu0 %2164, %v2031
    %v2166 = vpop.permute.xlu0 %2165
    %2169 = vset.pattern.permute.xlu0 3
    %2170 = vperm.xlu0 %2169, %v2032
    %v2171 = vpop.permute.xlu0 %2170
    %2174 = vset.pattern.permute.xlu0 3
    %2175 = vperm.xlu0 %2174, %v2033
    %v2176 = vpop.permute.xlu0 %2175
    %2179 = vset.pattern.permute.xlu0 3
    %2180 = vperm.xlu0 %2179, %v2034
    %v2181 = vpop.permute.xlu0 %2180
    %2184 = vset.pattern.permute.xlu0 3
    %2185 = vperm.xlu0 %2184, %v2035
    %v2186 = vpop.permute.xlu0 %2185
    %2189 = vset.pattern.permute.xlu0 3
    %2190 = vperm.xlu0 %2189, %v2036
    %v2191 = vpop.permute.xlu0 %2190
    %2194 = vset.pattern.permute.xlu0 3
    %2195 = vperm.xlu0 %2194, %v2037
    %v2196 = vpop.permute.xlu0 %2195
    %2199 = vset.pattern.permute.xlu0 3
    %2200 = vperm.xlu0 %2199, %v2038
    %v2201 = vpop.permute.xlu0 %2200
    %2204 = vset.pattern.permute.xlu0 3
    %2205 = vperm.xlu0 %2204, %v2039
    %v2206 = vpop.permute.xlu0 %2205
    %2209 = vset.pattern.permute.xlu0 3
    %2210 = vperm.xlu0 %2209, %v2040
    %v2211 = vpop.permute.xlu0 %2210
    %2214 = vset.pattern.permute.xlu0 3
    %2215 = vperm.xlu0 %2214, %v2041
    %v2216 = vpop.permute.xlu0 %2215
    %2219 = vset.pattern.permute.xlu0 3
    %2220 = vperm.xlu0 %2219, %v2042
    %v2221 = vpop.permute.xlu0 %2220
    %2224 = vset.pattern.permute.xlu0 3
    %2225 = vperm.xlu0 %2224, %v2043
    %v2226 = vpop.permute.xlu0 %2225
    %2229 = vset.pattern.permute.xlu0 3
    %2230 = vperm.xlu0 %2229, %v2044
    %v2231 = vpop.permute.xlu0 %2230
    %2234 = vset.pattern.permute.xlu0 3
    %2235 = vperm.xlu0 %2234, %v2045
    %v2236 = vpop.permute.xlu0 %2235
    %2239 = vset.pattern.permute.xlu0 3
    %2240 = vperm.xlu0 %2239, %v2046
    %v2241 = vpop.permute.xlu0 %2240
    %2244 = vset.pattern.permute.xlu0 3
    %2245 = vperm.xlu0 %2244, %v2047
    %v2246 = vpop.permute.xlu0 %2245
    %2249 = vset.pattern.permute.xlu0 3
    %2250 = vperm.xlu0 %2249, %v2048
    %v2251 = vpop.permute.xlu0 %2250
    %2254 = vset.pattern.permute.xlu0 3
    %2255 = vperm.xlu0 %2254, %v2049
    %v2256 = vpop.permute.xlu0 %2255
    %2259 = vset.pattern.permute.xlu0 3
    %2260 = vperm.xlu0 %2259, %v2050
    %v2261 = vpop.permute.xlu0 %2260
    %2264 = vset.pattern.permute.xlu0 3
    %2265 = vperm.xlu0 %2264, %v2051
    %v2266 = vpop.permute.xlu0 %2265
    %2269 = vset.pattern.permute.xlu0 3
    %2270 = vperm.xlu0 %2269, %v2052
    %v2271 = vpop.permute.xlu0 %2270
    %2274 = vset.pattern.permute.xlu0 3
    %2275 = vperm.xlu0 %2274, %v2053
    %v2276 = vpop.permute.xlu0 %2275
    %2279 = vset.pattern.permute.xlu0 3
    %2280 = vperm.xlu0 %2279, %v2054
    %v2281 = vpop.permute.xlu0 %2280
    %2284 = vset.pattern.permute.xlu0 3
    %2285 = vperm.xlu0 %2284, %v2055
    %v2286 = vpop.permute.xlu0 %2285
    %2289 = vset.pattern.permute.xlu0 3
    %2290 = vperm.xlu0 %2289, %v2056
    %v2291 = vpop.permute.xlu0 %2290
    %2294 = vset.pattern.permute.xlu0 3
    %2295 = vperm.xlu0 %2294, %v2057
    %v2296 = vpop.permute.xlu0 %2295
    %2299 = vset.pattern.permute.xlu0 3
    %2300 = vperm.xlu0 %2299, %v2058
    %v2301 = vpop.permute.xlu0 %2300
    %2304 = vset.pattern.permute.xlu0 3
    %2305 = vperm.xlu0 %2304, %v2059
    %v2306 = vpop.permute.xlu0 %2305
    %2309 = vset.pattern.permute.xlu0 3
    %2310 = vperm.xlu0 %2309, %v2060
    %v2311 = vpop.permute.xlu0 %2310
    %2314 = vset.pattern.permute.xlu0 3
    %2315 = vperm.xlu0 %2314, %v2061
    %v2316 = vpop.permute.xlu0 %2315
    %2319 = vset.pattern.permute.xlu0 3
    %2320 = vperm.xlu0 %2319, %v2062
    %v2321 = vpop.permute.xlu0 %2320
    %2324 = vset.pattern.permute.xlu0 3
    %2325 = vperm.xlu0 %2324, %v2063
    %v2326 = vpop.permute.xlu0 %2325
    %2329 = vset.pattern.permute.xlu0 3
    %2330 = vperm.xlu0 %2329, %v2064
    %v2331 = vpop.permute.xlu0 %2330
    %2334 = vset.pattern.permute.xlu0 3
    %2335 = vperm.xlu0 %2334, %v2065
    %v2336 = vpop.permute.xlu0 %2335
    %2339 = vset.pattern.permute.xlu0 3
    %2340 = vperm.xlu0 %2339, %v2066
    %v2341 = vpop.permute.xlu0 %2340
    %2344 = vset.pattern.permute.xlu0 3
    %2345 = vperm.xlu0 %2344, %v2067
    %v2346 = vpop.permute.xlu0 %2345
    %2349 = vset.pattern.permute.xlu0 3
    %2350 = vperm.xlu0 %2349, %v2068
    %v2351 = vpop.permute.xlu0 %2350
    %2354 = vset.pattern.permute.xlu0 3
    %2355 = vperm.xlu0 %2354, %v2069
    %v2356 = vpop.permute.xlu0 %2355
    %2359 = vset.pattern.permute.xlu0 3
    %2360 = vperm.xlu0 %2359, %v2070
    %v2361 = vpop.permute.xlu0 %2360
    %2364 = vset.pattern.permute.xlu0 3
    %2365 = vperm.xlu0 %2364, %v2071
    %v2366 = vpop.permute.xlu0 %2365
    %2369 = vset.pattern.permute.xlu0 3
    %2370 = vperm.xlu0 %2369, %v2072
    %v2371 = vpop.permute.xlu0 %2370
    %2374 = vset.pattern.permute.xlu0 3
    %2375 = vperm.xlu0 %2374, %v2073
    %v2376 = vpop.permute.xlu0 %2375
    %2379 = vset.pattern.permute.xlu0 3
    %2380 = vperm.xlu0 %2379, %v2074
    %v2381 = vpop.permute.xlu0 %2380
    %2384 = vset.pattern.permute.xlu0 3
    %2385 = vperm.xlu0 %2384, %v2075
    %v2386 = vpop.permute.xlu0 %2385
    %2389 = vset.pattern.permute.xlu0 3
    %2390 = vperm.xlu0 %2389, %v2076
    %v2391 = vpop.permute.xlu0 %2390
    %2394 = vset.pattern.permute.xlu0 3
    %2395 = vperm.xlu0 %2394, %v2077
    %v2396 = vpop.permute.xlu0 %2395
    %v2398 = vmul.f32 %v348, %v2081
    %v2399 = vmul.f32 %v347, %v2086
    %v2400 = vmul.f32 %v346, %v2091
    %v2401 = vmul.f32 %v345, %v2096
    %v2402 = vmul.f32 %v344, %v2101
    %v2403 = vmul.f32 %v343, %v2106
    %v2404 = vmul.f32 %v342, %v2111
    %v2405 = vmul.f32 %v341, %v2116
    %v2406 = vmul.f32 %v340, %v2121
    %v2407 = vmul.f32 %v339, %v2126
    %v2408 = vmul.f32 %v338, %v2131
    %v2409 = vmul.f32 %v337, %v2136
    %v2410 = vmul.f32 %v336, %v2141
    %v2411 = vmul.f32 %v335, %v2146
    %v2412 = vmul.f32 %v334, %v2151
    %v2413 = vmul.f32 %v333, %v2156
    %v2414 = vmul.f32 %v332, %v2161
    %v2415 = vmul.f32 %v331, %v2166
    %v2416 = vmul.f32 %v330, %v2171
    %v2417 = vmul.f32 %v329, %v2176
    %v2418 = vmul.f32 %v328, %v2181
    %v2419 = vmul.f32 %v327, %v2186
    %v2420 = vmul.f32 %v326, %v2191
    %v2421 = vmul.f32 %v325, %v2196
    %v2422 = vmul.f32 %v324, %v2201
    %v2423 = vmul.f32 %v323, %v2206
    %v2424 = vmul.f32 %v322, %v2211
    %v2425 = vmul.f32 %v321, %v2216
    %v2426 = vmul.f32 %v320, %v2221
    %v2427 = vmul.f32 %v319, %v2226
    %v2428 = vmul.f32 %v318, %v2231
    %v2429 = vmul.f32 %v317, %v2236
    %v2430 = vmul.f32 %v316, %v2241
    %v2431 = vmul.f32 %v315, %v2246
    %v2432 = vmul.f32 %v314, %v2251
    %v2433 = vmul.f32 %v313, %v2256
    %v2434 = vmul.f32 %v312, %v2261
    %v2435 = vmul.f32 %v311, %v2266
    %v2436 = vmul.f32 %v310, %v2271
    %v2437 = vmul.f32 %v309, %v2276
    %v2438 = vmul.f32 %v308, %v2281
    %v2439 = vmul.f32 %v307, %v2286
    %v2440 = vmul.f32 %v306, %v2291
    %v2441 = vmul.f32 %v305, %v2296
    %v2442 = vmul.f32 %v304, %v2301
    %v2443 = vmul.f32 %v303, %v2306
    %v2444 = vmul.f32 %v302, %v2311
    %v2445 = vmul.f32 %v301, %v2316
    %v2446 = vmul.f32 %v300, %v2321
    %v2447 = vmul.f32 %v299, %v2326
    %v2448 = vmul.f32 %v298, %v2331
    %v2449 = vmul.f32 %v297, %v2336
    %v2450 = vmul.f32 %v296, %v2341
    %v2451 = vmul.f32 %v295, %v2346
    %v2452 = vmul.f32 %v294, %v2351
    %v2453 = vmul.f32 %v293, %v2356
    %v2454 = vmul.f32 %v292, %v2361
    %v2455 = vmul.f32 %v291, %v2366
    %v2456 = vmul.f32 %v290, %v2371
    %v2457 = vmul.f32 %v289, %v2376
    %v2458 = vmul.f32 %v288, %v2381
    %v2459 = vmul.f32 %v287, %v2386
    %v2460 = vmul.f32 %v286, %v2391
    %v2461 = vmul.f32 %v285, %v2396
    %v2462 = vpack.c.bf16 %v2399, %v2398
    %v2463 = vpack.c.bf16 %v2401, %v2400
    %v2464 = vpack.c.bf16 %v2403, %v2402
    %v2465 = vpack.c.bf16 %v2405, %v2404
    %v2466 = vpack.c.bf16 %v2407, %v2406
    %v2467 = vpack.c.bf16 %v2409, %v2408
    %v2468 = vpack.c.bf16 %v2411, %v2410
    %v2469 = vpack.c.bf16 %v2413, %v2412
    %v2470 = vpack.c.bf16 %v2415, %v2414
    %v2471 = vpack.c.bf16 %v2417, %v2416
    %v2472 = vpack.c.bf16 %v2419, %v2418
    %v2473 = vpack.c.bf16 %v2421, %v2420
    %v2474 = vpack.c.bf16 %v2423, %v2422
    %v2475 = vpack.c.bf16 %v2425, %v2424
    %v2476 = vpack.c.bf16 %v2427, %v2426
    %v2477 = vpack.c.bf16 %v2429, %v2428
    %v2478 = vpack.c.bf16 %v2431, %v2430
    %v2479 = vpack.c.bf16 %v2433, %v2432
    %v2480 = vpack.c.bf16 %v2435, %v2434
    %v2481 = vpack.c.bf16 %v2437, %v2436
    %v2482 = vpack.c.bf16 %v2439, %v2438
    %v2483 = vpack.c.bf16 %v2441, %v2440
    %v2484 = vpack.c.bf16 %v2443, %v2442
    %v2485 = vpack.c.bf16 %v2445, %v2444
    %v2486 = vpack.c.bf16 %v2447, %v2446
    %v2487 = vpack.c.bf16 %v2449, %v2448
    %v2488 = vpack.c.bf16 %v2451, %v2450
    %v2489 = vpack.c.bf16 %v2453, %v2452
    %v2490 = vpack.c.bf16 %v2455, %v2454
    %v2491 = vpack.c.bf16 %v2457, %v2456
    %v2492 = vpack.c.bf16 %v2459, %v2458
    %v2493 = vpack.c.bf16 %v2461, %v2460
    %2494 = vst [vmem:[#allocation2 + $0x18] sm:$0xff] %v2462
    %2495 = vst [vmem:[#allocation2 + $0x60] sm:$0xff] %v2463
    %2496 = vst [vmem:[#allocation2 + $0xa8] sm:$0xff] %v2464
    %2497 = vst [vmem:[#allocation2 + $0xf0] sm:$0xff] %v2465
    %2498 = vst [vmem:[#allocation2 + $0x138] sm:$0xff] %v2466
    %2499 = vst [vmem:[#allocation2 + $0x180] sm:$0xff] %v2467
    %2500 = vst [vmem:[#allocation2 + $0x1c8] sm:$0xff] %v2468
    %2501 = vst [vmem:[#allocation2 + $0x210] sm:$0xff] %v2469
    %2502 = vst [vmem:[#allocation2 + $0x258] sm:$0xff] %v2470
    %2503 = vst [vmem:[#allocation2 + $0x2a0] sm:$0xff] %v2471
    %2504 = vst [vmem:[#allocation2 + $0x2e8] sm:$0xff] %v2472
    %2505 = vst [vmem:[#allocation2 + $0x330] sm:$0xff] %v2473
    %2506 = vst [vmem:[#allocation2 + $0x378] sm:$0xff] %v2474
    %2507 = vst [vmem:[#allocation2 + $0x3c0] sm:$0xff] %v2475
    %2508 = vst [vmem:[#allocation2 + $0x408] sm:$0xff] %v2476
    %2509 = vst [vmem:[#allocation2 + $0x450] sm:$0xff] %v2477
    %2510 = vst [vmem:[#allocation2 + $0x498] sm:$0xff] %v2478
    %2511 = vst [vmem:[#allocation2 + $0x4e0] sm:$0xff] %v2479
    %2512 = vst [vmem:[#allocation2 + $0x528] sm:$0xff] %v2480
    %2513 = vst [vmem:[#allocation2 + $0x570] sm:$0xff] %v2481
    %2514 = vst [vmem:[#allocation2 + $0x5b8] sm:$0xff] %v2482
    %2515 = vst [vmem:[#allocation2 + $0x600] sm:$0xff] %v2483
    %2516 = vst [vmem:[#allocation2 + $0x648] sm:$0xff] %v2484
    %2517 = vst [vmem:[#allocation2 + $0x690] sm:$0xff] %v2485
    %2518 = vst [vmem:[#allocation2 + $0x6d8] sm:$0xff] %v2486
    %2519 = vst [vmem:[#allocation2 + $0x720] sm:$0xff] %v2487
    %2520 = vst [vmem:[#allocation2 + $0x768] sm:$0xff] %v2488
    %2521 = vst [vmem:[#allocation2 + $0x7b0] sm:$0xff] %v2489
    %2522 = vst [vmem:[#allocation2 + $0x7f8] sm:$0xff] %v2490
    %2523 = vst [vmem:[#allocation2 + $0x840] sm:$0xff] %v2491
    %2524 = vst [vmem:[#allocation2 + $0x888] sm:$0xff] %v2492
    %2525 = vst [vmem:[#allocation2 + $0x8d0] sm:$0xff] %v2493
    %v2526 = vld [vmem:[%s2] sm:$0xff]
    %v2527 = vld [vmem:[%s2 + $0x8] sm:$0xff]
    %v2528 = vld [vmem:[%s2 + $0x10] sm:$0xff]
    %v2529 = vld [vmem:[%s2 + $0x18] sm:$0xff]
    %v2530 = vld [vmem:[%s2 + $0x20] sm:$0xff]
    %v2531 = vld [vmem:[%s2 + $0x28] sm:$0xff]
    %v2532 = vld [vmem:[%s2 + $0x30] sm:$0xff]
    %v2533 = vld [vmem:[%s2 + $0x38] sm:$0xff]
    %v2534 = vld [vmem:[%s2 + $0x40] sm:$0xff]
    %v2535 = vld [vmem:[%s2 + $0x48] sm:$0xff]
    %v2536 = vld [vmem:[%s2 + $0x50] sm:$0xff]
    %v2537 = vld [vmem:[%s2 + $0x58] sm:$0xff]
    %v2538 = vld [vmem:[%s2 + $0x60] sm:$0xff]
    %v2539 = vld [vmem:[%s2 + $0x68] sm:$0xff]
    %v2540 = vld [vmem:[%s2 + $0x70] sm:$0xff]
    %v2541 = vld [vmem:[%s2 + $0x78] sm:$0xff]
    %v2542 = vld [vmem:[%s2 + $0x80] sm:$0xff]
    %v2543 = vld [vmem:[%s2 + $0x88] sm:$0xff]
    %v2544 = vld [vmem:[%s2 + $0x90] sm:$0xff]
    %v2545 = vld [vmem:[%s2 + $0x98] sm:$0xff]
    %v2546 = vld [vmem:[%s2 + $0xa0] sm:$0xff]
    %v2547 = vld [vmem:[%s2 + $0xa8] sm:$0xff]
    %v2548 = vld [vmem:[%s2 + $0xb0] sm:$0xff]
    %v2549 = vld [vmem:[%s2 + $0xb8] sm:$0xff]
    %v2550 = vld [vmem:[%s2 + $0xc0] sm:$0xff]
    %v2551 = vld [vmem:[%s2 + $0xc8] sm:$0xff]
    %v2552 = vld [vmem:[%s2 + $0xd0] sm:$0xff]
    %v2553 = vld [vmem:[%s2 + $0xd8] sm:$0xff]
    %v2554 = vld [vmem:[%s2 + $0xe0] sm:$0xff]
    %v2555 = vld [vmem:[%s2 + $0xe8] sm:$0xff]
    %v2556 = vld [vmem:[%s2 + $0xf0] sm:$0xff]
    %v2557 = vld [vmem:[%s2 + $0xf8] sm:$0xff]
    %v2558 = vld [vmem:[%s2 + $0x100] sm:$0xff]
    %v2559 = vld [vmem:[%s2 + $0x108] sm:$0xff]
    %v2560 = vld [vmem:[%s2 + $0x110] sm:$0xff]
    %v2561 = vld [vmem:[%s2 + $0x118] sm:$0xff]
    %v2562 = vld [vmem:[%s2 + $0x120] sm:$0xff]
    %v2563 = vld [vmem:[%s2 + $0x128] sm:$0xff]
    %v2564 = vld [vmem:[%s2 + $0x130] sm:$0xff]
    %v2565 = vld [vmem:[%s2 + $0x138] sm:$0xff]
    %v2566 = vld [vmem:[%s2 + $0x140] sm:$0xff]
    %v2567 = vld [vmem:[%s2 + $0x148] sm:$0xff]
    %v2568 = vld [vmem:[%s2 + $0x150] sm:$0xff]
    %v2569 = vld [vmem:[%s2 + $0x158] sm:$0xff]
    %v2570 = vld [vmem:[%s2 + $0x160] sm:$0xff]
    %v2571 = vld [vmem:[%s2 + $0x168] sm:$0xff]
    %v2572 = vld [vmem:[%s2 + $0x170] sm:$0xff]
    %v2573 = vld [vmem:[%s2 + $0x178] sm:$0xff]
    %v2574 = vld [vmem:[%s2 + $0x180] sm:$0xff]
    %v2575 = vld [vmem:[%s2 + $0x188] sm:$0xff]
    %v2576 = vld [vmem:[%s2 + $0x190] sm:$0xff]
    %v2577 = vld [vmem:[%s2 + $0x198] sm:$0xff]
    %v2578 = vld [vmem:[%s2 + $0x1a0] sm:$0xff]
    %v2579 = vld [vmem:[%s2 + $0x1a8] sm:$0xff]
    %v2580 = vld [vmem:[%s2 + $0x1b0] sm:$0xff]
    %v2581 = vld [vmem:[%s2 + $0x1b8] sm:$0xff]
    %v2582 = vld [vmem:[%s2 + $0x1c0] sm:$0xff]
    %v2583 = vld [vmem:[%s2 + $0x1c8] sm:$0xff]
    %v2584 = vld [vmem:[%s2 + $0x1d0] sm:$0xff]
    %v2585 = vld [vmem:[%s2 + $0x1d8] sm:$0xff]
    %v2586 = vld [vmem:[%s2 + $0x1e0] sm:$0xff]
    %v2587 = vld [vmem:[%s2 + $0x1e8] sm:$0xff]
    %v2588 = vld [vmem:[%s2 + $0x1f0] sm:$0xff]
    %v2589 = vld [vmem:[%s2 + $0x1f8] sm:$0xff]
    %2591 = vset.pattern.permute.xlu0 4
    %2592 = vperm.xlu0 %2591, %v2526
    %v2593 = vpop.permute.xlu0 %2592
    %2596 = vset.pattern.permute.xlu0 4
    %2597 = vperm.xlu0 %2596, %v2527
    %v2598 = vpop.permute.xlu0 %2597
    %2601 = vset.pattern.permute.xlu0 4
    %2602 = vperm.xlu0 %2601, %v2528
    %v2603 = vpop.permute.xlu0 %2602
    %2606 = vset.pattern.permute.xlu0 4
    %2607 = vperm.xlu0 %2606, %v2529
    %v2608 = vpop.permute.xlu0 %2607
    %2611 = vset.pattern.permute.xlu0 4
    %2612 = vperm.xlu0 %2611, %v2530
    %v2613 = vpop.permute.xlu0 %2612
    %2616 = vset.pattern.permute.xlu0 4
    %2617 = vperm.xlu0 %2616, %v2531
    %v2618 = vpop.permute.xlu0 %2617
    %2621 = vset.pattern.permute.xlu0 4
    %2622 = vperm.xlu0 %2621, %v2532
    %v2623 = vpop.permute.xlu0 %2622
    %2626 = vset.pattern.permute.xlu0 4
    %2627 = vperm.xlu0 %2626, %v2533
    %v2628 = vpop.permute.xlu0 %2627
    %2631 = vset.pattern.permute.xlu0 4
    %2632 = vperm.xlu0 %2631, %v2534
    %v2633 = vpop.permute.xlu0 %2632
    %2636 = vset.pattern.permute.xlu0 4
    %2637 = vperm.xlu0 %2636, %v2535
    %v2638 = vpop.permute.xlu0 %2637
    %2641 = vset.pattern.permute.xlu0 4
    %2642 = vperm.xlu0 %2641, %v2536
    %v2643 = vpop.permute.xlu0 %2642
    %2646 = vset.pattern.permute.xlu0 4
    %2647 = vperm.xlu0 %2646, %v2537
    %v2648 = vpop.permute.xlu0 %2647
    %2651 = vset.pattern.permute.xlu0 4
    %2652 = vperm.xlu0 %2651, %v2538
    %v2653 = vpop.permute.xlu0 %2652
    %2656 = vset.pattern.permute.xlu0 4
    %2657 = vperm.xlu0 %2656, %v2539
    %v2658 = vpop.permute.xlu0 %2657
    %2661 = vset.pattern.permute.xlu0 4
    %2662 = vperm.xlu0 %2661, %v2540
    %v2663 = vpop.permute.xlu0 %2662
    %2666 = vset.pattern.permute.xlu0 4
    %2667 = vperm.xlu0 %2666, %v2541
    %v2668 = vpop.permute.xlu0 %2667
    %2671 = vset.pattern.permute.xlu0 4
    %2672 = vperm.xlu0 %2671, %v2542
    %v2673 = vpop.permute.xlu0 %2672
    %2676 = vset.pattern.permute.xlu0 4
    %2677 = vperm.xlu0 %2676, %v2543
    %v2678 = vpop.permute.xlu0 %2677
    %2681 = vset.pattern.permute.xlu0 4
    %2682 = vperm.xlu0 %2681, %v2544
    %v2683 = vpop.permute.xlu0 %2682
    %2686 = vset.pattern.permute.xlu0 4
    %2687 = vperm.xlu0 %2686, %v2545
    %v2688 = vpop.permute.xlu0 %2687
    %2691 = vset.pattern.permute.xlu0 4
    %2692 = vperm.xlu0 %2691, %v2546
    %v2693 = vpop.permute.xlu0 %2692
    %2696 = vset.pattern.permute.xlu0 4
    %2697 = vperm.xlu0 %2696, %v2547
    %v2698 = vpop.permute.xlu0 %2697
    %2701 = vset.pattern.permute.xlu0 4
    %2702 = vperm.xlu0 %2701, %v2548
    %v2703 = vpop.permute.xlu0 %2702
    %2706 = vset.pattern.permute.xlu0 4
    %2707 = vperm.xlu0 %2706, %v2549
    %v2708 = vpop.permute.xlu0 %2707
    %2711 = vset.pattern.permute.xlu0 4
    %2712 = vperm.xlu0 %2711, %v2550
    %v2713 = vpop.permute.xlu0 %2712
    %2716 = vset.pattern.permute.xlu0 4
    %2717 = vperm.xlu0 %2716, %v2551
    %v2718 = vpop.permute.xlu0 %2717
    %2721 = vset.pattern.permute.xlu0 4
    %2722 = vperm.xlu0 %2721, %v2552
    %v2723 = vpop.permute.xlu0 %2722
    %2726 = vset.pattern.permute.xlu0 4
    %2727 = vperm.xlu0 %2726, %v2553
    %v2728 = vpop.permute.xlu0 %2727
    %2731 = vset.pattern.permute.xlu0 4
    %2732 = vperm.xlu0 %2731, %v2554
    %v2733 = vpop.permute.xlu0 %2732
    %2736 = vset.pattern.permute.xlu0 4
    %2737 = vperm.xlu0 %2736, %v2555
    %v2738 = vpop.permute.xlu0 %2737
    %2741 = vset.pattern.permute.xlu0 4
    %2742 = vperm.xlu0 %2741, %v2556
    %v2743 = vpop.permute.xlu0 %2742
    %2746 = vset.pattern.permute.xlu0 4
    %2747 = vperm.xlu0 %2746, %v2557
    %v2748 = vpop.permute.xlu0 %2747
    %2751 = vset.pattern.permute.xlu0 4
    %2752 = vperm.xlu0 %2751, %v2558
    %v2753 = vpop.permute.xlu0 %2752
    %2756 = vset.pattern.permute.xlu0 4
    %2757 = vperm.xlu0 %2756, %v2559
    %v2758 = vpop.permute.xlu0 %2757
    %2761 = vset.pattern.permute.xlu0 4
    %2762 = vperm.xlu0 %2761, %v2560
    %v2763 = vpop.permute.xlu0 %2762
    %2766 = vset.pattern.permute.xlu0 4
    %2767 = vperm.xlu0 %2766, %v2561
    %v2768 = vpop.permute.xlu0 %2767
    %2771 = vset.pattern.permute.xlu0 4
    %2772 = vperm.xlu0 %2771, %v2562
    %v2773 = vpop.permute.xlu0 %2772
    %2776 = vset.pattern.permute.xlu0 4
    %2777 = vperm.xlu0 %2776, %v2563
    %v2778 = vpop.permute.xlu0 %2777
    %2781 = vset.pattern.permute.xlu0 4
    %2782 = vperm.xlu0 %2781, %v2564
    %v2783 = vpop.permute.xlu0 %2782
    %2786 = vset.pattern.permute.xlu0 4
    %2787 = vperm.xlu0 %2786, %v2565
    %v2788 = vpop.permute.xlu0 %2787
    %2791 = vset.pattern.permute.xlu0 4
    %2792 = vperm.xlu0 %2791, %v2566
    %v2793 = vpop.permute.xlu0 %2792
    %2796 = vset.pattern.permute.xlu0 4
    %2797 = vperm.xlu0 %2796, %v2567
    %v2798 = vpop.permute.xlu0 %2797
    %2801 = vset.pattern.permute.xlu0 4
    %2802 = vperm.xlu0 %2801, %v2568
    %v2803 = vpop.permute.xlu0 %2802
    %2806 = vset.pattern.permute.xlu0 4
    %2807 = vperm.xlu0 %2806, %v2569
    %v2808 = vpop.permute.xlu0 %2807
    %2811 = vset.pattern.permute.xlu0 4
    %2812 = vperm.xlu0 %2811, %v2570
    %v2813 = vpop.permute.xlu0 %2812
    %2816 = vset.pattern.permute.xlu0 4
    %2817 = vperm.xlu0 %2816, %v2571
    %v2818 = vpop.permute.xlu0 %2817
    %2821 = vset.pattern.permute.xlu0 4
    %2822 = vperm.xlu0 %2821, %v2572
    %v2823 = vpop.permute.xlu0 %2822
    %2826 = vset.pattern.permute.xlu0 4
    %2827 = vperm.xlu0 %2826, %v2573
    %v2828 = vpop.permute.xlu0 %2827
    %2831 = vset.pattern.permute.xlu0 4
    %2832 = vperm.xlu0 %2831, %v2574
    %v2833 = vpop.permute.xlu0 %2832
    %2836 = vset.pattern.permute.xlu0 4
    %2837 = vperm.xlu0 %2836, %v2575
    %v2838 = vpop.permute.xlu0 %2837
    %2841 = vset.pattern.permute.xlu0 4
    %2842 = vperm.xlu0 %2841, %v2576
    %v2843 = vpop.permute.xlu0 %2842
    %2846 = vset.pattern.permute.xlu0 4
    %2847 = vperm.xlu0 %2846, %v2577
    %v2848 = vpop.permute.xlu0 %2847
    %2851 = vset.pattern.permute.xlu0 4
    %2852 = vperm.xlu0 %2851, %v2578
    %v2853 = vpop.permute.xlu0 %2852
    %2856 = vset.pattern.permute.xlu0 4
    %2857 = vperm.xlu0 %2856, %v2579
    %v2858 = vpop.permute.xlu0 %2857
    %2861 = vset.pattern.permute.xlu0 4
    %2862 = vperm.xlu0 %2861, %v2580
    %v2863 = vpop.permute.xlu0 %2862
    %2866 = vset.pattern.permute.xlu0 4
    %2867 = vperm.xlu0 %2866, %v2581
    %v2868 = vpop.permute.xlu0 %2867
    %2871 = vset.pattern.permute.xlu0 4
    %2872 = vperm.xlu0 %2871, %v2582
    %v2873 = vpop.permute.xlu0 %2872
    %2876 = vset.pattern.permute.xlu0 4
    %2877 = vperm.xlu0 %2876, %v2583
    %v2878 = vpop.permute.xlu0 %2877
    %2881 = vset.pattern.permute.xlu0 4
    %2882 = vperm.xlu0 %2881, %v2584
    %v2883 = vpop.permute.xlu0 %2882
    %2886 = vset.pattern.permute.xlu0 4
    %2887 = vperm.xlu0 %2886, %v2585
    %v2888 = vpop.permute.xlu0 %2887
    %2891 = vset.pattern.permute.xlu0 4
    %2892 = vperm.xlu0 %2891, %v2586
    %v2893 = vpop.permute.xlu0 %2892
    %2896 = vset.pattern.permute.xlu0 4
    %2897 = vperm.xlu0 %2896, %v2587
    %v2898 = vpop.permute.xlu0 %2897
    %2901 = vset.pattern.permute.xlu0 4
    %2902 = vperm.xlu0 %2901, %v2588
    %v2903 = vpop.permute.xlu0 %2902
    %2906 = vset.pattern.permute.xlu0 4
    %2907 = vperm.xlu0 %2906, %v2589
    %v2908 = vpop.permute.xlu0 %2907
    %v2910 = vmul.f32 %v154, %v2593
    %v2911 = vmul.f32 %v155, %v2598
    %v2912 = vmul.f32 %v156, %v2603
    %v2913 = vmul.f32 %v157, %v2608
    %v2914 = vmul.f32 %v158, %v2613
    %v2915 = vmul.f32 %v159, %v2618
    %v2916 = vmul.f32 %v160, %v2623
    %v2917 = vmul.f32 %v161, %v2628
    %v2918 = vmul.f32 %v162, %v2633
    %v2919 = vmul.f32 %v163, %v2638
    %v2920 = vmul.f32 %v164, %v2643
    %v2921 = vmul.f32 %v165, %v2648
    %v2922 = vmul.f32 %v166, %v2653
    %v2923 = vmul.f32 %v167, %v2658
    %v2924 = vmul.f32 %v168, %v2663
    %v2925 = vmul.f32 %v169, %v2668
    %v2926 = vmul.f32 %v170, %v2673
    %v2927 = vmul.f32 %v171, %v2678
    %v2928 = vmul.f32 %v172, %v2683
    %v2929 = vmul.f32 %v173, %v2688
    %v2930 = vmul.f32 %v174, %v2693
    %v2931 = vmul.f32 %v175, %v2698
    %v2932 = vmul.f32 %v176, %v2703
    %v2933 = vmul.f32 %v177, %v2708
    %v2934 = vmul.f32 %v178, %v2713
    %v2935 = vmul.f32 %v179, %v2718
    %v2936 = vmul.f32 %v180, %v2723
    %v2937 = vmul.f32 %v181, %v2728
    %v2938 = vmul.f32 %v182, %v2733
    %v2939 = vmul.f32 %v183, %v2738
    %v2940 = vmul.f32 %v184, %v2743
    %v2941 = vmul.f32 %v185, %v2748
    %v2942 = vmul.f32 %v186, %v2753
    %v2943 = vmul.f32 %v187, %v2758
    %v2944 = vmul.f32 %v188, %v2763
    %v2945 = vmul.f32 %v189, %v2768
    %v2946 = vmul.f32 %v190, %v2773
    %v2947 = vmul.f32 %v191, %v2778
    %v2948 = vmul.f32 %v192, %v2783
    %v2949 = vmul.f32 %v193, %v2788
    %v2950 = vmul.f32 %v194, %v2793
    %v2951 = vmul.f32 %v195, %v2798
    %v2952 = vmul.f32 %v196, %v2803
    %v2953 = vmul.f32 %v197, %v2808
    %v2954 = vmul.f32 %v198, %v2813
    %v2955 = vmul.f32 %v199, %v2818
    %v2956 = vmul.f32 %v200, %v2823
    %v2957 = vmul.f32 %v201, %v2828
    %v2958 = vmul.f32 %v202, %v2833
    %v2959 = vmul.f32 %v203, %v2838
    %v2960 = vmul.f32 %v204, %v2843
    %v2961 = vmul.f32 %v205, %v2848
    %v2962 = vmul.f32 %v206, %v2853
    %v2963 = vmul.f32 %v207, %v2858
    %v2964 = vmul.f32 %v208, %v2863
    %v2965 = vmul.f32 %v209, %v2868
    %v2966 = vmul.f32 %v210, %v2873
    %v2967 = vmul.f32 %v211, %v2878
    %v2968 = vmul.f32 %v212, %v2883
    %v2969 = vmul.f32 %v213, %v2888
    %v2970 = vmul.f32 %v214, %v2893
    %v2971 = vmul.f32 %v215, %v2898
    %v2972 = vmul.f32 %v216, %v2903
    %v2973 = vmul.f32 %v217, %v2908
    %v2974 = vpack.c.bf16 %v2911, %v2910
    %v2975 = vpack.c.bf16 %v2913, %v2912
    %v2976 = vpack.c.bf16 %v2915, %v2914
    %v2977 = vpack.c.bf16 %v2917, %v2916
    %v2978 = vpack.c.bf16 %v2919, %v2918
    %v2979 = vpack.c.bf16 %v2921, %v2920
    %v2980 = vpack.c.bf16 %v2923, %v2922
    %v2981 = vpack.c.bf16 %v2925, %v2924
    %v2982 = vpack.c.bf16 %v2927, %v2926
    %v2983 = vpack.c.bf16 %v2929, %v2928
    %v2984 = vpack.c.bf16 %v2931, %v2930
    %v2985 = vpack.c.bf16 %v2933, %v2932
    %v2986 = vpack.c.bf16 %v2935, %v2934
    %v2987 = vpack.c.bf16 %v2937, %v2936
    %v2988 = vpack.c.bf16 %v2939, %v2938
    %v2989 = vpack.c.bf16 %v2941, %v2940
    %v2990 = vpack.c.bf16 %v2943, %v2942
    %v2991 = vpack.c.bf16 %v2945, %v2944
    %v2992 = vpack.c.bf16 %v2947, %v2946
    %v2993 = vpack.c.bf16 %v2949, %v2948
    %v2994 = vpack.c.bf16 %v2951, %v2950
    %v2995 = vpack.c.bf16 %v2953, %v2952
    %v2996 = vpack.c.bf16 %v2955, %v2954
    %v2997 = vpack.c.bf16 %v2957, %v2956
    %v2998 = vpack.c.bf16 %v2959, %v2958
    %v2999 = vpack.c.bf16 %v2961, %v2960
    %v3000 = vpack.c.bf16 %v2963, %v2962
    %v3001 = vpack.c.bf16 %v2965, %v2964
    %v3002 = vpack.c.bf16 %v2967, %v2966
    %v3003 = vpack.c.bf16 %v2969, %v2968
    %v3004 = vpack.c.bf16 %v2971, %v2970
    %v3005 = vpack.c.bf16 %v2973, %v2972
    %3006 = vst [vmem:[#allocation2 + $0x20] sm:$0xff] %v2974
    %3007 = vst [vmem:[#allocation2 + $0x68] sm:$0xff] %v2975
    %3008 = vst [vmem:[#allocation2 + $0xb0] sm:$0xff] %v2976
    %3009 = vst [vmem:[#allocation2 + $0xf8] sm:$0xff] %v2977
    %3010 = vst [vmem:[#allocation2 + $0x140] sm:$0xff] %v2978
    %3011 = vst [vmem:[#allocation2 + $0x188] sm:$0xff] %v2979
    %3012 = vst [vmem:[#allocation2 + $0x1d0] sm:$0xff] %v2980
    %3013 = vst [vmem:[#allocation2 + $0x218] sm:$0xff] %v2981
    %3014 = vst [vmem:[#allocation2 + $0x260] sm:$0xff] %v2982
    %3015 = vst [vmem:[#allocation2 + $0x2a8] sm:$0xff] %v2983
    %3016 = vst [vmem:[#allocation2 + $0x2f0] sm:$0xff] %v2984
    %3017 = vst [vmem:[#allocation2 + $0x338] sm:$0xff] %v2985
    %3018 = vst [vmem:[#allocation2 + $0x380] sm:$0xff] %v2986
    %3019 = vst [vmem:[#allocation2 + $0x3c8] sm:$0xff] %v2987
    %3020 = vst [vmem:[#allocation2 + $0x410] sm:$0xff] %v2988
    %3021 = vst [vmem:[#allocation2 + $0x458] sm:$0xff] %v2989
    %3022 = vst [vmem:[#allocation2 + $0x4a0] sm:$0xff] %v2990
    %3023 = vst [vmem:[#allocation2 + $0x4e8] sm:$0xff] %v2991
    %3024 = vst [vmem:[#allocation2 + $0x530] sm:$0xff] %v2992
    %3025 = vst [vmem:[#allocation2 + $0x578] sm:$0xff] %v2993
    %3026 = vst [vmem:[#allocation2 + $0x5c0] sm:$0xff] %v2994
    %3027 = vst [vmem:[#allocation2 + $0x608] sm:$0xff] %v2995
    %3028 = vst [vmem:[#allocation2 + $0x650] sm:$0xff] %v2996
    %3029 = vst [vmem:[#allocation2 + $0x698] sm:$0xff] %v2997
    %3030 = vst [vmem:[#allocation2 + $0x6e0] sm:$0xff] %v2998
    %3031 = vst [vmem:[#allocation2 + $0x728] sm:$0xff] %v2999
    %3032 = vst [vmem:[#allocation2 + $0x770] sm:$0xff] %v3000
    %3033 = vst [vmem:[#allocation2 + $0x7b8] sm:$0xff] %v3001
    %3034 = vst [vmem:[#allocation2 + $0x800] sm:$0xff] %v3002
    %3035 = vst [vmem:[#allocation2 + $0x848] sm:$0xff] %v3003
    %3036 = vst [vmem:[#allocation2 + $0x890] sm:$0xff] %v3004
    %3037 = vst [vmem:[#allocation2 + $0x8d8] sm:$0xff] %v3005
    %v3038 = vld [vmem:[%s2] sm:$0xff]
    %v3039 = vld [vmem:[%s2 + $0x8] sm:$0xff]
    %v3040 = vld [vmem:[%s2 + $0x10] sm:$0xff]
    %v3041 = vld [vmem:[%s2 + $0x18] sm:$0xff]
    %v3042 = vld [vmem:[%s2 + $0x20] sm:$0xff]
    %v3043 = vld [vmem:[%s2 + $0x28] sm:$0xff]
    %v3044 = vld [vmem:[%s2 + $0x30] sm:$0xff]
    %v3045 = vld [vmem:[%s2 + $0x38] sm:$0xff]
    %v3046 = vld [vmem:[%s2 + $0x40] sm:$0xff]
    %v3047 = vld [vmem:[%s2 + $0x48] sm:$0xff]
    %v3048 = vld [vmem:[%s2 + $0x50] sm:$0xff]
    %v3049 = vld [vmem:[%s2 + $0x58] sm:$0xff]
    %v3050 = vld [vmem:[%s2 + $0x60] sm:$0xff]
    %v3051 = vld [vmem:[%s2 + $0x68] sm:$0xff]
    %v3052 = vld [vmem:[%s2 + $0x70] sm:$0xff]
    %v3053 = vld [vmem:[%s2 + $0x78] sm:$0xff]
    %v3054 = vld [vmem:[%s2 + $0x80] sm:$0xff]
    %v3055 = vld [vmem:[%s2 + $0x88] sm:$0xff]
    %v3056 = vld [vmem:[%s2 + $0x90] sm:$0xff]
    %v3057 = vld [vmem:[%s2 + $0x98] sm:$0xff]
    %v3058 = vld [vmem:[%s2 + $0xa0] sm:$0xff]
    %v3059 = vld [vmem:[%s2 + $0xa8] sm:$0xff]
    %v3060 = vld [vmem:[%s2 + $0xb0] sm:$0xff]
    %v3061 = vld [vmem:[%s2 + $0xb8] sm:$0xff]
    %v3062 = vld [vmem:[%s2 + $0xc0] sm:$0xff]
    %v3063 = vld [vmem:[%s2 + $0xc8] sm:$0xff]
    %v3064 = vld [vmem:[%s2 + $0xd0] sm:$0xff]
    %v3065 = vld [vmem:[%s2 + $0xd8] sm:$0xff]
    %v3066 = vld [vmem:[%s2 + $0xe0] sm:$0xff]
    %v3067 = vld [vmem:[%s2 + $0xe8] sm:$0xff]
    %v3068 = vld [vmem:[%s2 + $0xf0] sm:$0xff]
    %v3069 = vld [vmem:[%s2 + $0xf8] sm:$0xff]
    %v3070 = vld [vmem:[%s2 + $0x100] sm:$0xff]
    %v3071 = vld [vmem:[%s2 + $0x108] sm:$0xff]
    %v3072 = vld [vmem:[%s2 + $0x110] sm:$0xff]
    %v3073 = vld [vmem:[%s2 + $0x118] sm:$0xff]
    %v3074 = vld [vmem:[%s2 + $0x120] sm:$0xff]
    %v3075 = vld [vmem:[%s2 + $0x128] sm:$0xff]
    %v3076 = vld [vmem:[%s2 + $0x130] sm:$0xff]
    %v3077 = vld [vmem:[%s2 + $0x138] sm:$0xff]
    %v3078 = vld [vmem:[%s2 + $0x140] sm:$0xff]
    %v3079 = vld [vmem:[%s2 + $0x148] sm:$0xff]
    %v3080 = vld [vmem:[%s2 + $0x150] sm:$0xff]
    %v3081 = vld [vmem:[%s2 + $0x158] sm:$0xff]
    %v3082 = vld [vmem:[%s2 + $0x160] sm:$0xff]
    %v3083 = vld [vmem:[%s2 + $0x168] sm:$0xff]
    %v3084 = vld [vmem:[%s2 + $0x170] sm:$0xff]
    %v3085 = vld [vmem:[%s2 + $0x178] sm:$0xff]
    %v3086 = vld [vmem:[%s2 + $0x180] sm:$0xff]
    %v3087 = vld [vmem:[%s2 + $0x188] sm:$0xff]
    %v3088 = vld [vmem:[%s2 + $0x190] sm:$0xff]
    %v3089 = vld [vmem:[%s2 + $0x198] sm:$0xff]
    %v3090 = vld [vmem:[%s2 + $0x1a0] sm:$0xff]
    %v3091 = vld [vmem:[%s2 + $0x1a8] sm:$0xff]
    %v3092 = vld [vmem:[%s2 + $0x1b0] sm:$0xff]
    %v3093 = vld [vmem:[%s2 + $0x1b8] sm:$0xff]
    %v3094 = vld [vmem:[%s2 + $0x1c0] sm:$0xff]
    %v3095 = vld [vmem:[%s2 + $0x1c8] sm:$0xff]
    %v3096 = vld [vmem:[%s2 + $0x1d0] sm:$0xff]
    %v3097 = vld [vmem:[%s2 + $0x1d8] sm:$0xff]
    %v3098 = vld [vmem:[%s2 + $0x1e0] sm:$0xff]
    %v3099 = vld [vmem:[%s2 + $0x1e8] sm:$0xff]
    %v3100 = vld [vmem:[%s2 + $0x1f0] sm:$0xff]
    %v3101 = vld [vmem:[%s2 + $0x1f8] sm:$0xff]
    %3103 = vset.pattern.permute.xlu0 5
    %3104 = vperm.xlu0 %3103, %v3038
    %v3105 = vpop.permute.xlu0 %3104
    %3108 = vset.pattern.permute.xlu0 5
    %3109 = vperm.xlu0 %3108, %v3039
    %v3110 = vpop.permute.xlu0 %3109
    %3113 = vset.pattern.permute.xlu0 5
    %3114 = vperm.xlu0 %3113, %v3040
    %v3115 = vpop.permute.xlu0 %3114
    %3118 = vset.pattern.permute.xlu0 5
    %3119 = vperm.xlu0 %3118, %v3041
    %v3120 = vpop.permute.xlu0 %3119
    %3123 = vset.pattern.permute.xlu0 5
    %3124 = vperm.xlu0 %3123, %v3042
    %v3125 = vpop.permute.xlu0 %3124
    %3128 = vset.pattern.permute.xlu0 5
    %3129 = vperm.xlu0 %3128, %v3043
    %v3130 = vpop.permute.xlu0 %3129
    %3133 = vset.pattern.permute.xlu0 5
    %3134 = vperm.xlu0 %3133, %v3044
    %v3135 = vpop.permute.xlu0 %3134
    %3138 = vset.pattern.permute.xlu0 5
    %3139 = vperm.xlu0 %3138, %v3045
    %v3140 = vpop.permute.xlu0 %3139
    %3143 = vset.pattern.permute.xlu0 5
    %3144 = vperm.xlu0 %3143, %v3046
    %v3145 = vpop.permute.xlu0 %3144
    %3148 = vset.pattern.permute.xlu0 5
    %3149 = vperm.xlu0 %3148, %v3047
    %v3150 = vpop.permute.xlu0 %3149
    %3153 = vset.pattern.permute.xlu0 5
    %3154 = vperm.xlu0 %3153, %v3048
    %v3155 = vpop.permute.xlu0 %3154
    %3158 = vset.pattern.permute.xlu0 5
    %3159 = vperm.xlu0 %3158, %v3049
    %v3160 = vpop.permute.xlu0 %3159
    %3163 = vset.pattern.permute.xlu0 5
    %3164 = vperm.xlu0 %3163, %v3050
    %v3165 = vpop.permute.xlu0 %3164
    %3168 = vset.pattern.permute.xlu0 5
    %3169 = vperm.xlu0 %3168, %v3051
    %v3170 = vpop.permute.xlu0 %3169
    %3173 = vset.pattern.permute.xlu0 5
    %3174 = vperm.xlu0 %3173, %v3052
    %v3175 = vpop.permute.xlu0 %3174
    %3178 = vset.pattern.permute.xlu0 5
    %3179 = vperm.xlu0 %3178, %v3053
    %v3180 = vpop.permute.xlu0 %3179
    %3183 = vset.pattern.permute.xlu0 5
    %3184 = vperm.xlu0 %3183, %v3054
    %v3185 = vpop.permute.xlu0 %3184
    %3188 = vset.pattern.permute.xlu0 5
    %3189 = vperm.xlu0 %3188, %v3055
    %v3190 = vpop.permute.xlu0 %3189
    %3193 = vset.pattern.permute.xlu0 5
    %3194 = vperm.xlu0 %3193, %v3056
    %v3195 = vpop.permute.xlu0 %3194
    %3198 = vset.pattern.permute.xlu0 5
    %3199 = vperm.xlu0 %3198, %v3057
    %v3200 = vpop.permute.xlu0 %3199
    %3203 = vset.pattern.permute.xlu0 5
    %3204 = vperm.xlu0 %3203, %v3058
    %v3205 = vpop.permute.xlu0 %3204
    %3208 = vset.pattern.permute.xlu0 5
    %3209 = vperm.xlu0 %3208, %v3059
    %v3210 = vpop.permute.xlu0 %3209
    %3213 = vset.pattern.permute.xlu0 5
    %3214 = vperm.xlu0 %3213, %v3060
    %v3215 = vpop.permute.xlu0 %3214
    %3218 = vset.pattern.permute.xlu0 5
    %3219 = vperm.xlu0 %3218, %v3061
    %v3220 = vpop.permute.xlu0 %3219
    %3223 = vset.pattern.permute.xlu0 5
    %3224 = vperm.xlu0 %3223, %v3062
    %v3225 = vpop.permute.xlu0 %3224
    %3228 = vset.pattern.permute.xlu0 5
    %3229 = vperm.xlu0 %3228, %v3063
    %v3230 = vpop.permute.xlu0 %3229
    %3233 = vset.pattern.permute.xlu0 5
    %3234 = vperm.xlu0 %3233, %v3064
    %v3235 = vpop.permute.xlu0 %3234
    %3238 = vset.pattern.permute.xlu0 5
    %3239 = vperm.xlu0 %3238, %v3065
    %v3240 = vpop.permute.xlu0 %3239
    %3243 = vset.pattern.permute.xlu0 5
    %3244 = vperm.xlu0 %3243, %v3066
    %v3245 = vpop.permute.xlu0 %3244
    %3248 = vset.pattern.permute.xlu0 5
    %3249 = vperm.xlu0 %3248, %v3067
    %v3250 = vpop.permute.xlu0 %3249
    %3253 = vset.pattern.permute.xlu0 5
    %3254 = vperm.xlu0 %3253, %v3068
    %v3255 = vpop.permute.xlu0 %3254
    %3258 = vset.pattern.permute.xlu0 5
    %3259 = vperm.xlu0 %3258, %v3069
    %v3260 = vpop.permute.xlu0 %3259
    %3263 = vset.pattern.permute.xlu0 5
    %3264 = vperm.xlu0 %3263, %v3070
    %v3265 = vpop.permute.xlu0 %3264
    %3268 = vset.pattern.permute.xlu0 5
    %3269 = vperm.xlu0 %3268, %v3071
    %v3270 = vpop.permute.xlu0 %3269
    %3273 = vset.pattern.permute.xlu0 5
    %3274 = vperm.xlu0 %3273, %v3072
    %v3275 = vpop.permute.xlu0 %3274
    %3278 = vset.pattern.permute.xlu0 5
    %3279 = vperm.xlu0 %3278, %v3073
    %v3280 = vpop.permute.xlu0 %3279
    %3283 = vset.pattern.permute.xlu0 5
    %3284 = vperm.xlu0 %3283, %v3074
    %v3285 = vpop.permute.xlu0 %3284
    %3288 = vset.pattern.permute.xlu0 5
    %3289 = vperm.xlu0 %3288, %v3075
    %v3290 = vpop.permute.xlu0 %3289
    %3293 = vset.pattern.permute.xlu0 5
    %3294 = vperm.xlu0 %3293, %v3076
    %v3295 = vpop.permute.xlu0 %3294
    %3298 = vset.pattern.permute.xlu0 5
    %3299 = vperm.xlu0 %3298, %v3077
    %v3300 = vpop.permute.xlu0 %3299
    %3303 = vset.pattern.permute.xlu0 5
    %3304 = vperm.xlu0 %3303, %v3078
    %v3305 = vpop.permute.xlu0 %3304
    %3308 = vset.pattern.permute.xlu0 5
    %3309 = vperm.xlu0 %3308, %v3079
    %v3310 = vpop.permute.xlu0 %3309
    %3313 = vset.pattern.permute.xlu0 5
    %3314 = vperm.xlu0 %3313, %v3080
    %v3315 = vpop.permute.xlu0 %3314
    %3318 = vset.pattern.permute.xlu0 5
    %3319 = vperm.xlu0 %3318, %v3081
    %v3320 = vpop.permute.xlu0 %3319
    %3323 = vset.pattern.permute.xlu0 5
    %3324 = vperm.xlu0 %3323, %v3082
    %v3325 = vpop.permute.xlu0 %3324
    %3328 = vset.pattern.permute.xlu0 5
    %3329 = vperm.xlu0 %3328, %v3083
    %v3330 = vpop.permute.xlu0 %3329
    %3333 = vset.pattern.permute.xlu0 5
    %3334 = vperm.xlu0 %3333, %v3084
    %v3335 = vpop.permute.xlu0 %3334
    %3338 = vset.pattern.permute.xlu0 5
    %3339 = vperm.xlu0 %3338, %v3085
    %v3340 = vpop.permute.xlu0 %3339
    %3343 = vset.pattern.permute.xlu0 5
    %3344 = vperm.xlu0 %3343, %v3086
    %v3345 = vpop.permute.xlu0 %3344
    %3348 = vset.pattern.permute.xlu0 5
    %3349 = vperm.xlu0 %3348, %v3087
    %v3350 = vpop.permute.xlu0 %3349
    %3353 = vset.pattern.permute.xlu0 5
    %3354 = vperm.xlu0 %3353, %v3088
    %v3355 = vpop.permute.xlu0 %3354
    %3358 = vset.pattern.permute.xlu0 5
    %3359 = vperm.xlu0 %3358, %v3089
    %v3360 = vpop.permute.xlu0 %3359
    %3363 = vset.pattern.permute.xlu0 5
    %3364 = vperm.xlu0 %3363, %v3090
    %v3365 = vpop.permute.xlu0 %3364
    %3368 = vset.pattern.permute.xlu0 5
    %3369 = vperm.xlu0 %3368, %v3091
    %v3370 = vpop.permute.xlu0 %3369
    %3373 = vset.pattern.permute.xlu0 5
    %3374 = vperm.xlu0 %3373, %v3092
    %v3375 = vpop.permute.xlu0 %3374
    %3378 = vset.pattern.permute.xlu0 5
    %3379 = vperm.xlu0 %3378, %v3093
    %v3380 = vpop.permute.xlu0 %3379
    %3383 = vset.pattern.permute.xlu0 5
    %3384 = vperm.xlu0 %3383, %v3094
    %v3385 = vpop.permute.xlu0 %3384
    %3388 = vset.pattern.permute.xlu0 5
    %3389 = vperm.xlu0 %3388, %v3095
    %v3390 = vpop.permute.xlu0 %3389
    %3393 = vset.pattern.permute.xlu0 5
    %3394 = vperm.xlu0 %3393, %v3096
    %v3395 = vpop.permute.xlu0 %3394
    %3398 = vset.pattern.permute.xlu0 5
    %3399 = vperm.xlu0 %3398, %v3097
    %v3400 = vpop.permute.xlu0 %3399
    %3403 = vset.pattern.permute.xlu0 5
    %3404 = vperm.xlu0 %3403, %v3098
    %v3405 = vpop.permute.xlu0 %3404
    %3408 = vset.pattern.permute.xlu0 5
    %3409 = vperm.xlu0 %3408, %v3099
    %v3410 = vpop.permute.xlu0 %3409
    %3413 = vset.pattern.permute.xlu0 5
    %3414 = vperm.xlu0 %3413, %v3100
    %v3415 = vpop.permute.xlu0 %3414
    %3418 = vset.pattern.permute.xlu0 5
    %3419 = vperm.xlu0 %3418, %v3101
    %v3420 = vpop.permute.xlu0 %3419
    %v3422 = vmul.f32 %v1500, %v3105
    %v3423 = vmul.f32 %v1499, %v3110
    %v3424 = vmul.f32 %v1498, %v3115
    %v3425 = vmul.f32 %v1497, %v3120
    %v3426 = vmul.f32 %v1496, %v3125
    %v3427 = vmul.f32 %v1495, %v3130
    %v3428 = vmul.f32 %v1494, %v3135
    %v3429 = vmul.f32 %v1493, %v3140
    %v3430 = vmul.f32 %v1492, %v3145
    %v3431 = vmul.f32 %v1491, %v3150
    %v3432 = vmul.f32 %v1490, %v3155
    %v3433 = vmul.f32 %v1489, %v3160
    %v3434 = vmul.f32 %v1488, %v3165
    %v3435 = vmul.f32 %v1487, %v3170
    %v3436 = vmul.f32 %v1486, %v3175
    %v3437 = vmul.f32 %v1485, %v3180
    %v3438 = vmul.f32 %v1484, %v3185
    %v3439 = vmul.f32 %v1483, %v3190
    %v3440 = vmul.f32 %v1482, %v3195
    %v3441 = vmul.f32 %v1481, %v3200
    %v3442 = vmul.f32 %v1480, %v3205
    %v3443 = vmul.f32 %v1479, %v3210
    %v3444 = vmul.f32 %v1478, %v3215
    %v3445 = vmul.f32 %v1477, %v3220
    %v3446 = vmul.f32 %v1476, %v3225
    %v3447 = vmul.f32 %v1475, %v3230
    %v3448 = vmul.f32 %v1474, %v3235
    %v3449 = vmul.f32 %v1473, %v3240
    %v3450 = vmul.f32 %v1472, %v3245
    %v3451 = vmul.f32 %v1471, %v3250
    %v3452 = vmul.f32 %v1470, %v3255
    %v3453 = vmul.f32 %v1469, %v3260
    %v3454 = vmul.f32 %v1468, %v3265
    %v3455 = vmul.f32 %v1467, %v3270
    %v3456 = vmul.f32 %v1466, %v3275
    %v3457 = vmul.f32 %v1465, %v3280
    %v3458 = vmul.f32 %v1464, %v3285
    %v3459 = vmul.f32 %v1463, %v3290
    %v3460 = vmul.f32 %v1462, %v3295
    %v3461 = vmul.f32 %v1461, %v3300
    %v3462 = vmul.f32 %v1460, %v3305
    %v3463 = vmul.f32 %v1459, %v3310
    %v3464 = vmul.f32 %v1458, %v3315
    %v3465 = vmul.f32 %v1457, %v3320
    %v3466 = vmul.f32 %v1456, %v3325
    %v3467 = vmul.f32 %v1455, %v3330
    %v3468 = vmul.f32 %v1454, %v3335
    %v3469 = vmul.f32 %v1453, %v3340
    %v3470 = vmul.f32 %v1452, %v3345
    %v3471 = vmul.f32 %v1451, %v3350
    %v3472 = vmul.f32 %v1450, %v3355
    %v3473 = vmul.f32 %v1449, %v3360
    %v3474 = vmul.f32 %v1448, %v3365
    %v3475 = vmul.f32 %v1447, %v3370
    %v3476 = vmul.f32 %v1446, %v3375
    %v3477 = vmul.f32 %v1445, %v3380
    %v3478 = vmul.f32 %v1444, %v3385
    %v3479 = vmul.f32 %v1443, %v3390
    %v3480 = vmul.f32 %v1442, %v3395
    %v3481 = vmul.f32 %v1441, %v3400
    %v3482 = vmul.f32 %v1440, %v3405
    %v3483 = vmul.f32 %v1439, %v3410
    %v3484 = vmul.f32 %v1438, %v3415
    %v3485 = vmul.f32 %v1501, %v3420
    %v3486 = vpack.c.bf16 %v3423, %v3422
    %v3487 = vpack.c.bf16 %v3425, %v3424
    %v3488 = vpack.c.bf16 %v3427, %v3426
    %v3489 = vpack.c.bf16 %v3429, %v3428
    %v3490 = vpack.c.bf16 %v3431, %v3430
    %v3491 = vpack.c.bf16 %v3433, %v3432
    %v3492 = vpack.c.bf16 %v3435, %v3434
    %v3493 = vpack.c.bf16 %v3437, %v3436
    %v3494 = vpack.c.bf16 %v3439, %v3438
    %v3495 = vpack.c.bf16 %v3441, %v3440
    %v3496 = vpack.c.bf16 %v3443, %v3442
    %v3497 = vpack.c.bf16 %v3445, %v3444
    %v3498 = vpack.c.bf16 %v3447, %v3446
    %v3499 = vpack.c.bf16 %v3449, %v3448
    %v3500 = vpack.c.bf16 %v3451, %v3450
    %v3501 = vpack.c.bf16 %v3453, %v3452
    %v3502 = vpack.c.bf16 %v3455, %v3454
    %v3503 = vpack.c.bf16 %v3457, %v3456
    %v3504 = vpack.c.bf16 %v3459, %v3458
    %v3505 = vpack.c.bf16 %v3461, %v3460
    %v3506 = vpack.c.bf16 %v3463, %v3462
    %v3507 = vpack.c.bf16 %v3465, %v3464
    %v3508 = vpack.c.bf16 %v3467, %v3466
    %v3509 = vpack.c.bf16 %v3469, %v3468
    %v3510 = vpack.c.bf16 %v3471, %v3470
    %v3511 = vpack.c.bf16 %v3473, %v3472
    %v3512 = vpack.c.bf16 %v3475, %v3474
    %v3513 = vpack.c.bf16 %v3477, %v3476
    %v3514 = vpack.c.bf16 %v3479, %v3478
    %v3515 = vpack.c.bf16 %v3481, %v3480
    %v3516 = vpack.c.bf16 %v3483, %v3482
    %v3517 = vpack.c.bf16 %v3485, %v3484
    %3518 = vst [vmem:[#allocation2 + $0x28] sm:$0xff] %v3486
    %3519 = vst [vmem:[#allocation2 + $0x70] sm:$0xff] %v3487
    %3520 = vst [vmem:[#allocation2 + $0xb8] sm:$0xff] %v3488
    %3521 = vst [vmem:[#allocation2 + $0x100] sm:$0xff] %v3489
    %3522 = vst [vmem:[#allocation2 + $0x148] sm:$0xff] %v3490
    %3523 = vst [vmem:[#allocation2 + $0x190] sm:$0xff] %v3491
    %3524 = vst [vmem:[#allocation2 + $0x1d8] sm:$0xff] %v3492
    %3525 = vst [vmem:[#allocation2 + $0x220] sm:$0xff] %v3493
    %3526 = vst [vmem:[#allocation2 + $0x268] sm:$0xff] %v3494
    %3527 = vst [vmem:[#allocation2 + $0x2b0] sm:$0xff] %v3495
    %3528 = vst [vmem:[#allocation2 + $0x2f8] sm:$0xff] %v3496
    %3529 = vst [vmem:[#allocation2 + $0x340] sm:$0xff] %v3497
    %3530 = vst [vmem:[#allocation2 + $0x388] sm:$0xff] %v3498
    %3531 = vst [vmem:[#allocation2 + $0x3d0] sm:$0xff] %v3499
    %3532 = vst [vmem:[#allocation2 + $0x418] sm:$0xff] %v3500
    %3533 = vst [vmem:[#allocation2 + $0x460] sm:$0xff] %v3501
    %3534 = vst [vmem:[#allocation2 + $0x4a8] sm:$0xff] %v3502
    %3535 = vst [vmem:[#allocation2 + $0x4f0] sm:$0xff] %v3503
    %3536 = vst [vmem:[#allocation2 + $0x538] sm:$0xff] %v3504
    %3537 = vst [vmem:[#allocation2 + $0x580] sm:$0xff] %v3505
    %3538 = vst [vmem:[#allocation2 + $0x5c8] sm:$0xff] %v3506
    %3539 = vst [vmem:[#allocation2 + $0x610] sm:$0xff] %v3507
    %3540 = vst [vmem:[#allocation2 + $0x658] sm:$0xff] %v3508
    %3541 = vst [vmem:[#allocation2 + $0x6a0] sm:$0xff] %v3509
    %3542 = vst [vmem:[#allocation2 + $0x6e8] sm:$0xff] %v3510
    %3543 = vst [vmem:[#allocation2 + $0x730] sm:$0xff] %v3511
    %3544 = vst [vmem:[#allocation2 + $0x778] sm:$0xff] %v3512
    %3545 = vst [vmem:[#allocation2 + $0x7c0] sm:$0xff] %v3513
    %3546 = vst [vmem:[#allocation2 + $0x808] sm:$0xff] %v3514
    %3547 = vst [vmem:[#allocation2 + $0x850] sm:$0xff] %v3515
    %3548 = vst [vmem:[#allocation2 + $0x898] sm:$0xff] %v3516
    %3549 = vst [vmem:[#allocation2 + $0x8e0] sm:$0xff] %v3517
    %v3550 = vld [vmem:[%s2] sm:$0xff]
    %v3551 = vld [vmem:[%s2 + $0x8] sm:$0xff]
    %v3552 = vld [vmem:[%s2 + $0x10] sm:$0xff]
    %v3553 = vld [vmem:[%s2 + $0x18] sm:$0xff]
    %v3554 = vld [vmem:[%s2 + $0x20] sm:$0xff]
    %v3555 = vld [vmem:[%s2 + $0x28] sm:$0xff]
    %v3556 = vld [vmem:[%s2 + $0x30] sm:$0xff]
    %v3557 = vld [vmem:[%s2 + $0x38] sm:$0xff]
    %v3558 = vld [vmem:[%s2 + $0x40] sm:$0xff]
    %v3559 = vld [vmem:[%s2 + $0x48] sm:$0xff]
    %v3560 = vld [vmem:[%s2 + $0x50] sm:$0xff]
    %v3561 = vld [vmem:[%s2 + $0x58] sm:$0xff]
    %v3562 = vld [vmem:[%s2 + $0x60] sm:$0xff]
    %v3563 = vld [vmem:[%s2 + $0x68] sm:$0xff]
    %v3564 = vld [vmem:[%s2 + $0x70] sm:$0xff]
    %v3565 = vld [vmem:[%s2 + $0x78] sm:$0xff]
    %v3566 = vld [vmem:[%s2 + $0x80] sm:$0xff]
    %v3567 = vld [vmem:[%s2 + $0x88] sm:$0xff]
    %v3568 = vld [vmem:[%s2 + $0x90] sm:$0xff]
    %v3569 = vld [vmem:[%s2 + $0x98] sm:$0xff]
    %v3570 = vld [vmem:[%s2 + $0xa0] sm:$0xff]
    %v3571 = vld [vmem:[%s2 + $0xa8] sm:$0xff]
    %v3572 = vld [vmem:[%s2 + $0xb0] sm:$0xff]
    %v3573 = vld [vmem:[%s2 + $0xb8] sm:$0xff]
    %v3574 = vld [vmem:[%s2 + $0xc0] sm:$0xff]
    %v3575 = vld [vmem:[%s2 + $0xc8] sm:$0xff]
    %v3576 = vld [vmem:[%s2 + $0xd0] sm:$0xff]
    %v3577 = vld [vmem:[%s2 + $0xd8] sm:$0xff]
    %v3578 = vld [vmem:[%s2 + $0xe0] sm:$0xff]
    %v3579 = vld [vmem:[%s2 + $0xe8] sm:$0xff]
    %v3580 = vld [vmem:[%s2 + $0xf0] sm:$0xff]
    %v3581 = vld [vmem:[%s2 + $0xf8] sm:$0xff]
    %v3582 = vld [vmem:[%s2 + $0x100] sm:$0xff]
    %v3583 = vld [vmem:[%s2 + $0x108] sm:$0xff]
    %v3584 = vld [vmem:[%s2 + $0x110] sm:$0xff]
    %v3585 = vld [vmem:[%s2 + $0x118] sm:$0xff]
    %v3586 = vld [vmem:[%s2 + $0x120] sm:$0xff]
    %v3587 = vld [vmem:[%s2 + $0x128] sm:$0xff]
    %v3588 = vld [vmem:[%s2 + $0x130] sm:$0xff]
    %v3589 = vld [vmem:[%s2 + $0x138] sm:$0xff]
    %v3590 = vld [vmem:[%s2 + $0x140] sm:$0xff]
    %v3591 = vld [vmem:[%s2 + $0x148] sm:$0xff]
    %v3592 = vld [vmem:[%s2 + $0x150] sm:$0xff]
    %v3593 = vld [vmem:[%s2 + $0x158] sm:$0xff]
    %v3594 = vld [vmem:[%s2 + $0x160] sm:$0xff]
    %v3595 = vld [vmem:[%s2 + $0x168] sm:$0xff]
    %v3596 = vld [vmem:[%s2 + $0x170] sm:$0xff]
    %v3597 = vld [vmem:[%s2 + $0x178] sm:$0xff]
    %v3598 = vld [vmem:[%s2 + $0x180] sm:$0xff]
    %v3599 = vld [vmem:[%s2 + $0x188] sm:$0xff]
    %v3600 = vld [vmem:[%s2 + $0x190] sm:$0xff]
    %v3601 = vld [vmem:[%s2 + $0x198] sm:$0xff]
    %v3602 = vld [vmem:[%s2 + $0x1a0] sm:$0xff]
    %v3603 = vld [vmem:[%s2 + $0x1a8] sm:$0xff]
    %v3604 = vld [vmem:[%s2 + $0x1b0] sm:$0xff]
    %v3605 = vld [vmem:[%s2 + $0x1b8] sm:$0xff]
    %v3606 = vld [vmem:[%s2 + $0x1c0] sm:$0xff]
    %v3607 = vld [vmem:[%s2 + $0x1c8] sm:$0xff]
    %v3608 = vld [vmem:[%s2 + $0x1d0] sm:$0xff]
    %v3609 = vld [vmem:[%s2 + $0x1d8] sm:$0xff]
    %v3610 = vld [vmem:[%s2 + $0x1e0] sm:$0xff]
    %v3611 = vld [vmem:[%s2 + $0x1e8] sm:$0xff]
    %v3612 = vld [vmem:[%s2 + $0x1f0] sm:$0xff]
    %v3613 = vld [vmem:[%s2 + $0x1f8] sm:$0xff]
    %3615 = vset.pattern.permute.xlu0 6
    %3616 = vperm.xlu0 %3615, %v3550
    %v3617 = vpop.permute.xlu0 %3616
    %3620 = vset.pattern.permute.xlu0 6
    %3621 = vperm.xlu0 %3620, %v3551
    %v3622 = vpop.permute.xlu0 %3621
    %3625 = vset.pattern.permute.xlu0 6
    %3626 = vperm.xlu0 %3625, %v3552
    %v3627 = vpop.permute.xlu0 %3626
    %3630 = vset.pattern.permute.xlu0 6
    %3631 = vperm.xlu0 %3630, %v3553
    %v3632 = vpop.permute.xlu0 %3631
    %3635 = vset.pattern.permute.xlu0 6
    %3636 = vperm.xlu0 %3635, %v3554
    %v3637 = vpop.permute.xlu0 %3636
    %3640 = vset.pattern.permute.xlu0 6
    %3641 = vperm.xlu0 %3640, %v3555
    %v3642 = vpop.permute.xlu0 %3641
    %3645 = vset.pattern.permute.xlu0 6
    %3646 = vperm.xlu0 %3645, %v3556
    %v3647 = vpop.permute.xlu0 %3646
    %3650 = vset.pattern.permute.xlu0 6
    %3651 = vperm.xlu0 %3650, %v3557
    %v3652 = vpop.permute.xlu0 %3651
    %3655 = vset.pattern.permute.xlu0 6
    %3656 = vperm.xlu0 %3655, %v3558
    %v3657 = vpop.permute.xlu0 %3656
    %3660 = vset.pattern.permute.xlu0 6
    %3661 = vperm.xlu0 %3660, %v3559
    %v3662 = vpop.permute.xlu0 %3661
    %3665 = vset.pattern.permute.xlu0 6
    %3666 = vperm.xlu0 %3665, %v3560
    %v3667 = vpop.permute.xlu0 %3666
    %3670 = vset.pattern.permute.xlu0 6
    %3671 = vperm.xlu0 %3670, %v3561
    %v3672 = vpop.permute.xlu0 %3671
    %3675 = vset.pattern.permute.xlu0 6
    %3676 = vperm.xlu0 %3675, %v3562
    %v3677 = vpop.permute.xlu0 %3676
    %3680 = vset.pattern.permute.xlu0 6
    %3681 = vperm.xlu0 %3680, %v3563
    %v3682 = vpop.permute.xlu0 %3681
    %3685 = vset.pattern.permute.xlu0 6
    %3686 = vperm.xlu0 %3685, %v3564
    %v3687 = vpop.permute.xlu0 %3686
    %3690 = vset.pattern.permute.xlu0 6
    %3691 = vperm.xlu0 %3690, %v3565
    %v3692 = vpop.permute.xlu0 %3691
    %3695 = vset.pattern.permute.xlu0 6
    %3696 = vperm.xlu0 %3695, %v3566
    %v3697 = vpop.permute.xlu0 %3696
    %3700 = vset.pattern.permute.xlu0 6
    %3701 = vperm.xlu0 %3700, %v3567
    %v3702 = vpop.permute.xlu0 %3701
    %3705 = vset.pattern.permute.xlu0 6
    %3706 = vperm.xlu0 %3705, %v3568
    %v3707 = vpop.permute.xlu0 %3706
    %3710 = vset.pattern.permute.xlu0 6
    %3711 = vperm.xlu0 %3710, %v3569
    %v3712 = vpop.permute.xlu0 %3711
    %3715 = vset.pattern.permute.xlu0 6
    %3716 = vperm.xlu0 %3715, %v3570
    %v3717 = vpop.permute.xlu0 %3716
    %3720 = vset.pattern.permute.xlu0 6
    %3721 = vperm.xlu0 %3720, %v3571
    %v3722 = vpop.permute.xlu0 %3721
    %3725 = vset.pattern.permute.xlu0 6
    %3726 = vperm.xlu0 %3725, %v3572
    %v3727 = vpop.permute.xlu0 %3726
    %3730 = vset.pattern.permute.xlu0 6
    %3731 = vperm.xlu0 %3730, %v3573
    %v3732 = vpop.permute.xlu0 %3731
    %3735 = vset.pattern.permute.xlu0 6
    %3736 = vperm.xlu0 %3735, %v3574
    %v3737 = vpop.permute.xlu0 %3736
    %3740 = vset.pattern.permute.xlu0 6
    %3741 = vperm.xlu0 %3740, %v3575
    %v3742 = vpop.permute.xlu0 %3741
    %3745 = vset.pattern.permute.xlu0 6
    %3746 = vperm.xlu0 %3745, %v3576
    %v3747 = vpop.permute.xlu0 %3746
    %3750 = vset.pattern.permute.xlu0 6
    %3751 = vperm.xlu0 %3750, %v3577
    %v3752 = vpop.permute.xlu0 %3751
    %3755 = vset.pattern.permute.xlu0 6
    %3756 = vperm.xlu0 %3755, %v3578
    %v3757 = vpop.permute.xlu0 %3756
    %3760 = vset.pattern.permute.xlu0 6
    %3761 = vperm.xlu0 %3760, %v3579
    %v3762 = vpop.permute.xlu0 %3761
    %3765 = vset.pattern.permute.xlu0 6
    %3766 = vperm.xlu0 %3765, %v3580
    %v3767 = vpop.permute.xlu0 %3766
    %3770 = vset.pattern.permute.xlu0 6
    %3771 = vperm.xlu0 %3770, %v3581
    %v3772 = vpop.permute.xlu0 %3771
    %3775 = vset.pattern.permute.xlu0 6
    %3776 = vperm.xlu0 %3775, %v3582
    %v3777 = vpop.permute.xlu0 %3776
    %3780 = vset.pattern.permute.xlu0 6
    %3781 = vperm.xlu0 %3780, %v3583
    %v3782 = vpop.permute.xlu0 %3781
    %3785 = vset.pattern.permute.xlu0 6
    %3786 = vperm.xlu0 %3785, %v3584
    %v3787 = vpop.permute.xlu0 %3786
    %3790 = vset.pattern.permute.xlu0 6
    %3791 = vperm.xlu0 %3790, %v3585
    %v3792 = vpop.permute.xlu0 %3791
    %3795 = vset.pattern.permute.xlu0 6
    %3796 = vperm.xlu0 %3795, %v3586
    %v3797 = vpop.permute.xlu0 %3796
    %3800 = vset.pattern.permute.xlu0 6
    %3801 = vperm.xlu0 %3800, %v3587
    %v3802 = vpop.permute.xlu0 %3801
    %3805 = vset.pattern.permute.xlu0 6
    %3806 = vperm.xlu0 %3805, %v3588
    %v3807 = vpop.permute.xlu0 %3806
    %3810 = vset.pattern.permute.xlu0 6
    %3811 = vperm.xlu0 %3810, %v3589
    %v3812 = vpop.permute.xlu0 %3811
    %3815 = vset.pattern.permute.xlu0 6
    %3816 = vperm.xlu0 %3815, %v3590
    %v3817 = vpop.permute.xlu0 %3816
    %3820 = vset.pattern.permute.xlu0 6
    %3821 = vperm.xlu0 %3820, %v3591
    %v3822 = vpop.permute.xlu0 %3821
    %3825 = vset.pattern.permute.xlu0 6
    %3826 = vperm.xlu0 %3825, %v3592
    %v3827 = vpop.permute.xlu0 %3826
    %3830 = vset.pattern.permute.xlu0 6
    %3831 = vperm.xlu0 %3830, %v3593
    %v3832 = vpop.permute.xlu0 %3831
    %3835 = vset.pattern.permute.xlu0 6
    %3836 = vperm.xlu0 %3835, %v3594
    %v3837 = vpop.permute.xlu0 %3836
    %3840 = vset.pattern.permute.xlu0 6
    %3841 = vperm.xlu0 %3840, %v3595
    %v3842 = vpop.permute.xlu0 %3841
    %3845 = vset.pattern.permute.xlu0 6
    %3846 = vperm.xlu0 %3845, %v3596
    %v3847 = vpop.permute.xlu0 %3846
    %3850 = vset.pattern.permute.xlu0 6
    %3851 = vperm.xlu0 %3850, %v3597
    %v3852 = vpop.permute.xlu0 %3851
    %3855 = vset.pattern.permute.xlu0 6
    %3856 = vperm.xlu0 %3855, %v3598
    %v3857 = vpop.permute.xlu0 %3856
    %3860 = vset.pattern.permute.xlu0 6
    %3861 = vperm.xlu0 %3860, %v3599
    %v3862 = vpop.permute.xlu0 %3861
    %3865 = vset.pattern.permute.xlu0 6
    %3866 = vperm.xlu0 %3865, %v3600
    %v3867 = vpop.permute.xlu0 %3866
    %3870 = vset.pattern.permute.xlu0 6
    %3871 = vperm.xlu0 %3870, %v3601
    %v3872 = vpop.permute.xlu0 %3871
    %3875 = vset.pattern.permute.xlu0 6
    %3876 = vperm.xlu0 %3875, %v3602
    %v3877 = vpop.permute.xlu0 %3876
    %3880 = vset.pattern.permute.xlu0 6
    %3881 = vperm.xlu0 %3880, %v3603
    %v3882 = vpop.permute.xlu0 %3881
    %3885 = vset.pattern.permute.xlu0 6
    %3886 = vperm.xlu0 %3885, %v3604
    %v3887 = vpop.permute.xlu0 %3886
    %3890 = vset.pattern.permute.xlu0 6
    %3891 = vperm.xlu0 %3890, %v3605
    %v3892 = vpop.permute.xlu0 %3891
    %3895 = vset.pattern.permute.xlu0 6
    %3896 = vperm.xlu0 %3895, %v3606
    %v3897 = vpop.permute.xlu0 %3896
    %3900 = vset.pattern.permute.xlu0 6
    %3901 = vperm.xlu0 %3900, %v3607
    %v3902 = vpop.permute.xlu0 %3901
    %3905 = vset.pattern.permute.xlu0 6
    %3906 = vperm.xlu0 %3905, %v3608
    %v3907 = vpop.permute.xlu0 %3906
    %3910 = vset.pattern.permute.xlu0 6
    %3911 = vperm.xlu0 %3910, %v3609
    %v3912 = vpop.permute.xlu0 %3911
    %3915 = vset.pattern.permute.xlu0 6
    %3916 = vperm.xlu0 %3915, %v3610
    %v3917 = vpop.permute.xlu0 %3916
    %3920 = vset.pattern.permute.xlu0 6
    %3921 = vperm.xlu0 %3920, %v3611
    %v3922 = vpop.permute.xlu0 %3921
    %3925 = vset.pattern.permute.xlu0 6
    %3926 = vperm.xlu0 %3925, %v3612
    %v3927 = vpop.permute.xlu0 %3926
    %3930 = vset.pattern.permute.xlu0 6
    %3931 = vperm.xlu0 %3930, %v3613
    %v3932 = vpop.permute.xlu0 %3931
    %v3934 = vmul.f32 %v346, %v3617
    %v3935 = vmul.f32 %v345, %v3622
    %v3936 = vmul.f32 %v344, %v3627
    %v3937 = vmul.f32 %v343, %v3632
    %v3938 = vmul.f32 %v342, %v3637
    %v3939 = vmul.f32 %v341, %v3642
    %v3940 = vmul.f32 %v340, %v3647
    %v3941 = vmul.f32 %v339, %v3652
    %v3942 = vmul.f32 %v338, %v3657
    %v3943 = vmul.f32 %v337, %v3662
    %v3944 = vmul.f32 %v336, %v3667
    %v3945 = vmul.f32 %v335, %v3672
    %v3946 = vmul.f32 %v334, %v3677
    %v3947 = vmul.f32 %v333, %v3682
    %v3948 = vmul.f32 %v332, %v3687
    %v3949 = vmul.f32 %v331, %v3692
    %v3950 = vmul.f32 %v330, %v3697
    %v3951 = vmul.f32 %v329, %v3702
    %v3952 = vmul.f32 %v328, %v3707
    %v3953 = vmul.f32 %v327, %v3712
    %v3954 = vmul.f32 %v326, %v3717
    %v3955 = vmul.f32 %v325, %v3722
    %v3956 = vmul.f32 %v324, %v3727
    %v3957 = vmul.f32 %v323, %v3732
    %v3958 = vmul.f32 %v322, %v3737
    %v3959 = vmul.f32 %v321, %v3742
    %v3960 = vmul.f32 %v320, %v3747
    %v3961 = vmul.f32 %v319, %v3752
    %v3962 = vmul.f32 %v318, %v3757
    %v3963 = vmul.f32 %v317, %v3762
    %v3964 = vmul.f32 %v316, %v3767
    %v3965 = vmul.f32 %v315, %v3772
    %v3966 = vmul.f32 %v314, %v3777
    %v3967 = vmul.f32 %v313, %v3782
    %v3968 = vmul.f32 %v312, %v3787
    %v3969 = vmul.f32 %v311, %v3792
    %v3970 = vmul.f32 %v310, %v3797
    %v3971 = vmul.f32 %v309, %v3802
    %v3972 = vmul.f32 %v308, %v3807
    %v3973 = vmul.f32 %v307, %v3812
    %v3974 = vmul.f32 %v306, %v3817
    %v3975 = vmul.f32 %v305, %v3822
    %v3976 = vmul.f32 %v304, %v3827
    %v3977 = vmul.f32 %v303, %v3832
    %v3978 = vmul.f32 %v302, %v3837
    %v3979 = vmul.f32 %v301, %v3842
    %v3980 = vmul.f32 %v300, %v3847
    %v3981 = vmul.f32 %v299, %v3852
    %v3982 = vmul.f32 %v298, %v3857
    %v3983 = vmul.f32 %v297, %v3862
    %v3984 = vmul.f32 %v296, %v3867
    %v3985 = vmul.f32 %v295, %v3872
    %v3986 = vmul.f32 %v294, %v3877
    %v3987 = vmul.f32 %v293, %v3882
    %v3988 = vmul.f32 %v292, %v3887
    %v3989 = vmul.f32 %v291, %v3892
    %v3990 = vmul.f32 %v290, %v3897
    %v3991 = vmul.f32 %v289, %v3902
    %v3992 = vmul.f32 %v288, %v3907
    %v3993 = vmul.f32 %v287, %v3912
    %v3994 = vmul.f32 %v286, %v3917
    %v3995 = vmul.f32 %v285, %v3922
    %v3996 = vmul.f32 %v348, %v3927
    %v3997 = vmul.f32 %v347, %v3932
    %v3998 = vpack.c.bf16 %v3935, %v3934
    %v3999 = vpack.c.bf16 %v3937, %v3936
    %v4000 = vpack.c.bf16 %v3939, %v3938
    %v4001 = vpack.c.bf16 %v3941, %v3940
    %v4002 = vpack.c.bf16 %v3943, %v3942
    %v4003 = vpack.c.bf16 %v3945, %v3944
    %v4004 = vpack.c.bf16 %v3947, %v3946
    %v4005 = vpack.c.bf16 %v3949, %v3948
    %v4006 = vpack.c.bf16 %v3951, %v3950
    %v4007 = vpack.c.bf16 %v3953, %v3952
    %v4008 = vpack.c.bf16 %v3955, %v3954
    %v4009 = vpack.c.bf16 %v3957, %v3956
    %v4010 = vpack.c.bf16 %v3959, %v3958
    %v4011 = vpack.c.bf16 %v3961, %v3960
    %v4012 = vpack.c.bf16 %v3963, %v3962
    %v4013 = vpack.c.bf16 %v3965, %v3964
    %v4014 = vpack.c.bf16 %v3967, %v3966
    %v4015 = vpack.c.bf16 %v3969, %v3968
    %v4016 = vpack.c.bf16 %v3971, %v3970
    %v4017 = vpack.c.bf16 %v3973, %v3972
    %v4018 = vpack.c.bf16 %v3975, %v3974
    %v4019 = vpack.c.bf16 %v3977, %v3976
    %v4020 = vpack.c.bf16 %v3979, %v3978
    %v4021 = vpack.c.bf16 %v3981, %v3980
    %v4022 = vpack.c.bf16 %v3983, %v3982
    %v4023 = vpack.c.bf16 %v3985, %v3984
    %v4024 = vpack.c.bf16 %v3987, %v3986
    %v4025 = vpack.c.bf16 %v3989, %v3988
    %v4026 = vpack.c.bf16 %v3991, %v3990
    %v4027 = vpack.c.bf16 %v3993, %v3992
    %v4028 = vpack.c.bf16 %v3995, %v3994
    %v4029 = vpack.c.bf16 %v3997, %v3996
    %4030 = vst [vmem:[#allocation2 + $0x30] sm:$0xff] %v3998
    %4031 = vst [vmem:[#allocation2 + $0x78] sm:$0xff] %v3999
    %4032 = vst [vmem:[#allocation2 + $0xc0] sm:$0xff] %v4000
    %4033 = vst [vmem:[#allocation2 + $0x108] sm:$0xff] %v4001
    %4034 = vst [vmem:[#allocation2 + $0x150] sm:$0xff] %v4002
    %4035 = vst [vmem:[#allocation2 + $0x198] sm:$0xff] %v4003
    %4036 = vst [vmem:[#allocation2 + $0x1e0] sm:$0xff] %v4004
    %4037 = vst [vmem:[#allocation2 + $0x228] sm:$0xff] %v4005
    %4038 = vst [vmem:[#allocation2 + $0x270] sm:$0xff] %v4006
    %4039 = vst [vmem:[#allocation2 + $0x2b8] sm:$0xff] %v4007
    %4040 = vst [vmem:[#allocation2 + $0x300] sm:$0xff] %v4008
    %4041 = vst [vmem:[#allocation2 + $0x348] sm:$0xff] %v4009
    %4042 = vst [vmem:[#allocation2 + $0x390] sm:$0xff] %v4010
    %4043 = vst [vmem:[#allocation2 + $0x3d8] sm:$0xff] %v4011
    %4044 = vst [vmem:[#allocation2 + $0x420] sm:$0xff] %v4012
    %4045 = vst [vmem:[#allocation2 + $0x468] sm:$0xff] %v4013
    %4046 = vst [vmem:[#allocation2 + $0x4b0] sm:$0xff] %v4014
    %4047 = vst [vmem:[#allocation2 + $0x4f8] sm:$0xff] %v4015
    %4048 = vst [vmem:[#allocation2 + $0x540] sm:$0xff] %v4016
    %4049 = vst [vmem:[#allocation2 + $0x588] sm:$0xff] %v4017
    %4050 = vst [vmem:[#allocation2 + $0x5d0] sm:$0xff] %v4018
    %4051 = vst [vmem:[#allocation2 + $0x618] sm:$0xff] %v4019
    %4052 = vst [vmem:[#allocation2 + $0x660] sm:$0xff] %v4020
    %4053 = vst [vmem:[#allocation2 + $0x6a8] sm:$0xff] %v4021
    %4054 = vst [vmem:[#allocation2 + $0x6f0] sm:$0xff] %v4022
    %4055 = vst [vmem:[#allocation2 + $0x738] sm:$0xff] %v4023
    %4056 = vst [vmem:[#allocation2 + $0x780] sm:$0xff] %v4024
    %4057 = vst [vmem:[#allocation2 + $0x7c8] sm:$0xff] %v4025
    %4058 = vst [vmem:[#allocation2 + $0x810] sm:$0xff] %v4026
    %4059 = vst [vmem:[#allocation2 + $0x858] sm:$0xff] %v4027
    %4060 = vst [vmem:[#allocation2 + $0x8a0] sm:$0xff] %v4028
    %4061 = vst [vmem:[#allocation2 + $0x8e8] sm:$0xff] %v4029
    %v4062 = vld [vmem:[%s2] sm:$0xff]
    %v4063 = vld [vmem:[%s2 + $0x8] sm:$0xff]
    %v4064 = vld [vmem:[%s2 + $0x10] sm:$0xff]
    %v4065 = vld [vmem:[%s2 + $0x18] sm:$0xff]
    %v4066 = vld [vmem:[%s2 + $0x20] sm:$0xff]
    %v4067 = vld [vmem:[%s2 + $0x28] sm:$0xff]
    %v4068 = vld [vmem:[%s2 + $0x30] sm:$0xff]
    %v4069 = vld [vmem:[%s2 + $0x38] sm:$0xff]
    %v4070 = vld [vmem:[%s2 + $0x40] sm:$0xff]
    %v4071 = vld [vmem:[%s2 + $0x48] sm:$0xff]
    %v4072 = vld [vmem:[%s2 + $0x50] sm:$0xff]
    %v4073 = vld [vmem:[%s2 + $0x58] sm:$0xff]
    %v4074 = vld [vmem:[%s2 + $0x60] sm:$0xff]
    %v4075 = vld [vmem:[%s2 + $0x68] sm:$0xff]
    %v4076 = vld [vmem:[%s2 + $0x70] sm:$0xff]
    %v4077 = vld [vmem:[%s2 + $0x78] sm:$0xff]
    %v4078 = vld [vmem:[%s2 + $0x80] sm:$0xff]
    %v4079 = vld [vmem:[%s2 + $0x88] sm:$0xff]
    %v4080 = vld [vmem:[%s2 + $0x90] sm:$0xff]
    %v4081 = vld [vmem:[%s2 + $0x98] sm:$0xff]
    %v4082 = vld [vmem:[%s2 + $0xa0] sm:$0xff]
    %v4083 = vld [vmem:[%s2 + $0xa8] sm:$0xff]
    %v4084 = vld [vmem:[%s2 + $0xb0] sm:$0xff]
    %v4085 = vld [vmem:[%s2 + $0xb8] sm:$0xff]
    %v4086 = vld [vmem:[%s2 + $0xc0] sm:$0xff]
    %v4087 = vld [vmem:[%s2 + $0xc8] sm:$0xff]
    %v4088 = vld [vmem:[%s2 + $0xd0] sm:$0xff]
    %v4089 = vld [vmem:[%s2 + $0xd8] sm:$0xff]
    %v4090 = vld [vmem:[%s2 + $0xe0] sm:$0xff]
    %v4091 = vld [vmem:[%s2 + $0xe8] sm:$0xff]
    %v4092 = vld [vmem:[%s2 + $0xf0] sm:$0xff]
    %v4093 = vld [vmem:[%s2 + $0xf8] sm:$0xff]
    %v4094 = vld [vmem:[%s2 + $0x100] sm:$0xff]
    %v4095 = vld [vmem:[%s2 + $0x108] sm:$0xff]
    %v4096 = vld [vmem:[%s2 + $0x110] sm:$0xff]
    %v4097 = vld [vmem:[%s2 + $0x118] sm:$0xff]
    %v4098 = vld [vmem:[%s2 + $0x120] sm:$0xff]
    %v4099 = vld [vmem:[%s2 + $0x128] sm:$0xff]
    %v4100 = vld [vmem:[%s2 + $0x130] sm:$0xff]
    %v4101 = vld [vmem:[%s2 + $0x138] sm:$0xff]
    %v4102 = vld [vmem:[%s2 + $0x140] sm:$0xff]
    %v4103 = vld [vmem:[%s2 + $0x148] sm:$0xff]
    %v4104 = vld [vmem:[%s2 + $0x150] sm:$0xff]
    %v4105 = vld [vmem:[%s2 + $0x158] sm:$0xff]
    %v4106 = vld [vmem:[%s2 + $0x160] sm:$0xff]
    %v4107 = vld [vmem:[%s2 + $0x168] sm:$0xff]
    %v4108 = vld [vmem:[%s2 + $0x170] sm:$0xff]
    %v4109 = vld [vmem:[%s2 + $0x178] sm:$0xff]
    %v4110 = vld [vmem:[%s2 + $0x180] sm:$0xff]
    %v4111 = vld [vmem:[%s2 + $0x188] sm:$0xff]
    %v4112 = vld [vmem:[%s2 + $0x190] sm:$0xff]
    %v4113 = vld [vmem:[%s2 + $0x198] sm:$0xff]
    %v4114 = vld [vmem:[%s2 + $0x1a0] sm:$0xff]
    %v4115 = vld [vmem:[%s2 + $0x1a8] sm:$0xff]
    %v4116 = vld [vmem:[%s2 + $0x1b0] sm:$0xff]
    %v4117 = vld [vmem:[%s2 + $0x1b8] sm:$0xff]
    %v4118 = vld [vmem:[%s2 + $0x1c0] sm:$0xff]
    %v4119 = vld [vmem:[%s2 + $0x1c8] sm:$0xff]
    %v4120 = vld [vmem:[%s2 + $0x1d0] sm:$0xff]
    %v4121 = vld [vmem:[%s2 + $0x1d8] sm:$0xff]
    %v4122 = vld [vmem:[%s2 + $0x1e0] sm:$0xff]
    %v4123 = vld [vmem:[%s2 + $0x1e8] sm:$0xff]
    %v4124 = vld [vmem:[%s2 + $0x1f0] sm:$0xff]
    %v4125 = vld [vmem:[%s2 + $0x1f8] sm:$0xff]
    %4127 = vset.pattern.permute.xlu0 7
    %4128 = vperm.xlu0 %4127, %v4062
    %v4129 = vpop.permute.xlu0 %4128
    %4132 = vset.pattern.permute.xlu0 7
    %4133 = vperm.xlu0 %4132, %v4063
    %v4134 = vpop.permute.xlu0 %4133
    %4137 = vset.pattern.permute.xlu0 7
    %4138 = vperm.xlu0 %4137, %v4064
    %v4139 = vpop.permute.xlu0 %4138
    %4142 = vset.pattern.permute.xlu0 7
    %4143 = vperm.xlu0 %4142, %v4065
    %v4144 = vpop.permute.xlu0 %4143
    %4147 = vset.pattern.permute.xlu0 7
    %4148 = vperm.xlu0 %4147, %v4066
    %v4149 = vpop.permute.xlu0 %4148
    %4152 = vset.pattern.permute.xlu0 7
    %4153 = vperm.xlu0 %4152, %v4067
    %v4154 = vpop.permute.xlu0 %4153
    %4157 = vset.pattern.permute.xlu0 7
    %4158 = vperm.xlu0 %4157, %v4068
    %v4159 = vpop.permute.xlu0 %4158
    %4162 = vset.pattern.permute.xlu0 7
    %4163 = vperm.xlu0 %4162, %v4069
    %v4164 = vpop.permute.xlu0 %4163
    %4167 = vset.pattern.permute.xlu0 7
    %4168 = vperm.xlu0 %4167, %v4070
    %v4169 = vpop.permute.xlu0 %4168
    %4172 = vset.pattern.permute.xlu0 7
    %4173 = vperm.xlu0 %4172, %v4071
    %v4174 = vpop.permute.xlu0 %4173
    %4177 = vset.pattern.permute.xlu0 7
    %4178 = vperm.xlu0 %4177, %v4072
    %v4179 = vpop.permute.xlu0 %4178
    %4182 = vset.pattern.permute.xlu0 7
    %4183 = vperm.xlu0 %4182, %v4073
    %v4184 = vpop.permute.xlu0 %4183
    %4187 = vset.pattern.permute.xlu0 7
    %4188 = vperm.xlu0 %4187, %v4074
    %v4189 = vpop.permute.xlu0 %4188
    %4192 = vset.pattern.permute.xlu0 7
    %4193 = vperm.xlu0 %4192, %v4075
    %v4194 = vpop.permute.xlu0 %4193
    %4197 = vset.pattern.permute.xlu0 7
    %4198 = vperm.xlu0 %4197, %v4076
    %v4199 = vpop.permute.xlu0 %4198
    %4202 = vset.pattern.permute.xlu0 7
    %4203 = vperm.xlu0 %4202, %v4077
    %v4204 = vpop.permute.xlu0 %4203
    %4207 = vset.pattern.permute.xlu0 7
    %4208 = vperm.xlu0 %4207, %v4078
    %v4209 = vpop.permute.xlu0 %4208
    %4212 = vset.pattern.permute.xlu0 7
    %4213 = vperm.xlu0 %4212, %v4079
    %v4214 = vpop.permute.xlu0 %4213
    %4217 = vset.pattern.permute.xlu0 7
    %4218 = vperm.xlu0 %4217, %v4080
    %v4219 = vpop.permute.xlu0 %4218
    %4222 = vset.pattern.permute.xlu0 7
    %4223 = vperm.xlu0 %4222, %v4081
    %v4224 = vpop.permute.xlu0 %4223
    %4227 = vset.pattern.permute.xlu0 7
    %4228 = vperm.xlu0 %4227, %v4082
    %v4229 = vpop.permute.xlu0 %4228
    %4232 = vset.pattern.permute.xlu0 7
    %4233 = vperm.xlu0 %4232, %v4083
    %v4234 = vpop.permute.xlu0 %4233
    %4237 = vset.pattern.permute.xlu0 7
    %4238 = vperm.xlu0 %4237, %v4084
    %v4239 = vpop.permute.xlu0 %4238
    %4242 = vset.pattern.permute.xlu0 7
    %4243 = vperm.xlu0 %4242, %v4085
    %v4244 = vpop.permute.xlu0 %4243
    %4247 = vset.pattern.permute.xlu0 7
    %4248 = vperm.xlu0 %4247, %v4086
    %v4249 = vpop.permute.xlu0 %4248
    %4252 = vset.pattern.permute.xlu0 7
    %4253 = vperm.xlu0 %4252, %v4087
    %v4254 = vpop.permute.xlu0 %4253
    %4257 = vset.pattern.permute.xlu0 7
    %4258 = vperm.xlu0 %4257, %v4088
    %v4259 = vpop.permute.xlu0 %4258
    %4262 = vset.pattern.permute.xlu0 7
    %4263 = vperm.xlu0 %4262, %v4089
    %v4264 = vpop.permute.xlu0 %4263
    %4267 = vset.pattern.permute.xlu0 7
    %4268 = vperm.xlu0 %4267, %v4090
    %v4269 = vpop.permute.xlu0 %4268
    %4272 = vset.pattern.permute.xlu0 7
    %4273 = vperm.xlu0 %4272, %v4091
    %v4274 = vpop.permute.xlu0 %4273
    %4277 = vset.pattern.permute.xlu0 7
    %4278 = vperm.xlu0 %4277, %v4092
    %v4279 = vpop.permute.xlu0 %4278
    %4282 = vset.pattern.permute.xlu0 7
    %4283 = vperm.xlu0 %4282, %v4093
    %v4284 = vpop.permute.xlu0 %4283
    %4287 = vset.pattern.permute.xlu0 7
    %4288 = vperm.xlu0 %4287, %v4094
    %v4289 = vpop.permute.xlu0 %4288
    %4292 = vset.pattern.permute.xlu0 7
    %4293 = vperm.xlu0 %4292, %v4095
    %v4294 = vpop.permute.xlu0 %4293
    %4297 = vset.pattern.permute.xlu0 7
    %4298 = vperm.xlu0 %4297, %v4096
    %v4299 = vpop.permute.xlu0 %4298
    %4302 = vset.pattern.permute.xlu0 7
    %4303 = vperm.xlu0 %4302, %v4097
    %v4304 = vpop.permute.xlu0 %4303
    %4307 = vset.pattern.permute.xlu0 7
    %4308 = vperm.xlu0 %4307, %v4098
    %v4309 = vpop.permute.xlu0 %4308
    %4312 = vset.pattern.permute.xlu0 7
    %4313 = vperm.xlu0 %4312, %v4099
    %v4314 = vpop.permute.xlu0 %4313
    %4317 = vset.pattern.permute.xlu0 7
    %4318 = vperm.xlu0 %4317, %v4100
    %v4319 = vpop.permute.xlu0 %4318
    %4322 = vset.pattern.permute.xlu0 7
    %4323 = vperm.xlu0 %4322, %v4101
    %v4324 = vpop.permute.xlu0 %4323
    %4327 = vset.pattern.permute.xlu0 7
    %4328 = vperm.xlu0 %4327, %v4102
    %v4329 = vpop.permute.xlu0 %4328
    %4332 = vset.pattern.permute.xlu0 7
    %4333 = vperm.xlu0 %4332, %v4103
    %v4334 = vpop.permute.xlu0 %4333
    %4337 = vset.pattern.permute.xlu0 7
    %4338 = vperm.xlu0 %4337, %v4104
    %v4339 = vpop.permute.xlu0 %4338
    %4342 = vset.pattern.permute.xlu0 7
    %4343 = vperm.xlu0 %4342, %v4105
    %v4344 = vpop.permute.xlu0 %4343
    %4347 = vset.pattern.permute.xlu0 7
    %4348 = vperm.xlu0 %4347, %v4106
    %v4349 = vpop.permute.xlu0 %4348
    %4352 = vset.pattern.permute.xlu0 7
    %4353 = vperm.xlu0 %4352, %v4107
    %v4354 = vpop.permute.xlu0 %4353
    %4357 = vset.pattern.permute.xlu0 7
    %4358 = vperm.xlu0 %4357, %v4108
    %v4359 = vpop.permute.xlu0 %4358
    %4362 = vset.pattern.permute.xlu0 7
    %4363 = vperm.xlu0 %4362, %v4109
    %v4364 = vpop.permute.xlu0 %4363
    %4367 = vset.pattern.permute.xlu0 7
    %4368 = vperm.xlu0 %4367, %v4110
    %v4369 = vpop.permute.xlu0 %4368
    %4372 = vset.pattern.permute.xlu0 7
    %4373 = vperm.xlu0 %4372, %v4111
    %v4374 = vpop.permute.xlu0 %4373
    %4377 = vset.pattern.permute.xlu0 7
    %4378 = vperm.xlu0 %4377, %v4112
    %v4379 = vpop.permute.xlu0 %4378
    %4382 = vset.pattern.permute.xlu0 7
    %4383 = vperm.xlu0 %4382, %v4113
    %v4384 = vpop.permute.xlu0 %4383
    %4387 = vset.pattern.permute.xlu0 7
    %4388 = vperm.xlu0 %4387, %v4114
    %v4389 = vpop.permute.xlu0 %4388
    %4392 = vset.pattern.permute.xlu0 7
    %4393 = vperm.xlu0 %4392, %v4115
    %v4394 = vpop.permute.xlu0 %4393
    %4397 = vset.pattern.permute.xlu0 7
    %4398 = vperm.xlu0 %4397, %v4116
    %v4399 = vpop.permute.xlu0 %4398
    %4402 = vset.pattern.permute.xlu0 7
    %4403 = vperm.xlu0 %4402, %v4117
    %v4404 = vpop.permute.xlu0 %4403
    %4407 = vset.pattern.permute.xlu0 7
    %4408 = vperm.xlu0 %4407, %v4118
    %v4409 = vpop.permute.xlu0 %4408
    %4412 = vset.pattern.permute.xlu0 7
    %4413 = vperm.xlu0 %4412, %v4119
    %v4414 = vpop.permute.xlu0 %4413
    %4417 = vset.pattern.permute.xlu0 7
    %4418 = vperm.xlu0 %4417, %v4120
    %v4419 = vpop.permute.xlu0 %4418
    %4422 = vset.pattern.permute.xlu0 7
    %4423 = vperm.xlu0 %4422, %v4121
    %v4424 = vpop.permute.xlu0 %4423
    %4427 = vset.pattern.permute.xlu0 7
    %4428 = vperm.xlu0 %4427, %v4122
    %v4429 = vpop.permute.xlu0 %4428
    %4432 = vset.pattern.permute.xlu0 7
    %4433 = vperm.xlu0 %4432, %v4123
    %v4434 = vpop.permute.xlu0 %4433
    %4437 = vset.pattern.permute.xlu0 7
    %4438 = vperm.xlu0 %4437, %v4124
    %v4439 = vpop.permute.xlu0 %4438
    %4442 = vset.pattern.permute.xlu0 7
    %4443 = vperm.xlu0 %4442, %v4125
    %v4444 = vpop.permute.xlu0 %4443
    %v4446 = vmul.f32 %v156, %v4129
    %v4447 = vmul.f32 %v157, %v4134
    %v4448 = vmul.f32 %v158, %v4139
    %v4449 = vmul.f32 %v159, %v4144
    %v4450 = vmul.f32 %v160, %v4149
    %v4451 = vmul.f32 %v161, %v4154
    %v4452 = vmul.f32 %v162, %v4159
    %v4453 = vmul.f32 %v163, %v4164
    %v4454 = vmul.f32 %v164, %v4169
    %v4455 = vmul.f32 %v165, %v4174
    %v4456 = vmul.f32 %v166, %v4179
    %v4457 = vmul.f32 %v167, %v4184
    %v4458 = vmul.f32 %v168, %v4189
    %v4459 = vmul.f32 %v169, %v4194
    %v4460 = vmul.f32 %v170, %v4199
    %v4461 = vmul.f32 %v171, %v4204
    %v4462 = vmul.f32 %v172, %v4209
    %v4463 = vmul.f32 %v173, %v4214
    %v4464 = vmul.f32 %v174, %v4219
    %v4465 = vmul.f32 %v175, %v4224
    %v4466 = vmul.f32 %v176, %v4229
    %v4467 = vmul.f32 %v177, %v4234
    %v4468 = vmul.f32 %v178, %v4239
    %v4469 = vmul.f32 %v179, %v4244
    %v4470 = vmul.f32 %v180, %v4249
    %v4471 = vmul.f32 %v181, %v4254
    %v4472 = vmul.f32 %v182, %v4259
    %v4473 = vmul.f32 %v183, %v4264
    %v4474 = vmul.f32 %v184, %v4269
    %v4475 = vmul.f32 %v185, %v4274
    %v4476 = vmul.f32 %v186, %v4279
    %v4477 = vmul.f32 %v187, %v4284
    %v4478 = vmul.f32 %v188, %v4289
    %v4479 = vmul.f32 %v189, %v4294
    %v4480 = vmul.f32 %v190, %v4299
    %v4481 = vmul.f32 %v191, %v4304
    %v4482 = vmul.f32 %v192, %v4309
    %v4483 = vmul.f32 %v193, %v4314
    %v4484 = vmul.f32 %v194, %v4319
    %v4485 = vmul.f32 %v195, %v4324
    %v4486 = vmul.f32 %v196, %v4329
    %v4487 = vmul.f32 %v197, %v4334
    %v4488 = vmul.f32 %v198, %v4339
    %v4489 = vmul.f32 %v199, %v4344
    %v4490 = vmul.f32 %v200, %v4349
    %v4491 = vmul.f32 %v201, %v4354
    %v4492 = vmul.f32 %v202, %v4359
    %v4493 = vmul.f32 %v203, %v4364
    %v4494 = vmul.f32 %v204, %v4369
    %v4495 = vmul.f32 %v205, %v4374
    %v4496 = vmul.f32 %v206, %v4379
    %v4497 = vmul.f32 %v207, %v4384
    %v4498 = vmul.f32 %v208, %v4389
    %v4499 = vmul.f32 %v209, %v4394
    %v4500 = vmul.f32 %v210, %v4399
    %v4501 = vmul.f32 %v211, %v4404
    %v4502 = vmul.f32 %v212, %v4409
    %v4503 = vmul.f32 %v213, %v4414
    %v4504 = vmul.f32 %v214, %v4419
    %v4505 = vmul.f32 %v215, %v4424
    %v4506 = vmul.f32 %v216, %v4429
    %v4507 = vmul.f32 %v217, %v4434
    %v4508 = vmul.f32 %v154, %v4439
    %v4509 = vmul.f32 %v155, %v4444
    %v4510 = vpack.c.bf16 %v4447, %v4446
    %v4511 = vpack.c.bf16 %v4449, %v4448
    %v4512 = vpack.c.bf16 %v4451, %v4450
    %v4513 = vpack.c.bf16 %v4453, %v4452
    %v4514 = vpack.c.bf16 %v4455, %v4454
    %v4515 = vpack.c.bf16 %v4457, %v4456
    %v4516 = vpack.c.bf16 %v4459, %v4458
    %v4517 = vpack.c.bf16 %v4461, %v4460
    %v4518 = vpack.c.bf16 %v4463, %v4462
    %v4519 = vpack.c.bf16 %v4465, %v4464
    %v4520 = vpack.c.bf16 %v4467, %v4466
    %v4521 = vpack.c.bf16 %v4469, %v4468
    %v4522 = vpack.c.bf16 %v4471, %v4470
    %v4523 = vpack.c.bf16 %v4473, %v4472
    %v4524 = vpack.c.bf16 %v4475, %v4474
    %v4525 = vpack.c.bf16 %v4477, %v4476
    %v4526 = vpack.c.bf16 %v4479, %v4478
    %v4527 = vpack.c.bf16 %v4481, %v4480
    %v4528 = vpack.c.bf16 %v4483, %v4482
    %v4529 = vpack.c.bf16 %v4485, %v4484
    %v4530 = vpack.c.bf16 %v4487, %v4486
    %v4531 = vpack.c.bf16 %v4489, %v4488
    %v4532 = vpack.c.bf16 %v4491, %v4490
    %v4533 = vpack.c.bf16 %v4493, %v4492
    %v4534 = vpack.c.bf16 %v4495, %v4494
    %v4535 = vpack.c.bf16 %v4497, %v4496
    %v4536 = vpack.c.bf16 %v4499, %v4498
    %v4537 = vpack.c.bf16 %v4501, %v4500
    %v4538 = vpack.c.bf16 %v4503, %v4502
    %v4539 = vpack.c.bf16 %v4505, %v4504
    %v4540 = vpack.c.bf16 %v4507, %v4506
    %v4541 = vpack.c.bf16 %v4509, %v4508
    %4542 = vst [vmem:[#allocation2 + $0x38] sm:$0xff] %v4510
    %4543 = vst [vmem:[#allocation2 + $0x80] sm:$0xff] %v4511
    %4544 = vst [vmem:[#allocation2 + $0xc8] sm:$0xff] %v4512
    %4545 = vst [vmem:[#allocation2 + $0x110] sm:$0xff] %v4513
    %4546 = vst [vmem:[#allocation2 + $0x158] sm:$0xff] %v4514
    %4547 = vst [vmem:[#allocation2 + $0x1a0] sm:$0xff] %v4515
    %4548 = vst [vmem:[#allocation2 + $0x1e8] sm:$0xff] %v4516
    %4549 = vst [vmem:[#allocation2 + $0x230] sm:$0xff] %v4517
    %4550 = vst [vmem:[#allocation2 + $0x278] sm:$0xff] %v4518
    %4551 = vst [vmem:[#allocation2 + $0x2c0] sm:$0xff] %v4519
    %4552 = vst [vmem:[#allocation2 + $0x308] sm:$0xff] %v4520
    %4553 = vst [vmem:[#allocation2 + $0x350] sm:$0xff] %v4521
    %4554 = vst [vmem:[#allocation2 + $0x398] sm:$0xff] %v4522
    %4555 = vst [vmem:[#allocation2 + $0x3e0] sm:$0xff] %v4523
    %4556 = vst [vmem:[#allocation2 + $0x428] sm:$0xff] %v4524
    %4557 = vst [vmem:[#allocation2 + $0x470] sm:$0xff] %v4525
    %4558 = vst [vmem:[#allocation2 + $0x4b8] sm:$0xff] %v4526
    %4559 = vst [vmem:[#allocation2 + $0x500] sm:$0xff] %v4527
    %4560 = vst [vmem:[#allocation2 + $0x548] sm:$0xff] %v4528
    %4561 = vst [vmem:[#allocation2 + $0x590] sm:$0xff] %v4529
    %4562 = vst [vmem:[#allocation2 + $0x5d8] sm:$0xff] %v4530
    %4563 = vst [vmem:[#allocation2 + $0x620] sm:$0xff] %v4531
    %4564 = vst [vmem:[#allocation2 + $0x668] sm:$0xff] %v4532
    %4565 = vst [vmem:[#allocation2 + $0x6b0] sm:$0xff] %v4533
    %4566 = vst [vmem:[#allocation2 + $0x6f8] sm:$0xff] %v4534
    %4567 = vst [vmem:[#allocation2 + $0x740] sm:$0xff] %v4535
    %4568 = vst [vmem:[#allocation2 + $0x788] sm:$0xff] %v4536
    %4569 = vst [vmem:[#allocation2 + $0x7d0] sm:$0xff] %v4537
    %4570 = vst [vmem:[#allocation2 + $0x818] sm:$0xff] %v4538
    %4571 = vst [vmem:[#allocation2 + $0x860] sm:$0xff] %v4539
    %4572 = vst [vmem:[#allocation2 + $0x8a8] sm:$0xff] %v4540
    %4573 = vst [vmem:[#allocation2 + $0x8f0] sm:$0xff] %v4541
    %v4574 = vld [vmem:[%s2] sm:$0xff]
    %v4575 = vld [vmem:[%s2 + $0x8] sm:$0xff]
    %v4576 = vld [vmem:[%s2 + $0x10] sm:$0xff]
    %v4577 = vld [vmem:[%s2 + $0x18] sm:$0xff]
    %v4578 = vld [vmem:[%s2 + $0x20] sm:$0xff]
    %v4579 = vld [vmem:[%s2 + $0x28] sm:$0xff]
    %v4580 = vld [vmem:[%s2 + $0x30] sm:$0xff]
    %v4581 = vld [vmem:[%s2 + $0x38] sm:$0xff]
    %v4582 = vld [vmem:[%s2 + $0x40] sm:$0xff]
    %v4583 = vld [vmem:[%s2 + $0x48] sm:$0xff]
    %v4584 = vld [vmem:[%s2 + $0x50] sm:$0xff]
    %v4585 = vld [vmem:[%s2 + $0x58] sm:$0xff]
    %v4586 = vld [vmem:[%s2 + $0x60] sm:$0xff]
    %v4587 = vld [vmem:[%s2 + $0x68] sm:$0xff]
    %v4588 = vld [vmem:[%s2 + $0x70] sm:$0xff]
    %v4589 = vld [vmem:[%s2 + $0x78] sm:$0xff]
    %v4590 = vld [vmem:[%s2 + $0x80] sm:$0xff]
    %v4591 = vld [vmem:[%s2 + $0x88] sm:$0xff]
    %v4592 = vld [vmem:[%s2 + $0x90] sm:$0xff]
    %v4593 = vld [vmem:[%s2 + $0x98] sm:$0xff]
    %v4594 = vld [vmem:[%s2 + $0xa0] sm:$0xff]
    %v4595 = vld [vmem:[%s2 + $0xa8] sm:$0xff]
    %v4596 = vld [vmem:[%s2 + $0xb0] sm:$0xff]
    %v4597 = vld [vmem:[%s2 + $0xb8] sm:$0xff]
    %v4598 = vld [vmem:[%s2 + $0xc0] sm:$0xff]
    %v4599 = vld [vmem:[%s2 + $0xc8] sm:$0xff]
    %v4600 = vld [vmem:[%s2 + $0xd0] sm:$0xff]
    %v4601 = vld [vmem:[%s2 + $0xd8] sm:$0xff]
    %v4602 = vld [vmem:[%s2 + $0xe0] sm:$0xff]
    %v4603 = vld [vmem:[%s2 + $0xe8] sm:$0xff]
    %v4604 = vld [vmem:[%s2 + $0xf0] sm:$0xff]
    %v4605 = vld [vmem:[%s2 + $0xf8] sm:$0xff]
    %v4606 = vld [vmem:[%s2 + $0x100] sm:$0xff]
    %v4607 = vld [vmem:[%s2 + $0x108] sm:$0xff]
    %v4608 = vld [vmem:[%s2 + $0x110] sm:$0xff]
    %v4609 = vld [vmem:[%s2 + $0x118] sm:$0xff]
    %v4610 = vld [vmem:[%s2 + $0x120] sm:$0xff]
    %v4611 = vld [vmem:[%s2 + $0x128] sm:$0xff]
    %v4612 = vld [vmem:[%s2 + $0x130] sm:$0xff]
    %v4613 = vld [vmem:[%s2 + $0x138] sm:$0xff]
    %v4614 = vld [vmem:[%s2 + $0x140] sm:$0xff]
    %v4615 = vld [vmem:[%s2 + $0x148] sm:$0xff]
    %v4616 = vld [vmem:[%s2 + $0x150] sm:$0xff]
    %v4617 = vld [vmem:[%s2 + $0x158] sm:$0xff]
    %v4618 = vld [vmem:[%s2 + $0x160] sm:$0xff]
    %v4619 = vld [vmem:[%s2 + $0x168] sm:$0xff]
    %v4620 = vld [vmem:[%s2 + $0x170] sm:$0xff]
    %v4621 = vld [vmem:[%s2 + $0x178] sm:$0xff]
    %v4622 = vld [vmem:[%s2 + $0x180] sm:$0xff]
    %v4623 = vld [vmem:[%s2 + $0x188] sm:$0xff]
    %v4624 = vld [vmem:[%s2 + $0x190] sm:$0xff]
    %v4625 = vld [vmem:[%s2 + $0x198] sm:$0xff]
    %v4626 = vld [vmem:[%s2 + $0x1a0] sm:$0xff]
    %v4627 = vld [vmem:[%s2 + $0x1a8] sm:$0xff]
    %v4628 = vld [vmem:[%s2 + $0x1b0] sm:$0xff]
    %v4629 = vld [vmem:[%s2 + $0x1b8] sm:$0xff]
    %v4630 = vld [vmem:[%s2 + $0x1c0] sm:$0xff]
    %v4631 = vld [vmem:[%s2 + $0x1c8] sm:$0xff]
    %v4632 = vld [vmem:[%s2 + $0x1d0] sm:$0xff]
    %v4633 = vld [vmem:[%s2 + $0x1d8] sm:$0xff]
    %v4634 = vld [vmem:[%s2 + $0x1e0] sm:$0xff]
    %v4635 = vld [vmem:[%s2 + $0x1e8] sm:$0xff]
    %v4636 = vld [vmem:[%s2 + $0x1f0] sm:$0xff]
    %v4637 = vld [vmem:[%s2 + $0x1f8] sm:$0xff]
    %4639 = vset.pattern.permute.xlu0 8
    %4640 = vperm.xlu0 %4639, %v4574
    %v4641 = vpop.permute.xlu0 %4640
    %4644 = vset.pattern.permute.xlu0 8
    %4645 = vperm.xlu0 %4644, %v4575
    %v4646 = vpop.permute.xlu0 %4645
    %4649 = vset.pattern.permute.xlu0 8
    %4650 = vperm.xlu0 %4649, %v4576
    %v4651 = vpop.permute.xlu0 %4650
    %4654 = vset.pattern.permute.xlu0 8
    %4655 = vperm.xlu0 %4654, %v4577
    %v4656 = vpop.permute.xlu0 %4655
    %4659 = vset.pattern.permute.xlu0 8
    %4660 = vperm.xlu0 %4659, %v4578
    %v4661 = vpop.permute.xlu0 %4660
    %4664 = vset.pattern.permute.xlu0 8
    %4665 = vperm.xlu0 %4664, %v4579
    %v4666 = vpop.permute.xlu0 %4665
    %4669 = vset.pattern.permute.xlu0 8
    %4670 = vperm.xlu0 %4669, %v4580
    %v4671 = vpop.permute.xlu0 %4670
    %4674 = vset.pattern.permute.xlu0 8
    %4675 = vperm.xlu0 %4674, %v4581
    %v4676 = vpop.permute.xlu0 %4675
    %4679 = vset.pattern.permute.xlu0 8
    %4680 = vperm.xlu0 %4679, %v4582
    %v4681 = vpop.permute.xlu0 %4680
    %4684 = vset.pattern.permute.xlu0 8
    %4685 = vperm.xlu0 %4684, %v4583
    %v4686 = vpop.permute.xlu0 %4685
    %4689 = vset.pattern.permute.xlu0 8
    %4690 = vperm.xlu0 %4689, %v4584
    %v4691 = vpop.permute.xlu0 %4690
    %4694 = vset.pattern.permute.xlu0 8
    %4695 = vperm.xlu0 %4694, %v4585
    %v4696 = vpop.permute.xlu0 %4695
    %4699 = vset.pattern.permute.xlu0 8
    %4700 = vperm.xlu0 %4699, %v4586
    %v4701 = vpop.permute.xlu0 %4700
    %4704 = vset.pattern.permute.xlu0 8
    %4705 = vperm.xlu0 %4704, %v4587
    %v4706 = vpop.permute.xlu0 %4705
    %4709 = vset.pattern.permute.xlu0 8
    %4710 = vperm.xlu0 %4709, %v4588
    %v4711 = vpop.permute.xlu0 %4710
    %4714 = vset.pattern.permute.xlu0 8
    %4715 = vperm.xlu0 %4714, %v4589
    %v4716 = vpop.permute.xlu0 %4715
    %4719 = vset.pattern.permute.xlu0 8
    %4720 = vperm.xlu0 %4719, %v4590
    %v4721 = vpop.permute.xlu0 %4720
    %4724 = vset.pattern.permute.xlu0 8
    %4725 = vperm.xlu0 %4724, %v4591
    %v4726 = vpop.permute.xlu0 %4725
    %4729 = vset.pattern.permute.xlu0 8
    %4730 = vperm.xlu0 %4729, %v4592
    %v4731 = vpop.permute.xlu0 %4730
    %4734 = vset.pattern.permute.xlu0 8
    %4735 = vperm.xlu0 %4734, %v4593
    %v4736 = vpop.permute.xlu0 %4735
    %4739 = vset.pattern.permute.xlu0 8
    %4740 = vperm.xlu0 %4739, %v4594
    %v4741 = vpop.permute.xlu0 %4740
    %4744 = vset.pattern.permute.xlu0 8
    %4745 = vperm.xlu0 %4744, %v4595
    %v4746 = vpop.permute.xlu0 %4745
    %4749 = vset.pattern.permute.xlu0 8
    %4750 = vperm.xlu0 %4749, %v4596
    %v4751 = vpop.permute.xlu0 %4750
    %4754 = vset.pattern.permute.xlu0 8
    %4755 = vperm.xlu0 %4754, %v4597
    %v4756 = vpop.permute.xlu0 %4755
    %4759 = vset.pattern.permute.xlu0 8
    %4760 = vperm.xlu0 %4759, %v4598
    %v4761 = vpop.permute.xlu0 %4760
    %4764 = vset.pattern.permute.xlu0 8
    %4765 = vperm.xlu0 %4764, %v4599
    %v4766 = vpop.permute.xlu0 %4765
    %4769 = vset.pattern.permute.xlu0 8
    %4770 = vperm.xlu0 %4769, %v4600
    %v4771 = vpop.permute.xlu0 %4770
    %4774 = vset.pattern.permute.xlu0 8
    %4775 = vperm.xlu0 %4774, %v4601
    %v4776 = vpop.permute.xlu0 %4775
    %4779 = vset.pattern.permute.xlu0 8
    %4780 = vperm.xlu0 %4779, %v4602
    %v4781 = vpop.permute.xlu0 %4780
    %4784 = vset.pattern.permute.xlu0 8
    %4785 = vperm.xlu0 %4784, %v4603
    %v4786 = vpop.permute.xlu0 %4785
    %4789 = vset.pattern.permute.xlu0 8
    %4790 = vperm.xlu0 %4789, %v4604
    %v4791 = vpop.permute.xlu0 %4790
    %4794 = vset.pattern.permute.xlu0 8
    %4795 = vperm.xlu0 %4794, %v4605
    %v4796 = vpop.permute.xlu0 %4795
    %4799 = vset.pattern.permute.xlu0 8
    %4800 = vperm.xlu0 %4799, %v4606
    %v4801 = vpop.permute.xlu0 %4800
    %4804 = vset.pattern.permute.xlu0 8
    %4805 = vperm.xlu0 %4804, %v4607
    %v4806 = vpop.permute.xlu0 %4805
    %4809 = vset.pattern.permute.xlu0 8
    %4810 = vperm.xlu0 %4809, %v4608
    %v4811 = vpop.permute.xlu0 %4810
    %4814 = vset.pattern.permute.xlu0 8
    %4815 = vperm.xlu0 %4814, %v4609
    %v4816 = vpop.permute.xlu0 %4815
    %4819 = vset.pattern.permute.xlu0 8
    %4820 = vperm.xlu0 %4819, %v4610
    %v4821 = vpop.permute.xlu0 %4820
    %4824 = vset.pattern.permute.xlu0 8
    %4825 = vperm.xlu0 %4824, %v4611
    %v4826 = vpop.permute.xlu0 %4825
    %4829 = vset.pattern.permute.xlu0 8
    %4830 = vperm.xlu0 %4829, %v4612
    %v4831 = vpop.permute.xlu0 %4830
    %4834 = vset.pattern.permute.xlu0 8
    %4835 = vperm.xlu0 %4834, %v4613
    %v4836 = vpop.permute.xlu0 %4835
    %4839 = vset.pattern.permute.xlu0 8
    %4840 = vperm.xlu0 %4839, %v4614
    %v4841 = vpop.permute.xlu0 %4840
    %4844 = vset.pattern.permute.xlu0 8
    %4845 = vperm.xlu0 %4844, %v4615
    %v4846 = vpop.permute.xlu0 %4845
    %4849 = vset.pattern.permute.xlu0 8
    %4850 = vperm.xlu0 %4849, %v4616
    %v4851 = vpop.permute.xlu0 %4850
    %4854 = vset.pattern.permute.xlu0 8
    %4855 = vperm.xlu0 %4854, %v4617
    %v4856 = vpop.permute.xlu0 %4855
    %4859 = vset.pattern.permute.xlu0 8
    %4860 = vperm.xlu0 %4859, %v4618
    %v4861 = vpop.permute.xlu0 %4860
    %4864 = vset.pattern.permute.xlu0 8
    %4865 = vperm.xlu0 %4864, %v4619
    %v4866 = vpop.permute.xlu0 %4865
    %4869 = vset.pattern.permute.xlu0 8
    %4870 = vperm.xlu0 %4869, %v4620
    %v4871 = vpop.permute.xlu0 %4870
    %4874 = vset.pattern.permute.xlu0 8
    %4875 = vperm.xlu0 %4874, %v4621
    %v4876 = vpop.permute.xlu0 %4875
    %4879 = vset.pattern.permute.xlu0 8
    %4880 = vperm.xlu0 %4879, %v4622
    %v4881 = vpop.permute.xlu0 %4880
    %4884 = vset.pattern.permute.xlu0 8
    %4885 = vperm.xlu0 %4884, %v4623
    %v4886 = vpop.permute.xlu0 %4885
    %4889 = vset.pattern.permute.xlu0 8
    %4890 = vperm.xlu0 %4889, %v4624
    %v4891 = vpop.permute.xlu0 %4890
    %4894 = vset.pattern.permute.xlu0 8
    %4895 = vperm.xlu0 %4894, %v4625
    %v4896 = vpop.permute.xlu0 %4895
    %4899 = vset.pattern.permute.xlu0 8
    %4900 = vperm.xlu0 %4899, %v4626
    %v4901 = vpop.permute.xlu0 %4900
    %4904 = vset.pattern.permute.xlu0 8
    %4905 = vperm.xlu0 %4904, %v4627
    %v4906 = vpop.permute.xlu0 %4905
    %4909 = vset.pattern.permute.xlu0 8
    %4910 = vperm.xlu0 %4909, %v4628
    %v4911 = vpop.permute.xlu0 %4910
    %4914 = vset.pattern.permute.xlu0 8
    %4915 = vperm.xlu0 %4914, %v4629
    %v4916 = vpop.permute.xlu0 %4915
    %4919 = vset.pattern.permute.xlu0 8
    %4920 = vperm.xlu0 %4919, %v4630
    %v4921 = vpop.permute.xlu0 %4920
    %4924 = vset.pattern.permute.xlu0 8
    %4925 = vperm.xlu0 %4924, %v4631
    %v4926 = vpop.permute.xlu0 %4925
    %4929 = vset.pattern.permute.xlu0 8
    %4930 = vperm.xlu0 %4929, %v4632
    %v4931 = vpop.permute.xlu0 %4930
    %4934 = vset.pattern.permute.xlu0 8
    %4935 = vperm.xlu0 %4934, %v4633
    %v4936 = vpop.permute.xlu0 %4935
    %4939 = vset.pattern.permute.xlu0 8
    %4940 = vperm.xlu0 %4939, %v4634
    %v4941 = vpop.permute.xlu0 %4940
    %4944 = vset.pattern.permute.xlu0 8
    %4945 = vperm.xlu0 %4944, %v4635
    %v4946 = vpop.permute.xlu0 %4945
    %4949 = vset.pattern.permute.xlu0 8
    %4950 = vperm.xlu0 %4949, %v4636
    %v4951 = vpop.permute.xlu0 %4950
    %4954 = vset.pattern.permute.xlu0 8
    %4955 = vperm.xlu0 %4954, %v4637
    %v4956 = vpop.permute.xlu0 %4955
    %v4958 = vmul.f32 %v1498, %v4641
    %v4959 = vmul.f32 %v1497, %v4646
    %v4960 = vmul.f32 %v1496, %v4651
    %v4961 = vmul.f32 %v1495, %v4656
    %v4962 = vmul.f32 %v1494, %v4661
    %v4963 = vmul.f32 %v1493, %v4666
    %v4964 = vmul.f32 %v1492, %v4671
    %v4965 = vmul.f32 %v1491, %v4676
    %v4966 = vmul.f32 %v1490, %v4681
    %v4967 = vmul.f32 %v1489, %v4686
    %v4968 = vmul.f32 %v1488, %v4691
    %v4969 = vmul.f32 %v1487, %v4696
    %v4970 = vmul.f32 %v1486, %v4701
    %v4971 = vmul.f32 %v1485, %v4706
    %v4972 = vmul.f32 %v1484, %v4711
    %v4973 = vmul.f32 %v1483, %v4716
    %v4974 = vmul.f32 %v1482, %v4721
    %v4975 = vmul.f32 %v1481, %v4726
    %v4976 = vmul.f32 %v1480, %v4731
    %v4977 = vmul.f32 %v1479, %v4736
    %v4978 = vmul.f32 %v1478, %v4741
    %v4979 = vmul.f32 %v1477, %v4746
    %v4980 = vmul.f32 %v1476, %v4751
    %v4981 = vmul.f32 %v1475, %v4756
    %v4982 = vmul.f32 %v1474, %v4761
    %v4983 = vmul.f32 %v1473, %v4766
    %v4984 = vmul.f32 %v1472, %v4771
    %v4985 = vmul.f32 %v1471, %v4776
    %v4986 = vmul.f32 %v1470, %v4781
    %v4987 = vmul.f32 %v1469, %v4786
    %v4988 = vmul.f32 %v1468, %v4791
    %v4989 = vmul.f32 %v1467, %v4796
    %v4990 = vmul.f32 %v1466, %v4801
    %v4991 = vmul.f32 %v1465, %v4806
    %v4992 = vmul.f32 %v1464, %v4811
    %v4993 = vmul.f32 %v1463, %v4816
    %v4994 = vmul.f32 %v1462, %v4821
    %v4995 = vmul.f32 %v1461, %v4826
    %v4996 = vmul.f32 %v1460, %v4831
    %v4997 = vmul.f32 %v1459, %v4836
    %v4998 = vmul.f32 %v1458, %v4841
    %v4999 = vmul.f32 %v1457, %v4846
    %v5000 = vmul.f32 %v1456, %v4851
    %v5001 = vmul.f32 %v1455, %v4856
    %v5002 = vmul.f32 %v1454, %v4861
    %v5003 = vmul.f32 %v1453, %v4866
    %v5004 = vmul.f32 %v1452, %v4871
    %v5005 = vmul.f32 %v1451, %v4876
    %v5006 = vmul.f32 %v1450, %v4881
    %v5007 = vmul.f32 %v1449, %v4886
    %v5008 = vmul.f32 %v1448, %v4891
    %v5009 = vmul.f32 %v1447, %v4896
    %v5010 = vmul.f32 %v1446, %v4901
    %v5011 = vmul.f32 %v1445, %v4906
    %v5012 = vmul.f32 %v1444, %v4911
    %v5013 = vmul.f32 %v1443, %v4916
    %v5014 = vmul.f32 %v1442, %v4921
    %v5015 = vmul.f32 %v1441, %v4926
    %v5016 = vmul.f32 %v1440, %v4931
    %v5017 = vmul.f32 %v1439, %v4936
    %v5018 = vmul.f32 %v1438, %v4941
    %v5019 = vmul.f32 %v1501, %v4946
    %v5020 = vmul.f32 %v1500, %v4951
    %v5021 = vmul.f32 %v1499, %v4956
    %v5022 = vpack.c.bf16 %v4959, %v4958
    %v5023 = vpack.c.bf16 %v4961, %v4960
    %v5024 = vpack.c.bf16 %v4963, %v4962
    %v5025 = vpack.c.bf16 %v4965, %v4964
    %v5026 = vpack.c.bf16 %v4967, %v4966
    %v5027 = vpack.c.bf16 %v4969, %v4968
    %v5028 = vpack.c.bf16 %v4971, %v4970
    %v5029 = vpack.c.bf16 %v4973, %v4972
    %v5030 = vpack.c.bf16 %v4975, %v4974
    %v5031 = vpack.c.bf16 %v4977, %v4976
    %v5032 = vpack.c.bf16 %v4979, %v4978
    %v5033 = vpack.c.bf16 %v4981, %v4980
    %v5034 = vpack.c.bf16 %v4983, %v4982
    %v5035 = vpack.c.bf16 %v4985, %v4984
    %v5036 = vpack.c.bf16 %v4987, %v4986
    %v5037 = vpack.c.bf16 %v4989, %v4988
    %v5038 = vpack.c.bf16 %v4991, %v4990
    %v5039 = vpack.c.bf16 %v4993, %v4992
    %v5040 = vpack.c.bf16 %v4995, %v4994
    %v5041 = vpack.c.bf16 %v4997, %v4996
    %v5042 = vpack.c.bf16 %v4999, %v4998
    %v5043 = vpack.c.bf16 %v5001, %v5000
    %v5044 = vpack.c.bf16 %v5003, %v5002
    %v5045 = vpack.c.bf16 %v5005, %v5004
    %v5046 = vpack.c.bf16 %v5007, %v5006
    %v5047 = vpack.c.bf16 %v5009, %v5008
    %v5048 = vpack.c.bf16 %v5011, %v5010
    %v5049 = vpack.c.bf16 %v5013, %v5012
    %v5050 = vpack.c.bf16 %v5015, %v5014
    %v5051 = vpack.c.bf16 %v5017, %v5016
    %v5052 = vpack.c.bf16 %v5019, %v5018
    %v5053 = vpack.c.bf16 %v5021, %v5020
    %5054 = vst [vmem:[#allocation2 + $0x40] sm:$0xff] %v5022
    %5055 = vst [vmem:[#allocation2 + $0x88] sm:$0xff] %v5023
    %5056 = vst [vmem:[#allocation2 + $0xd0] sm:$0xff] %v5024
    %5057 = vst [vmem:[#allocation2 + $0x118] sm:$0xff] %v5025
    %5058 = vst [vmem:[#allocation2 + $0x160] sm:$0xff] %v5026
    %5059 = vst [vmem:[#allocation2 + $0x1a8] sm:$0xff] %v5027
    %5060 = vst [vmem:[#allocation2 + $0x1f0] sm:$0xff] %v5028
    %5061 = vst [vmem:[#allocation2 + $0x238] sm:$0xff] %v5029
    %5062 = vst [vmem:[#allocation2 + $0x280] sm:$0xff] %v5030
    %5063 = vst [vmem:[#allocation2 + $0x2c8] sm:$0xff] %v5031
    %5064 = vst [vmem:[#allocation2 + $0x310] sm:$0xff] %v5032
    %5065 = vst [vmem:[#allocation2 + $0x358] sm:$0xff] %v5033
    %5066 = vst [vmem:[#allocation2 + $0x3a0] sm:$0xff] %v5034
    %5067 = vst [vmem:[#allocation2 + $0x3e8] sm:$0xff] %v5035
    %5068 = vst [vmem:[#allocation2 + $0x430] sm:$0xff] %v5036
    %5069 = vst [vmem:[#allocation2 + $0x478] sm:$0xff] %v5037
    %5070 = vst [vmem:[#allocation2 + $0x4c0] sm:$0xff] %v5038
    %5071 = vst [vmem:[#allocation2 + $0x508] sm:$0xff] %v5039
    %5072 = vst [vmem:[#allocation2 + $0x550] sm:$0xff] %v5040
    %5073 = vst [vmem:[#allocation2 + $0x598] sm:$0xff] %v5041
    %5074 = vst [vmem:[#allocation2 + $0x5e0] sm:$0xff] %v5042
    %5075 = vst [vmem:[#allocation2 + $0x628] sm:$0xff] %v5043
    %5076 = vst [vmem:[#allocation2 + $0x670] sm:$0xff] %v5044
    %5077 = vst [vmem:[#allocation2 + $0x6b8] sm:$0xff] %v5045
    %5078 = vst [vmem:[#allocation2 + $0x700] sm:$0xff] %v5046
    %5079 = vst [vmem:[#allocation2 + $0x748] sm:$0xff] %v5047
    %5080 = vst [vmem:[#allocation2 + $0x790] sm:$0xff] %v5048
    %5081 = vst [vmem:[#allocation2 + $0x7d8] sm:$0xff] %v5049
    %5082 = vst [vmem:[#allocation2 + $0x820] sm:$0xff] %v5050
    %5083 = vst [vmem:[#allocation2 + $0x868] sm:$0xff] %v5051
    %5084 = vst [vmem:[#allocation2 + $0x8b0] sm:$0xff] %v5052
    %5085 = vst [vmem:[#allocation2 + $0x8f8] sm:$0xff] %v5053
    %v5086 = vld [vmem:[#allocation2] sm:$0xff]
    %v5087 = vld [vmem:[#allocation2 + $0x8] sm:$0xff]
    %v5088 = vld [vmem:[#allocation2 + $0x10] sm:$0xff]
    %v5089 = vld [vmem:[#allocation2 + $0x18] sm:$0xff]
    %v5090 = vld [vmem:[#allocation2 + $0x20] sm:$0xff]
    %v5091 = vld [vmem:[#allocation2 + $0x28] sm:$0xff]
    %v5092 = vld [vmem:[#allocation2 + $0x30] sm:$0xff]
    %v5093 = vld [vmem:[#allocation2 + $0x38] sm:$0xff]
    %v5094 = vld [vmem:[#allocation2 + $0x40] sm:$0xff]
    %v5095 = vld [vmem:[#allocation2 + $0x48] sm:$0xff]
    %v5096 = vld [vmem:[#allocation2 + $0x50] sm:$0xff]
    %v5097 = vld [vmem:[#allocation2 + $0x58] sm:$0xff]
    %v5098 = vld [vmem:[#allocation2 + $0x60] sm:$0xff]
    %v5099 = vld [vmem:[#allocation2 + $0x68] sm:$0xff]
    %v5100 = vld [vmem:[#allocation2 + $0x70] sm:$0xff]
    %v5101 = vld [vmem:[#allocation2 + $0x78] sm:$0xff]
    %v5102 = vld [vmem:[#allocation2 + $0x80] sm:$0xff]
    %v5103 = vld [vmem:[#allocation2 + $0x88] sm:$0xff]
    %v5104 = vld [vmem:[#allocation2 + $0x90] sm:$0xff]
    %v5105 = vld [vmem:[#allocation2 + $0x98] sm:$0xff]
    %v5106 = vld [vmem:[#allocation2 + $0xa0] sm:$0xff]
    %v5107 = vld [vmem:[#allocation2 + $0xa8] sm:$0xff]
    %v5108 = vld [vmem:[#allocation2 + $0xb0] sm:$0xff]
    %v5109 = vld [vmem:[#allocation2 + $0xb8] sm:$0xff]
    %v5110 = vld [vmem:[#allocation2 + $0xc0] sm:$0xff]
    %v5111 = vld [vmem:[#allocation2 + $0xc8] sm:$0xff]
    %v5112 = vld [vmem:[#allocation2 + $0xd0] sm:$0xff]
    %v5113 = vld [vmem:[#allocation2 + $0xd8] sm:$0xff]
    %v5114 = vld [vmem:[#allocation2 + $0xe0] sm:$0xff]
    %v5115 = vld [vmem:[#allocation2 + $0xe8] sm:$0xff]
    %v5116 = vld [vmem:[#allocation2 + $0xf0] sm:$0xff]
    %v5117 = vld [vmem:[#allocation2 + $0xf8] sm:$0xff]
    %v5118 = vld [vmem:[#allocation2 + $0x100] sm:$0xff]
    %v5119 = vld [vmem:[#allocation2 + $0x108] sm:$0xff]
    %v5120 = vld [vmem:[#allocation2 + $0x110] sm:$0xff]
    %v5121 = vld [vmem:[#allocation2 + $0x118] sm:$0xff]
    %v5122 = vld [vmem:[#allocation2 + $0x120] sm:$0xff]
    %v5123 = vld [vmem:[#allocation2 + $0x128] sm:$0xff]
    %v5124 = vld [vmem:[#allocation2 + $0x130] sm:$0xff]
    %v5125 = vld [vmem:[#allocation2 + $0x138] sm:$0xff]
    %v5126 = vld [vmem:[#allocation2 + $0x140] sm:$0xff]
    %v5127 = vld [vmem:[#allocation2 + $0x148] sm:$0xff]
    %v5128 = vld [vmem:[#allocation2 + $0x150] sm:$0xff]
    %v5129 = vld [vmem:[#allocation2 + $0x158] sm:$0xff]
    %v5130 = vld [vmem:[#allocation2 + $0x160] sm:$0xff]
    %v5131 = vld [vmem:[#allocation2 + $0x168] sm:$0xff]
    %v5132 = vld [vmem:[#allocation2 + $0x170] sm:$0xff]
    %v5133 = vld [vmem:[#allocation2 + $0x178] sm:$0xff]
    %v5134 = vld [vmem:[#allocation2 + $0x180] sm:$0xff]
    %v5135 = vld [vmem:[#allocation2 + $0x188] sm:$0xff]
    %v5136 = vld [vmem:[#allocation2 + $0x190] sm:$0xff]
    %v5137 = vld [vmem:[#allocation2 + $0x198] sm:$0xff]
    %v5138 = vld [vmem:[#allocation2 + $0x1a0] sm:$0xff]
    %v5139 = vld [vmem:[#allocation2 + $0x1a8] sm:$0xff]
    %v5140 = vld [vmem:[#allocation2 + $0x1b0] sm:$0xff]
    %v5141 = vld [vmem:[#allocation2 + $0x1b8] sm:$0xff]
    %v5142 = vld [vmem:[#allocation2 + $0x1c0] sm:$0xff]
    %v5143 = vld [vmem:[#allocation2 + $0x1c8] sm:$0xff]
    %v5144 = vld [vmem:[#allocation2 + $0x1d0] sm:$0xff]
    %v5145 = vld [vmem:[#allocation2 + $0x1d8] sm:$0xff]
    %v5146 = vld [vmem:[#allocation2 + $0x1e0] sm:$0xff]
    %v5147 = vld [vmem:[#allocation2 + $0x1e8] sm:$0xff]
    %v5148 = vld [vmem:[#allocation2 + $0x1f0] sm:$0xff]
    %v5149 = vld [vmem:[#allocation2 + $0x1f8] sm:$0xff]
    %v5150 = vld [vmem:[#allocation2 + $0x200] sm:$0xff]
    %v5151 = vld [vmem:[#allocation2 + $0x208] sm:$0xff]
    %v5152 = vld [vmem:[#allocation2 + $0x210] sm:$0xff]
    %v5153 = vld [vmem:[#allocation2 + $0x218] sm:$0xff]
    %v5154 = vld [vmem:[#allocation2 + $0x220] sm:$0xff]
    %v5155 = vld [vmem:[#allocation2 + $0x228] sm:$0xff]
    %v5156 = vld [vmem:[#allocation2 + $0x230] sm:$0xff]
    %v5157 = vld [vmem:[#allocation2 + $0x238] sm:$0xff]
    %v5158 = vld [vmem:[#allocation2 + $0x240] sm:$0xff]
    %v5159 = vld [vmem:[#allocation2 + $0x248] sm:$0xff]
    %v5160 = vld [vmem:[#allocation2 + $0x250] sm:$0xff]
    %v5161 = vld [vmem:[#allocation2 + $0x258] sm:$0xff]
    %v5162 = vld [vmem:[#allocation2 + $0x260] sm:$0xff]
    %v5163 = vld [vmem:[#allocation2 + $0x268] sm:$0xff]
    %v5164 = vld [vmem:[#allocation2 + $0x270] sm:$0xff]
    %v5165 = vld [vmem:[#allocation2 + $0x278] sm:$0xff]
    %v5166 = vld [vmem:[#allocation2 + $0x280] sm:$0xff]
    %v5167 = vld [vmem:[#allocation2 + $0x288] sm:$0xff]
    %v5168 = vld [vmem:[#allocation2 + $0x290] sm:$0xff]
    %v5169 = vld [vmem:[#allocation2 + $0x298] sm:$0xff]
    %v5170 = vld [vmem:[#allocation2 + $0x2a0] sm:$0xff]
    %v5171 = vld [vmem:[#allocation2 + $0x2a8] sm:$0xff]
    %v5172 = vld [vmem:[#allocation2 + $0x2b0] sm:$0xff]
    %v5173 = vld [vmem:[#allocation2 + $0x2b8] sm:$0xff]
    %v5174 = vld [vmem:[#allocation2 + $0x2c0] sm:$0xff]
    %v5175 = vld [vmem:[#allocation2 + $0x2c8] sm:$0xff]
    %v5176 = vld [vmem:[#allocation2 + $0x2d0] sm:$0xff]
    %v5177 = vld [vmem:[#allocation2 + $0x2d8] sm:$0xff]
    %v5178 = vld [vmem:[#allocation2 + $0x2e0] sm:$0xff]
    %v5179 = vld [vmem:[#allocation2 + $0x2e8] sm:$0xff]
    %v5180 = vld [vmem:[#allocation2 + $0x2f0] sm:$0xff]
    %v5181 = vld [vmem:[#allocation2 + $0x2f8] sm:$0xff]
    %v5182 = vld [vmem:[#allocation2 + $0x300] sm:$0xff]
    %v5183 = vld [vmem:[#allocation2 + $0x308] sm:$0xff]
    %v5184 = vld [vmem:[#allocation2 + $0x310] sm:$0xff]
    %v5185 = vld [vmem:[#allocation2 + $0x318] sm:$0xff]
    %v5186 = vld [vmem:[#allocation2 + $0x320] sm:$0xff]
    %v5187 = vld [vmem:[#allocation2 + $0x328] sm:$0xff]
    %v5188 = vld [vmem:[#allocation2 + $0x330] sm:$0xff]
    %v5189 = vld [vmem:[#allocation2 + $0x338] sm:$0xff]
    %v5190 = vld [vmem:[#allocation2 + $0x340] sm:$0xff]
    %v5191 = vld [vmem:[#allocation2 + $0x348] sm:$0xff]
    %v5192 = vld [vmem:[#allocation2 + $0x350] sm:$0xff]
    %v5193 = vld [vmem:[#allocation2 + $0x358] sm:$0xff]
    %v5194 = vld [vmem:[#allocation2 + $0x360] sm:$0xff]
    %v5195 = vld [vmem:[#allocation2 + $0x368] sm:$0xff]
    %v5196 = vld [vmem:[#allocation2 + $0x370] sm:$0xff]
    %v5197 = vld [vmem:[#allocation2 + $0x378] sm:$0xff]
    %v5198 = vld [vmem:[#allocation2 + $0x380] sm:$0xff]
    %v5199 = vld [vmem:[#allocation2 + $0x388] sm:$0xff]
    %v5200 = vld [vmem:[#allocation2 + $0x390] sm:$0xff]
    %v5201 = vld [vmem:[#allocation2 + $0x398] sm:$0xff]
    %v5202 = vld [vmem:[#allocation2 + $0x3a0] sm:$0xff]
    %v5203 = vld [vmem:[#allocation2 + $0x3a8] sm:$0xff]
    %v5204 = vld [vmem:[#allocation2 + $0x3b0] sm:$0xff]
    %v5205 = vld [vmem:[#allocation2 + $0x3b8] sm:$0xff]
    %v5206 = vld [vmem:[#allocation2 + $0x3c0] sm:$0xff]
    %v5207 = vld [vmem:[#allocation2 + $0x3c8] sm:$0xff]
    %v5208 = vld [vmem:[#allocation2 + $0x3d0] sm:$0xff]
    %v5209 = vld [vmem:[#allocation2 + $0x3d8] sm:$0xff]
    %v5210 = vld [vmem:[#allocation2 + $0x3e0] sm:$0xff]
    %v5211 = vld [vmem:[#allocation2 + $0x3e8] sm:$0xff]
    %v5212 = vld [vmem:[#allocation2 + $0x3f0] sm:$0xff]
    %v5213 = vld [vmem:[#allocation2 + $0x3f8] sm:$0xff]
    %v5214 = vld [vmem:[#allocation2 + $0x400] sm:$0xff]
    %v5215 = vld [vmem:[#allocation2 + $0x408] sm:$0xff]
    %v5216 = vld [vmem:[#allocation2 + $0x410] sm:$0xff]
    %v5217 = vld [vmem:[#allocation2 + $0x418] sm:$0xff]
    %v5218 = vld [vmem:[#allocation2 + $0x420] sm:$0xff]
    %v5219 = vld [vmem:[#allocation2 + $0x428] sm:$0xff]
    %v5220 = vld [vmem:[#allocation2 + $0x430] sm:$0xff]
    %v5221 = vld [vmem:[#allocation2 + $0x438] sm:$0xff]
    %v5222 = vld [vmem:[#allocation2 + $0x440] sm:$0xff]
    %v5223 = vld [vmem:[#allocation2 + $0x448] sm:$0xff]
    %v5224 = vld [vmem:[#allocation2 + $0x450] sm:$0xff]
    %v5225 = vld [vmem:[#allocation2 + $0x458] sm:$0xff]
    %v5226 = vld [vmem:[#allocation2 + $0x460] sm:$0xff]
    %v5227 = vld [vmem:[#allocation2 + $0x468] sm:$0xff]
    %v5228 = vld [vmem:[#allocation2 + $0x470] sm:$0xff]
    %v5229 = vld [vmem:[#allocation2 + $0x478] sm:$0xff]
    %v5230 = vld [vmem:[#allocation2 + $0x480] sm:$0xff]
    %v5231 = vld [vmem:[#allocation2 + $0x488] sm:$0xff]
    %v5232 = vld [vmem:[#allocation2 + $0x490] sm:$0xff]
    %v5233 = vld [vmem:[#allocation2 + $0x498] sm:$0xff]
    %v5234 = vld [vmem:[#allocation2 + $0x4a0] sm:$0xff]
    %v5235 = vld [vmem:[#allocation2 + $0x4a8] sm:$0xff]
    %v5236 = vld [vmem:[#allocation2 + $0x4b0] sm:$0xff]
    %v5237 = vld [vmem:[#allocation2 + $0x4b8] sm:$0xff]
    %v5238 = vld [vmem:[#allocation2 + $0x4c0] sm:$0xff]
    %v5239 = vld [vmem:[#allocation2 + $0x4c8] sm:$0xff]
    %v5240 = vld [vmem:[#allocation2 + $0x4d0] sm:$0xff]
    %v5241 = vld [vmem:[#allocation2 + $0x4d8] sm:$0xff]
    %v5242 = vld [vmem:[#allocation2 + $0x4e0] sm:$0xff]
    %v5243 = vld [vmem:[#allocation2 + $0x4e8] sm:$0xff]
    %v5244 = vld [vmem:[#allocation2 + $0x4f0] sm:$0xff]
    %v5245 = vld [vmem:[#allocation2 + $0x4f8] sm:$0xff]
    %v5246 = vld [vmem:[#allocation2 + $0x500] sm:$0xff]
    %v5247 = vld [vmem:[#allocation2 + $0x508] sm:$0xff]
    %v5248 = vld [vmem:[#allocation2 + $0x510] sm:$0xff]
    %v5249 = vld [vmem:[#allocation2 + $0x518] sm:$0xff]
    %v5250 = vld [vmem:[#allocation2 + $0x520] sm:$0xff]
    %v5251 = vld [vmem:[#allocation2 + $0x528] sm:$0xff]
    %v5252 = vld [vmem:[#allocation2 + $0x530] sm:$0xff]
    %v5253 = vld [vmem:[#allocation2 + $0x538] sm:$0xff]
    %v5254 = vld [vmem:[#allocation2 + $0x540] sm:$0xff]
    %v5255 = vld [vmem:[#allocation2 + $0x548] sm:$0xff]
    %v5256 = vld [vmem:[#allocation2 + $0x550] sm:$0xff]
    %v5257 = vld [vmem:[#allocation2 + $0x558] sm:$0xff]
    %v5258 = vld [vmem:[#allocation2 + $0x560] sm:$0xff]
    %v5259 = vld [vmem:[#allocation2 + $0x568] sm:$0xff]
    %v5260 = vld [vmem:[#allocation2 + $0x570] sm:$0xff]
    %v5261 = vld [vmem:[#allocation2 + $0x578] sm:$0xff]
    %v5262 = vld [vmem:[#allocation2 + $0x580] sm:$0xff]
    %v5263 = vld [vmem:[#allocation2 + $0x588] sm:$0xff]
    %v5264 = vld [vmem:[#allocation2 + $0x590] sm:$0xff]
    %v5265 = vld [vmem:[#allocation2 + $0x598] sm:$0xff]
    %v5266 = vld [vmem:[#allocation2 + $0x5a0] sm:$0xff]
    %v5267 = vld [vmem:[#allocation2 + $0x5a8] sm:$0xff]
    %v5268 = vld [vmem:[#allocation2 + $0x5b0] sm:$0xff]
    %v5269 = vld [vmem:[#allocation2 + $0x5b8] sm:$0xff]
    %v5270 = vld [vmem:[#allocation2 + $0x5c0] sm:$0xff]
    %v5271 = vld [vmem:[#allocation2 + $0x5c8] sm:$0xff]
    %v5272 = vld [vmem:[#allocation2 + $0x5d0] sm:$0xff]
    %v5273 = vld [vmem:[#allocation2 + $0x5d8] sm:$0xff]
    %v5274 = vld [vmem:[#allocation2 + $0x5e0] sm:$0xff]
    %v5275 = vld [vmem:[#allocation2 + $0x5e8] sm:$0xff]
    %v5276 = vld [vmem:[#allocation2 + $0x5f0] sm:$0xff]
    %v5277 = vld [vmem:[#allocation2 + $0x5f8] sm:$0xff]
    %v5278 = vld [vmem:[#allocation2 + $0x600] sm:$0xff]
    %v5279 = vld [vmem:[#allocation2 + $0x608] sm:$0xff]
    %v5280 = vld [vmem:[#allocation2 + $0x610] sm:$0xff]
    %v5281 = vld [vmem:[#allocation2 + $0x618] sm:$0xff]
    %v5282 = vld [vmem:[#allocation2 + $0x620] sm:$0xff]
    %v5283 = vld [vmem:[#allocation2 + $0x628] sm:$0xff]
    %v5284 = vld [vmem:[#allocation2 + $0x630] sm:$0xff]
    %v5285 = vld [vmem:[#allocation2 + $0x638] sm:$0xff]
    %v5286 = vld [vmem:[#allocation2 + $0x640] sm:$0xff]
    %v5287 = vld [vmem:[#allocation2 + $0x648] sm:$0xff]
    %v5288 = vld [vmem:[#allocation2 + $0x650] sm:$0xff]
    %v5289 = vld [vmem:[#allocation2 + $0x658] sm:$0xff]
    %v5290 = vld [vmem:[#allocation2 + $0x660] sm:$0xff]
    %v5291 = vld [vmem:[#allocation2 + $0x668] sm:$0xff]
    %v5292 = vld [vmem:[#allocation2 + $0x670] sm:$0xff]
    %v5293 = vld [vmem:[#allocation2 + $0x678] sm:$0xff]
    %v5294 = vld [vmem:[#allocation2 + $0x680] sm:$0xff]
    %v5295 = vld [vmem:[#allocation2 + $0x688] sm:$0xff]
    %v5296 = vld [vmem:[#allocation2 + $0x690] sm:$0xff]
    %v5297 = vld [vmem:[#allocation2 + $0x698] sm:$0xff]
    %v5298 = vld [vmem:[#allocation2 + $0x6a0] sm:$0xff]
    %v5299 = vld [vmem:[#allocation2 + $0x6a8] sm:$0xff]
    %v5300 = vld [vmem:[#allocation2 + $0x6b0] sm:$0xff]
    %v5301 = vld [vmem:[#allocation2 + $0x6b8] sm:$0xff]
    %v5302 = vld [vmem:[#allocation2 + $0x6c0] sm:$0xff]
    %v5303 = vld [vmem:[#allocation2 + $0x6c8] sm:$0xff]
    %v5304 = vld [vmem:[#allocation2 + $0x6d0] sm:$0xff]
    %v5305 = vld [vmem:[#allocation2 + $0x6d8] sm:$0xff]
    %v5306 = vld [vmem:[#allocation2 + $0x6e0] sm:$0xff]
    %v5307 = vld [vmem:[#allocation2 + $0x6e8] sm:$0xff]
    %v5308 = vld [vmem:[#allocation2 + $0x6f0] sm:$0xff]
    %v5309 = vld [vmem:[#allocation2 + $0x6f8] sm:$0xff]
    %v5310 = vld [vmem:[#allocation2 + $0x700] sm:$0xff]
    %v5311 = vld [vmem:[#allocation2 + $0x708] sm:$0xff]
    %v5312 = vld [vmem:[#allocation2 + $0x710] sm:$0xff]
    %v5313 = vld [vmem:[#allocation2 + $0x718] sm:$0xff]
    %v5314 = vld [vmem:[#allocation2 + $0x720] sm:$0xff]
    %v5315 = vld [vmem:[#allocation2 + $0x728] sm:$0xff]
    %v5316 = vld [vmem:[#allocation2 + $0x730] sm:$0xff]
    %v5317 = vld [vmem:[#allocation2 + $0x738] sm:$0xff]
    %v5318 = vld [vmem:[#allocation2 + $0x740] sm:$0xff]
    %v5319 = vld [vmem:[#allocation2 + $0x748] sm:$0xff]
    %v5320 = vld [vmem:[#allocation2 + $0x750] sm:$0xff]
    %v5321 = vld [vmem:[#allocation2 + $0x758] sm:$0xff]
    %v5322 = vld [vmem:[#allocation2 + $0x760] sm:$0xff]
    %v5323 = vld [vmem:[#allocation2 + $0x768] sm:$0xff]
    %v5324 = vld [vmem:[#allocation2 + $0x770] sm:$0xff]
    %v5325 = vld [vmem:[#allocation2 + $0x778] sm:$0xff]
    %v5326 = vld [vmem:[#allocation2 + $0x780] sm:$0xff]
    %v5327 = vld [vmem:[#allocation2 + $0x788] sm:$0xff]
    %v5328 = vld [vmem:[#allocation2 + $0x790] sm:$0xff]
    %v5329 = vld [vmem:[#allocation2 + $0x798] sm:$0xff]
    %v5330 = vld [vmem:[#allocation2 + $0x7a0] sm:$0xff]
    %v5331 = vld [vmem:[#allocation2 + $0x7a8] sm:$0xff]
    %v5332 = vld [vmem:[#allocation2 + $0x7b0] sm:$0xff]
    %v5333 = vld [vmem:[#allocation2 + $0x7b8] sm:$0xff]
    %v5334 = vld [vmem:[#allocation2 + $0x7c0] sm:$0xff]
    %v5335 = vld [vmem:[#allocation2 + $0x7c8] sm:$0xff]
    %v5336 = vld [vmem:[#allocation2 + $0x7d0] sm:$0xff]
    %v5337 = vld [vmem:[#allocation2 + $0x7d8] sm:$0xff]
    %v5338 = vld [vmem:[#allocation2 + $0x7e0] sm:$0xff]
    %v5339 = vld [vmem:[#allocation2 + $0x7e8] sm:$0xff]
    %v5340 = vld [vmem:[#allocation2 + $0x7f0] sm:$0xff]
    %v5341 = vld [vmem:[#allocation2 + $0x7f8] sm:$0xff]
    %v5342 = vld [vmem:[#allocation2 + $0x800] sm:$0xff]
    %v5343 = vld [vmem:[#allocation2 + $0x808] sm:$0xff]
    %v5344 = vld [vmem:[#allocation2 + $0x810] sm:$0xff]
    %v5345 = vld [vmem:[#allocation2 + $0x818] sm:$0xff]
    %v5346 = vld [vmem:[#allocation2 + $0x820] sm:$0xff]
    %v5347 = vld [vmem:[#allocation2 + $0x828] sm:$0xff]
    %v5348 = vld [vmem:[#allocation2 + $0x830] sm:$0xff]
    %v5349 = vld [vmem:[#allocation2 + $0x838] sm:$0xff]
    %v5350 = vld [vmem:[#allocation2 + $0x840] sm:$0xff]
    %v5351 = vld [vmem:[#allocation2 + $0x848] sm:$0xff]
    %v5352 = vld [vmem:[#allocation2 + $0x850] sm:$0xff]
    %v5353 = vld [vmem:[#allocation2 + $0x858] sm:$0xff]
    %v5354 = vld [vmem:[#allocation2 + $0x860] sm:$0xff]
    %v5355 = vld [vmem:[#allocation2 + $0x868] sm:$0xff]
    %v5356 = vld [vmem:[#allocation2 + $0x870] sm:$0xff]
    %v5357 = vld [vmem:[#allocation2 + $0x878] sm:$0xff]
    %v5358 = vld [vmem:[#allocation2 + $0x880] sm:$0xff]
    %v5359 = vld [vmem:[#allocation2 + $0x888] sm:$0xff]
    %v5360 = vld [vmem:[#allocation2 + $0x890] sm:$0xff]
    %v5361 = vld [vmem:[#allocation2 + $0x898] sm:$0xff]
    %v5362 = vld [vmem:[#allocation2 + $0x8a0] sm:$0xff]
    %v5363 = vld [vmem:[#allocation2 + $0x8a8] sm:$0xff]
    %v5364 = vld [vmem:[#allocation2 + $0x8b0] sm:$0xff]
    %v5365 = vld [vmem:[#allocation2 + $0x8b8] sm:$0xff]
    %v5366 = vld [vmem:[#allocation2 + $0x8c0] sm:$0xff]
    %v5367 = vld [vmem:[#allocation2 + $0x8c8] sm:$0xff]
    %v5368 = vld [vmem:[#allocation2 + $0x8d0] sm:$0xff]
    %v5369 = vld [vmem:[#allocation2 + $0x8d8] sm:$0xff]
    %v5370 = vld [vmem:[#allocation2 + $0x8e0] sm:$0xff]
    %v5371 = vld [vmem:[#allocation2 + $0x8e8] sm:$0xff]
    %v5372 = vld [vmem:[#allocation2 + $0x8f0] sm:$0xff]
    %v5373 = vld [vmem:[#allocation2 + $0x8f8] sm:$0xff]
    %v5374 = vld [vmem:[%s3] sm:$0xf]
    %v5375 = vld [vmem:[%s3 + $0x4] sm:$0xf]
    %v5376 = vld [vmem:[%s3 + $0x8] sm:$0xf]
    %v5377 = vld [vmem:[%s3 + $0xc] sm:$0xf]
    %v5378 = vld [vmem:[%s3 + $0x10] sm:$0xf]
    %v5379 = vld [vmem:[%s3 + $0x14] sm:$0xf]
    %v5380 = vld [vmem:[%s3 + $0x18] sm:$0xf]
    %v5381 = vld [vmem:[%s3 + $0x1c] sm:$0xf]
    %v5382 = vld [vmem:[%s3 + $0x20] sm:$0xf]
    %v5383 = vld [vmem:[%s3 + $0x24] sm:$0xf]
    %v5384 = vld [vmem:[%s3 + $0x28] sm:$0xf]
    %v5385 = vld [vmem:[%s3 + $0x2c] sm:$0xf]
    %v5386 = vld [vmem:[%s3 + $0x30] sm:$0xf]
    %v5387 = vld [vmem:[%s3 + $0x34] sm:$0xf]
    %v5388 = vld [vmem:[%s3 + $0x38] sm:$0xf]
    %v5389 = vld [vmem:[%s3 + $0x3c] sm:$0xf]
    %v5390 = vld [vmem:[%s3 + $0x40] sm:$0xf]
    %v5391 = vld [vmem:[%s3 + $0x44] sm:$0xf]
    %v5392 = vld [vmem:[%s3 + $0x48] sm:$0xf]
    %v5393 = vld [vmem:[%s3 + $0x4c] sm:$0xf]
    %v5394 = vld [vmem:[%s3 + $0x50] sm:$0xf]
    %v5395 = vld [vmem:[%s3 + $0x54] sm:$0xf]
    %v5396 = vld [vmem:[%s3 + $0x58] sm:$0xf]
    %v5397 = vld [vmem:[%s3 + $0x5c] sm:$0xf]
    %v5398 = vld [vmem:[%s3 + $0x60] sm:$0xf]
    %v5399 = vld [vmem:[%s3 + $0x64] sm:$0xf]
    %v5400 = vld [vmem:[%s3 + $0x68] sm:$0xf]
    %v5401 = vld [vmem:[%s3 + $0x6c] sm:$0xf]
    %v5402 = vld [vmem:[%s3 + $0x70] sm:$0xf]
    %v5403 = vld [vmem:[%s3 + $0x74] sm:$0xf]
    %v5404 = vld [vmem:[%s3 + $0x78] sm:$0xf]
    %v5405 = vld [vmem:[%s3 + $0x7c] sm:$0xf]
    %v5406 = vld [vmem:[%s3 + $0x80] sm:$0xf]
    %v5407 = vld [vmem:[%s3 + $0x84] sm:$0xf]
    %v5408 = vld [vmem:[%s3 + $0x88] sm:$0xf]
    %v5409 = vld [vmem:[%s3 + $0x8c] sm:$0xf]
    %v5410 = vld [vmem:[%s3 + $0x90] sm:$0xf]
    %v5411 = vld [vmem:[%s3 + $0x94] sm:$0xf]
    %v5412 = vld [vmem:[%s3 + $0x98] sm:$0xf]
    %v5413 = vld [vmem:[%s3 + $0x9c] sm:$0xf]
    %v5414 = vld [vmem:[%s3 + $0xa0] sm:$0xf]
    %v5415 = vld [vmem:[%s3 + $0xa4] sm:$0xf]
    %v5416 = vld [vmem:[%s3 + $0xa8] sm:$0xf]
    %v5417 = vld [vmem:[%s3 + $0xac] sm:$0xf]
    %v5418 = vld [vmem:[%s3 + $0xb0] sm:$0xf]
    %v5419 = vld [vmem:[%s3 + $0xb4] sm:$0xf]
    %v5420 = vld [vmem:[%s3 + $0xb8] sm:$0xf]
    %v5421 = vld [vmem:[%s3 + $0xbc] sm:$0xf]
    %v5422 = vld [vmem:[%s3 + $0xc0] sm:$0xf]
    %v5423 = vld [vmem:[%s3 + $0xc4] sm:$0xf]
    %v5424 = vld [vmem:[%s3 + $0xc8] sm:$0xf]
    %v5425 = vld [vmem:[%s3 + $0xcc] sm:$0xf]
    %v5426 = vld [vmem:[%s3 + $0xd0] sm:$0xf]
    %v5427 = vld [vmem:[%s3 + $0xd4] sm:$0xf]
    %v5428 = vld [vmem:[%s3 + $0xd8] sm:$0xf]
    %v5429 = vld [vmem:[%s3 + $0xdc] sm:$0xf]
    %v5430 = vld [vmem:[%s3 + $0xe0] sm:$0xf]
    %v5431 = vld [vmem:[%s3 + $0xe4] sm:$0xf]
    %v5432 = vld [vmem:[%s3 + $0xe8] sm:$0xf]
    %v5433 = vld [vmem:[%s3 + $0xec] sm:$0xf]
    %v5434 = vld [vmem:[%s3 + $0xf0] sm:$0xf]
    %v5435 = vld [vmem:[%s3 + $0xf4] sm:$0xf]
    %v5436 = vld [vmem:[%s3 + $0xf8] sm:$0xf]
    %v5437 = vld [vmem:[%s3 + $0xfc] sm:$0xf]
    %v5438 = vld [vmem:[%s3 + $0x100] sm:$0xf]
    %v5439 = vld [vmem:[%s3 + $0x104] sm:$0xf]
    %v5440 = vld [vmem:[%s3 + $0x108] sm:$0xf]
    %v5441 = vld [vmem:[%s3 + $0x10c] sm:$0xf]
    %v5442 = vld [vmem:[%s3 + $0x110] sm:$0xf]
    %v5443 = vld [vmem:[%s3 + $0x114] sm:$0xf]
    %v5444 = vld [vmem:[%s3 + $0x118] sm:$0xf]
    %v5445 = vld [vmem:[%s3 + $0x11c] sm:$0xf]
    %v5446 = vld [vmem:[%s3 + $0x120] sm:$0xf]
    %v5447 = vld [vmem:[%s3 + $0x124] sm:$0xf]
    %v5448 = vld [vmem:[%s3 + $0x128] sm:$0xf]
    %v5449 = vld [vmem:[%s3 + $0x12c] sm:$0xf]
    %v5450 = vld [vmem:[%s3 + $0x130] sm:$0xf]
    %v5451 = vld [vmem:[%s3 + $0x134] sm:$0xf]
    %v5452 = vld [vmem:[%s3 + $0x138] sm:$0xf]
    %v5453 = vld [vmem:[%s3 + $0x13c] sm:$0xf]
    %v5454 = vld [vmem:[%s3 + $0x140] sm:$0xf]
    %v5455 = vld [vmem:[%s3 + $0x144] sm:$0xf]
    %v5456 = vld [vmem:[%s3 + $0x148] sm:$0xf]
    %v5457 = vld [vmem:[%s3 + $0x14c] sm:$0xf]
    %v5458 = vld [vmem:[%s3 + $0x150] sm:$0xf]
    %v5459 = vld [vmem:[%s3 + $0x154] sm:$0xf]
    %v5460 = vld [vmem:[%s3 + $0x158] sm:$0xf]
    %v5461 = vld [vmem:[%s3 + $0x15c] sm:$0xf]
    %v5462 = vld [vmem:[%s3 + $0x160] sm:$0xf]
    %v5463 = vld [vmem:[%s3 + $0x164] sm:$0xf]
    %v5464 = vld [vmem:[%s3 + $0x168] sm:$0xf]
    %v5465 = vld [vmem:[%s3 + $0x16c] sm:$0xf]
    %v5466 = vld [vmem:[%s3 + $0x170] sm:$0xf]
    %v5467 = vld [vmem:[%s3 + $0x174] sm:$0xf]
    %v5468 = vld [vmem:[%s3 + $0x178] sm:$0xf]
    %v5469 = vld [vmem:[%s3 + $0x17c] sm:$0xf]
    %v5470 = vld [vmem:[%s3 + $0x180] sm:$0xf]
    %v5471 = vld [vmem:[%s3 + $0x184] sm:$0xf]
    %v5472 = vld [vmem:[%s3 + $0x188] sm:$0xf]
    %v5473 = vld [vmem:[%s3 + $0x18c] sm:$0xf]
    %v5474 = vld [vmem:[%s3 + $0x190] sm:$0xf]
    %v5475 = vld [vmem:[%s3 + $0x194] sm:$0xf]
    %v5476 = vld [vmem:[%s3 + $0x198] sm:$0xf]
    %v5477 = vld [vmem:[%s3 + $0x19c] sm:$0xf]
    %v5478 = vld [vmem:[%s3 + $0x1a0] sm:$0xf]
    %v5479 = vld [vmem:[%s3 + $0x1a4] sm:$0xf]
    %v5480 = vld [vmem:[%s3 + $0x1a8] sm:$0xf]
    %v5481 = vld [vmem:[%s3 + $0x1ac] sm:$0xf]
    %v5482 = vld [vmem:[%s3 + $0x1b0] sm:$0xf]
    %v5483 = vld [vmem:[%s3 + $0x1b4] sm:$0xf]
    %v5484 = vld [vmem:[%s3 + $0x1b8] sm:$0xf]
    %v5485 = vld [vmem:[%s3 + $0x1bc] sm:$0xf]
    %v5486 = vld [vmem:[%s3 + $0x1c0] sm:$0xf]
    %v5487 = vld [vmem:[%s3 + $0x1c4] sm:$0xf]
    %v5488 = vld [vmem:[%s3 + $0x1c8] sm:$0xf]
    %v5489 = vld [vmem:[%s3 + $0x1cc] sm:$0xf]
    %v5490 = vld [vmem:[%s3 + $0x1d0] sm:$0xf]
    %v5491 = vld [vmem:[%s3 + $0x1d4] sm:$0xf]
    %v5492 = vld [vmem:[%s3 + $0x1d8] sm:$0xf]
    %v5493 = vld [vmem:[%s3 + $0x1dc] sm:$0xf]
    %v5494 = vld [vmem:[%s3 + $0x1e0] sm:$0xf]
    %v5495 = vld [vmem:[%s3 + $0x1e4] sm:$0xf]
    %v5496 = vld [vmem:[%s3 + $0x1e8] sm:$0xf]
    %v5497 = vld [vmem:[%s3 + $0x1ec] sm:$0xf]
    %v5498 = vld [vmem:[%s3 + $0x1f0] sm:$0xf]
    %v5499 = vld [vmem:[%s3 + $0x1f4] sm:$0xf]
    %v5500 = vld [vmem:[%s3 + $0x1f8] sm:$0xf]
    %v5501 = vld [vmem:[%s3 + $0x1fc] sm:$0xf]
    %v5502 = vld [vmem:[%s3 + $0x200] sm:$0xf]
    %v5503 = vld [vmem:[%s3 + $0x204] sm:$0xf]
    %v5504 = vld [vmem:[%s3 + $0x208] sm:$0xf]
    %v5505 = vld [vmem:[%s3 + $0x20c] sm:$0xf]
    %v5506 = vld [vmem:[%s3 + $0x210] sm:$0xf]
    %v5507 = vld [vmem:[%s3 + $0x214] sm:$0xf]
    %v5508 = vld [vmem:[%s3 + $0x218] sm:$0xf]
    %v5509 = vld [vmem:[%s3 + $0x21c] sm:$0xf]
    %v5510 = vld [vmem:[%s3 + $0x220] sm:$0xf]
    %v5511 = vld [vmem:[%s3 + $0x224] sm:$0xf]
    %v5512 = vld [vmem:[%s3 + $0x228] sm:$0xf]
    %v5513 = vld [vmem:[%s3 + $0x22c] sm:$0xf]
    %v5514 = vld [vmem:[%s3 + $0x230] sm:$0xf]
    %v5515 = vld [vmem:[%s3 + $0x234] sm:$0xf]
    %v5516 = vld [vmem:[%s3 + $0x238] sm:$0xf]
    %v5517 = vld [vmem:[%s3 + $0x23c] sm:$0xf]
    %v5518 = vld [vmem:[%s4] sm:$0x1]
    %v5520 = vlaneseq
    %v5521 = vshrl.u32 %v5520, 7
    %v5522 = vsub.s32 0, %v5521
    %v5523 = vrot.slane %v5518, %v5522
    %v5669 = vunpack.c.l.b16 %v5374
    %v5670 = vunpack.c.l.b16 %v5375
    %v5671 = vunpack.c.l.b16 %v5376
    %v5672 = vunpack.c.l.b16 %v5377
    %v5673 = vunpack.c.l.b16 %v5378
    %v5674 = vunpack.c.l.b16 %v5379
    %v5675 = vunpack.c.l.b16 %v5380
    %v5676 = vunpack.c.l.b16 %v5381
    %v5677 = vunpack.c.l.b16 %v5382
    %v5678 = vunpack.c.l.b16 %v5383
    %v5679 = vunpack.c.l.b16 %v5384
    %v5680 = vunpack.c.l.b16 %v5385
    %v5681 = vunpack.c.l.b16 %v5386
    %v5682 = vunpack.c.l.b16 %v5387
    %v5683 = vunpack.c.l.b16 %v5388
    %v5684 = vunpack.c.l.b16 %v5389
    %v5685 = vunpack.c.l.b16 %v5390
    %v5686 = vunpack.c.l.b16 %v5391
    %v5687 = vunpack.c.l.b16 %v5392
    %v5688 = vunpack.c.l.b16 %v5393
    %v5689 = vunpack.c.l.b16 %v5394
    %v5690 = vunpack.c.l.b16 %v5395
    %v5691 = vunpack.c.l.b16 %v5396
    %v5692 = vunpack.c.l.b16 %v5397
    %v5693 = vunpack.c.l.b16 %v5398
    %v5694 = vunpack.c.l.b16 %v5399
    %v5695 = vunpack.c.l.b16 %v5400
    %v5696 = vunpack.c.l.b16 %v5401
    %v5697 = vunpack.c.l.b16 %v5402
    %v5698 = vunpack.c.l.b16 %v5403
    %v5699 = vunpack.c.l.b16 %v5404
    %v5700 = vunpack.c.l.b16 %v5405
    %v5701 = vunpack.c.l.b16 %v5406
    %v5702 = vunpack.c.l.b16 %v5407
    %v5703 = vunpack.c.l.b16 %v5408
    %v5704 = vunpack.c.l.b16 %v5409
    %v5705 = vunpack.c.l.b16 %v5410
    %v5706 = vunpack.c.l.b16 %v5411
    %v5707 = vunpack.c.l.b16 %v5412
    %v5708 = vunpack.c.l.b16 %v5413
    %v5709 = vunpack.c.l.b16 %v5414
    %v5710 = vunpack.c.l.b16 %v5415
    %v5711 = vunpack.c.l.b16 %v5416
    %v5712 = vunpack.c.l.b16 %v5417
    %v5713 = vunpack.c.l.b16 %v5418
    %v5714 = vunpack.c.l.b16 %v5419
    %v5715 = vunpack.c.l.b16 %v5420
    %v5716 = vunpack.c.l.b16 %v5421
    %v5717 = vunpack.c.l.b16 %v5422
    %v5718 = vunpack.c.l.b16 %v5423
    %v5719 = vunpack.c.l.b16 %v5424
    %v5720 = vunpack.c.l.b16 %v5425
    %v5721 = vunpack.c.l.b16 %v5426
    %v5722 = vunpack.c.l.b16 %v5427
    %v5723 = vunpack.c.l.b16 %v5428
    %v5724 = vunpack.c.l.b16 %v5429
    %v5725 = vunpack.c.l.b16 %v5430
    %v5726 = vunpack.c.l.b16 %v5431
    %v5727 = vunpack.c.l.b16 %v5432
    %v5728 = vunpack.c.l.b16 %v5433
    %v5729 = vunpack.c.l.b16 %v5434
    %v5730 = vunpack.c.l.b16 %v5435
    %v5731 = vunpack.c.l.b16 %v5436
    %v5732 = vunpack.c.l.b16 %v5437
    %v5733 = vunpack.c.l.b16 %v5438
    %v5734 = vunpack.c.l.b16 %v5439
    %v5735 = vunpack.c.l.b16 %v5440
    %v5736 = vunpack.c.l.b16 %v5441
    %v5737 = vunpack.c.l.b16 %v5442
    %v5738 = vunpack.c.l.b16 %v5443
    %v5739 = vunpack.c.l.b16 %v5444
    %v5740 = vunpack.c.l.b16 %v5445
    %v5741 = vunpack.c.l.b16 %v5446
    %v5742 = vunpack.c.l.b16 %v5447
    %v5743 = vunpack.c.l.b16 %v5448
    %v5744 = vunpack.c.l.b16 %v5449
    %v5745 = vunpack.c.l.b16 %v5450
    %v5746 = vunpack.c.l.b16 %v5451
    %v5747 = vunpack.c.l.b16 %v5452
    %v5748 = vunpack.c.l.b16 %v5453
    %v5749 = vunpack.c.l.b16 %v5454
    %v5750 = vunpack.c.l.b16 %v5455
    %v5751 = vunpack.c.l.b16 %v5456
    %v5752 = vunpack.c.l.b16 %v5457
    %v5753 = vunpack.c.l.b16 %v5458
    %v5754 = vunpack.c.l.b16 %v5459
    %v5755 = vunpack.c.l.b16 %v5460
    %v5756 = vunpack.c.l.b16 %v5461
    %v5757 = vunpack.c.l.b16 %v5462
    %v5758 = vunpack.c.l.b16 %v5463
    %v5759 = vunpack.c.l.b16 %v5464
    %v5760 = vunpack.c.l.b16 %v5465
    %v5761 = vunpack.c.l.b16 %v5466
    %v5762 = vunpack.c.l.b16 %v5467
    %v5763 = vunpack.c.l.b16 %v5468
    %v5764 = vunpack.c.l.b16 %v5469
    %v5765 = vunpack.c.l.b16 %v5470
    %v5766 = vunpack.c.l.b16 %v5471
    %v5767 = vunpack.c.l.b16 %v5472
    %v5768 = vunpack.c.l.b16 %v5473
    %v5769 = vunpack.c.l.b16 %v5474
    %v5770 = vunpack.c.l.b16 %v5475
    %v5771 = vunpack.c.l.b16 %v5476
    %v5772 = vunpack.c.l.b16 %v5477
    %v5773 = vunpack.c.l.b16 %v5478
    %v5774 = vunpack.c.l.b16 %v5479
    %v5775 = vunpack.c.l.b16 %v5480
    %v5776 = vunpack.c.l.b16 %v5481
    %v5777 = vunpack.c.l.b16 %v5482
    %v5778 = vunpack.c.l.b16 %v5483
    %v5779 = vunpack.c.l.b16 %v5484
    %v5780 = vunpack.c.l.b16 %v5485
    %v5781 = vunpack.c.l.b16 %v5486
    %v5782 = vunpack.c.l.b16 %v5487
    %v5783 = vunpack.c.l.b16 %v5488
    %v5784 = vunpack.c.l.b16 %v5489
    %v5785 = vunpack.c.l.b16 %v5490
    %v5786 = vunpack.c.l.b16 %v5491
    %v5787 = vunpack.c.l.b16 %v5492
    %v5788 = vunpack.c.l.b16 %v5493
    %v5789 = vunpack.c.l.b16 %v5494
    %v5790 = vunpack.c.l.b16 %v5495
    %v5791 = vunpack.c.l.b16 %v5496
    %v5792 = vunpack.c.l.b16 %v5497
    %v5793 = vunpack.c.l.b16 %v5498
    %v5794 = vunpack.c.l.b16 %v5499
    %v5795 = vunpack.c.l.b16 %v5500
    %v5796 = vunpack.c.l.b16 %v5501
    %v5797 = vunpack.c.l.b16 %v5502
    %v5798 = vunpack.c.l.b16 %v5503
    %v5799 = vunpack.c.l.b16 %v5504
    %v5800 = vunpack.c.l.b16 %v5505
    %v5801 = vunpack.c.l.b16 %v5506
    %v5802 = vunpack.c.l.b16 %v5507
    %v5803 = vunpack.c.l.b16 %v5508
    %v5804 = vunpack.c.l.b16 %v5509
    %v5805 = vunpack.c.l.b16 %v5510
    %v5806 = vunpack.c.l.b16 %v5511
    %v5807 = vunpack.c.l.b16 %v5512
    %v5808 = vunpack.c.l.b16 %v5513
    %v5809 = vunpack.c.l.b16 %v5514
    %v5810 = vunpack.c.l.b16 %v5515
    %v5811 = vunpack.c.l.b16 %v5516
    %v5812 = vunpack.c.l.b16 %v5517
    %v5813 = vpack.c.b16 %v5670, %v5669
    %v5814 = vpack.c.b16 %v5672, %v5671
    %v5815 = vpack.c.b16 %v5674, %v5673
    %v5816 = vpack.c.b16 %v5676, %v5675
    %v5817 = vpack.c.b16 %v5678, %v5677
    %v5818 = vpack.c.b16 %v5680, %v5679
    %v5819 = vpack.c.b16 %v5682, %v5681
    %v5820 = vpack.c.b16 %v5684, %v5683
    %v5821 = vpack.c.b16 %v5686, %v5685
    %v5822 = vpack.c.b16 %v5688, %v5687
    %v5823 = vpack.c.b16 %v5690, %v5689
    %v5824 = vpack.c.b16 %v5692, %v5691
    %v5825 = vpack.c.b16 %v5694, %v5693
    %v5826 = vpack.c.b16 %v5696, %v5695
    %v5827 = vpack.c.b16 %v5698, %v5697
    %v5828 = vpack.c.b16 %v5700, %v5699
    %v5829 = vpack.c.b16 %v5702, %v5701
    %v5830 = vpack.c.b16 %v5704, %v5703
    %v5831 = vpack.c.b16 %v5706, %v5705
    %v5832 = vpack.c.b16 %v5708, %v5707
    %v5833 = vpack.c.b16 %v5710, %v5709
    %v5834 = vpack.c.b16 %v5712, %v5711
    %v5835 = vpack.c.b16 %v5714, %v5713
    %v5836 = vpack.c.b16 %v5716, %v5715
    %v5837 = vpack.c.b16 %v5718, %v5717
    %v5838 = vpack.c.b16 %v5720, %v5719
    %v5839 = vpack.c.b16 %v5722, %v5721
    %v5840 = vpack.c.b16 %v5724, %v5723
    %v5841 = vpack.c.b16 %v5726, %v5725
    %v5842 = vpack.c.b16 %v5728, %v5727
    %v5843 = vpack.c.b16 %v5730, %v5729
    %v5844 = vpack.c.b16 %v5732, %v5731
    %v5845 = vpack.c.b16 %v5734, %v5733
    %v5846 = vpack.c.b16 %v5736, %v5735
    %v5847 = vpack.c.b16 %v5738, %v5737
    %v5848 = vpack.c.b16 %v5740, %v5739
    %v5849 = vpack.c.b16 %v5742, %v5741
    %v5850 = vpack.c.b16 %v5744, %v5743
    %v5851 = vpack.c.b16 %v5746, %v5745
    %v5852 = vpack.c.b16 %v5748, %v5747
    %v5853 = vpack.c.b16 %v5750, %v5749
    %v5854 = vpack.c.b16 %v5752, %v5751
    %v5855 = vpack.c.b16 %v5754, %v5753
    %v5856 = vpack.c.b16 %v5756, %v5755
    %v5857 = vpack.c.b16 %v5758, %v5757
    %v5858 = vpack.c.b16 %v5760, %v5759
    %v5859 = vpack.c.b16 %v5762, %v5761
    %v5860 = vpack.c.b16 %v5764, %v5763
    %v5861 = vpack.c.b16 %v5766, %v5765
    %v5862 = vpack.c.b16 %v5768, %v5767
    %v5863 = vpack.c.b16 %v5770, %v5769
    %v5864 = vpack.c.b16 %v5772, %v5771
    %v5865 = vpack.c.b16 %v5774, %v5773
    %v5866 = vpack.c.b16 %v5776, %v5775
    %v5867 = vpack.c.b16 %v5778, %v5777
    %v5868 = vpack.c.b16 %v5780, %v5779
    %v5869 = vpack.c.b16 %v5782, %v5781
    %v5870 = vpack.c.b16 %v5784, %v5783
    %v5871 = vpack.c.b16 %v5786, %v5785
    %v5872 = vpack.c.b16 %v5788, %v5787
    %v5873 = vpack.c.b16 %v5790, %v5789
    %v5874 = vpack.c.b16 %v5792, %v5791
    %v5875 = vpack.c.b16 %v5794, %v5793
    %v5876 = vpack.c.b16 %v5796, %v5795
    %v5877 = vpack.c.b16 %v5798, %v5797
    %v5878 = vpack.c.b16 %v5800, %v5799
    %v5879 = vpack.c.b16 %v5802, %v5801
    %v5880 = vpack.c.b16 %v5804, %v5803
    %v5881 = vpack.c.b16 %v5806, %v5805
    %v5882 = vpack.c.b16 %v5808, %v5807
    %v5883 = vpack.c.b16 %v5810, %v5809
    %v5884 = vpack.c.b16 %v5812, %v5811
    %5957 = vmatprep.subr.bf16.mxu0 0
    %5958 = vmatpush1.bf16.msra.mxu0 %v5813
    %5959 = vmatprep.subr.bf16.mxu0 0
    %5960 = vmatpush1.bf16.msra.mxu0 %v5814
    %5961 = vmatprep.subr.bf16.mxu0 0
    %5962 = vmatpush1.bf16.msra.mxu0 %v5815
    %5963 = vmatprep.subr.bf16.mxu0 0
    %5964 = vmatpush1.bf16.msra.mxu0 %v5816
    %5965 = vmatprep.subr.bf16.mxu0 0
    %5966 = vmatpush1.bf16.msra.mxu0 %v5817
    %5967 = vmatprep.subr.bf16.mxu0 0
    %5968 = vmatpush1.bf16.msra.mxu0 %v5818
    %5969 = vmatprep.subr.bf16.mxu0 0
    %5970 = vmatpush1.bf16.msra.mxu0 %v5819
    %5971 = vmatprep.subr.bf16.mxu0 0
    %5972 = vmatpush1.bf16.msra.mxu0 %v5820
    %5973 = vmatprep.subr.bf16.mxu0 0
    %5974 = vmatpush1.bf16.msra.mxu0 %v5821
    %5975 = vmatprep.subr.bf16.mxu0 0
    %5976 = vmatpush1.bf16.msra.mxu0 %v5822
    %5977 = vmatprep.subr.bf16.mxu0 0
    %5978 = vmatpush1.bf16.msra.mxu0 %v5823
    %5979 = vmatprep.subr.bf16.mxu0 0
    %5980 = vmatpush1.bf16.msra.mxu0 %v5824
    %5981 = vmatprep.subr.bf16.mxu0 0
    %5982 = vmatpush1.bf16.msra.mxu0 %v5825
    %5983 = vmatprep.subr.bf16.mxu0 0
    %5984 = vmatpush1.bf16.msra.mxu0 %v5826
    %5985 = vmatprep.subr.bf16.mxu0 0
    %5986 = vmatpush1.bf16.msra.mxu0 %v5827
    %5987 = vmatprep.subr.bf16.mxu0 0
    %5988 = vmatpush1.bf16.msra.mxu0 %v5828
    %5989 = vmatprep.mubr.bf16.mxu0 %v5087
    %5990 = vmatmul.mubr.bf16.gmra.mrb[0].mxu0 %v5086
    %v5991 = vpop.f32.mrb[0].mxu0
    %v5992 = vadd.f32 %v5523, %v5991
    %v5993 = vpop.f32.mrb[0].mxu0
    %v5994 = vpop.f32.mrb[0].mxu0
    %v5995 = vadd.f32 %v5523, %v5994
    %v5996 = vpop.f32.mrb[0].mxu0
    %5997 = vmatprep.mubr.bf16.mxu0 %v5096
    %5998 = vmatmul.mubr.bf16.gmra.mrb[0].mxu0 %v5095
    %v5999 = vpop.f32.mrb[0].mxu0
    %v6000 = vadd.f32 %v5523, %v5999
    %v6001 = vpop.f32.mrb[0].mxu0
    %v6002 = vpop.f32.mrb[0].mxu0
    %v6003 = vadd.f32 %v5523, %v6002
    %v6004 = vpop.f32.mrb[0].mxu0
    %6005 = vmatprep.mubr.bf16.mxu0 %v5105
    %6006 = vmatmul.mubr.bf16.gmra.mrb[0].mxu0 %v5104
    %v6007 = vpop.f32.mrb[0].mxu0
    %v6008 = vadd.f32 %v5523, %v6007
    %v6009 = vpop.f32.mrb[0].mxu0
    %v6010 = vpop.f32.mrb[0].mxu0
    %v6011 = vadd.f32 %v5523, %v6010
    %v6012 = vpop.f32.mrb[0].mxu0
    %6013 = vmatprep.mubr.bf16.mxu0 %v5114
    %6014 = vmatmul.mubr.bf16.gmra.mrb[0].mxu0 %v5113
    %v6015 = vpop.f32.mrb[0].mxu0
    %v6016 = vadd.f32 %v5523, %v6015
    %v6017 = vpop.f32.mrb[0].mxu0
    %v6018 = vpop.f32.mrb[0].mxu0
    %v6019 = vadd.f32 %v5523, %v6018
    %v6020 = vpop.f32.mrb[0].mxu0
    %6021 = vmatprep.mubr.bf16.mxu0 %v5123
    %6022 = vmatmul.mubr.bf16.gmra.mrb[0].mxu0 %v5122
    %v6023 = vpop.f32.mrb[0].mxu0
    %v6024 = vadd.f32 %v5523, %v6023
    %v6025 = vpop.f32.mrb[0].mxu0
    %v6026 = vpop.f32.mrb[0].mxu0
    %v6027 = vadd.f32 %v5523, %v6026
    %v6028 = vpop.f32.mrb[0].mxu0
    %6029 = vmatprep.mubr.bf16.mxu0 %v5132
    %6030 = vmatmul.mubr.bf16.gmra.mrb[0].mxu0 %v5131
    %v6031 = vpop.f32.mrb[0].mxu0
    %v6032 = vadd.f32 %v5523, %v6031
    %v6033 = vpop.f32.mrb[0].mxu0
    %v6034 = vpop.f32.mrb[0].mxu0
    %v6035 = vadd.f32 %v5523, %v6034
    %v6036 = vpop.f32.mrb[0].mxu0
    %6037 = vmatprep.mubr.bf16.mxu0 %v5141
    %6038 = vmatmul.mubr.bf16.gmra.mrb[0].mxu0 %v5140
    %v6039 = vpop.f32.mrb[0].mxu0
    %v6040 = vadd.f32 %v5523, %v6039
    %v6041 = vpop.f32.mrb[0].mxu0
    %v6042 = vpop.f32.mrb[0].mxu0
    %v6043 = vadd.f32 %v5523, %v6042
    %v6044 = vpop.f32.mrb[0].mxu0
    %6045 = vmatprep.mubr.bf16.mxu0 %v5150
    %6046 = vmatmul.mubr.bf16.gmra.mrb[0].mxu0 %v5149
    %v6047 = vpop.f32.mrb[0].mxu0
    %v6048 = vadd.f32 %v5523, %v6047
    %v6049 = vpop.f32.mrb[0].mxu0
    %v6050 = vpop.f32.mrb[0].mxu0
    %v6051 = vadd.f32 %v5523, %v6050
    %v6052 = vpop.f32.mrb[0].mxu0
    %6053 = vmatprep.mubr.bf16.mxu0 %v5159
    %6054 = vmatmul.mubr.bf16.gmra.mrb[0].mxu0 %v5158
    %v6055 = vpop.f32.mrb[0].mxu0
    %v6056 = vadd.f32 %v5523, %v6055
    %v6057 = vpop.f32.mrb[0].mxu0
    %v6058 = vpop.f32.mrb[0].mxu0
    %v6059 = vadd.f32 %v5523, %v6058
    %v6060 = vpop.f32.mrb[0].mxu0
    %6061 = vmatprep.mubr.bf16.mxu0 %v5168
    %6062 = vmatmul.mubr.bf16.gmra.mrb[0].mxu0 %v5167
    %v6063 = vpop.f32.mrb[0].mxu0
    %v6064 = vadd.f32 %v5523, %v6063
    %v6065 = vpop.f32.mrb[0].mxu0
    %v6066 = vpop.f32.mrb[0].mxu0
    %v6067 = vadd.f32 %v5523, %v6066
    %v6068 = vpop.f32.mrb[0].mxu0
    %6069 = vmatprep.mubr.bf16.mxu0 %v5177
    %6070 = vmatmul.mubr.bf16.gmra.mrb[0].mxu0 %v5176
    %v6071 = vpop.f32.mrb[0].mxu0
    %v6072 = vadd.f32 %v5523, %v6071
    %v6073 = vpop.f32.mrb[0].mxu0
    %v6074 = vpop.f32.mrb[0].mxu0
    %v6075 = vadd.f32 %v5523, %v6074
    %v6076 = vpop.f32.mrb[0].mxu0
    %6077 = vmatprep.mubr.bf16.mxu0 %v5186
    %6078 = vmatmul.mubr.bf16.gmra.mrb[0].mxu0 %v5185
    %v6079 = vpop.f32.mrb[0].mxu0
    %v6080 = vadd.f32 %v5523, %v6079
    %v6081 = vpop.f32.mrb[0].mxu0
    %v6082 = vpop.f32.mrb[0].mxu0
    %v6083 = vadd.f32 %v5523, %v6082
    %v6084 = vpop.f32.mrb[0].mxu0
    %6085 = vmatprep.mubr.bf16.mxu0 %v5195
    %6086 = vmatmul.mubr.bf16.gmra.mrb[0].mxu0 %v5194
    %v6087 = vpop.f32.mrb[0].mxu0
    %v6088 = vadd.f32 %v5523, %v6087
    %v6089 = vpop.f32.mrb[0].mxu0
    %v6090 = vpop.f32.mrb[0].mxu0
    %v6091 = vadd.f32 %v5523, %v6090
    %v6092 = vpop.f32.mrb[0].mxu0
    %6093 = vmatprep.mubr.bf16.mxu0 %v5204
    %6094 = vmatmul.mubr.bf16.gmra.mrb[0].mxu0 %v5203
    %v6095 = vpop.f32.mrb[0].mxu0
    %v6096 = vadd.f32 %v5523, %v6095
    %v6097 = vpop.f32.mrb[0].mxu0
    %v6098 = vpop.f32.mrb[0].mxu0
    %v6099 = vadd.f32 %v5523, %v6098
    %v6100 = vpop.f32.mrb[0].mxu0
    %6101 = vmatprep.mubr.bf16.mxu0 %v5213
    %6102 = vmatmul.mubr.bf16.gmra.mrb[0].mxu0 %v5212
    %v6103 = vpop.f32.mrb[0].mxu0
    %v6104 = vadd.f32 %v5523, %v6103
    %v6105 = vpop.f32.mrb[0].mxu0
    %v6106 = vpop.f32.mrb[0].mxu0
    %v6107 = vadd.f32 %v5523, %v6106
    %v6108 = vpop.f32.mrb[0].mxu0
    %6109 = vmatprep.mubr.bf16.mxu0 %v5222
    %6110 = vmatmul.mubr.bf16.gmra.mrb[0].mxu0 %v5221
    %v6111 = vpop.f32.mrb[0].mxu0
    %v6112 = vadd.f32 %v5523, %v6111
    %v6113 = vpop.f32.mrb[0].mxu0
    %v6114 = vpop.f32.mrb[0].mxu0
    %v6115 = vadd.f32 %v5523, %v6114
    %v6116 = vpop.f32.mrb[0].mxu0
    %6117 = vmatprep.mubr.bf16.mxu0 %v5231
    %6118 = vmatmul.mubr.bf16.gmra.mrb[0].mxu0 %v5230
    %v6119 = vpop.f32.mrb[0].mxu0
    %v6120 = vadd.f32 %v5523, %v6119
    %v6121 = vpop.f32.mrb[0].mxu0
    %v6122 = vpop.f32.mrb[0].mxu0
    %v6123 = vadd.f32 %v5523, %v6122
    %v6124 = vpop.f32.mrb[0].mxu0
    %6125 = vmatprep.mubr.bf16.mxu0 %v5240
    %6126 = vmatmul.mubr.bf16.gmra.mrb[0].mxu0 %v5239
    %v6127 = vpop.f32.mrb[0].mxu0
    %v6128 = vadd.f32 %v5523, %v6127
    %v6129 = vpop.f32.mrb[0].mxu0
    %v6130 = vpop.f32.mrb[0].mxu0
    %v6131 = vadd.f32 %v5523, %v6130
    %v6132 = vpop.f32.mrb[0].mxu0
    %6133 = vmatprep.mubr.bf16.mxu0 %v5249
    %6134 = vmatmul.mubr.bf16.gmra.mrb[0].mxu0 %v5248
    %v6135 = vpop.f32.mrb[0].mxu0
    %v6136 = vadd.f32 %v5523, %v6135
    %v6137 = vpop.f32.mrb[0].mxu0
    %v6138 = vpop.f32.mrb[0].mxu0
    %v6139 = vadd.f32 %v5523, %v6138
    %v6140 = vpop.f32.mrb[0].mxu0
    %6141 = vmatprep.mubr.bf16.mxu0 %v5258
    %6142 = vmatmul.mubr.bf16.gmra.mrb[0].mxu0 %v5257
    %v6143 = vpop.f32.mrb[0].mxu0
    %v6144 = vadd.f32 %v5523, %v6143
    %v6145 = vpop.f32.mrb[0].mxu0
    %v6146 = vpop.f32.mrb[0].mxu0
    %v6147 = vadd.f32 %v5523, %v6146
    %v6148 = vpop.f32.mrb[0].mxu0
    %6149 = vmatprep.mubr.bf16.mxu0 %v5267
    %6150 = vmatmul.mubr.bf16.gmra.mrb[0].mxu0 %v5266
    %v6151 = vpop.f32.mrb[0].mxu0
    %v6152 = vadd.f32 %v5523, %v6151
    %v6153 = vpop.f32.mrb[0].mxu0
    %v6154 = vpop.f32.mrb[0].mxu0
    %v6155 = vadd.f32 %v5523, %v6154
    %v6156 = vpop.f32.mrb[0].mxu0
    %6157 = vmatprep.mubr.bf16.mxu0 %v5276
    %6158 = vmatmul.mubr.bf16.gmra.mrb[0].mxu0 %v5275
    %v6159 = vpop.f32.mrb[0].mxu0
    %v6160 = vadd.f32 %v5523, %v6159
    %v6161 = vpop.f32.mrb[0].mxu0
    %v6162 = vpop.f32.mrb[0].mxu0
    %v6163 = vadd.f32 %v5523, %v6162
    %v6164 = vpop.f32.mrb[0].mxu0
    %6165 = vmatprep.mubr.bf16.mxu0 %v5285
    %6166 = vmatmul.mubr.bf16.gmra.mrb[0].mxu0 %v5284
    %v6167 = vpop.f32.mrb[0].mxu0
    %v6168 = vadd.f32 %v5523, %v6167
    %v6169 = vpop.f32.mrb[0].mxu0
    %v6170 = vpop.f32.mrb[0].mxu0
    %v6171 = vadd.f32 %v5523, %v6170
    %v6172 = vpop.f32.mrb[0].mxu0
    %6173 = vmatprep.mubr.bf16.mxu0 %v5294
    %6174 = vmatmul.mubr.bf16.gmra.mrb[0].mxu0 %v5293
    %v6175 = vpop.f32.mrb[0].mxu0
    %v6176 = vadd.f32 %v5523, %v6175
    %v6177 = vpop.f32.mrb[0].mxu0
    %v6178 = vpop.f32.mrb[0].mxu0
    %v6179 = vadd.f32 %v5523, %v6178
    %v6180 = vpop.f32.mrb[0].mxu0
    %6181 = vmatprep.mubr.bf16.mxu0 %v5303
    %6182 = vmatmul.mubr.bf16.gmra.mrb[0].mxu0 %v5302
    %v6183 = vpop.f32.mrb[0].mxu0
    %v6184 = vadd.f32 %v5523, %v6183
    %v6185 = vpop.f32.mrb[0].mxu0
    %v6186 = vpop.f32.mrb[0].mxu0
    %v6187 = vadd.f32 %v5523, %v6186
    %v6188 = vpop.f32.mrb[0].mxu0
    %6189 = vmatprep.mubr.bf16.mxu0 %v5312
    %6190 = vmatmul.mubr.bf16.gmra.mrb[0].mxu0 %v5311
    %v6191 = vpop.f32.mrb[0].mxu0
    %v6192 = vadd.f32 %v5523, %v6191
    %v6193 = vpop.f32.mrb[0].mxu0
    %v6194 = vpop.f32.mrb[0].mxu0
    %v6195 = vadd.f32 %v5523, %v6194
    %v6196 = vpop.f32.mrb[0].mxu0
    %6197 = vmatprep.mubr.bf16.mxu0 %v5321
    %6198 = vmatmul.mubr.bf16.gmra.mrb[0].mxu0 %v5320
    %v6199 = vpop.f32.mrb[0].mxu0
    %v6200 = vadd.f32 %v5523, %v6199
    %v6201 = vpop.f32.mrb[0].mxu0
    %v6202 = vpop.f32.mrb[0].mxu0
    %v6203 = vadd.f32 %v5523, %v6202
    %v6204 = vpop.f32.mrb[0].mxu0
    %6205 = vmatprep.mubr.bf16.mxu0 %v5330
    %6206 = vmatmul.mubr.bf16.gmra.mrb[0].mxu0 %v5329
    %v6207 = vpop.f32.mrb[0].mxu0
    %v6208 = vadd.f32 %v5523, %v6207
    %v6209 = vpop.f32.mrb[0].mxu0
    %v6210 = vpop.f32.mrb[0].mxu0
    %v6211 = vadd.f32 %v5523, %v6210
    %v6212 = vpop.f32.mrb[0].mxu0
    %6213 = vmatprep.mubr.bf16.mxu0 %v5339
    %6214 = vmatmul.mubr.bf16.gmra.mrb[0].mxu0 %v5338
    %v6215 = vpop.f32.mrb[0].mxu0
    %v6216 = vadd.f32 %v5523, %v6215
    %v6217 = vpop.f32.mrb[0].mxu0
    %v6218 = vpop.f32.mrb[0].mxu0
    %v6219 = vadd.f32 %v5523, %v6218
    %v6220 = vpop.f32.mrb[0].mxu0
    %6221 = vmatprep.mubr.bf16.mxu0 %v5348
    %6222 = vmatmul.mubr.bf16.gmra.mrb[0].mxu0 %v5347
    %v6223 = vpop.f32.mrb[0].mxu0
    %v6224 = vadd.f32 %v5523, %v6223
    %v6225 = vpop.f32.mrb[0].mxu0
    %v6226 = vpop.f32.mrb[0].mxu0
    %v6227 = vadd.f32 %v5523, %v6226
    %v6228 = vpop.f32.mrb[0].mxu0
    %6229 = vmatprep.mubr.bf16.mxu0 %v5357
    %6230 = vmatmul.mubr.bf16.gmra.mrb[0].mxu0 %v5356
    %v6231 = vpop.f32.mrb[0].mxu0
    %v6232 = vadd.f32 %v5523, %v6231
    %v6233 = vpop.f32.mrb[0].mxu0
    %v6234 = vpop.f32.mrb[0].mxu0
    %v6235 = vadd.f32 %v5523, %v6234
    %v6236 = vpop.f32.mrb[0].mxu0
    %6237 = vmatprep.mubr.bf16.mxu0 %v5366
    %6238 = vmatmul.mubr.bf16.gmra.mrb[0].mxu0 %v5365
    %v6239 = vpop.f32.mrb[0].mxu0
    %v6240 = vadd.f32 %v5523, %v6239
    %v6241 = vpop.f32.mrb[0].mxu0
    %v6242 = vpop.f32.mrb[0].mxu0
    %v6243 = vadd.f32 %v5523, %v6242
    %v6244 = vpop.f32.mrb[0].mxu0
    %6245 = vdwg.mxu0
    %6246 = vmatprep.subr.bf16.mxu0 0
    %6247 = vmatpush1.bf16.msra.mxu0 %v5829
    %6248 = vmatprep.subr.bf16.mxu0 0
    %6249 = vmatpush1.bf16.msra.mxu0 %v5830
    %6250 = vmatprep.subr.bf16.mxu0 0
    %6251 = vmatpush1.bf16.msra.mxu0 %v5831
    %6252 = vmatprep.subr.bf16.mxu0 0
    %6253 = vmatpush1.bf16.msra.mxu0 %v5832
    %6254 = vmatprep.subr.bf16.mxu0 0
    %6255 = vmatpush1.bf16.msra.mxu0 %v5833
    %6256 = vmatprep.subr.bf16.mxu0 0
    %6257 = vmatpush1.bf16.msra.mxu0 %v5834
    %6258 = vmatprep.subr.bf16.mxu0 0
    %6259 = vmatpush1.bf16.msra.mxu0 %v5835
    %6260 = vmatprep.subr.bf16.mxu0 0
    %6261 = vmatpush1.bf16.msra.mxu0 %v5836
    %6262 = vmatprep.subr.bf16.mxu0 0
    %6263 = vmatpush1.bf16.msra.mxu0 %v5837
    %6264 = vmatprep.subr.bf16.mxu0 0
    %6265 = vmatpush1.bf16.msra.mxu0 %v5838
    %6266 = vmatprep.subr.bf16.mxu0 0
    %6267 = vmatpush1.bf16.msra.mxu0 %v5839
    %6268 = vmatprep.subr.bf16.mxu0 0
    %6269 = vmatpush1.bf16.msra.mxu0 %v5840
    %6270 = vmatprep.subr.bf16.mxu0 0
    %6271 = vmatpush1.bf16.msra.mxu0 %v5841
    %6272 = vmatprep.subr.bf16.mxu0 0
    %6273 = vmatpush1.bf16.msra.mxu0 %v5842
    %6274 = vmatprep.subr.bf16.mxu0 0
    %6275 = vmatpush1.bf16.msra.mxu0 %v5843
    %6276 = vmatprep.subr.bf16.mxu0 0
    %6277 = vmatpush1.bf16.msra.mxu0 %v5844
    %6278 = vmatprep.mubr.bf16.mxu0 %v5089
    %6279 = vmatmul.mubr.bf16.gmra.mrb[0].mxu0 %v5088
    %v6280 = vpop.f32.mrb[0].mxu0
    %v6281 = vadd.f32 %v5992, %v6280
    %v6282 = vpop.f32.mrb[0].mxu0
    %v6283 = vpop.f32.mrb[0].mxu0
    %v6284 = vadd.f32 %v5995, %v6283
    %v6285 = vpop.f32.mrb[0].mxu0
    %6286 = vmatprep.mubr.bf16.mxu0 %v5098
    %6287 = vmatmul.mubr.bf16.gmra.mrb[0].mxu0 %v5097
    %v6288 = vpop.f32.mrb[0].mxu0
    %v6289 = vadd.f32 %v6000, %v6288
    %v6290 = vpop.f32.mrb[0].mxu0
    %v6291 = vpop.f32.mrb[0].mxu0
    %v6292 = vadd.f32 %v6003, %v6291
    %v6293 = vpop.f32.mrb[0].mxu0
    %6294 = vmatprep.mubr.bf16.mxu0 %v5107
    %6295 = vmatmul.mubr.bf16.gmra.mrb[0].mxu0 %v5106
    %v6296 = vpop.f32.mrb[0].mxu0
    %v6297 = vadd.f32 %v6008, %v6296
    %v6298 = vpop.f32.mrb[0].mxu0
    %v6299 = vpop.f32.mrb[0].mxu0
    %v6300 = vadd.f32 %v6011, %v6299
    %v6301 = vpop.f32.mrb[0].mxu0
    %6302 = vmatprep.mubr.bf16.mxu0 %v5116
    %6303 = vmatmul.mubr.bf16.gmra.mrb[0].mxu0 %v5115
    %v6304 = vpop.f32.mrb[0].mxu0
    %v6305 = vadd.f32 %v6016, %v6304
    %v6306 = vpop.f32.mrb[0].mxu0
    %v6307 = vpop.f32.mrb[0].mxu0
    %v6308 = vadd.f32 %v6019, %v6307
    %v6309 = vpop.f32.mrb[0].mxu0
    %6310 = vmatprep.mubr.bf16.mxu0 %v5125
    %6311 = vmatmul.mubr.bf16.gmra.mrb[0].mxu0 %v5124
    %v6312 = vpop.f32.mrb[0].mxu0
    %v6313 = vadd.f32 %v6024, %v6312
    %v6314 = vpop.f32.mrb[0].mxu0
    %v6315 = vpop.f32.mrb[0].mxu0
    %v6316 = vadd.f32 %v6027, %v6315
    %v6317 = vpop.f32.mrb[0].mxu0
    %6318 = vmatprep.mubr.bf16.mxu0 %v5134
    %6319 = vmatmul.mubr.bf16.gmra.mrb[0].mxu0 %v5133
    %v6320 = vpop.f32.mrb[0].mxu0
    %v6321 = vadd.f32 %v6032, %v6320
    %v6322 = vpop.f32.mrb[0].mxu0
    %v6323 = vpop.f32.mrb[0].mxu0
    %v6324 = vadd.f32 %v6035, %v6323
    %v6325 = vpop.f32.mrb[0].mxu0
    %6326 = vmatprep.mubr.bf16.mxu0 %v5143
    %6327 = vmatmul.mubr.bf16.gmra.mrb[0].mxu0 %v5142
    %v6328 = vpop.f32.mrb[0].mxu0
    %v6329 = vadd.f32 %v6040, %v6328
    %v6330 = vpop.f32.mrb[0].mxu0
    %v6331 = vpop.f32.mrb[0].mxu0
    %v6332 = vadd.f32 %v6043, %v6331
    %v6333 = vpop.f32.mrb[0].mxu0
    %6334 = vmatprep.mubr.bf16.mxu0 %v5152
    %6335 = vmatmul.mubr.bf16.gmra.mrb[0].mxu0 %v5151
    %v6336 = vpop.f32.mrb[0].mxu0
    %v6337 = vadd.f32 %v6048, %v6336
    %v6338 = vpop.f32.mrb[0].mxu0
    %v6339 = vpop.f32.mrb[0].mxu0
    %v6340 = vadd.f32 %v6051, %v6339
    %v6341 = vpop.f32.mrb[0].mxu0
    %6342 = vmatprep.mubr.bf16.mxu0 %v5161
    %6343 = vmatmul.mubr.bf16.gmra.mrb[0].mxu0 %v5160
    %v6344 = vpop.f32.mrb[0].mxu0
    %v6345 = vadd.f32 %v6056, %v6344
    %v6346 = vpop.f32.mrb[0].mxu0
    %v6347 = vpop.f32.mrb[0].mxu0
    %v6348 = vadd.f32 %v6059, %v6347
    %v6349 = vpop.f32.mrb[0].mxu0
    %6350 = vmatprep.mubr.bf16.mxu0 %v5170
    %6351 = vmatmul.mubr.bf16.gmra.mrb[0].mxu0 %v5169
    %v6352 = vpop.f32.mrb[0].mxu0
    %v6353 = vadd.f32 %v6064, %v6352
    %v6354 = vpop.f32.mrb[0].mxu0
    %v6355 = vpop.f32.mrb[0].mxu0
    %v6356 = vadd.f32 %v6067, %v6355
    %v6357 = vpop.f32.mrb[0].mxu0
    %6358 = vmatprep.mubr.bf16.mxu0 %v5179
    %6359 = vmatmul.mubr.bf16.gmra.mrb[0].mxu0 %v5178
    %v6360 = vpop.f32.mrb[0].mxu0
    %v6361 = vadd.f32 %v6072, %v6360
    %v6362 = vpop.f32.mrb[0].mxu0
    %v6363 = vpop.f32.mrb[0].mxu0
    %v6364 = vadd.f32 %v6075, %v6363
    %v6365 = vpop.f32.mrb[0].mxu0
    %6366 = vmatprep.mubr.bf16.mxu0 %v5188
    %6367 = vmatmul.mubr.bf16.gmra.mrb[0].mxu0 %v5187
    %v6368 = vpop.f32.mrb[0].mxu0
    %v6369 = vadd.f32 %v6080, %v6368
    %v6370 = vpop.f32.mrb[0].mxu0
    %v6371 = vpop.f32.mrb[0].mxu0
    %v6372 = vadd.f32 %v6083, %v6371
    %v6373 = vpop.f32.mrb[0].mxu0
    %6374 = vmatprep.mubr.bf16.mxu0 %v5197
    %6375 = vmatmul.mubr.bf16.gmra.mrb[0].mxu0 %v5196
    %v6376 = vpop.f32.mrb[0].mxu0
    %v6377 = vadd.f32 %v6088, %v6376
    %v6378 = vpop.f32.mrb[0].mxu0
    %v6379 = vpop.f32.mrb[0].mxu0
    %v6380 = vadd.f32 %v6091, %v6379
    %v6381 = vpop.f32.mrb[0].mxu0
    %6382 = vmatprep.mubr.bf16.mxu0 %v5206
    %6383 = vmatmul.mubr.bf16.gmra.mrb[0].mxu0 %v5205
    %v6384 = vpop.f32.mrb[0].mxu0
    %v6385 = vadd.f32 %v6096, %v6384
    %v6386 = vpop.f32.mrb[0].mxu0
    %v6387 = vpop.f32.mrb[0].mxu0
    %v6388 = vadd.f32 %v6099, %v6387
    %v6389 = vpop.f32.mrb[0].mxu0
    %6390 = vmatprep.mubr.bf16.mxu0 %v5215
    %6391 = vmatmul.mubr.bf16.gmra.mrb[0].mxu0 %v5214
    %v6392 = vpop.f32.mrb[0].mxu0
    %v6393 = vadd.f32 %v6104, %v6392
    %v6394 = vpop.f32.mrb[0].mxu0
    %v6395 = vpop.f32.mrb[0].mxu0
    %v6396 = vadd.f32 %v6107, %v6395
    %v6397 = vpop.f32.mrb[0].mxu0
    %6398 = vmatprep.mubr.bf16.mxu0 %v5224
    %6399 = vmatmul.mubr.bf16.gmra.mrb[0].mxu0 %v5223
    %v6400 = vpop.f32.mrb[0].mxu0
    %v6401 = vadd.f32 %v6112, %v6400
    %v6402 = vpop.f32.mrb[0].mxu0
    %v6403 = vpop.f32.mrb[0].mxu0
    %v6404 = vadd.f32 %v6115, %v6403
    %v6405 = vpop.f32.mrb[0].mxu0
    %6406 = vmatprep.mubr.bf16.mxu0 %v5233
    %6407 = vmatmul.mubr.bf16.gmra.mrb[0].mxu0 %v5232
    %v6408 = vpop.f32.mrb[0].mxu0
    %v6409 = vadd.f32 %v6120, %v6408
    %v6410 = vpop.f32.mrb[0].mxu0
    %v6411 = vpop.f32.mrb[0].mxu0
    %v6412 = vadd.f32 %v6123, %v6411
    %v6413 = vpop.f32.mrb[0].mxu0
    %6414 = vmatprep.mubr.bf16.mxu0 %v5242
    %6415 = vmatmul.mubr.bf16.gmra.mrb[0].mxu0 %v5241
    %v6416 = vpop.f32.mrb[0].mxu0
    %v6417 = vadd.f32 %v6128, %v6416
    %v6418 = vpop.f32.mrb[0].mxu0
    %v6419 = vpop.f32.mrb[0].mxu0
    %v6420 = vadd.f32 %v6131, %v6419
    %v6421 = vpop.f32.mrb[0].mxu0
    %6422 = vmatprep.mubr.bf16.mxu0 %v5251
    %6423 = vmatmul.mubr.bf16.gmra.mrb[0].mxu0 %v5250
    %v6424 = vpop.f32.mrb[0].mxu0
    %v6425 = vadd.f32 %v6136, %v6424
    %v6426 = vpop.f32.mrb[0].mxu0
    %v6427 = vpop.f32.mrb[0].mxu0
    %v6428 = vadd.f32 %v6139, %v6427
    %v6429 = vpop.f32.mrb[0].mxu0
    %6430 = vmatprep.mubr.bf16.mxu0 %v5260
    %6431 = vmatmul.mubr.bf16.gmra.mrb[0].mxu0 %v5259
    %v6432 = vpop.f32.mrb[0].mxu0
    %v6433 = vadd.f32 %v6144, %v6432
    %v6434 = vpop.f32.mrb[0].mxu0
    %v6435 = vpop.f32.mrb[0].mxu0
    %v6436 = vadd.f32 %v6147, %v6435
    %v6437 = vpop.f32.mrb[0].mxu0
    %6438 = vmatprep.mubr.bf16.mxu0 %v5269
    %6439 = vmatmul.mubr.bf16.gmra.mrb[0].mxu0 %v5268
    %v6440 = vpop.f32.mrb[0].mxu0
    %v6441 = vadd.f32 %v6152, %v6440
    %v6442 = vpop.f32.mrb[0].mxu0
    %v6443 = vpop.f32.mrb[0].mxu0
    %v6444 = vadd.f32 %v6155, %v6443
    %v6445 = vpop.f32.mrb[0].mxu0
    %6446 = vmatprep.mubr.bf16.mxu0 %v5278
    %6447 = vmatmul.mubr.bf16.gmra.mrb[0].mxu0 %v5277
    %v6448 = vpop.f32.mrb[0].mxu0
    %v6449 = vadd.f32 %v6160, %v6448
    %v6450 = vpop.f32.mrb[0].mxu0
    %v6451 = vpop.f32.mrb[0].mxu0
    %v6452 = vadd.f32 %v6163, %v6451
    %v6453 = vpop.f32.mrb[0].mxu0
    %6454 = vmatprep.mubr.bf16.mxu0 %v5287
    %6455 = vmatmul.mubr.bf16.gmra.mrb[0].mxu0 %v5286
    %v6456 = vpop.f32.mrb[0].mxu0
    %v6457 = vadd.f32 %v6168, %v6456
    %v6458 = vpop.f32.mrb[0].mxu0
    %v6459 = vpop.f32.mrb[0].mxu0
    %v6460 = vadd.f32 %v6171, %v6459
    %v6461 = vpop.f32.mrb[0].mxu0
    %6462 = vmatprep.mubr.bf16.mxu0 %v5296
    %6463 = vmatmul.mubr.bf16.gmra.mrb[0].mxu0 %v5295
    %v6464 = vpop.f32.mrb[0].mxu0
    %v6465 = vadd.f32 %v6176, %v6464
    %v6466 = vpop.f32.mrb[0].mxu0
    %v6467 = vpop.f32.mrb[0].mxu0
    %v6468 = vadd.f32 %v6179, %v6467
    %v6469 = vpop.f32.mrb[0].mxu0
    %6470 = vmatprep.mubr.bf16.mxu0 %v5305
    %6471 = vmatmul.mubr.bf16.gmra.mrb[0].mxu0 %v5304
    %v6472 = vpop.f32.mrb[0].mxu0
    %v6473 = vadd.f32 %v6184, %v6472
    %v6474 = vpop.f32.mrb[0].mxu0
    %v6475 = vpop.f32.mrb[0].mxu0
    %v6476 = vadd.f32 %v6187, %v6475
    %v6477 = vpop.f32.mrb[0].mxu0
    %6478 = vmatprep.mubr.bf16.mxu0 %v5314
    %6479 = vmatmul.mubr.bf16.gmra.mrb[0].mxu0 %v5313
    %v6480 = vpop.f32.mrb[0].mxu0
    %v6481 = vadd.f32 %v6192, %v6480
    %v6482 = vpop.f32.mrb[0].mxu0
    %v6483 = vpop.f32.mrb[0].mxu0
    %v6484 = vadd.f32 %v6195, %v6483
    %v6485 = vpop.f32.mrb[0].mxu0
    %6486 = vmatprep.mubr.bf16.mxu0 %v5323
    %6487 = vmatmul.mubr.bf16.gmra.mrb[0].mxu0 %v5322
    %v6488 = vpop.f32.mrb[0].mxu0
    %v6489 = vadd.f32 %v6200, %v6488
    %v6490 = vpop.f32.mrb[0].mxu0
    %v6491 = vpop.f32.mrb[0].mxu0
    %v6492 = vadd.f32 %v6203, %v6491
    %v6493 = vpop.f32.mrb[0].mxu0
    %6494 = vmatprep.mubr.bf16.mxu0 %v5332
    %6495 = vmatmul.mubr.bf16.gmra.mrb[0].mxu0 %v5331
    %v6496 = vpop.f32.mrb[0].mxu0
    %v6497 = vadd.f32 %v6208, %v6496
    %v6498 = vpop.f32.mrb[0].mxu0
    %v6499 = vpop.f32.mrb[0].mxu0
    %v6500 = vadd.f32 %v6211, %v6499
    %v6501 = vpop.f32.mrb[0].mxu0
    %6502 = vmatprep.mubr.bf16.mxu0 %v5341
    %6503 = vmatmul.mubr.bf16.gmra.mrb[0].mxu0 %v5340
    %v6504 = vpop.f32.mrb[0].mxu0
    %v6505 = vadd.f32 %v6216, %v6504
    %v6506 = vpop.f32.mrb[0].mxu0
    %v6507 = vpop.f32.mrb[0].mxu0
    %v6508 = vadd.f32 %v6219, %v6507
    %v6509 = vpop.f32.mrb[0].mxu0
    %6510 = vmatprep.mubr.bf16.mxu0 %v5350
    %6511 = vmatmul.mubr.bf16.gmra.mrb[0].mxu0 %v5349
    %v6512 = vpop.f32.mrb[0].mxu0
    %v6513 = vadd.f32 %v6224, %v6512
    %v6514 = vpop.f32.mrb[0].mxu0
    %v6515 = vpop.f32.mrb[0].mxu0
    %v6516 = vadd.f32 %v6227, %v6515
    %v6517 = vpop.f32.mrb[0].mxu0
    %6518 = vmatprep.mubr.bf16.mxu0 %v5359
    %6519 = vmatmul.mubr.bf16.gmra.mrb[0].mxu0 %v5358
    %v6520 = vpop.f32.mrb[0].mxu0
    %v6521 = vadd.f32 %v6232, %v6520
    %v6522 = vpop.f32.mrb[0].mxu0
    %v6523 = vpop.f32.mrb[0].mxu0
    %v6524 = vadd.f32 %v6235, %v6523
    %v6525 = vpop.f32.mrb[0].mxu0
    %6526 = vmatprep.mubr.bf16.mxu0 %v5368
    %6527 = vmatmul.mubr.bf16.gmra.mrb[0].mxu0 %v5367
    %v6528 = vpop.f32.mrb[0].mxu0
    %v6529 = vadd.f32 %v6240, %v6528
    %v6530 = vpop.f32.mrb[0].mxu0
    %v6531 = vpop.f32.mrb[0].mxu0
    %v6532 = vadd.f32 %v6243, %v6531
    %v6533 = vpop.f32.mrb[0].mxu0
    %6534 = vdwg.mxu0
    %6535 = vmatprep.subr.bf16.mxu0 0
    %6536 = vmatpush1.bf16.msra.mxu0 %v5845
    %6537 = vmatprep.subr.bf16.mxu0 0
    %6538 = vmatpush1.bf16.msra.mxu0 %v5846
    %6539 = vmatprep.subr.bf16.mxu0 0
    %6540 = vmatpush1.bf16.msra.mxu0 %v5847
    %6541 = vmatprep.subr.bf16.mxu0 0
    %6542 = vmatpush1.bf16.msra.mxu0 %v5848
    %6543 = vmatprep.subr.bf16.mxu0 0
    %6544 = vmatpush1.bf16.msra.mxu0 %v5849
    %6545 = vmatprep.subr.bf16.mxu0 0
    %6546 = vmatpush1.bf16.msra.mxu0 %v5850
    %6547 = vmatprep.subr.bf16.mxu0 0
    %6548 = vmatpush1.bf16.msra.mxu0 %v5851
    %6549 = vmatprep.subr.bf16.mxu0 0
    %6550 = vmatpush1.bf16.msra.mxu0 %v5852
    %6551 = vmatprep.subr.bf16.mxu0 0
    %6552 = vmatpush1.bf16.msra.mxu0 %v5853
    %6553 = vmatprep.subr.bf16.mxu0 0
    %6554 = vmatpush1.bf16.msra.mxu0 %v5854
    %6555 = vmatprep.subr.bf16.mxu0 0
    %6556 = vmatpush1.bf16.msra.mxu0 %v5855
    %6557 = vmatprep.subr.bf16.mxu0 0
    %6558 = vmatpush1.bf16.msra.mxu0 %v5856
    %6559 = vmatprep.subr.bf16.mxu0 0
    %6560 = vmatpush1.bf16.msra.mxu0 %v5857
    %6561 = vmatprep.subr.bf16.mxu0 0
    %6562 = vmatpush1.bf16.msra.mxu0 %v5858
    %6563 = vmatprep.subr.bf16.mxu0 0
    %6564 = vmatpush1.bf16.msra.mxu0 %v5859
    %6565 = vmatprep.subr.bf16.mxu0 0
    %6566 = vmatpush1.bf16.msra.mxu0 %v5860
    %6567 = vmatprep.mubr.bf16.mxu0 %v5091
    %6568 = vmatmul.mubr.bf16.gmra.mrb[0].mxu0 %v5090
    %v6569 = vpop.f32.mrb[0].mxu0
    %v6570 = vadd.f32 %v6281, %v6569
    %v6571 = vpop.f32.mrb[0].mxu0
    %v6572 = vpop.f32.mrb[0].mxu0
    %v6573 = vadd.f32 %v6284, %v6572
    %v6574 = vpop.f32.mrb[0].mxu0
    %6575 = vmatprep.mubr.bf16.mxu0 %v5100
    %6576 = vmatmul.mubr.bf16.gmra.mrb[0].mxu0 %v5099
    %v6577 = vpop.f32.mrb[0].mxu0
    %v6578 = vadd.f32 %v6289, %v6577
    %v6579 = vpop.f32.mrb[0].mxu0
    %v6580 = vpop.f32.mrb[0].mxu0
    %v6581 = vadd.f32 %v6292, %v6580
    %v6582 = vpop.f32.mrb[0].mxu0
    %6583 = vmatprep.mubr.bf16.mxu0 %v5109
    %6584 = vmatmul.mubr.bf16.gmra.mrb[0].mxu0 %v5108
    %v6585 = vpop.f32.mrb[0].mxu0
    %v6586 = vadd.f32 %v6297, %v6585
    %v6587 = vpop.f32.mrb[0].mxu0
    %v6588 = vpop.f32.mrb[0].mxu0
    %v6589 = vadd.f32 %v6300, %v6588
    %v6590 = vpop.f32.mrb[0].mxu0
    %6591 = vmatprep.mubr.bf16.mxu0 %v5118
    %6592 = vmatmul.mubr.bf16.gmra.mrb[0].mxu0 %v5117
    %v6593 = vpop.f32.mrb[0].mxu0
    %v6594 = vadd.f32 %v6305, %v6593
    %v6595 = vpop.f32.mrb[0].mxu0
    %v6596 = vpop.f32.mrb[0].mxu0
    %v6597 = vadd.f32 %v6308, %v6596
    %v6598 = vpop.f32.mrb[0].mxu0
    %6599 = vmatprep.mubr.bf16.mxu0 %v5127
    %6600 = vmatmul.mubr.bf16.gmra.mrb[0].mxu0 %v5126
    %v6601 = vpop.f32.mrb[0].mxu0
    %v6602 = vadd.f32 %v6313, %v6601
    %v6603 = vpop.f32.mrb[0].mxu0
    %v6604 = vpop.f32.mrb[0].mxu0
    %v6605 = vadd.f32 %v6316, %v6604
    %v6606 = vpop.f32.mrb[0].mxu0
    %6607 = vmatprep.mubr.bf16.mxu0 %v5136
    %6608 = vmatmul.mubr.bf16.gmra.mrb[0].mxu0 %v5135
    %v6609 = vpop.f32.mrb[0].mxu0
    %v6610 = vadd.f32 %v6321, %v6609
    %v6611 = vpop.f32.mrb[0].mxu0
    %v6612 = vpop.f32.mrb[0].mxu0
    %v6613 = vadd.f32 %v6324, %v6612
    %v6614 = vpop.f32.mrb[0].mxu0
    %6615 = vmatprep.mubr.bf16.mxu0 %v5145
    %6616 = vmatmul.mubr.bf16.gmra.mrb[0].mxu0 %v5144
    %v6617 = vpop.f32.mrb[0].mxu0
    %v6618 = vadd.f32 %v6329, %v6617
    %v6619 = vpop.f32.mrb[0].mxu0
    %v6620 = vpop.f32.mrb[0].mxu0
    %v6621 = vadd.f32 %v6332, %v6620
    %v6622 = vpop.f32.mrb[0].mxu0
    %6623 = vmatprep.mubr.bf16.mxu0 %v5154
    %6624 = vmatmul.mubr.bf16.gmra.mrb[0].mxu0 %v5153
    %v6625 = vpop.f32.mrb[0].mxu0
    %v6626 = vadd.f32 %v6337, %v6625
    %v6627 = vpop.f32.mrb[0].mxu0
    %v6628 = vpop.f32.mrb[0].mxu0
    %v6629 = vadd.f32 %v6340, %v6628
    %v6630 = vpop.f32.mrb[0].mxu0
    %6631 = vmatprep.mubr.bf16.mxu0 %v5163
    %6632 = vmatmul.mubr.bf16.gmra.mrb[0].mxu0 %v5162
    %v6633 = vpop.f32.mrb[0].mxu0
    %v6634 = vadd.f32 %v6345, %v6633
    %v6635 = vpop.f32.mrb[0].mxu0
    %v6636 = vpop.f32.mrb[0].mxu0
    %v6637 = vadd.f32 %v6348, %v6636
    %v6638 = vpop.f32.mrb[0].mxu0
    %6639 = vmatprep.mubr.bf16.mxu0 %v5172
    %6640 = vmatmul.mubr.bf16.gmra.mrb[0].mxu0 %v5171
    %v6641 = vpop.f32.mrb[0].mxu0
    %v6642 = vadd.f32 %v6353, %v6641
    %v6643 = vpop.f32.mrb[0].mxu0
    %v6644 = vpop.f32.mrb[0].mxu0
    %v6645 = vadd.f32 %v6356, %v6644
    %v6646 = vpop.f32.mrb[0].mxu0
    %6647 = vmatprep.mubr.bf16.mxu0 %v5181
    %6648 = vmatmul.mubr.bf16.gmra.mrb[0].mxu0 %v5180
    %v6649 = vpop.f32.mrb[0].mxu0
    %v6650 = vadd.f32 %v6361, %v6649
    %v6651 = vpop.f32.mrb[0].mxu0
    %v6652 = vpop.f32.mrb[0].mxu0
    %v6653 = vadd.f32 %v6364, %v6652
    %v6654 = vpop.f32.mrb[0].mxu0
    %6655 = vmatprep.mubr.bf16.mxu0 %v5190
    %6656 = vmatmul.mubr.bf16.gmra.mrb[0].mxu0 %v5189
    %v6657 = vpop.f32.mrb[0].mxu0
    %v6658 = vadd.f32 %v6369, %v6657
    %v6659 = vpop.f32.mrb[0].mxu0
    %v6660 = vpop.f32.mrb[0].mxu0
    %v6661 = vadd.f32 %v6372, %v6660
    %v6662 = vpop.f32.mrb[0].mxu0
    %6663 = vmatprep.mubr.bf16.mxu0 %v5199
    %6664 = vmatmul.mubr.bf16.gmra.mrb[0].mxu0 %v5198
    %v6665 = vpop.f32.mrb[0].mxu0
    %v6666 = vadd.f32 %v6377, %v6665
    %v6667 = vpop.f32.mrb[0].mxu0
    %v6668 = vpop.f32.mrb[0].mxu0
    %v6669 = vadd.f32 %v6380, %v6668
    %v6670 = vpop.f32.mrb[0].mxu0
    %6671 = vmatprep.mubr.bf16.mxu0 %v5208
    %6672 = vmatmul.mubr.bf16.gmra.mrb[0].mxu0 %v5207
    %v6673 = vpop.f32.mrb[0].mxu0
    %v6674 = vadd.f32 %v6385, %v6673
    %v6675 = vpop.f32.mrb[0].mxu0
    %v6676 = vpop.f32.mrb[0].mxu0
    %v6677 = vadd.f32 %v6388, %v6676
    %v6678 = vpop.f32.mrb[0].mxu0
    %6679 = vmatprep.mubr.bf16.mxu0 %v5217
    %6680 = vmatmul.mubr.bf16.gmra.mrb[0].mxu0 %v5216
    %v6681 = vpop.f32.mrb[0].mxu0
    %v6682 = vadd.f32 %v6393, %v6681
    %v6683 = vpop.f32.mrb[0].mxu0
    %v6684 = vpop.f32.mrb[0].mxu0
    %v6685 = vadd.f32 %v6396, %v6684
    %v6686 = vpop.f32.mrb[0].mxu0
    %6687 = vmatprep.mubr.bf16.mxu0 %v5226
    %6688 = vmatmul.mubr.bf16.gmra.mrb[0].mxu0 %v5225
    %v6689 = vpop.f32.mrb[0].mxu0
    %v6690 = vadd.f32 %v6401, %v6689
    %v6691 = vpop.f32.mrb[0].mxu0
    %v6692 = vpop.f32.mrb[0].mxu0
    %v6693 = vadd.f32 %v6404, %v6692
    %v6694 = vpop.f32.mrb[0].mxu0
    %6695 = vmatprep.mubr.bf16.mxu0 %v5235
    %6696 = vmatmul.mubr.bf16.gmra.mrb[0].mxu0 %v5234
    %v6697 = vpop.f32.mrb[0].mxu0
    %v6698 = vadd.f32 %v6409, %v6697
    %v6699 = vpop.f32.mrb[0].mxu0
    %v6700 = vpop.f32.mrb[0].mxu0
    %v6701 = vadd.f32 %v6412, %v6700
    %v6702 = vpop.f32.mrb[0].mxu0
    %6703 = vmatprep.mubr.bf16.mxu0 %v5244
    %6704 = vmatmul.mubr.bf16.gmra.mrb[0].mxu0 %v5243
    %v6705 = vpop.f32.mrb[0].mxu0
    %v6706 = vadd.f32 %v6417, %v6705
    %v6707 = vpop.f32.mrb[0].mxu0
    %v6708 = vpop.f32.mrb[0].mxu0
    %v6709 = vadd.f32 %v6420, %v6708
    %v6710 = vpop.f32.mrb[0].mxu0
    %6711 = vmatprep.mubr.bf16.mxu0 %v5253
    %6712 = vmatmul.mubr.bf16.gmra.mrb[0].mxu0 %v5252
    %v6713 = vpop.f32.mrb[0].mxu0
    %v6714 = vadd.f32 %v6425, %v6713
    %v6715 = vpop.f32.mrb[0].mxu0
    %v6716 = vpop.f32.mrb[0].mxu0
    %v6717 = vadd.f32 %v6428, %v6716
    %v6718 = vpop.f32.mrb[0].mxu0
    %6719 = vmatprep.mubr.bf16.mxu0 %v5262
    %6720 = vmatmul.mubr.bf16.gmra.mrb[0].mxu0 %v5261
    %v6721 = vpop.f32.mrb[0].mxu0
    %v6722 = vadd.f32 %v6433, %v6721
    %v6723 = vpop.f32.mrb[0].mxu0
    %v6724 = vpop.f32.mrb[0].mxu0
    %v6725 = vadd.f32 %v6436, %v6724
    %v6726 = vpop.f32.mrb[0].mxu0
    %6727 = vmatprep.mubr.bf16.mxu0 %v5271
    %6728 = vmatmul.mubr.bf16.gmra.mrb[0].mxu0 %v5270
    %v6729 = vpop.f32.mrb[0].mxu0
    %v6730 = vadd.f32 %v6441, %v6729
    %v6731 = vpop.f32.mrb[0].mxu0
    %v6732 = vpop.f32.mrb[0].mxu0
    %v6733 = vadd.f32 %v6444, %v6732
    %v6734 = vpop.f32.mrb[0].mxu0
    %6735 = vmatprep.mubr.bf16.mxu0 %v5280
    %6736 = vmatmul.mubr.bf16.gmra.mrb[0].mxu0 %v5279
    %v6737 = vpop.f32.mrb[0].mxu0
    %v6738 = vadd.f32 %v6449, %v6737
    %v6739 = vpop.f32.mrb[0].mxu0
    %v6740 = vpop.f32.mrb[0].mxu0
    %v6741 = vadd.f32 %v6452, %v6740
    %v6742 = vpop.f32.mrb[0].mxu0
    %6743 = vmatprep.mubr.bf16.mxu0 %v5289
    %6744 = vmatmul.mubr.bf16.gmra.mrb[0].mxu0 %v5288
    %v6745 = vpop.f32.mrb[0].mxu0
    %v6746 = vadd.f32 %v6457, %v6745
    %v6747 = vpop.f32.mrb[0].mxu0
    %v6748 = vpop.f32.mrb[0].mxu0
    %v6749 = vadd.f32 %v6460, %v6748
    %v6750 = vpop.f32.mrb[0].mxu0
    %6751 = vmatprep.mubr.bf16.mxu0 %v5298
    %6752 = vmatmul.mubr.bf16.gmra.mrb[0].mxu0 %v5297
    %v6753 = vpop.f32.mrb[0].mxu0
    %v6754 = vadd.f32 %v6465, %v6753
    %v6755 = vpop.f32.mrb[0].mxu0
    %v6756 = vpop.f32.mrb[0].mxu0
    %v6757 = vadd.f32 %v6468, %v6756
    %v6758 = vpop.f32.mrb[0].mxu0
    %6759 = vmatprep.mubr.bf16.mxu0 %v5307
    %6760 = vmatmul.mubr.bf16.gmra.mrb[0].mxu0 %v5306
    %v6761 = vpop.f32.mrb[0].mxu0
    %v6762 = vadd.f32 %v6473, %v6761
    %v6763 = vpop.f32.mrb[0].mxu0
    %v6764 = vpop.f32.mrb[0].mxu0
    %v6765 = vadd.f32 %v6476, %v6764
    %v6766 = vpop.f32.mrb[0].mxu0
    %6767 = vmatprep.mubr.bf16.mxu0 %v5316
    %6768 = vmatmul.mubr.bf16.gmra.mrb[0].mxu0 %v5315
    %v6769 = vpop.f32.mrb[0].mxu0
    %v6770 = vadd.f32 %v6481, %v6769
    %v6771 = vpop.f32.mrb[0].mxu0
    %v6772 = vpop.f32.mrb[0].mxu0
    %v6773 = vadd.f32 %v6484, %v6772
    %v6774 = vpop.f32.mrb[0].mxu0
    %6775 = vmatprep.mubr.bf16.mxu0 %v5325
    %6776 = vmatmul.mubr.bf16.gmra.mrb[0].mxu0 %v5324
    %v6777 = vpop.f32.mrb[0].mxu0
    %v6778 = vadd.f32 %v6489, %v6777
    %v6779 = vpop.f32.mrb[0].mxu0
    %v6780 = vpop.f32.mrb[0].mxu0
    %v6781 = vadd.f32 %v6492, %v6780
    %v6782 = vpop.f32.mrb[0].mxu0
    %6783 = vmatprep.mubr.bf16.mxu0 %v5334
    %6784 = vmatmul.mubr.bf16.gmra.mrb[0].mxu0 %v5333
    %v6785 = vpop.f32.mrb[0].mxu0
    %v6786 = vadd.f32 %v6497, %v6785
    %v6787 = vpop.f32.mrb[0].mxu0
    %v6788 = vpop.f32.mrb[0].mxu0
    %v6789 = vadd.f32 %v6500, %v6788
    %v6790 = vpop.f32.mrb[0].mxu0
    %6791 = vmatprep.mubr.bf16.mxu0 %v5343
    %6792 = vmatmul.mubr.bf16.gmra.mrb[0].mxu0 %v5342
    %v6793 = vpop.f32.mrb[0].mxu0
    %v6794 = vadd.f32 %v6505, %v6793
    %v6795 = vpop.f32.mrb[0].mxu0
    %v6796 = vpop.f32.mrb[0].mxu0
    %v6797 = vadd.f32 %v6508, %v6796
    %v6798 = vpop.f32.mrb[0].mxu0
    %6799 = vmatprep.mubr.bf16.mxu0 %v5352
    %6800 = vmatmul.mubr.bf16.gmra.mrb[0].mxu0 %v5351
    %v6801 = vpop.f32.mrb[0].mxu0
    %v6802 = vadd.f32 %v6513, %v6801
    %v6803 = vpop.f32.mrb[0].mxu0
    %v6804 = vpop.f32.mrb[0].mxu0
    %v6805 = vadd.f32 %v6516, %v6804
    %v6806 = vpop.f32.mrb[0].mxu0
    %6807 = vmatprep.mubr.bf16.mxu0 %v5361
    %6808 = vmatmul.mubr.bf16.gmra.mrb[0].mxu0 %v5360
    %v6809 = vpop.f32.mrb[0].mxu0
    %v6810 = vadd.f32 %v6521, %v6809
    %v6811 = vpop.f32.mrb[0].mxu0
    %v6812 = vpop.f32.mrb[0].mxu0
    %v6813 = vadd.f32 %v6524, %v6812
    %v6814 = vpop.f32.mrb[0].mxu0
    %6815 = vmatprep.mubr.bf16.mxu0 %v5370
    %6816 = vmatmul.mubr.bf16.gmra.mrb[0].mxu0 %v5369
    %v6817 = vpop.f32.mrb[0].mxu0
    %v6818 = vadd.f32 %v6529, %v6817
    %v6819 = vpop.f32.mrb[0].mxu0
    %v6820 = vpop.f32.mrb[0].mxu0
    %v6821 = vadd.f32 %v6532, %v6820
    %v6822 = vpop.f32.mrb[0].mxu0
    %6823 = vdwg.mxu0
    %6824 = vmatprep.subr.bf16.mxu0 0
    %6825 = vmatpush1.bf16.msra.mxu0 %v5861
    %6826 = vmatprep.subr.bf16.mxu0 0
    %6827 = vmatpush1.bf16.msra.mxu0 %v5862
    %6828 = vmatprep.subr.bf16.mxu0 0
    %6829 = vmatpush1.bf16.msra.mxu0 %v5863
    %6830 = vmatprep.subr.bf16.mxu0 0
    %6831 = vmatpush1.bf16.msra.mxu0 %v5864
    %6832 = vmatprep.subr.bf16.mxu0 0
    %6833 = vmatpush1.bf16.msra.mxu0 %v5865
    %6834 = vmatprep.subr.bf16.mxu0 0
    %6835 = vmatpush1.bf16.msra.mxu0 %v5866
    %6836 = vmatprep.subr.bf16.mxu0 0
    %6837 = vmatpush1.bf16.msra.mxu0 %v5867
    %6838 = vmatprep.subr.bf16.mxu0 0
    %6839 = vmatpush1.bf16.msra.mxu0 %v5868
    %6840 = vmatprep.subr.bf16.mxu0 0
    %6841 = vmatpush1.bf16.msra.mxu0 %v5869
    %6842 = vmatprep.subr.bf16.mxu0 0
    %6843 = vmatpush1.bf16.msra.mxu0 %v5870
    %6844 = vmatprep.subr.bf16.mxu0 0
    %6845 = vmatpush1.bf16.msra.mxu0 %v5871
    %6846 = vmatprep.subr.bf16.mxu0 0
    %6847 = vmatpush1.bf16.msra.mxu0 %v5872
    %6848 = vmatprep.subr.bf16.mxu0 0
    %6849 = vmatpush1.bf16.msra.mxu0 %v5873
    %6850 = vmatprep.subr.bf16.mxu0 0
    %6851 = vmatpush1.bf16.msra.mxu0 %v5874
    %6852 = vmatprep.subr.bf16.mxu0 0
    %6853 = vmatpush1.bf16.msra.mxu0 %v5875
    %6854 = vmatprep.subr.bf16.mxu0 0
    %6855 = vmatpush1.bf16.msra.mxu0 %v5876
    %6856 = vmatprep.mubr.bf16.mxu0 %v5093
    %6857 = vmatmul.mubr.bf16.gmra.mrb[0].mxu0 %v5092
    %v6858 = vpop.f32.mrb[0].mxu0
    %v6859 = vadd.f32 %v6570, %v6858
    %v6860 = vpop.f32.mrb[0].mxu0
    %v6861 = vpop.f32.mrb[0].mxu0
    %v6862 = vadd.f32 %v6573, %v6861
    %v6863 = vpop.f32.mrb[0].mxu0
    %6864 = vmatprep.mubr.bf16.mxu0 %v5102
    %6865 = vmatmul.mubr.bf16.gmra.mrb[0].mxu0 %v5101
    %v6866 = vpop.f32.mrb[0].mxu0
    %v6867 = vadd.f32 %v6578, %v6866
    %v6868 = vpop.f32.mrb[0].mxu0
    %v6869 = vpop.f32.mrb[0].mxu0
    %v6870 = vadd.f32 %v6581, %v6869
    %v6871 = vpop.f32.mrb[0].mxu0
    %6872 = vmatprep.mubr.bf16.mxu0 %v5111
    %6873 = vmatmul.mubr.bf16.gmra.mrb[0].mxu0 %v5110
    %v6874 = vpop.f32.mrb[0].mxu0
    %v6875 = vadd.f32 %v6586, %v6874
    %v6876 = vpop.f32.mrb[0].mxu0
    %v6877 = vpop.f32.mrb[0].mxu0
    %v6878 = vadd.f32 %v6589, %v6877
    %v6879 = vpop.f32.mrb[0].mxu0
    %6880 = vmatprep.mubr.bf16.mxu0 %v5120
    %6881 = vmatmul.mubr.bf16.gmra.mrb[0].mxu0 %v5119
    %v6882 = vpop.f32.mrb[0].mxu0
    %v6883 = vadd.f32 %v6594, %v6882
    %v6884 = vpop.f32.mrb[0].mxu0
    %v6885 = vpop.f32.mrb[0].mxu0
    %v6886 = vadd.f32 %v6597, %v6885
    %v6887 = vpop.f32.mrb[0].mxu0
    %6888 = vmatprep.mubr.bf16.mxu0 %v5129
    %6889 = vmatmul.mubr.bf16.gmra.mrb[0].mxu0 %v5128
    %v6890 = vpop.f32.mrb[0].mxu0
    %v6891 = vadd.f32 %v6602, %v6890
    %v6892 = vpop.f32.mrb[0].mxu0
    %v6893 = vpop.f32.mrb[0].mxu0
    %v6894 = vadd.f32 %v6605, %v6893
    %v6895 = vpop.f32.mrb[0].mxu0
    %6896 = vmatprep.mubr.bf16.mxu0 %v5138
    %6897 = vmatmul.mubr.bf16.gmra.mrb[0].mxu0 %v5137
    %v6898 = vpop.f32.mrb[0].mxu0
    %v6899 = vadd.f32 %v6610, %v6898
    %v6900 = vpop.f32.mrb[0].mxu0
    %v6901 = vpop.f32.mrb[0].mxu0
    %v6902 = vadd.f32 %v6613, %v6901
    %v6903 = vpop.f32.mrb[0].mxu0
    %6904 = vmatprep.mubr.bf16.mxu0 %v5147
    %6905 = vmatmul.mubr.bf16.gmra.mrb[0].mxu0 %v5146
    %v6906 = vpop.f32.mrb[0].mxu0
    %v6907 = vadd.f32 %v6618, %v6906
    %v6908 = vpop.f32.mrb[0].mxu0
    %v6909 = vpop.f32.mrb[0].mxu0
    %v6910 = vadd.f32 %v6621, %v6909
    %v6911 = vpop.f32.mrb[0].mxu0
    %6912 = vmatprep.mubr.bf16.mxu0 %v5156
    %6913 = vmatmul.mubr.bf16.gmra.mrb[0].mxu0 %v5155
    %v6914 = vpop.f32.mrb[0].mxu0
    %v6915 = vadd.f32 %v6626, %v6914
    %v6916 = vpop.f32.mrb[0].mxu0
    %v6917 = vpop.f32.mrb[0].mxu0
    %v6918 = vadd.f32 %v6629, %v6917
    %v6919 = vpop.f32.mrb[0].mxu0
    %6920 = vmatprep.mubr.bf16.mxu0 %v5165
    %6921 = vmatmul.mubr.bf16.gmra.mrb[0].mxu0 %v5164
    %v6922 = vpop.f32.mrb[0].mxu0
    %v6923 = vadd.f32 %v6634, %v6922
    %v6924 = vpop.f32.mrb[0].mxu0
    %v6925 = vpop.f32.mrb[0].mxu0
    %v6926 = vadd.f32 %v6637, %v6925
    %v6927 = vpop.f32.mrb[0].mxu0
    %6928 = vmatprep.mubr.bf16.mxu0 %v5174
    %6929 = vmatmul.mubr.bf16.gmra.mrb[0].mxu0 %v5173
    %v6930 = vpop.f32.mrb[0].mxu0
    %v6931 = vadd.f32 %v6642, %v6930
    %v6932 = vpop.f32.mrb[0].mxu0
    %v6933 = vpop.f32.mrb[0].mxu0
    %v6934 = vadd.f32 %v6645, %v6933
    %v6935 = vpop.f32.mrb[0].mxu0
    %6936 = vmatprep.mubr.bf16.mxu0 %v5183
    %6937 = vmatmul.mubr.bf16.gmra.mrb[0].mxu0 %v5182
    %v6938 = vpop.f32.mrb[0].mxu0
    %v6939 = vadd.f32 %v6650, %v6938
    %v6940 = vpop.f32.mrb[0].mxu0
    %v6941 = vpop.f32.mrb[0].mxu0
    %v6942 = vadd.f32 %v6653, %v6941
    %v6943 = vpop.f32.mrb[0].mxu0
    %6944 = vmatprep.mubr.bf16.mxu0 %v5192
    %6945 = vmatmul.mubr.bf16.gmra.mrb[0].mxu0 %v5191
    %v6946 = vpop.f32.mrb[0].mxu0
    %v6947 = vadd.f32 %v6658, %v6946
    %v6948 = vpop.f32.mrb[0].mxu0
    %v6949 = vpop.f32.mrb[0].mxu0
    %v6950 = vadd.f32 %v6661, %v6949
    %v6951 = vpop.f32.mrb[0].mxu0
    %6952 = vmatprep.mubr.bf16.mxu0 %v5201
    %6953 = vmatmul.mubr.bf16.gmra.mrb[0].mxu0 %v5200
    %v6954 = vpop.f32.mrb[0].mxu0
    %v6955 = vadd.f32 %v6666, %v6954
    %v6956 = vpop.f32.mrb[0].mxu0
    %v6957 = vpop.f32.mrb[0].mxu0
    %v6958 = vadd.f32 %v6669, %v6957
    %v6959 = vpop.f32.mrb[0].mxu0
    %6960 = vmatprep.mubr.bf16.mxu0 %v5210
    %6961 = vmatmul.mubr.bf16.gmra.mrb[0].mxu0 %v5209
    %v6962 = vpop.f32.mrb[0].mxu0
    %v6963 = vadd.f32 %v6674, %v6962
    %v6964 = vpop.f32.mrb[0].mxu0
    %v6965 = vpop.f32.mrb[0].mxu0
    %v6966 = vadd.f32 %v6677, %v6965
    %v6967 = vpop.f32.mrb[0].mxu0
    %6968 = vmatprep.mubr.bf16.mxu0 %v5219
    %6969 = vmatmul.mubr.bf16.gmra.mrb[0].mxu0 %v5218
    %v6970 = vpop.f32.mrb[0].mxu0
    %v6971 = vadd.f32 %v6682, %v6970
    %v6972 = vpop.f32.mrb[0].mxu0
    %v6973 = vpop.f32.mrb[0].mxu0
    %v6974 = vadd.f32 %v6685, %v6973
    %v6975 = vpop.f32.mrb[0].mxu0
    %6976 = vmatprep.mubr.bf16.mxu0 %v5228
    %6977 = vmatmul.mubr.bf16.gmra.mrb[0].mxu0 %v5227
    %v6978 = vpop.f32.mrb[0].mxu0
    %v6979 = vadd.f32 %v6690, %v6978
    %v6980 = vpop.f32.mrb[0].mxu0
    %v6981 = vpop.f32.mrb[0].mxu0
    %v6982 = vadd.f32 %v6693, %v6981
    %v6983 = vpop.f32.mrb[0].mxu0
    %6984 = vmatprep.mubr.bf16.mxu0 %v5237
    %6985 = vmatmul.mubr.bf16.gmra.mrb[0].mxu0 %v5236
    %v6986 = vpop.f32.mrb[0].mxu0
    %v6987 = vadd.f32 %v6698, %v6986
    %v6988 = vpop.f32.mrb[0].mxu0
    %v6989 = vpop.f32.mrb[0].mxu0
    %v6990 = vadd.f32 %v6701, %v6989
    %v6991 = vpop.f32.mrb[0].mxu0
    %6992 = vmatprep.mubr.bf16.mxu0 %v5246
    %6993 = vmatmul.mubr.bf16.gmra.mrb[0].mxu0 %v5245
    %v6994 = vpop.f32.mrb[0].mxu0
    %v6995 = vadd.f32 %v6706, %v6994
    %v6996 = vpop.f32.mrb[0].mxu0
    %v6997 = vpop.f32.mrb[0].mxu0
    %v6998 = vadd.f32 %v6709, %v6997
    %v6999 = vpop.f32.mrb[0].mxu0
    %7000 = vmatprep.mubr.bf16.mxu0 %v5255
    %7001 = vmatmul.mubr.bf16.gmra.mrb[0].mxu0 %v5254
    %v7002 = vpop.f32.mrb[0].mxu0
    %v7003 = vadd.f32 %v6714, %v7002
    %v7004 = vpop.f32.mrb[0].mxu0
    %v7005 = vpop.f32.mrb[0].mxu0
    %v7006 = vadd.f32 %v6717, %v7005
    %v7007 = vpop.f32.mrb[0].mxu0
    %7008 = vmatprep.mubr.bf16.mxu0 %v5264
    %7009 = vmatmul.mubr.bf16.gmra.mrb[0].mxu0 %v5263
    %v7010 = vpop.f32.mrb[0].mxu0
    %v7011 = vadd.f32 %v6722, %v7010
    %v7012 = vpop.f32.mrb[0].mxu0
    %v7013 = vpop.f32.mrb[0].mxu0
    %v7014 = vadd.f32 %v6725, %v7013
    %v7015 = vpop.f32.mrb[0].mxu0
    %7016 = vmatprep.mubr.bf16.mxu0 %v5273
    %7017 = vmatmul.mubr.bf16.gmra.mrb[0].mxu0 %v5272
    %v7018 = vpop.f32.mrb[0].mxu0
    %v7019 = vadd.f32 %v6730, %v7018
    %v7020 = vpop.f32.mrb[0].mxu0
    %v7021 = vpop.f32.mrb[0].mxu0
    %v7022 = vadd.f32 %v6733, %v7021
    %v7023 = vpop.f32.mrb[0].mxu0
    %7024 = vmatprep.mubr.bf16.mxu0 %v5282
    %7025 = vmatmul.mubr.bf16.gmra.mrb[0].mxu0 %v5281
    %v7026 = vpop.f32.mrb[0].mxu0
    %v7027 = vadd.f32 %v6738, %v7026
    %v7028 = vpop.f32.mrb[0].mxu0
    %v7029 = vpop.f32.mrb[0].mxu0
    %v7030 = vadd.f32 %v6741, %v7029
    %v7031 = vpop.f32.mrb[0].mxu0
    %7032 = vmatprep.mubr.bf16.mxu0 %v5291
    %7033 = vmatmul.mubr.bf16.gmra.mrb[0].mxu0 %v5290
    %v7034 = vpop.f32.mrb[0].mxu0
    %v7035 = vadd.f32 %v6746, %v7034
    %v7036 = vpop.f32.mrb[0].mxu0
    %v7037 = vpop.f32.mrb[0].mxu0
    %v7038 = vadd.f32 %v6749, %v7037
    %v7039 = vpop.f32.mrb[0].mxu0
    %7040 = vmatprep.mubr.bf16.mxu0 %v5300
    %7041 = vmatmul.mubr.bf16.gmra.mrb[0].mxu0 %v5299
    %v7042 = vpop.f32.mrb[0].mxu0
    %v7043 = vadd.f32 %v6754, %v7042
    %v7044 = vpop.f32.mrb[0].mxu0
    %v7045 = vpop.f32.mrb[0].mxu0
    %v7046 = vadd.f32 %v6757, %v7045
    %v7047 = vpop.f32.mrb[0].mxu0
    %7048 = vmatprep.mubr.bf16.mxu0 %v5309
    %7049 = vmatmul.mubr.bf16.gmra.mrb[0].mxu0 %v5308
    %v7050 = vpop.f32.mrb[0].mxu0
    %v7051 = vadd.f32 %v6762, %v7050
    %v7052 = vpop.f32.mrb[0].mxu0
    %v7053 = vpop.f32.mrb[0].mxu0
    %v7054 = vadd.f32 %v6765, %v7053
    %v7055 = vpop.f32.mrb[0].mxu0
    %7056 = vmatprep.mubr.bf16.mxu0 %v5318
    %7057 = vmatmul.mubr.bf16.gmra.mrb[0].mxu0 %v5317
    %v7058 = vpop.f32.mrb[0].mxu0
    %v7059 = vadd.f32 %v6770, %v7058
    %v7060 = vpop.f32.mrb[0].mxu0
    %v7061 = vpop.f32.mrb[0].mxu0
    %v7062 = vadd.f32 %v6773, %v7061
    %v7063 = vpop.f32.mrb[0].mxu0
    %7064 = vmatprep.mubr.bf16.mxu0 %v5327
    %7065 = vmatmul.mubr.bf16.gmra.mrb[0].mxu0 %v5326
    %v7066 = vpop.f32.mrb[0].mxu0
    %v7067 = vadd.f32 %v6778, %v7066
    %v7068 = vpop.f32.mrb[0].mxu0
    %v7069 = vpop.f32.mrb[0].mxu0
    %v7070 = vadd.f32 %v6781, %v7069
    %v7071 = vpop.f32.mrb[0].mxu0
    %7072 = vmatprep.mubr.bf16.mxu0 %v5336
    %7073 = vmatmul.mubr.bf16.gmra.mrb[0].mxu0 %v5335
    %v7074 = vpop.f32.mrb[0].mxu0
    %v7075 = vadd.f32 %v6786, %v7074
    %v7076 = vpop.f32.mrb[0].mxu0
    %v7077 = vpop.f32.mrb[0].mxu0
    %v7078 = vadd.f32 %v6789, %v7077
    %v7079 = vpop.f32.mrb[0].mxu0
    %7080 = vmatprep.mubr.bf16.mxu0 %v5345
    %7081 = vmatmul.mubr.bf16.gmra.mrb[0].mxu0 %v5344
    %v7082 = vpop.f32.mrb[0].mxu0
    %v7083 = vadd.f32 %v6794, %v7082
    %v7084 = vpop.f32.mrb[0].mxu0
    %v7085 = vpop.f32.mrb[0].mxu0
    %v7086 = vadd.f32 %v6797, %v7085
    %v7087 = vpop.f32.mrb[0].mxu0
    %7088 = vmatprep.mubr.bf16.mxu0 %v5354
    %7089 = vmatmul.mubr.bf16.gmra.mrb[0].mxu0 %v5353
    %v7090 = vpop.f32.mrb[0].mxu0
    %v7091 = vadd.f32 %v6802, %v7090
    %v7092 = vpop.f32.mrb[0].mxu0
    %v7093 = vpop.f32.mrb[0].mxu0
    %v7094 = vadd.f32 %v6805, %v7093
    %v7095 = vpop.f32.mrb[0].mxu0
    %7096 = vmatprep.mubr.bf16.mxu0 %v5363
    %7097 = vmatmul.mubr.bf16.gmra.mrb[0].mxu0 %v5362
    %v7098 = vpop.f32.mrb[0].mxu0
    %v7099 = vadd.f32 %v6810, %v7098
    %v7100 = vpop.f32.mrb[0].mxu0
    %v7101 = vpop.f32.mrb[0].mxu0
    %v7102 = vadd.f32 %v6813, %v7101
    %v7103 = vpop.f32.mrb[0].mxu0
    %7104 = vmatprep.mubr.bf16.mxu0 %v5372
    %7105 = vmatmul.mubr.bf16.gmra.mrb[0].mxu0 %v5371
    %v7106 = vpop.f32.mrb[0].mxu0
    %v7107 = vadd.f32 %v6818, %v7106
    %v7108 = vpop.f32.mrb[0].mxu0
    %v7109 = vpop.f32.mrb[0].mxu0
    %v7110 = vadd.f32 %v6821, %v7109
    %v7111 = vpop.f32.mrb[0].mxu0
    %7112 = vdwg.mxu0
    %7113 = vmatprep.subr.bf16.mxu0 0
    %7114 = vmatpush1.bf16.msra.mxu0 %v5877
    %7115 = vmatprep.subr.bf16.mxu0 0
    %7116 = vmatpush1.bf16.msra.mxu0 %v5878
    %7117 = vmatprep.subr.bf16.mxu0 0
    %7118 = vmatpush1.bf16.msra.mxu0 %v5879
    %7119 = vmatprep.subr.bf16.mxu0 0
    %7120 = vmatpush1.bf16.msra.mxu0 %v5880
    %7121 = vmatprep.subr.bf16.mxu0 0
    %7122 = vmatpush1.bf16.msra.mxu0 %v5881
    %7123 = vmatprep.subr.bf16.mxu0 0
    %7124 = vmatpush1.bf16.msra.mxu0 %v5882
    %7125 = vmatprep.subr.bf16.mxu0 0
    %7126 = vmatpush1.bf16.msra.mxu0 %v5883
    %7127 = vmatprep.subr.bf16.mxu0 0
    %7128 = vmatpush1.bf16.msra.mxu0 %v5884
    %7129 = vmatprep.subr.bf16.mxu0 0
    %7130 = vmatpush1.bf16.msra.mxu0 0
    %7131 = vmatprep.subr.bf16.mxu0 0
    %7132 = vmatpush1.bf16.msra.mxu0 0
    %7133 = vmatprep.subr.bf16.mxu0 0
    %7134 = vmatpush1.bf16.msra.mxu0 0
    %7135 = vmatprep.subr.bf16.mxu0 0
    %7136 = vmatpush1.bf16.msra.mxu0 0
    %7137 = vmatprep.subr.bf16.mxu0 0
    %7138 = vmatpush1.bf16.msra.mxu0 0
    %7139 = vmatprep.subr.bf16.mxu0 0
    %7140 = vmatpush1.bf16.msra.mxu0 0
    %7141 = vmatprep.subr.bf16.mxu0 0
    %7142 = vmatpush1.bf16.msra.mxu0 0
    %7143 = vmatprep.subr.bf16.mxu0 0
    %7144 = vmatpush1.bf16.msra.mxu0 0
    %7145 = vmatprep.mubr.bf16.mxu0 0
    %7146 = vmatmul.mubr.bf16.gmra.mrb[0].mxu0 %v5094
    %v7147 = vpop.f32.mrb[0].mxu0
    %v7148 = vadd.f32 %v6859, %v7147
    %v7149 = vpop.f32.mrb[0].mxu0
    %v7150 = vpop.f32.mrb[0].mxu0
    %v7151 = vadd.f32 %v6862, %v7150
    %v7152 = vpop.f32.mrb[0].mxu0
    %7153 = vmatprep.mubr.bf16.mxu0 0
    %7154 = vmatmul.mubr.bf16.gmra.mrb[0].mxu0 %v5103
    %v7155 = vpop.f32.mrb[0].mxu0
    %v7156 = vadd.f32 %v6867, %v7155
    %v7157 = vpop.f32.mrb[0].mxu0
    %v7158 = vpop.f32.mrb[0].mxu0
    %v7159 = vadd.f32 %v6870, %v7158
    %v7160 = vpop.f32.mrb[0].mxu0
    %7161 = vmatprep.mubr.bf16.mxu0 0
    %7162 = vmatmul.mubr.bf16.gmra.mrb[0].mxu0 %v5112
    %v7163 = vpop.f32.mrb[0].mxu0
    %v7164 = vadd.f32 %v6875, %v7163
    %v7165 = vpop.f32.mrb[0].mxu0
    %v7166 = vpop.f32.mrb[0].mxu0
    %v7167 = vadd.f32 %v6878, %v7166
    %v7168 = vpop.f32.mrb[0].mxu0
    %7169 = vmatprep.mubr.bf16.mxu0 0
    %7170 = vmatmul.mubr.bf16.gmra.mrb[0].mxu0 %v5121
    %v7171 = vpop.f32.mrb[0].mxu0
    %v7172 = vadd.f32 %v6883, %v7171
    %v7173 = vpop.f32.mrb[0].mxu0
    %v7174 = vpop.f32.mrb[0].mxu0
    %v7175 = vadd.f32 %v6886, %v7174
    %v7176 = vpop.f32.mrb[0].mxu0
    %7177 = vmatprep.mubr.bf16.mxu0 0
    %7178 = vmatmul.mubr.bf16.gmra.mrb[0].mxu0 %v5130
    %v7179 = vpop.f32.mrb[0].mxu0
    %v7180 = vadd.f32 %v6891, %v7179
    %v7181 = vpop.f32.mrb[0].mxu0
    %v7182 = vpop.f32.mrb[0].mxu0
    %v7183 = vadd.f32 %v6894, %v7182
    %v7184 = vpop.f32.mrb[0].mxu0
    %7185 = vmatprep.mubr.bf16.mxu0 0
    %7186 = vmatmul.mubr.bf16.gmra.mrb[0].mxu0 %v5139
    %v7187 = vpop.f32.mrb[0].mxu0
    %v7188 = vadd.f32 %v6899, %v7187
    %v7189 = vpop.f32.mrb[0].mxu0
    %v7190 = vpop.f32.mrb[0].mxu0
    %v7191 = vadd.f32 %v6902, %v7190
    %v7192 = vpop.f32.mrb[0].mxu0
    %7193 = vmatprep.mubr.bf16.mxu0 0
    %7194 = vmatmul.mubr.bf16.gmra.mrb[0].mxu0 %v5148
    %v7195 = vpop.f32.mrb[0].mxu0
    %v7196 = vadd.f32 %v6907, %v7195
    %v7197 = vpop.f32.mrb[0].mxu0
    %v7198 = vpop.f32.mrb[0].mxu0
    %v7199 = vadd.f32 %v6910, %v7198
    %v7200 = vpop.f32.mrb[0].mxu0
    %7201 = vmatprep.mubr.bf16.mxu0 0
    %7202 = vmatmul.mubr.bf16.gmra.mrb[0].mxu0 %v5157
    %v7203 = vpop.f32.mrb[0].mxu0
    %v7204 = vadd.f32 %v6915, %v7203
    %v7205 = vpop.f32.mrb[0].mxu0
    %v7206 = vpop.f32.mrb[0].mxu0
    %v7207 = vadd.f32 %v6918, %v7206
    %v7208 = vpop.f32.mrb[0].mxu0
    %7209 = vmatprep.mubr.bf16.mxu0 0
    %7210 = vmatmul.mubr.bf16.gmra.mrb[0].mxu0 %v5166
    %v7211 = vpop.f32.mrb[0].mxu0
    %v7212 = vadd.f32 %v6923, %v7211
    %v7213 = vpop.f32.mrb[0].mxu0
    %v7214 = vpop.f32.mrb[0].mxu0
    %v7215 = vadd.f32 %v6926, %v7214
    %v7216 = vpop.f32.mrb[0].mxu0
    %7217 = vmatprep.mubr.bf16.mxu0 0
    %7218 = vmatmul.mubr.bf16.gmra.mrb[0].mxu0 %v5175
    %v7219 = vpop.f32.mrb[0].mxu0
    %v7220 = vadd.f32 %v6931, %v7219
    %v7221 = vpop.f32.mrb[0].mxu0
    %v7222 = vpop.f32.mrb[0].mxu0
    %v7223 = vadd.f32 %v6934, %v7222
    %v7224 = vpop.f32.mrb[0].mxu0
    %7225 = vmatprep.mubr.bf16.mxu0 0
    %7226 = vmatmul.mubr.bf16.gmra.mrb[0].mxu0 %v5184
    %v7227 = vpop.f32.mrb[0].mxu0
    %v7228 = vadd.f32 %v6939, %v7227
    %v7229 = vpop.f32.mrb[0].mxu0
    %v7230 = vpop.f32.mrb[0].mxu0
    %v7231 = vadd.f32 %v6942, %v7230
    %v7232 = vpop.f32.mrb[0].mxu0
    %7233 = vmatprep.mubr.bf16.mxu0 0
    %7234 = vmatmul.mubr.bf16.gmra.mrb[0].mxu0 %v5193
    %v7235 = vpop.f32.mrb[0].mxu0
    %v7236 = vadd.f32 %v6947, %v7235
    %v7237 = vpop.f32.mrb[0].mxu0
    %v7238 = vpop.f32.mrb[0].mxu0
    %v7239 = vadd.f32 %v6950, %v7238
    %v7240 = vpop.f32.mrb[0].mxu0
    %7241 = vmatprep.mubr.bf16.mxu0 0
    %7242 = vmatmul.mubr.bf16.gmra.mrb[0].mxu0 %v5202
    %v7243 = vpop.f32.mrb[0].mxu0
    %v7244 = vadd.f32 %v6955, %v7243
    %v7245 = vpop.f32.mrb[0].mxu0
    %v7246 = vpop.f32.mrb[0].mxu0
    %v7247 = vadd.f32 %v6958, %v7246
    %v7248 = vpop.f32.mrb[0].mxu0
    %7249 = vmatprep.mubr.bf16.mxu0 0
    %7250 = vmatmul.mubr.bf16.gmra.mrb[0].mxu0 %v5211
    %v7251 = vpop.f32.mrb[0].mxu0
    %v7252 = vadd.f32 %v6963, %v7251
    %v7253 = vpop.f32.mrb[0].mxu0
    %v7254 = vpop.f32.mrb[0].mxu0
    %v7255 = vadd.f32 %v6966, %v7254
    %v7256 = vpop.f32.mrb[0].mxu0
    %7257 = vmatprep.mubr.bf16.mxu0 0
    %7258 = vmatmul.mubr.bf16.gmra.mrb[0].mxu0 %v5220
    %v7259 = vpop.f32.mrb[0].mxu0
    %v7260 = vadd.f32 %v6971, %v7259
    %v7261 = vpop.f32.mrb[0].mxu0
    %v7262 = vpop.f32.mrb[0].mxu0
    %v7263 = vadd.f32 %v6974, %v7262
    %v7264 = vpop.f32.mrb[0].mxu0
    %7265 = vmatprep.mubr.bf16.mxu0 0
    %7266 = vmatmul.mubr.bf16.gmra.mrb[0].mxu0 %v5229
    %v7267 = vpop.f32.mrb[0].mxu0
    %v7268 = vadd.f32 %v6979, %v7267
    %v7269 = vpop.f32.mrb[0].mxu0
    %v7270 = vpop.f32.mrb[0].mxu0
    %v7271 = vadd.f32 %v6982, %v7270
    %v7272 = vpop.f32.mrb[0].mxu0
    %7273 = vmatprep.mubr.bf16.mxu0 0
    %7274 = vmatmul.mubr.bf16.gmra.mrb[0].mxu0 %v5238
    %v7275 = vpop.f32.mrb[0].mxu0
    %v7276 = vadd.f32 %v6987, %v7275
    %v7277 = vpop.f32.mrb[0].mxu0
    %v7278 = vpop.f32.mrb[0].mxu0
    %v7279 = vadd.f32 %v6990, %v7278
    %v7280 = vpop.f32.mrb[0].mxu0
    %7281 = vmatprep.mubr.bf16.mxu0 0
    %7282 = vmatmul.mubr.bf16.gmra.mrb[0].mxu0 %v5247
    %v7283 = vpop.f32.mrb[0].mxu0
    %v7284 = vadd.f32 %v6995, %v7283
    %v7285 = vpop.f32.mrb[0].mxu0
    %v7286 = vpop.f32.mrb[0].mxu0
    %v7287 = vadd.f32 %v6998, %v7286
    %v7288 = vpop.f32.mrb[0].mxu0
    %7289 = vmatprep.mubr.bf16.mxu0 0
    %7290 = vmatmul.mubr.bf16.gmra.mrb[0].mxu0 %v5256
    %v7291 = vpop.f32.mrb[0].mxu0
    %v7292 = vadd.f32 %v7003, %v7291
    %v7293 = vpop.f32.mrb[0].mxu0
    %v7294 = vpop.f32.mrb[0].mxu0
    %v7295 = vadd.f32 %v7006, %v7294
    %v7296 = vpop.f32.mrb[0].mxu0
    %7297 = vmatprep.mubr.bf16.mxu0 0
    %7298 = vmatmul.mubr.bf16.gmra.mrb[0].mxu0 %v5265
    %v7299 = vpop.f32.mrb[0].mxu0
    %v7300 = vadd.f32 %v7011, %v7299
    %v7301 = vpop.f32.mrb[0].mxu0
    %v7302 = vpop.f32.mrb[0].mxu0
    %v7303 = vadd.f32 %v7014, %v7302
    %v7304 = vpop.f32.mrb[0].mxu0
    %7305 = vmatprep.mubr.bf16.mxu0 0
    %7306 = vmatmul.mubr.bf16.gmra.mrb[0].mxu0 %v5274
    %v7307 = vpop.f32.mrb[0].mxu0
    %v7308 = vadd.f32 %v7019, %v7307
    %v7309 = vpop.f32.mrb[0].mxu0
    %v7310 = vpop.f32.mrb[0].mxu0
    %v7311 = vadd.f32 %v7022, %v7310
    %v7312 = vpop.f32.mrb[0].mxu0
    %7313 = vmatprep.mubr.bf16.mxu0 0
    %7314 = vmatmul.mubr.bf16.gmra.mrb[0].mxu0 %v5283
    %v7315 = vpop.f32.mrb[0].mxu0
    %v7316 = vadd.f32 %v7027, %v7315
    %v7317 = vpop.f32.mrb[0].mxu0
    %v7318 = vpop.f32.mrb[0].mxu0
    %v7319 = vadd.f32 %v7030, %v7318
    %v7320 = vpop.f32.mrb[0].mxu0
    %7321 = vmatprep.mubr.bf16.mxu0 0
    %7322 = vmatmul.mubr.bf16.gmra.mrb[0].mxu0 %v5292
    %v7323 = vpop.f32.mrb[0].mxu0
    %v7324 = vadd.f32 %v7035, %v7323
    %v7325 = vpop.f32.mrb[0].mxu0
    %v7326 = vpop.f32.mrb[0].mxu0
    %v7327 = vadd.f32 %v7038, %v7326
    %v7328 = vpop.f32.mrb[0].mxu0
    %7329 = vmatprep.mubr.bf16.mxu0 0
    %7330 = vmatmul.mubr.bf16.gmra.mrb[0].mxu0 %v5301
    %v7331 = vpop.f32.mrb[0].mxu0
    %v7332 = vadd.f32 %v7043, %v7331
    %v7333 = vpop.f32.mrb[0].mxu0
    %v7334 = vpop.f32.mrb[0].mxu0
    %v7335 = vadd.f32 %v7046, %v7334
    %v7336 = vpop.f32.mrb[0].mxu0
    %7337 = vmatprep.mubr.bf16.mxu0 0
    %7338 = vmatmul.mubr.bf16.gmra.mrb[0].mxu0 %v5310
    %v7339 = vpop.f32.mrb[0].mxu0
    %v7340 = vadd.f32 %v7051, %v7339
    %v7341 = vpop.f32.mrb[0].mxu0
    %v7342 = vpop.f32.mrb[0].mxu0
    %v7343 = vadd.f32 %v7054, %v7342
    %v7344 = vpop.f32.mrb[0].mxu0
    %7345 = vmatprep.mubr.bf16.mxu0 0
    %7346 = vmatmul.mubr.bf16.gmra.mrb[0].mxu0 %v5319
    %v7347 = vpop.f32.mrb[0].mxu0
    %v7348 = vadd.f32 %v7059, %v7347
    %v7349 = vpop.f32.mrb[0].mxu0
    %v7350 = vpop.f32.mrb[0].mxu0
    %v7351 = vadd.f32 %v7062, %v7350
    %v7352 = vpop.f32.mrb[0].mxu0
    %7353 = vmatprep.mubr.bf16.mxu0 0
    %7354 = vmatmul.mubr.bf16.gmra.mrb[0].mxu0 %v5328
    %v7355 = vpop.f32.mrb[0].mxu0
    %v7356 = vadd.f32 %v7067, %v7355
    %v7357 = vpop.f32.mrb[0].mxu0
    %v7358 = vpop.f32.mrb[0].mxu0
    %v7359 = vadd.f32 %v7070, %v7358
    %v7360 = vpop.f32.mrb[0].mxu0
    %7361 = vmatprep.mubr.bf16.mxu0 0
    %7362 = vmatmul.mubr.bf16.gmra.mrb[0].mxu0 %v5337
    %v7363 = vpop.f32.mrb[0].mxu0
    %v7364 = vadd.f32 %v7075, %v7363
    %v7365 = vpop.f32.mrb[0].mxu0
    %v7366 = vpop.f32.mrb[0].mxu0
    %v7367 = vadd.f32 %v7078, %v7366
    %v7368 = vpop.f32.mrb[0].mxu0
    %7369 = vmatprep.mubr.bf16.mxu0 0
    %7370 = vmatmul.mubr.bf16.gmra.mrb[0].mxu0 %v5346
    %v7371 = vpop.f32.mrb[0].mxu0
    %v7372 = vadd.f32 %v7083, %v7371
    %v7373 = vpop.f32.mrb[0].mxu0
    %v7374 = vpop.f32.mrb[0].mxu0
    %v7375 = vadd.f32 %v7086, %v7374
    %v7376 = vpop.f32.mrb[0].mxu0
    %7377 = vmatprep.mubr.bf16.mxu0 0
    %7378 = vmatmul.mubr.bf16.gmra.mrb[0].mxu0 %v5355
    %v7379 = vpop.f32.mrb[0].mxu0
    %v7380 = vadd.f32 %v7091, %v7379
    %v7381 = vpop.f32.mrb[0].mxu0
    %v7382 = vpop.f32.mrb[0].mxu0
    %v7383 = vadd.f32 %v7094, %v7382
    %v7384 = vpop.f32.mrb[0].mxu0
    %7385 = vmatprep.mubr.bf16.mxu0 0
    %7386 = vmatmul.mubr.bf16.gmra.mrb[0].mxu0 %v5364
    %v7387 = vpop.f32.mrb[0].mxu0
    %v7388 = vadd.f32 %v7099, %v7387
    %v7389 = vpop.f32.mrb[0].mxu0
    %v7390 = vpop.f32.mrb[0].mxu0
    %v7391 = vadd.f32 %v7102, %v7390
    %v7392 = vpop.f32.mrb[0].mxu0
    %7393 = vmatprep.mubr.bf16.mxu0 0
    %7394 = vmatmul.mubr.bf16.gmra.mrb[0].mxu0 %v5373
    %v7395 = vpop.f32.mrb[0].mxu0
    %v7396 = vadd.f32 %v7107, %v7395
    %v7397 = vpop.f32.mrb[0].mxu0
    %v7398 = vpop.f32.mrb[0].mxu0
    %v7399 = vadd.f32 %v7110, %v7398
    %v7400 = vpop.f32.mrb[0].mxu0
    %7401 = vdwg.mxu0
    %v7402 = vlaneseq
    %v7403 = vand.u32 %v7402, 127
    %vm7404 = vcmp.ge.s32.totalorder %v7403, 96
    %v7405 = vsel %vm7404, 1.0, 0.5
    %v7406 = vmul.f32 %v7148, %v7405
    %v7407 = vmul.f32 %v7151, %v7405
    %v7408 = vmul.f32 %v7156, %v7405
    %v7409 = vmul.f32 %v7159, %v7405
    %v7410 = vmul.f32 %v7164, %v7405
    %v7411 = vmul.f32 %v7167, %v7405
    %v7412 = vmul.f32 %v7172, %v7405
    %v7413 = vmul.f32 %v7175, %v7405
    %v7414 = vmul.f32 %v7180, %v7405
    %v7415 = vmul.f32 %v7183, %v7405
    %v7416 = vmul.f32 %v7188, %v7405
    %v7417 = vmul.f32 %v7191, %v7405
    %v7418 = vmul.f32 %v7196, %v7405
    %v7419 = vmul.f32 %v7199, %v7405
    %v7420 = vmul.f32 %v7204, %v7405
    %v7421 = vmul.f32 %v7207, %v7405
    %v7422 = vmul.f32 %v7212, %v7405
    %v7423 = vmul.f32 %v7215, %v7405
    %v7424 = vmul.f32 %v7220, %v7405
    %v7425 = vmul.f32 %v7223, %v7405
    %v7426 = vmul.f32 %v7228, %v7405
    %v7427 = vmul.f32 %v7231, %v7405
    %v7428 = vmul.f32 %v7236, %v7405
    %v7429 = vmul.f32 %v7239, %v7405
    %v7430 = vmul.f32 %v7244, %v7405
    %v7431 = vmul.f32 %v7247, %v7405
    %v7432 = vmul.f32 %v7252, %v7405
    %v7433 = vmul.f32 %v7255, %v7405
    %v7434 = vmul.f32 %v7260, %v7405
    %v7435 = vmul.f32 %v7263, %v7405
    %v7436 = vmul.f32 %v7268, %v7405
    %v7437 = vmul.f32 %v7271, %v7405
    %v7438 = vmul.f32 %v7276, %v7405
    %v7439 = vmul.f32 %v7279, %v7405
    %v7440 = vmul.f32 %v7284, %v7405
    %v7441 = vmul.f32 %v7287, %v7405
    %v7442 = vmul.f32 %v7292, %v7405
    %v7443 = vmul.f32 %v7295, %v7405
    %v7444 = vmul.f32 %v7300, %v7405
    %v7445 = vmul.f32 %v7303, %v7405
    %v7446 = vmul.f32 %v7308, %v7405
    %v7447 = vmul.f32 %v7311, %v7405
    %v7448 = vmul.f32 %v7316, %v7405
    %v7449 = vmul.f32 %v7319, %v7405
    %v7450 = vmul.f32 %v7324, %v7405
    %v7451 = vmul.f32 %v7327, %v7405
    %v7452 = vmul.f32 %v7332, %v7405
    %v7453 = vmul.f32 %v7335, %v7405
    %v7454 = vmul.f32 %v7340, %v7405
    %v7455 = vmul.f32 %v7343, %v7405
    %v7456 = vmul.f32 %v7348, %v7405
    %v7457 = vmul.f32 %v7351, %v7405
    %v7458 = vmul.f32 %v7356, %v7405
    %v7459 = vmul.f32 %v7359, %v7405
    %v7460 = vmul.f32 %v7364, %v7405
    %v7461 = vmul.f32 %v7367, %v7405
    %v7462 = vmul.f32 %v7372, %v7405
    %v7463 = vmul.f32 %v7375, %v7405
    %v7464 = vmul.f32 %v7380, %v7405
    %v7465 = vmul.f32 %v7383, %v7405
    %v7466 = vmul.f32 %v7388, %v7405
    %v7467 = vmul.f32 %v7391, %v7405
    %v7468 = vmul.f32 %v7396, %v7405
    %v7469 = vmul.f32 %v7399, %v7405
    %v7470 = vtanh.pop %v7406
    %v7471 = vtanh.pop %v7407
    %v7472 = vtanh.pop %v7408
    %v7473 = vtanh.pop %v7409
    %v7474 = vtanh.pop %v7410
    %v7475 = vtanh.pop %v7411
    %v7476 = vtanh.pop %v7412
    %v7477 = vtanh.pop %v7413
    %v7478 = vtanh.pop %v7414
    %v7479 = vtanh.pop %v7415
    %v7480 = vtanh.pop %v7416
    %v7481 = vtanh.pop %v7417
    %v7482 = vtanh.pop %v7418
    %v7483 = vtanh.pop %v7419
    %v7484 = vtanh.pop %v7420
    %v7485 = vtanh.pop %v7421
    %v7486 = vtanh.pop %v7422
    %v7487 = vtanh.pop %v7423
    %v7488 = vtanh.pop %v7424
    %v7489 = vtanh.pop %v7425
    %v7490 = vtanh.pop %v7426
    %v7491 = vtanh.pop %v7427
    %v7492 = vtanh.pop %v7428
    %v7493 = vtanh.pop %v7429
    %v7494 = vtanh.pop %v7430
    %v7495 = vtanh.pop %v7431
    %v7496 = vtanh.pop %v7432
    %v7497 = vtanh.pop %v7433
    %v7498 = vtanh.pop %v7434
    %v7499 = vtanh.pop %v7435
    %v7500 = vtanh.pop %v7436
    %v7501 = vtanh.pop %v7437
    %v7502 = vtanh.pop %v7438
    %v7503 = vtanh.pop %v7439
    %v7504 = vtanh.pop %v7440
    %v7505 = vtanh.pop %v7441
    %v7506 = vtanh.pop %v7442
    %v7507 = vtanh.pop %v7443
    %v7508 = vtanh.pop %v7444
    %v7509 = vtanh.pop %v7445
    %v7510 = vtanh.pop %v7446
    %v7511 = vtanh.pop %v7447
    %v7512 = vtanh.pop %v7448
    %v7513 = vtanh.pop %v7449
    %v7514 = vtanh.pop %v7450
    %v7515 = vtanh.pop %v7451
    %v7516 = vtanh.pop %v7452
    %v7517 = vtanh.pop %v7453
    %v7518 = vtanh.pop %v7454
    %v7519 = vtanh.pop %v7455
    %v7520 = vtanh.pop %v7456
    %v7521 = vtanh.pop %v7457
    %v7522 = vtanh.pop %v7458
    %v7523 = vtanh.pop %v7459
    %v7524 = vtanh.pop %v7460
    %v7525 = vtanh.pop %v7461
    %v7526 = vtanh.pop %v7462
    %v7527 = vtanh.pop %v7463
    %v7528 = vtanh.pop %v7464
    %v7529 = vtanh.pop %v7465
    %v7530 = vtanh.pop %v7466
    %v7531 = vtanh.pop %v7467
    %v7532 = vtanh.pop %v7468
    %v7533 = vtanh.pop %v7469
    %v7534 = vadd.f32 %v7470, 1.0
    %v7535 = vadd.f32 %v7471, 1.0
    %v7536 = vadd.f32 %v7472, 1.0
    %v7537 = vadd.f32 %v7473, 1.0
    %v7538 = vadd.f32 %v7474, 1.0
    %v7539 = vadd.f32 %v7475, 1.0
    %v7540 = vadd.f32 %v7476, 1.0
    %v7541 = vadd.f32 %v7477, 1.0
    %v7542 = vadd.f32 %v7478, 1.0
    %v7543 = vadd.f32 %v7479, 1.0
    %v7544 = vadd.f32 %v7480, 1.0
    %v7545 = vadd.f32 %v7481, 1.0
    %v7546 = vadd.f32 %v7482, 1.0
    %v7547 = vadd.f32 %v7483, 1.0
    %v7548 = vadd.f32 %v7484, 1.0
    %v7549 = vadd.f32 %v7485, 1.0
    %v7550 = vadd.f32 %v7486, 1.0
    %v7551 = vadd.f32 %v7487, 1.0
    %v7552 = vadd.f32 %v7488, 1.0
    %v7553 = vadd.f32 %v7489, 1.0
    %v7554 = vadd.f32 %v7490, 1.0
    %v7555 = vadd.f32 %v7491, 1.0
    %v7556 = vadd.f32 %v7492, 1.0
    %v7557 = vadd.f32 %v7493, 1.0
    %v7558 = vadd.f32 %v7494, 1.0
    %v7559 = vadd.f32 %v7495, 1.0
    %v7560 = vadd.f32 %v7496, 1.0
    %v7561 = vadd.f32 %v7497, 1.0
    %v7562 = vadd.f32 %v7498, 1.0
    %v7563 = vadd.f32 %v7499, 1.0
    %v7564 = vadd.f32 %v7500, 1.0
    %v7565 = vadd.f32 %v7501, 1.0
    %v7566 = vadd.f32 %v7502, 1.0
    %v7567 = vadd.f32 %v7503, 1.0
    %v7568 = vadd.f32 %v7504, 1.0
    %v7569 = vadd.f32 %v7505, 1.0
    %v7570 = vadd.f32 %v7506, 1.0
    %v7571 = vadd.f32 %v7507, 1.0
    %v7572 = vadd.f32 %v7508, 1.0
    %v7573 = vadd.f32 %v7509, 1.0
    %v7574 = vadd.f32 %v7510, 1.0
    %v7575 = vadd.f32 %v7511, 1.0
    %v7576 = vadd.f32 %v7512, 1.0
    %v7577 = vadd.f32 %v7513, 1.0
    %v7578 = vadd.f32 %v7514, 1.0
    %v7579 = vadd.f32 %v7515, 1.0
    %v7580 = vadd.f32 %v7516, 1.0
    %v7581 = vadd.f32 %v7517, 1.0
    %v7582 = vadd.f32 %v7518, 1.0
    %v7583 = vadd.f32 %v7519, 1.0
    %v7584 = vadd.f32 %v7520, 1.0
    %v7585 = vadd.f32 %v7521, 1.0
    %v7586 = vadd.f32 %v7522, 1.0
    %v7587 = vadd.f32 %v7523, 1.0
    %v7588 = vadd.f32 %v7524, 1.0
    %v7589 = vadd.f32 %v7525, 1.0
    %v7590 = vadd.f32 %v7526, 1.0
    %v7591 = vadd.f32 %v7527, 1.0
    %v7592 = vadd.f32 %v7528, 1.0
    %v7593 = vadd.f32 %v7529, 1.0
    %v7594 = vadd.f32 %v7530, 1.0
    %v7595 = vadd.f32 %v7531, 1.0
    %v7596 = vadd.f32 %v7532, 1.0
    %v7597 = vadd.f32 %v7533, 1.0
    %v7598 = vmul.f32 %v7534, 0.5
    %v7599 = vmul.f32 %v7535, 0.5
    %v7600 = vmul.f32 %v7536, 0.5
    %v7601 = vmul.f32 %v7537, 0.5
    %v7602 = vmul.f32 %v7538, 0.5
    %v7603 = vmul.f32 %v7539, 0.5
    %v7604 = vmul.f32 %v7540, 0.5
    %v7605 = vmul.f32 %v7541, 0.5
    %v7606 = vmul.f32 %v7542, 0.5
    %v7607 = vmul.f32 %v7543, 0.5
    %v7608 = vmul.f32 %v7544, 0.5
    %v7609 = vmul.f32 %v7545, 0.5
    %v7610 = vmul.f32 %v7546, 0.5
    %v7611 = vmul.f32 %v7547, 0.5
    %v7612 = vmul.f32 %v7548, 0.5
    %v7613 = vmul.f32 %v7549, 0.5
    %v7614 = vmul.f32 %v7550, 0.5
    %v7615 = vmul.f32 %v7551, 0.5
    %v7616 = vmul.f32 %v7552, 0.5
    %v7617 = vmul.f32 %v7553, 0.5
    %v7618 = vmul.f32 %v7554, 0.5
    %v7619 = vmul.f32 %v7555, 0.5
    %v7620 = vmul.f32 %v7556, 0.5
    %v7621 = vmul.f32 %v7557, 0.5
    %v7622 = vmul.f32 %v7558, 0.5
    %v7623 = vmul.f32 %v7559, 0.5
    %v7624 = vmul.f32 %v7560, 0.5
    %v7625 = vmul.f32 %v7561, 0.5
    %v7626 = vmul.f32 %v7562, 0.5
    %v7627 = vmul.f32 %v7563, 0.5
    %v7628 = vmul.f32 %v7564, 0.5
    %v7629 = vmul.f32 %v7565, 0.5
    %v7630 = vmul.f32 %v7566, 0.5
    %v7631 = vmul.f32 %v7567, 0.5
    %v7632 = vmul.f32 %v7568, 0.5
    %v7633 = vmul.f32 %v7569, 0.5
    %v7634 = vmul.f32 %v7570, 0.5
    %v7635 = vmul.f32 %v7571, 0.5
    %v7636 = vmul.f32 %v7572, 0.5
    %v7637 = vmul.f32 %v7573, 0.5
    %v7638 = vmul.f32 %v7574, 0.5
    %v7639 = vmul.f32 %v7575, 0.5
    %v7640 = vmul.f32 %v7576, 0.5
    %v7641 = vmul.f32 %v7577, 0.5
    %v7642 = vmul.f32 %v7578, 0.5
    %v7643 = vmul.f32 %v7579, 0.5
    %v7644 = vmul.f32 %v7580, 0.5
    %v7645 = vmul.f32 %v7581, 0.5
    %v7646 = vmul.f32 %v7582, 0.5
    %v7647 = vmul.f32 %v7583, 0.5
    %v7648 = vmul.f32 %v7584, 0.5
    %v7649 = vmul.f32 %v7585, 0.5
    %v7650 = vmul.f32 %v7586, 0.5
    %v7651 = vmul.f32 %v7587, 0.5
    %v7652 = vmul.f32 %v7588, 0.5
    %v7653 = vmul.f32 %v7589, 0.5
    %v7654 = vmul.f32 %v7590, 0.5
    %v7655 = vmul.f32 %v7591, 0.5
    %v7656 = vmul.f32 %v7592, 0.5
    %v7657 = vmul.f32 %v7593, 0.5
    %v7658 = vmul.f32 %v7594, 0.5
    %v7659 = vmul.f32 %v7595, 0.5
    %v7660 = vmul.f32 %v7596, 0.5
    %v7661 = vmul.f32 %v7597, 0.5
    %v7662 = vsel %vm7404, 1, 0
    %vm7663 = vcmp.eq.s32.totalorder %v7662, 1
    %v7664 = vsel %vm7663, %v7470, %v7598
    %v7665 = vsel %vm7663, %v7471, %v7599
    %v7666 = vsel %vm7663, %v7472, %v7600
    %v7667 = vsel %vm7663, %v7473, %v7601
    %v7668 = vsel %vm7663, %v7474, %v7602
    %v7669 = vsel %vm7663, %v7475, %v7603
    %v7670 = vsel %vm7663, %v7476, %v7604
    %v7671 = vsel %vm7663, %v7477, %v7605
    %v7672 = vsel %vm7663, %v7478, %v7606
    %v7673 = vsel %vm7663, %v7479, %v7607
    %v7674 = vsel %vm7663, %v7480, %v7608
    %v7675 = vsel %vm7663, %v7481, %v7609
    %v7676 = vsel %vm7663, %v7482, %v7610
    %v7677 = vsel %vm7663, %v7483, %v7611
    %v7678 = vsel %vm7663, %v7484, %v7612
    %v7679 = vsel %vm7663, %v7485, %v7613
    %v7680 = vsel %vm7663, %v7486, %v7614
    %v7681 = vsel %vm7663, %v7487, %v7615
    %v7682 = vsel %vm7663, %v7488, %v7616
    %v7683 = vsel %vm7663, %v7489, %v7617
    %v7684 = vsel %vm7663, %v7490, %v7618
    %v7685 = vsel %vm7663, %v7491, %v7619
    %v7686 = vsel %vm7663, %v7492, %v7620
    %v7687 = vsel %vm7663, %v7493, %v7621
    %v7688 = vsel %vm7663, %v7494, %v7622
    %v7689 = vsel %vm7663, %v7495, %v7623
    %v7690 = vsel %vm7663, %v7496, %v7624
    %v7691 = vsel %vm7663, %v7497, %v7625
    %v7692 = vsel %vm7663, %v7498, %v7626
    %v7693 = vsel %vm7663, %v7499, %v7627
    %v7694 = vsel %vm7663, %v7500, %v7628
    %v7695 = vsel %vm7663, %v7501, %v7629
    %v7696 = vsel %vm7663, %v7502, %v7630
    %v7697 = vsel %vm7663, %v7503, %v7631
    %v7698 = vsel %vm7663, %v7504, %v7632
    %v7699 = vsel %vm7663, %v7505, %v7633
    %v7700 = vsel %vm7663, %v7506, %v7634
    %v7701 = vsel %vm7663, %v7507, %v7635
    %v7702 = vsel %vm7663, %v7508, %v7636
    %v7703 = vsel %vm7663, %v7509, %v7637
    %v7704 = vsel %vm7663, %v7510, %v7638
    %v7705 = vsel %vm7663, %v7511, %v7639
    %v7706 = vsel %vm7663, %v7512, %v7640
    %v7707 = vsel %vm7663, %v7513, %v7641
    %v7708 = vsel %vm7663, %v7514, %v7642
    %v7709 = vsel %vm7663, %v7515, %v7643
    %v7710 = vsel %vm7663, %v7516, %v7644
    %v7711 = vsel %vm7663, %v7517, %v7645
    %v7712 = vsel %vm7663, %v7518, %v7646
    %v7713 = vsel %vm7663, %v7519, %v7647
    %v7714 = vsel %vm7663, %v7520, %v7648
    %v7715 = vsel %vm7663, %v7521, %v7649
    %v7716 = vsel %vm7663, %v7522, %v7650
    %v7717 = vsel %vm7663, %v7523, %v7651
    %v7718 = vsel %vm7663, %v7524, %v7652
    %v7719 = vsel %vm7663, %v7525, %v7653
    %v7720 = vsel %vm7663, %v7526, %v7654
    %v7721 = vsel %vm7663, %v7527, %v7655
    %v7722 = vsel %vm7663, %v7528, %v7656
    %v7723 = vsel %vm7663, %v7529, %v7657
    %v7724 = vsel %vm7663, %v7530, %v7658
    %v7725 = vsel %vm7663, %v7531, %v7659
    %v7726 = vsel %vm7663, %v7532, %v7660
    %v7727 = vsel %vm7663, %v7533, %v7661
    %v7728 = vld [vmem:[%s1] sm:$0xff]
    %v7729 = vld [vmem:[%s1 + $0x8] sm:$0xff]
    %v7730 = vld [vmem:[%s1 + $0x10] sm:$0xff]
    %v7731 = vld [vmem:[%s1 + $0x18] sm:$0xff]
    %v7732 = vld [vmem:[%s1 + $0x20] sm:$0xff]
    %v7733 = vld [vmem:[%s1 + $0x28] sm:$0xff]
    %v7734 = vld [vmem:[%s1 + $0x30] sm:$0xff]
    %v7735 = vld [vmem:[%s1 + $0x38] sm:$0xff]
    %v7736 = vld [vmem:[%s1 + $0x40] sm:$0xff]
    %v7737 = vld [vmem:[%s1 + $0x48] sm:$0xff]
    %v7738 = vld [vmem:[%s1 + $0x50] sm:$0xff]
    %v7739 = vld [vmem:[%s1 + $0x58] sm:$0xff]
    %v7740 = vld [vmem:[%s1 + $0x60] sm:$0xff]
    %v7741 = vld [vmem:[%s1 + $0x68] sm:$0xff]
    %v7742 = vld [vmem:[%s1 + $0x70] sm:$0xff]
    %v7743 = vld [vmem:[%s1 + $0x78] sm:$0xff]
    %v7744 = vld [vmem:[%s1 + $0x80] sm:$0xff]
    %v7745 = vld [vmem:[%s1 + $0x88] sm:$0xff]
    %v7746 = vld [vmem:[%s1 + $0x90] sm:$0xff]
    %v7747 = vld [vmem:[%s1 + $0x98] sm:$0xff]
    %v7748 = vld [vmem:[%s1 + $0xa0] sm:$0xff]
    %v7749 = vld [vmem:[%s1 + $0xa8] sm:$0xff]
    %v7750 = vld [vmem:[%s1 + $0xb0] sm:$0xff]
    %v7751 = vld [vmem:[%s1 + $0xb8] sm:$0xff]
    %v7752 = vld [vmem:[%s1 + $0xc0] sm:$0xff]
    %v7753 = vld [vmem:[%s1 + $0xc8] sm:$0xff]
    %v7754 = vld [vmem:[%s1 + $0xd0] sm:$0xff]
    %v7755 = vld [vmem:[%s1 + $0xd8] sm:$0xff]
    %v7756 = vld [vmem:[%s1 + $0xe0] sm:$0xff]
    %v7757 = vld [vmem:[%s1 + $0xe8] sm:$0xff]
    %v7758 = vld [vmem:[%s1 + $0xf0] sm:$0xff]
    %v7759 = vld [vmem:[%s1 + $0xf8] sm:$0xff]
    %v7760 = vld [vmem:[%s1 + $0x100] sm:$0xff]
    %v7761 = vld [vmem:[%s1 + $0x108] sm:$0xff]
    %v7762 = vld [vmem:[%s1 + $0x110] sm:$0xff]
    %v7763 = vld [vmem:[%s1 + $0x118] sm:$0xff]
    %v7764 = vld [vmem:[%s1 + $0x120] sm:$0xff]
    %v7765 = vld [vmem:[%s1 + $0x128] sm:$0xff]
    %v7766 = vld [vmem:[%s1 + $0x130] sm:$0xff]
    %v7767 = vld [vmem:[%s1 + $0x138] sm:$0xff]
    %v7768 = vld [vmem:[%s1 + $0x140] sm:$0xff]
    %v7769 = vld [vmem:[%s1 + $0x148] sm:$0xff]
    %v7770 = vld [vmem:[%s1 + $0x150] sm:$0xff]
    %v7771 = vld [vmem:[%s1 + $0x158] sm:$0xff]
    %v7772 = vld [vmem:[%s1 + $0x160] sm:$0xff]
    %v7773 = vld [vmem:[%s1 + $0x168] sm:$0xff]
    %v7774 = vld [vmem:[%s1 + $0x170] sm:$0xff]
    %v7775 = vld [vmem:[%s1 + $0x178] sm:$0xff]
    %v7776 = vld [vmem:[%s1 + $0x180] sm:$0xff]
    %v7777 = vld [vmem:[%s1 + $0x188] sm:$0xff]
    %v7778 = vld [vmem:[%s1 + $0x190] sm:$0xff]
    %v7779 = vld [vmem:[%s1 + $0x198] sm:$0xff]
    %v7780 = vld [vmem:[%s1 + $0x1a0] sm:$0xff]
    %v7781 = vld [vmem:[%s1 + $0x1a8] sm:$0xff]
    %v7782 = vld [vmem:[%s1 + $0x1b0] sm:$0xff]
    %v7783 = vld [vmem:[%s1 + $0x1b8] sm:$0xff]
    %v7784 = vld [vmem:[%s1 + $0x1c0] sm:$0xff]
    %v7785 = vld [vmem:[%s1 + $0x1c8] sm:$0xff]
    %v7786 = vld [vmem:[%s1 + $0x1d0] sm:$0xff]
    %v7787 = vld [vmem:[%s1 + $0x1d8] sm:$0xff]
    %v7788 = vld [vmem:[%s1 + $0x1e0] sm:$0xff]
    %v7789 = vld [vmem:[%s1 + $0x1e8] sm:$0xff]
    %v7790 = vld [vmem:[%s1 + $0x1f0] sm:$0xff]
    %v7791 = vld [vmem:[%s1 + $0x1f8] sm:$0xff]
    %7856 = vrot.lane.b32.xlu0 %v7728, 32
    %v7857 = vpop.permute.xlu0 %7856
    %7858 = vrot.lane.b32.xlu0 %v7729, 32
    %v7859 = vpop.permute.xlu0 %7858
    %7860 = vrot.lane.b32.xlu0 %v7730, 32
    %v7861 = vpop.permute.xlu0 %7860
    %7862 = vrot.lane.b32.xlu0 %v7731, 32
    %v7863 = vpop.permute.xlu0 %7862
    %7864 = vrot.lane.b32.xlu0 %v7732, 32
    %v7865 = vpop.permute.xlu0 %7864
    %7866 = vrot.lane.b32.xlu0 %v7733, 32
    %v7867 = vpop.permute.xlu0 %7866
    %7868 = vrot.lane.b32.xlu0 %v7734, 32
    %v7869 = vpop.permute.xlu0 %7868
    %7870 = vrot.lane.b32.xlu0 %v7735, 32
    %v7871 = vpop.permute.xlu0 %7870
    %7872 = vrot.lane.b32.xlu0 %v7736, 32
    %v7873 = vpop.permute.xlu0 %7872
    %7874 = vrot.lane.b32.xlu0 %v7737, 32
    %v7875 = vpop.permute.xlu0 %7874
    %7876 = vrot.lane.b32.xlu0 %v7738, 32
    %v7877 = vpop.permute.xlu0 %7876
    %7878 = vrot.lane.b32.xlu0 %v7739, 32
    %v7879 = vpop.permute.xlu0 %7878
    %7880 = vrot.lane.b32.xlu0 %v7740, 32
    %v7881 = vpop.permute.xlu0 %7880
    %7882 = vrot.lane.b32.xlu0 %v7741, 32
    %v7883 = vpop.permute.xlu0 %7882
    %7884 = vrot.lane.b32.xlu0 %v7742, 32
    %v7885 = vpop.permute.xlu0 %7884
    %7886 = vrot.lane.b32.xlu0 %v7743, 32
    %v7887 = vpop.permute.xlu0 %7886
    %7888 = vrot.lane.b32.xlu0 %v7744, 32
    %v7889 = vpop.permute.xlu0 %7888
    %7890 = vrot.lane.b32.xlu0 %v7745, 32
    %v7891 = vpop.permute.xlu0 %7890
    %7892 = vrot.lane.b32.xlu0 %v7746, 32
    %v7893 = vpop.permute.xlu0 %7892
    %7894 = vrot.lane.b32.xlu0 %v7747, 32
    %v7895 = vpop.permute.xlu0 %7894
    %7896 = vrot.lane.b32.xlu0 %v7748, 32
    %v7897 = vpop.permute.xlu0 %7896
    %7898 = vrot.lane.b32.xlu0 %v7749, 32
    %v7899 = vpop.permute.xlu0 %7898
    %7900 = vrot.lane.b32.xlu0 %v7750, 32
    %v7901 = vpop.permute.xlu0 %7900
    %7902 = vrot.lane.b32.xlu0 %v7751, 32
    %v7903 = vpop.permute.xlu0 %7902
    %7904 = vrot.lane.b32.xlu0 %v7752, 32
    %v7905 = vpop.permute.xlu0 %7904
    %7906 = vrot.lane.b32.xlu0 %v7753, 32
    %v7907 = vpop.permute.xlu0 %7906
    %7908 = vrot.lane.b32.xlu0 %v7754, 32
    %v7909 = vpop.permute.xlu0 %7908
    %7910 = vrot.lane.b32.xlu0 %v7755, 32
    %v7911 = vpop.permute.xlu0 %7910
    %7912 = vrot.lane.b32.xlu0 %v7756, 32
    %v7913 = vpop.permute.xlu0 %7912
    %7914 = vrot.lane.b32.xlu0 %v7757, 32
    %v7915 = vpop.permute.xlu0 %7914
    %7916 = vrot.lane.b32.xlu0 %v7758, 32
    %v7917 = vpop.permute.xlu0 %7916
    %7918 = vrot.lane.b32.xlu0 %v7759, 32
    %v7919 = vpop.permute.xlu0 %7918
    %7920 = vrot.lane.b32.xlu0 %v7760, 32
    %v7921 = vpop.permute.xlu0 %7920
    %7922 = vrot.lane.b32.xlu0 %v7761, 32
    %v7923 = vpop.permute.xlu0 %7922
    %7924 = vrot.lane.b32.xlu0 %v7762, 32
    %v7925 = vpop.permute.xlu0 %7924
    %7926 = vrot.lane.b32.xlu0 %v7763, 32
    %v7927 = vpop.permute.xlu0 %7926
    %7928 = vrot.lane.b32.xlu0 %v7764, 32
    %v7929 = vpop.permute.xlu0 %7928
    %7930 = vrot.lane.b32.xlu0 %v7765, 32
    %v7931 = vpop.permute.xlu0 %7930
    %7932 = vrot.lane.b32.xlu0 %v7766, 32
    %v7933 = vpop.permute.xlu0 %7932
    %7934 = vrot.lane.b32.xlu0 %v7767, 32
    %v7935 = vpop.permute.xlu0 %7934
    %7936 = vrot.lane.b32.xlu0 %v7768, 32
    %v7937 = vpop.permute.xlu0 %7936
    %7938 = vrot.lane.b32.xlu0 %v7769, 32
    %v7939 = vpop.permute.xlu0 %7938
    %7940 = vrot.lane.b32.xlu0 %v7770, 32
    %v7941 = vpop.permute.xlu0 %7940
    %7942 = vrot.lane.b32.xlu0 %v7771, 32
    %v7943 = vpop.permute.xlu0 %7942
    %7944 = vrot.lane.b32.xlu0 %v7772, 32
    %v7945 = vpop.permute.xlu0 %7944
    %7946 = vrot.lane.b32.xlu0 %v7773, 32
    %v7947 = vpop.permute.xlu0 %7946
    %7948 = vrot.lane.b32.xlu0 %v7774, 32
    %v7949 = vpop.permute.xlu0 %7948
    %7950 = vrot.lane.b32.xlu0 %v7775, 32
    %v7951 = vpop.permute.xlu0 %7950
    %7952 = vrot.lane.b32.xlu0 %v7776, 32
    %v7953 = vpop.permute.xlu0 %7952
    %7954 = vrot.lane.b32.xlu0 %v7777, 32
    %v7955 = vpop.permute.xlu0 %7954
    %7956 = vrot.lane.b32.xlu0 %v7778, 32
    %v7957 = vpop.permute.xlu0 %7956
    %7958 = vrot.lane.b32.xlu0 %v7779, 32
    %v7959 = vpop.permute.xlu0 %7958
    %7960 = vrot.lane.b32.xlu0 %v7780, 32
    %v7961 = vpop.permute.xlu0 %7960
    %7962 = vrot.lane.b32.xlu0 %v7781, 32
    %v7963 = vpop.permute.xlu0 %7962
    %7964 = vrot.lane.b32.xlu0 %v7782, 32
    %v7965 = vpop.permute.xlu0 %7964
    %7966 = vrot.lane.b32.xlu0 %v7783, 32
    %v7967 = vpop.permute.xlu0 %7966
    %7968 = vrot.lane.b32.xlu0 %v7784, 32
    %v7969 = vpop.permute.xlu0 %7968
    %7970 = vrot.lane.b32.xlu0 %v7785, 32
    %v7971 = vpop.permute.xlu0 %7970
    %7972 = vrot.lane.b32.xlu0 %v7786, 32
    %v7973 = vpop.permute.xlu0 %7972
    %7974 = vrot.lane.b32.xlu0 %v7787, 32
    %v7975 = vpop.permute.xlu0 %7974
    %7976 = vrot.lane.b32.xlu0 %v7788, 32
    %v7977 = vpop.permute.xlu0 %7976
    %7978 = vrot.lane.b32.xlu0 %v7789, 32
    %v7979 = vpop.permute.xlu0 %7978
    %7980 = vrot.lane.b32.xlu0 %v7790, 32
    %v7981 = vpop.permute.xlu0 %7980
    %7982 = vrot.lane.b32.xlu0 %v7791, 32
    %v7983 = vpop.permute.xlu0 %7982
    %v8048 = vmul.f32 %v7664, %v7857
    %v8049 = vmul.f32 %v7665, %v7859
    %v8050 = vmul.f32 %v7666, %v7861
    %v8051 = vmul.f32 %v7667, %v7863
    %v8052 = vmul.f32 %v7668, %v7865
    %v8053 = vmul.f32 %v7669, %v7867
    %v8054 = vmul.f32 %v7670, %v7869
    %v8055 = vmul.f32 %v7671, %v7871
    %v8056 = vmul.f32 %v7672, %v7873
    %v8057 = vmul.f32 %v7673, %v7875
    %v8058 = vmul.f32 %v7674, %v7877
    %v8059 = vmul.f32 %v7675, %v7879
    %v8060 = vmul.f32 %v7676, %v7881
    %v8061 = vmul.f32 %v7677, %v7883
    %v8062 = vmul.f32 %v7678, %v7885
    %v8063 = vmul.f32 %v7679, %v7887
    %v8064 = vmul.f32 %v7680, %v7889
    %v8065 = vmul.f32 %v7681, %v7891
    %v8066 = vmul.f32 %v7682, %v7893
    %v8067 = vmul.f32 %v7683, %v7895
    %v8068 = vmul.f32 %v7684, %v7897
    %v8069 = vmul.f32 %v7685, %v7899
    %v8070 = vmul.f32 %v7686, %v7901
    %v8071 = vmul.f32 %v7687, %v7903
    %v8072 = vmul.f32 %v7688, %v7905
    %v8073 = vmul.f32 %v7689, %v7907
    %v8074 = vmul.f32 %v7690, %v7909
    %v8075 = vmul.f32 %v7691, %v7911
    %v8076 = vmul.f32 %v7692, %v7913
    %v8077 = vmul.f32 %v7693, %v7915
    %v8078 = vmul.f32 %v7694, %v7917
    %v8079 = vmul.f32 %v7695, %v7919
    %v8080 = vmul.f32 %v7696, %v7921
    %v8081 = vmul.f32 %v7697, %v7923
    %v8082 = vmul.f32 %v7698, %v7925
    %v8083 = vmul.f32 %v7699, %v7927
    %v8084 = vmul.f32 %v7700, %v7929
    %v8085 = vmul.f32 %v7701, %v7931
    %v8086 = vmul.f32 %v7702, %v7933
    %v8087 = vmul.f32 %v7703, %v7935
    %v8088 = vmul.f32 %v7704, %v7937
    %v8089 = vmul.f32 %v7705, %v7939
    %v8090 = vmul.f32 %v7706, %v7941
    %v8091 = vmul.f32 %v7707, %v7943
    %v8092 = vmul.f32 %v7708, %v7945
    %v8093 = vmul.f32 %v7709, %v7947
    %v8094 = vmul.f32 %v7710, %v7949
    %v8095 = vmul.f32 %v7711, %v7951
    %v8096 = vmul.f32 %v7712, %v7953
    %v8097 = vmul.f32 %v7713, %v7955
    %v8098 = vmul.f32 %v7714, %v7957
    %v8099 = vmul.f32 %v7715, %v7959
    %v8100 = vmul.f32 %v7716, %v7961
    %v8101 = vmul.f32 %v7717, %v7963
    %v8102 = vmul.f32 %v7718, %v7965
    %v8103 = vmul.f32 %v7719, %v7967
    %v8104 = vmul.f32 %v7720, %v7969
    %v8105 = vmul.f32 %v7721, %v7971
    %v8106 = vmul.f32 %v7722, %v7973
    %v8107 = vmul.f32 %v7723, %v7975
    %v8108 = vmul.f32 %v7724, %v7977
    %v8109 = vmul.f32 %v7725, %v7979
    %v8110 = vmul.f32 %v7726, %v7981
    %v8111 = vmul.f32 %v7727, %v7983
    %8176 = vrot.lane.b32.xlu0 %v7664, 32
    %v8177 = vpop.permute.xlu0 %8176
    %8178 = vrot.lane.b32.xlu0 %v7665, 32
    %v8179 = vpop.permute.xlu0 %8178
    %8180 = vrot.lane.b32.xlu0 %v7666, 32
    %v8181 = vpop.permute.xlu0 %8180
    %8182 = vrot.lane.b32.xlu0 %v7667, 32
    %v8183 = vpop.permute.xlu0 %8182
    %8184 = vrot.lane.b32.xlu0 %v7668, 32
    %v8185 = vpop.permute.xlu0 %8184
    %8186 = vrot.lane.b32.xlu0 %v7669, 32
    %v8187 = vpop.permute.xlu0 %8186
    %8188 = vrot.lane.b32.xlu0 %v7670, 32
    %v8189 = vpop.permute.xlu0 %8188
    %8190 = vrot.lane.b32.xlu0 %v7671, 32
    %v8191 = vpop.permute.xlu0 %8190
    %8192 = vrot.lane.b32.xlu0 %v7672, 32
    %v8193 = vpop.permute.xlu0 %8192
    %8194 = vrot.lane.b32.xlu0 %v7673, 32
    %v8195 = vpop.permute.xlu0 %8194
    %8196 = vrot.lane.b32.xlu0 %v7674, 32
    %v8197 = vpop.permute.xlu0 %8196
    %8198 = vrot.lane.b32.xlu0 %v7675, 32
    %v8199 = vpop.permute.xlu0 %8198
    %8200 = vrot.lane.b32.xlu0 %v7676, 32
    %v8201 = vpop.permute.xlu0 %8200
    %8202 = vrot.lane.b32.xlu0 %v7677, 32
    %v8203 = vpop.permute.xlu0 %8202
    %8204 = vrot.lane.b32.xlu0 %v7678, 32
    %v8205 = vpop.permute.xlu0 %8204
    %8206 = vrot.lane.b32.xlu0 %v7679, 32
    %v8207 = vpop.permute.xlu0 %8206
    %8208 = vrot.lane.b32.xlu0 %v7680, 32
    %v8209 = vpop.permute.xlu0 %8208
    %8210 = vrot.lane.b32.xlu0 %v7681, 32
    %v8211 = vpop.permute.xlu0 %8210
    %8212 = vrot.lane.b32.xlu0 %v7682, 32
    %v8213 = vpop.permute.xlu0 %8212
    %8214 = vrot.lane.b32.xlu0 %v7683, 32
    %v8215 = vpop.permute.xlu0 %8214
    %8216 = vrot.lane.b32.xlu0 %v7684, 32
    %v8217 = vpop.permute.xlu0 %8216
    %8218 = vrot.lane.b32.xlu0 %v7685, 32
    %v8219 = vpop.permute.xlu0 %8218
    %8220 = vrot.lane.b32.xlu0 %v7686, 32
    %v8221 = vpop.permute.xlu0 %8220
    %8222 = vrot.lane.b32.xlu0 %v7687, 32
    %v8223 = vpop.permute.xlu0 %8222
    %8224 = vrot.lane.b32.xlu0 %v7688, 32
    %v8225 = vpop.permute.xlu0 %8224
    %8226 = vrot.lane.b32.xlu0 %v7689, 32
    %v8227 = vpop.permute.xlu0 %8226
    %8228 = vrot.lane.b32.xlu0 %v7690, 32
    %v8229 = vpop.permute.xlu0 %8228
    %8230 = vrot.lane.b32.xlu0 %v7691, 32
    %v8231 = vpop.permute.xlu0 %8230
    %8232 = vrot.lane.b32.xlu0 %v7692, 32
    %v8233 = vpop.permute.xlu0 %8232
    %8234 = vrot.lane.b32.xlu0 %v7693, 32
    %v8235 = vpop.permute.xlu0 %8234
    %8236 = vrot.lane.b32.xlu0 %v7694, 32
    %v8237 = vpop.permute.xlu0 %8236
    %8238 = vrot.lane.b32.xlu0 %v7695, 32
    %v8239 = vpop.permute.xlu0 %8238
    %8240 = vrot.lane.b32.xlu0 %v7696, 32
    %v8241 = vpop.permute.xlu0 %8240
    %8242 = vrot.lane.b32.xlu0 %v7697, 32
    %v8243 = vpop.permute.xlu0 %8242
    %8244 = vrot.lane.b32.xlu0 %v7698, 32
    %v8245 = vpop.permute.xlu0 %8244
    %8246 = vrot.lane.b32.xlu0 %v7699, 32
    %v8247 = vpop.permute.xlu0 %8246
    %8248 = vrot.lane.b32.xlu0 %v7700, 32
    %v8249 = vpop.permute.xlu0 %8248
    %8250 = vrot.lane.b32.xlu0 %v7701, 32
    %v8251 = vpop.permute.xlu0 %8250
    %8252 = vrot.lane.b32.xlu0 %v7702, 32
    %v8253 = vpop.permute.xlu0 %8252
    %8254 = vrot.lane.b32.xlu0 %v7703, 32
    %v8255 = vpop.permute.xlu0 %8254
    %8256 = vrot.lane.b32.xlu0 %v7704, 32
    %v8257 = vpop.permute.xlu0 %8256
    %8258 = vrot.lane.b32.xlu0 %v7705, 32
    %v8259 = vpop.permute.xlu0 %8258
    %8260 = vrot.lane.b32.xlu0 %v7706, 32
    %v8261 = vpop.permute.xlu0 %8260
    %8262 = vrot.lane.b32.xlu0 %v7707, 32
    %v8263 = vpop.permute.xlu0 %8262
    %8264 = vrot.lane.b32.xlu0 %v7708, 32
    %v8265 = vpop.permute.xlu0 %8264
    %8266 = vrot.lane.b32.xlu0 %v7709, 32
    %v8267 = vpop.permute.xlu0 %8266
    %8268 = vrot.lane.b32.xlu0 %v7710, 32
    %v8269 = vpop.permute.xlu0 %8268
    %8270 = vrot.lane.b32.xlu0 %v7711, 32
    %v8271 = vpop.permute.xlu0 %8270
    %8272 = vrot.lane.b32.xlu0 %v7712, 32
    %v8273 = vpop.permute.xlu0 %8272
    %8274 = vrot.lane.b32.xlu0 %v7713, 32
    %v8275 = vpop.permute.xlu0 %8274
    %8276 = vrot.lane.b32.xlu0 %v7714, 32
    %v8277 = vpop.permute.xlu0 %8276
    %8278 = vrot.lane.b32.xlu0 %v7715, 32
    %v8279 = vpop.permute.xlu0 %8278
    %8280 = vrot.lane.b32.xlu0 %v7716, 32
    %v8281 = vpop.permute.xlu0 %8280
    %8282 = vrot.lane.b32.xlu0 %v7717, 32
    %v8283 = vpop.permute.xlu0 %8282
    %8284 = vrot.lane.b32.xlu0 %v7718, 32
    %v8285 = vpop.permute.xlu0 %8284
    %8286 = vrot.lane.b32.xlu0 %v7719, 32
    %v8287 = vpop.permute.xlu0 %8286
    %8288 = vrot.lane.b32.xlu0 %v7720, 32
    %v8289 = vpop.permute.xlu0 %8288
    %8290 = vrot.lane.b32.xlu0 %v7721, 32
    %v8291 = vpop.permute.xlu0 %8290
    %8292 = vrot.lane.b32.xlu0 %v7722, 32
    %v8293 = vpop.permute.xlu0 %8292
    %8294 = vrot.lane.b32.xlu0 %v7723, 32
    %v8295 = vpop.permute.xlu0 %8294
    %8296 = vrot.lane.b32.xlu0 %v7724, 32
    %v8297 = vpop.permute.xlu0 %8296
    %8298 = vrot.lane.b32.xlu0 %v7725, 32
    %v8299 = vpop.permute.xlu0 %8298
    %8300 = vrot.lane.b32.xlu0 %v7726, 32
    %v8301 = vpop.permute.xlu0 %8300
    %8302 = vrot.lane.b32.xlu0 %v7727, 32
    %v8303 = vpop.permute.xlu0 %8302
    %v8368 = vmul.f32 %v7664, %v8177
    %v8369 = vmul.f32 %v7665, %v8179
    %v8370 = vmul.f32 %v7666, %v8181
    %v8371 = vmul.f32 %v7667, %v8183
    %v8372 = vmul.f32 %v7668, %v8185
    %v8373 = vmul.f32 %v7669, %v8187
    %v8374 = vmul.f32 %v7670, %v8189
    %v8375 = vmul.f32 %v7671, %v8191
    %v8376 = vmul.f32 %v7672, %v8193
    %v8377 = vmul.f32 %v7673, %v8195
    %v8378 = vmul.f32 %v7674, %v8197
    %v8379 = vmul.f32 %v7675, %v8199
    %v8380 = vmul.f32 %v7676, %v8201
    %v8381 = vmul.f32 %v7677, %v8203
    %v8382 = vmul.f32 %v7678, %v8205
    %v8383 = vmul.f32 %v7679, %v8207
    %v8384 = vmul.f32 %v7680, %v8209
    %v8385 = vmul.f32 %v7681, %v8211
    %v8386 = vmul.f32 %v7682, %v8213
    %v8387 = vmul.f32 %v7683, %v8215
    %v8388 = vmul.f32 %v7684, %v8217
    %v8389 = vmul.f32 %v7685, %v8219
    %v8390 = vmul.f32 %v7686, %v8221
    %v8391 = vmul.f32 %v7687, %v8223
    %v8392 = vmul.f32 %v7688, %v8225
    %v8393 = vmul.f32 %v7689, %v8227
    %v8394 = vmul.f32 %v7690, %v8229
    %v8395 = vmul.f32 %v7691, %v8231
    %v8396 = vmul.f32 %v7692, %v8233
    %v8397 = vmul.f32 %v7693, %v8235
    %v8398 = vmul.f32 %v7694, %v8237
    %v8399 = vmul.f32 %v7695, %v8239
    %v8400 = vmul.f32 %v7696, %v8241
    %v8401 = vmul.f32 %v7697, %v8243
    %v8402 = vmul.f32 %v7698, %v8245
    %v8403 = vmul.f32 %v7699, %v8247
    %v8404 = vmul.f32 %v7700, %v8249
    %v8405 = vmul.f32 %v7701, %v8251
    %v8406 = vmul.f32 %v7702, %v8253
    %v8407 = vmul.f32 %v7703, %v8255
    %v8408 = vmul.f32 %v7704, %v8257
    %v8409 = vmul.f32 %v7705, %v8259
    %v8410 = vmul.f32 %v7706, %v8261
    %v8411 = vmul.f32 %v7707, %v8263
    %v8412 = vmul.f32 %v7708, %v8265
    %v8413 = vmul.f32 %v7709, %v8267
    %v8414 = vmul.f32 %v7710, %v8269
    %v8415 = vmul.f32 %v7711, %v8271
    %v8416 = vmul.f32 %v7712, %v8273
    %v8417 = vmul.f32 %v7713, %v8275
    %v8418 = vmul.f32 %v7714, %v8277
    %v8419 = vmul.f32 %v7715, %v8279
    %v8420 = vmul.f32 %v7716, %v8281
    %v8421 = vmul.f32 %v7717, %v8283
    %v8422 = vmul.f32 %v7718, %v8285
    %v8423 = vmul.f32 %v7719, %v8287
    %v8424 = vmul.f32 %v7720, %v8289
    %v8425 = vmul.f32 %v7721, %v8291
    %v8426 = vmul.f32 %v7722, %v8293
    %v8427 = vmul.f32 %v7723, %v8295
    %v8428 = vmul.f32 %v7724, %v8297
    %v8429 = vmul.f32 %v7725, %v8299
    %v8430 = vmul.f32 %v7726, %v8301
    %v8431 = vmul.f32 %v7727, %v8303
    %8496 = vrot.lane.b32.xlu0 %v8368, 32
    %v8497 = vpop.permute.xlu0 %8496
    %8498 = vrot.lane.b32.xlu0 %v8369, 32
    %v8499 = vpop.permute.xlu0 %8498
    %8500 = vrot.lane.b32.xlu0 %v8370, 32
    %v8501 = vpop.permute.xlu0 %8500
    %8502 = vrot.lane.b32.xlu0 %v8371, 32
    %v8503 = vpop.permute.xlu0 %8502
    %8504 = vrot.lane.b32.xlu0 %v8372, 32
    %v8505 = vpop.permute.xlu0 %8504
    %8506 = vrot.lane.b32.xlu0 %v8373, 32
    %v8507 = vpop.permute.xlu0 %8506
    %8508 = vrot.lane.b32.xlu0 %v8374, 32
    %v8509 = vpop.permute.xlu0 %8508
    %8510 = vrot.lane.b32.xlu0 %v8375, 32
    %v8511 = vpop.permute.xlu0 %8510
    %8512 = vrot.lane.b32.xlu0 %v8376, 32
    %v8513 = vpop.permute.xlu0 %8512
    %8514 = vrot.lane.b32.xlu0 %v8377, 32
    %v8515 = vpop.permute.xlu0 %8514
    %8516 = vrot.lane.b32.xlu0 %v8378, 32
    %v8517 = vpop.permute.xlu0 %8516
    %8518 = vrot.lane.b32.xlu0 %v8379, 32
    %v8519 = vpop.permute.xlu0 %8518
    %8520 = vrot.lane.b32.xlu0 %v8380, 32
    %v8521 = vpop.permute.xlu0 %8520
    %8522 = vrot.lane.b32.xlu0 %v8381, 32
    %v8523 = vpop.permute.xlu0 %8522
    %8524 = vrot.lane.b32.xlu0 %v8382, 32
    %v8525 = vpop.permute.xlu0 %8524
    %8526 = vrot.lane.b32.xlu0 %v8383, 32
    %v8527 = vpop.permute.xlu0 %8526
    %8528 = vrot.lane.b32.xlu0 %v8384, 32
    %v8529 = vpop.permute.xlu0 %8528
    %8530 = vrot.lane.b32.xlu0 %v8385, 32
    %v8531 = vpop.permute.xlu0 %8530
    %8532 = vrot.lane.b32.xlu0 %v8386, 32
    %v8533 = vpop.permute.xlu0 %8532
    %8534 = vrot.lane.b32.xlu0 %v8387, 32
    %v8535 = vpop.permute.xlu0 %8534
    %8536 = vrot.lane.b32.xlu0 %v8388, 32
    %v8537 = vpop.permute.xlu0 %8536
    %8538 = vrot.lane.b32.xlu0 %v8389, 32
    %v8539 = vpop.permute.xlu0 %8538
    %8540 = vrot.lane.b32.xlu0 %v8390, 32
    %v8541 = vpop.permute.xlu0 %8540
    %8542 = vrot.lane.b32.xlu0 %v8391, 32
    %v8543 = vpop.permute.xlu0 %8542
    %8544 = vrot.lane.b32.xlu0 %v8392, 32
    %v8545 = vpop.permute.xlu0 %8544
    %8546 = vrot.lane.b32.xlu0 %v8393, 32
    %v8547 = vpop.permute.xlu0 %8546
    %8548 = vrot.lane.b32.xlu0 %v8394, 32
    %v8549 = vpop.permute.xlu0 %8548
    %8550 = vrot.lane.b32.xlu0 %v8395, 32
    %v8551 = vpop.permute.xlu0 %8550
    %8552 = vrot.lane.b32.xlu0 %v8396, 32
    %v8553 = vpop.permute.xlu0 %8552
    %8554 = vrot.lane.b32.xlu0 %v8397, 32
    %v8555 = vpop.permute.xlu0 %8554
    %8556 = vrot.lane.b32.xlu0 %v8398, 32
    %v8557 = vpop.permute.xlu0 %8556
    %8558 = vrot.lane.b32.xlu0 %v8399, 32
    %v8559 = vpop.permute.xlu0 %8558
    %8560 = vrot.lane.b32.xlu0 %v8400, 32
    %v8561 = vpop.permute.xlu0 %8560
    %8562 = vrot.lane.b32.xlu0 %v8401, 32
    %v8563 = vpop.permute.xlu0 %8562
    %8564 = vrot.lane.b32.xlu0 %v8402, 32
    %v8565 = vpop.permute.xlu0 %8564
    %8566 = vrot.lane.b32.xlu0 %v8403, 32
    %v8567 = vpop.permute.xlu0 %8566
    %8568 = vrot.lane.b32.xlu0 %v8404, 32
    %v8569 = vpop.permute.xlu0 %8568
    %8570 = vrot.lane.b32.xlu0 %v8405, 32
    %v8571 = vpop.permute.xlu0 %8570
    %8572 = vrot.lane.b32.xlu0 %v8406, 32
    %v8573 = vpop.permute.xlu0 %8572
    %8574 = vrot.lane.b32.xlu0 %v8407, 32
    %v8575 = vpop.permute.xlu0 %8574
    %8576 = vrot.lane.b32.xlu0 %v8408, 32
    %v8577 = vpop.permute.xlu0 %8576
    %8578 = vrot.lane.b32.xlu0 %v8409, 32
    %v8579 = vpop.permute.xlu0 %8578
    %8580 = vrot.lane.b32.xlu0 %v8410, 32
    %v8581 = vpop.permute.xlu0 %8580
    %8582 = vrot.lane.b32.xlu0 %v8411, 32
    %v8583 = vpop.permute.xlu0 %8582
    %8584 = vrot.lane.b32.xlu0 %v8412, 32
    %v8585 = vpop.permute.xlu0 %8584
    %8586 = vrot.lane.b32.xlu0 %v8413, 32
    %v8587 = vpop.permute.xlu0 %8586
    %8588 = vrot.lane.b32.xlu0 %v8414, 32
    %v8589 = vpop.permute.xlu0 %8588
    %8590 = vrot.lane.b32.xlu0 %v8415, 32
    %v8591 = vpop.permute.xlu0 %8590
    %8592 = vrot.lane.b32.xlu0 %v8416, 32
    %v8593 = vpop.permute.xlu0 %8592
    %8594 = vrot.lane.b32.xlu0 %v8417, 32
    %v8595 = vpop.permute.xlu0 %8594
    %8596 = vrot.lane.b32.xlu0 %v8418, 32
    %v8597 = vpop.permute.xlu0 %8596
    %8598 = vrot.lane.b32.xlu0 %v8419, 32
    %v8599 = vpop.permute.xlu0 %8598
    %8600 = vrot.lane.b32.xlu0 %v8420, 32
    %v8601 = vpop.permute.xlu0 %8600
    %8602 = vrot.lane.b32.xlu0 %v8421, 32
    %v8603 = vpop.permute.xlu0 %8602
    %8604 = vrot.lane.b32.xlu0 %v8422, 32
    %v8605 = vpop.permute.xlu0 %8604
    %8606 = vrot.lane.b32.xlu0 %v8423, 32
    %v8607 = vpop.permute.xlu0 %8606
    %8608 = vrot.lane.b32.xlu0 %v8424, 32
    %v8609 = vpop.permute.xlu0 %8608
    %8610 = vrot.lane.b32.xlu0 %v8425, 32
    %v8611 = vpop.permute.xlu0 %8610
    %8612 = vrot.lane.b32.xlu0 %v8426, 32
    %v8613 = vpop.permute.xlu0 %8612
    %8614 = vrot.lane.b32.xlu0 %v8427, 32
    %v8615 = vpop.permute.xlu0 %8614
    %8616 = vrot.lane.b32.xlu0 %v8428, 32
    %v8617 = vpop.permute.xlu0 %8616
    %8618 = vrot.lane.b32.xlu0 %v8429, 32
    %v8619 = vpop.permute.xlu0 %8618
    %8620 = vrot.lane.b32.xlu0 %v8430, 32
    %v8621 = vpop.permute.xlu0 %8620
    %8622 = vrot.lane.b32.xlu0 %v8431, 32
    %v8623 = vpop.permute.xlu0 %8622
    %v8688 = vadd.f32 %v8048, %v8497
    %v8689 = vadd.f32 %v8049, %v8499
    %v8690 = vadd.f32 %v8050, %v8501
    %v8691 = vadd.f32 %v8051, %v8503
    %v8692 = vadd.f32 %v8052, %v8505
    %v8693 = vadd.f32 %v8053, %v8507
    %v8694 = vadd.f32 %v8054, %v8509
    %v8695 = vadd.f32 %v8055, %v8511
    %v8696 = vadd.f32 %v8056, %v8513
    %v8697 = vadd.f32 %v8057, %v8515
    %v8698 = vadd.f32 %v8058, %v8517
    %v8699 = vadd.f32 %v8059, %v8519
    %v8700 = vadd.f32 %v8060, %v8521
    %v8701 = vadd.f32 %v8061, %v8523
    %v8702 = vadd.f32 %v8062, %v8525
    %v8703 = vadd.f32 %v8063, %v8527
    %v8704 = vadd.f32 %v8064, %v8529
    %v8705 = vadd.f32 %v8065, %v8531
    %v8706 = vadd.f32 %v8066, %v8533
    %v8707 = vadd.f32 %v8067, %v8535
    %v8708 = vadd.f32 %v8068, %v8537
    %v8709 = vadd.f32 %v8069, %v8539
    %v8710 = vadd.f32 %v8070, %v8541
    %v8711 = vadd.f32 %v8071, %v8543
    %v8712 = vadd.f32 %v8072, %v8545
    %v8713 = vadd.f32 %v8073, %v8547
    %v8714 = vadd.f32 %v8074, %v8549
    %v8715 = vadd.f32 %v8075, %v8551
    %v8716 = vadd.f32 %v8076, %v8553
    %v8717 = vadd.f32 %v8077, %v8555
    %v8718 = vadd.f32 %v8078, %v8557
    %v8719 = vadd.f32 %v8079, %v8559
    %v8720 = vadd.f32 %v8080, %v8561
    %v8721 = vadd.f32 %v8081, %v8563
    %v8722 = vadd.f32 %v8082, %v8565
    %v8723 = vadd.f32 %v8083, %v8567
    %v8724 = vadd.f32 %v8084, %v8569
    %v8725 = vadd.f32 %v8085, %v8571
    %v8726 = vadd.f32 %v8086, %v8573
    %v8727 = vadd.f32 %v8087, %v8575
    %v8728 = vadd.f32 %v8088, %v8577
    %v8729 = vadd.f32 %v8089, %v8579
    %v8730 = vadd.f32 %v8090, %v8581
    %v8731 = vadd.f32 %v8091, %v8583
    %v8732 = vadd.f32 %v8092, %v8585
    %v8733 = vadd.f32 %v8093, %v8587
    %v8734 = vadd.f32 %v8094, %v8589
    %v8735 = vadd.f32 %v8095, %v8591
    %v8736 = vadd.f32 %v8096, %v8593
    %v8737 = vadd.f32 %v8097, %v8595
    %v8738 = vadd.f32 %v8098, %v8597
    %v8739 = vadd.f32 %v8099, %v8599
    %v8740 = vadd.f32 %v8100, %v8601
    %v8741 = vadd.f32 %v8101, %v8603
    %v8742 = vadd.f32 %v8102, %v8605
    %v8743 = vadd.f32 %v8103, %v8607
    %v8744 = vadd.f32 %v8104, %v8609
    %v8745 = vadd.f32 %v8105, %v8611
    %v8746 = vadd.f32 %v8106, %v8613
    %v8747 = vadd.f32 %v8107, %v8615
    %v8748 = vadd.f32 %v8108, %v8617
    %v8749 = vadd.f32 %v8109, %v8619
    %v8750 = vadd.f32 %v8110, %v8621
    %v8751 = vadd.f32 %v8111, %v8623
    %v8752 = vtanh.pop %v8688
    %v8753 = vtanh.pop %v8689
    %v8754 = vtanh.pop %v8690
    %v8755 = vtanh.pop %v8691
    %v8756 = vtanh.pop %v8692
    %v8757 = vtanh.pop %v8693
    %v8758 = vtanh.pop %v8694
    %v8759 = vtanh.pop %v8695
    %v8760 = vtanh.pop %v8696
    %v8761 = vtanh.pop %v8697
    %v8762 = vtanh.pop %v8698
    %v8763 = vtanh.pop %v8699
    %v8764 = vtanh.pop %v8700
    %v8765 = vtanh.pop %v8701
    %v8766 = vtanh.pop %v8702
    %v8767 = vtanh.pop %v8703
    %v8768 = vtanh.pop %v8704
    %v8769 = vtanh.pop %v8705
    %v8770 = vtanh.pop %v8706
    %v8771 = vtanh.pop %v8707
    %v8772 = vtanh.pop %v8708
    %v8773 = vtanh.pop %v8709
    %v8774 = vtanh.pop %v8710
    %v8775 = vtanh.pop %v8711
    %v8776 = vtanh.pop %v8712
    %v8777 = vtanh.pop %v8713
    %v8778 = vtanh.pop %v8714
    %v8779 = vtanh.pop %v8715
    %v8780 = vtanh.pop %v8716
    %v8781 = vtanh.pop %v8717
    %v8782 = vtanh.pop %v8718
    %v8783 = vtanh.pop %v8719
    %v8784 = vtanh.pop %v8720
    %v8785 = vtanh.pop %v8721
    %v8786 = vtanh.pop %v8722
    %v8787 = vtanh.pop %v8723
    %v8788 = vtanh.pop %v8724
    %v8789 = vtanh.pop %v8725
    %v8790 = vtanh.pop %v8726
    %v8791 = vtanh.pop %v8727
    %v8792 = vtanh.pop %v8728
    %v8793 = vtanh.pop %v8729
    %v8794 = vtanh.pop %v8730
    %v8795 = vtanh.pop %v8731
    %v8796 = vtanh.pop %v8732
    %v8797 = vtanh.pop %v8733
    %v8798 = vtanh.pop %v8734
    %v8799 = vtanh.pop %v8735
    %v8800 = vtanh.pop %v8736
    %v8801 = vtanh.pop %v8737
    %v8802 = vtanh.pop %v8738
    %v8803 = vtanh.pop %v8739
    %v8804 = vtanh.pop %v8740
    %v8805 = vtanh.pop %v8741
    %v8806 = vtanh.pop %v8742
    %v8807 = vtanh.pop %v8743
    %v8808 = vtanh.pop %v8744
    %v8809 = vtanh.pop %v8745
    %v8810 = vtanh.pop %v8746
    %v8811 = vtanh.pop %v8747
    %v8812 = vtanh.pop %v8748
    %v8813 = vtanh.pop %v8749
    %v8814 = vtanh.pop %v8750
    %v8815 = vtanh.pop %v8751
    %8880 = vrot.lane.b32.xlu0 %v8752, 32
    %v8881 = vpop.permute.xlu0 %8880
    %8882 = vrot.lane.b32.xlu0 %v8753, 32
    %v8883 = vpop.permute.xlu0 %8882
    %8884 = vrot.lane.b32.xlu0 %v8754, 32
    %v8885 = vpop.permute.xlu0 %8884
    %8886 = vrot.lane.b32.xlu0 %v8755, 32
    %v8887 = vpop.permute.xlu0 %8886
    %8888 = vrot.lane.b32.xlu0 %v8756, 32
    %v8889 = vpop.permute.xlu0 %8888
    %8890 = vrot.lane.b32.xlu0 %v8757, 32
    %v8891 = vpop.permute.xlu0 %8890
    %8892 = vrot.lane.b32.xlu0 %v8758, 32
    %v8893 = vpop.permute.xlu0 %8892
    %8894 = vrot.lane.b32.xlu0 %v8759, 32
    %v8895 = vpop.permute.xlu0 %8894
    %8896 = vrot.lane.b32.xlu0 %v8760, 32
    %v8897 = vpop.permute.xlu0 %8896
    %8898 = vrot.lane.b32.xlu0 %v8761, 32
    %v8899 = vpop.permute.xlu0 %8898
    %8900 = vrot.lane.b32.xlu0 %v8762, 32
    %v8901 = vpop.permute.xlu0 %8900
    %8902 = vrot.lane.b32.xlu0 %v8763, 32
    %v8903 = vpop.permute.xlu0 %8902
    %8904 = vrot.lane.b32.xlu0 %v8764, 32
    %v8905 = vpop.permute.xlu0 %8904
    %8906 = vrot.lane.b32.xlu0 %v8765, 32
    %v8907 = vpop.permute.xlu0 %8906
    %8908 = vrot.lane.b32.xlu0 %v8766, 32
    %v8909 = vpop.permute.xlu0 %8908
    %8910 = vrot.lane.b32.xlu0 %v8767, 32
    %v8911 = vpop.permute.xlu0 %8910
    %8912 = vrot.lane.b32.xlu0 %v8768, 32
    %v8913 = vpop.permute.xlu0 %8912
    %8914 = vrot.lane.b32.xlu0 %v8769, 32
    %v8915 = vpop.permute.xlu0 %8914
    %8916 = vrot.lane.b32.xlu0 %v8770, 32
    %v8917 = vpop.permute.xlu0 %8916
    %8918 = vrot.lane.b32.xlu0 %v8771, 32
    %v8919 = vpop.permute.xlu0 %8918
    %8920 = vrot.lane.b32.xlu0 %v8772, 32
    %v8921 = vpop.permute.xlu0 %8920
    %8922 = vrot.lane.b32.xlu0 %v8773, 32
    %v8923 = vpop.permute.xlu0 %8922
    %8924 = vrot.lane.b32.xlu0 %v8774, 32
    %v8925 = vpop.permute.xlu0 %8924
    %8926 = vrot.lane.b32.xlu0 %v8775, 32
    %v8927 = vpop.permute.xlu0 %8926
    %8928 = vrot.lane.b32.xlu0 %v8776, 32
    %v8929 = vpop.permute.xlu0 %8928
    %8930 = vrot.lane.b32.xlu0 %v8777, 32
    %v8931 = vpop.permute.xlu0 %8930
    %8932 = vrot.lane.b32.xlu0 %v8778, 32
    %v8933 = vpop.permute.xlu0 %8932
    %8934 = vrot.lane.b32.xlu0 %v8779, 32
    %v8935 = vpop.permute.xlu0 %8934
    %8936 = vrot.lane.b32.xlu0 %v8780, 32
    %v8937 = vpop.permute.xlu0 %8936
    %8938 = vrot.lane.b32.xlu0 %v8781, 32
    %v8939 = vpop.permute.xlu0 %8938
    %8940 = vrot.lane.b32.xlu0 %v8782, 32
    %v8941 = vpop.permute.xlu0 %8940
    %8942 = vrot.lane.b32.xlu0 %v8783, 32
    %v8943 = vpop.permute.xlu0 %8942
    %8944 = vrot.lane.b32.xlu0 %v8784, 32
    %v8945 = vpop.permute.xlu0 %8944
    %8946 = vrot.lane.b32.xlu0 %v8785, 32
    %v8947 = vpop.permute.xlu0 %8946
    %8948 = vrot.lane.b32.xlu0 %v8786, 32
    %v8949 = vpop.permute.xlu0 %8948
    %8950 = vrot.lane.b32.xlu0 %v8787, 32
    %v8951 = vpop.permute.xlu0 %8950
    %8952 = vrot.lane.b32.xlu0 %v8788, 32
    %v8953 = vpop.permute.xlu0 %8952
    %8954 = vrot.lane.b32.xlu0 %v8789, 32
    %v8955 = vpop.permute.xlu0 %8954
    %8956 = vrot.lane.b32.xlu0 %v8790, 32
    %v8957 = vpop.permute.xlu0 %8956
    %8958 = vrot.lane.b32.xlu0 %v8791, 32
    %v8959 = vpop.permute.xlu0 %8958
    %8960 = vrot.lane.b32.xlu0 %v8792, 32
    %v8961 = vpop.permute.xlu0 %8960
    %8962 = vrot.lane.b32.xlu0 %v8793, 32
    %v8963 = vpop.permute.xlu0 %8962
    %8964 = vrot.lane.b32.xlu0 %v8794, 32
    %v8965 = vpop.permute.xlu0 %8964
    %8966 = vrot.lane.b32.xlu0 %v8795, 32
    %v8967 = vpop.permute.xlu0 %8966
    %8968 = vrot.lane.b32.xlu0 %v8796, 32
    %v8969 = vpop.permute.xlu0 %8968
    %8970 = vrot.lane.b32.xlu0 %v8797, 32
    %v8971 = vpop.permute.xlu0 %8970
    %8972 = vrot.lane.b32.xlu0 %v8798, 32
    %v8973 = vpop.permute.xlu0 %8972
    %8974 = vrot.lane.b32.xlu0 %v8799, 32
    %v8975 = vpop.permute.xlu0 %8974
    %8976 = vrot.lane.b32.xlu0 %v8800, 32
    %v8977 = vpop.permute.xlu0 %8976
    %8978 = vrot.lane.b32.xlu0 %v8801, 32
    %v8979 = vpop.permute.xlu0 %8978
    %8980 = vrot.lane.b32.xlu0 %v8802, 32
    %v8981 = vpop.permute.xlu0 %8980
    %8982 = vrot.lane.b32.xlu0 %v8803, 32
    %v8983 = vpop.permute.xlu0 %8982
    %8984 = vrot.lane.b32.xlu0 %v8804, 32
    %v8985 = vpop.permute.xlu0 %8984
    %8986 = vrot.lane.b32.xlu0 %v8805, 32
    %v8987 = vpop.permute.xlu0 %8986
    %8988 = vrot.lane.b32.xlu0 %v8806, 32
    %v8989 = vpop.permute.xlu0 %8988
    %8990 = vrot.lane.b32.xlu0 %v8807, 32
    %v8991 = vpop.permute.xlu0 %8990
    %8992 = vrot.lane.b32.xlu0 %v8808, 32
    %v8993 = vpop.permute.xlu0 %8992
    %8994 = vrot.lane.b32.xlu0 %v8809, 32
    %v8995 = vpop.permute.xlu0 %8994
    %8996 = vrot.lane.b32.xlu0 %v8810, 32
    %v8997 = vpop.permute.xlu0 %8996
    %8998 = vrot.lane.b32.xlu0 %v8811, 32
    %v8999 = vpop.permute.xlu0 %8998
    %9000 = vrot.lane.b32.xlu0 %v8812, 32
    %v9001 = vpop.permute.xlu0 %9000
    %9002 = vrot.lane.b32.xlu0 %v8813, 32
    %v9003 = vpop.permute.xlu0 %9002
    %9004 = vrot.lane.b32.xlu0 %v8814, 32
    %v9005 = vpop.permute.xlu0 %9004
    %9006 = vrot.lane.b32.xlu0 %v8815, 32
    %v9007 = vpop.permute.xlu0 %9006
    %v9072 = vmul.f32 %v7664, %v8881
    %v9073 = vmul.f32 %v7665, %v8883
    %v9074 = vmul.f32 %v7666, %v8885
    %v9075 = vmul.f32 %v7667, %v8887
    %v9076 = vmul.f32 %v7668, %v8889
    %v9077 = vmul.f32 %v7669, %v8891
    %v9078 = vmul.f32 %v7670, %v8893
    %v9079 = vmul.f32 %v7671, %v8895
    %v9080 = vmul.f32 %v7672, %v8897
    %v9081 = vmul.f32 %v7673, %v8899
    %v9082 = vmul.f32 %v7674, %v8901
    %v9083 = vmul.f32 %v7675, %v8903
    %v9084 = vmul.f32 %v7676, %v8905
    %v9085 = vmul.f32 %v7677, %v8907
    %v9086 = vmul.f32 %v7678, %v8909
    %v9087 = vmul.f32 %v7679, %v8911
    %v9088 = vmul.f32 %v7680, %v8913
    %v9089 = vmul.f32 %v7681, %v8915
    %v9090 = vmul.f32 %v7682, %v8917
    %v9091 = vmul.f32 %v7683, %v8919
    %v9092 = vmul.f32 %v7684, %v8921
    %v9093 = vmul.f32 %v7685, %v8923
    %v9094 = vmul.f32 %v7686, %v8925
    %v9095 = vmul.f32 %v7687, %v8927
    %v9096 = vmul.f32 %v7688, %v8929
    %v9097 = vmul.f32 %v7689, %v8931
    %v9098 = vmul.f32 %v7690, %v8933
    %v9099 = vmul.f32 %v7691, %v8935
    %v9100 = vmul.f32 %v7692, %v8937
    %v9101 = vmul.f32 %v7693, %v8939
    %v9102 = vmul.f32 %v7694, %v8941
    %v9103 = vmul.f32 %v7695, %v8943
    %v9104 = vmul.f32 %v7696, %v8945
    %v9105 = vmul.f32 %v7697, %v8947
    %v9106 = vmul.f32 %v7698, %v8949
    %v9107 = vmul.f32 %v7699, %v8951
    %v9108 = vmul.f32 %v7700, %v8953
    %v9109 = vmul.f32 %v7701, %v8955
    %v9110 = vmul.f32 %v7702, %v8957
    %v9111 = vmul.f32 %v7703, %v8959
    %v9112 = vmul.f32 %v7704, %v8961
    %v9113 = vmul.f32 %v7705, %v8963
    %v9114 = vmul.f32 %v7706, %v8965
    %v9115 = vmul.f32 %v7707, %v8967
    %v9116 = vmul.f32 %v7708, %v8969
    %v9117 = vmul.f32 %v7709, %v8971
    %v9118 = vmul.f32 %v7710, %v8973
    %v9119 = vmul.f32 %v7711, %v8975
    %v9120 = vmul.f32 %v7712, %v8977
    %v9121 = vmul.f32 %v7713, %v8979
    %v9122 = vmul.f32 %v7714, %v8981
    %v9123 = vmul.f32 %v7715, %v8983
    %v9124 = vmul.f32 %v7716, %v8985
    %v9125 = vmul.f32 %v7717, %v8987
    %v9126 = vmul.f32 %v7718, %v8989
    %v9127 = vmul.f32 %v7719, %v8991
    %v9128 = vmul.f32 %v7720, %v8993
    %v9129 = vmul.f32 %v7721, %v8995
    %v9130 = vmul.f32 %v7722, %v8997
    %v9131 = vmul.f32 %v7723, %v8999
    %v9132 = vmul.f32 %v7724, %v9001
    %v9133 = vmul.f32 %v7725, %v9003
    %v9134 = vmul.f32 %v7726, %v9005
    %v9135 = vmul.f32 %v7727, %v9007
    %9200 = vrot.lane.b32.xlu0 %v8688, 96
    %v9201 = vpop.permute.xlu0 %9200
    %9202 = vrot.lane.b32.xlu0 %v8689, 96
    %v9203 = vpop.permute.xlu0 %9202
    %9204 = vrot.lane.b32.xlu0 %v8690, 96
    %v9205 = vpop.permute.xlu0 %9204
    %9206 = vrot.lane.b32.xlu0 %v8691, 96
    %v9207 = vpop.permute.xlu0 %9206
    %9208 = vrot.lane.b32.xlu0 %v8692, 96
    %v9209 = vpop.permute.xlu0 %9208
    %9210 = vrot.lane.b32.xlu0 %v8693, 96
    %v9211 = vpop.permute.xlu0 %9210
    %9212 = vrot.lane.b32.xlu0 %v8694, 96
    %v9213 = vpop.permute.xlu0 %9212
    %9214 = vrot.lane.b32.xlu0 %v8695, 96
    %v9215 = vpop.permute.xlu0 %9214
    %9216 = vrot.lane.b32.xlu0 %v8696, 96
    %v9217 = vpop.permute.xlu0 %9216
    %9218 = vrot.lane.b32.xlu0 %v8697, 96
    %v9219 = vpop.permute.xlu0 %9218
    %9220 = vrot.lane.b32.xlu0 %v8698, 96
    %v9221 = vpop.permute.xlu0 %9220
    %9222 = vrot.lane.b32.xlu0 %v8699, 96
    %v9223 = vpop.permute.xlu0 %9222
    %9224 = vrot.lane.b32.xlu0 %v8700, 96
    %v9225 = vpop.permute.xlu0 %9224
    %9226 = vrot.lane.b32.xlu0 %v8701, 96
    %v9227 = vpop.permute.xlu0 %9226
    %9228 = vrot.lane.b32.xlu0 %v8702, 96
    %v9229 = vpop.permute.xlu0 %9228
    %9230 = vrot.lane.b32.xlu0 %v8703, 96
    %v9231 = vpop.permute.xlu0 %9230
    %9232 = vrot.lane.b32.xlu0 %v8704, 96
    %v9233 = vpop.permute.xlu0 %9232
    %9234 = vrot.lane.b32.xlu0 %v8705, 96
    %v9235 = vpop.permute.xlu0 %9234
    %9236 = vrot.lane.b32.xlu0 %v8706, 96
    %v9237 = vpop.permute.xlu0 %9236
    %9238 = vrot.lane.b32.xlu0 %v8707, 96
    %v9239 = vpop.permute.xlu0 %9238
    %9240 = vrot.lane.b32.xlu0 %v8708, 96
    %v9241 = vpop.permute.xlu0 %9240
    %9242 = vrot.lane.b32.xlu0 %v8709, 96
    %v9243 = vpop.permute.xlu0 %9242
    %9244 = vrot.lane.b32.xlu0 %v8710, 96
    %v9245 = vpop.permute.xlu0 %9244
    %9246 = vrot.lane.b32.xlu0 %v8711, 96
    %v9247 = vpop.permute.xlu0 %9246
    %9248 = vrot.lane.b32.xlu0 %v8712, 96
    %v9249 = vpop.permute.xlu0 %9248
    %9250 = vrot.lane.b32.xlu0 %v8713, 96
    %v9251 = vpop.permute.xlu0 %9250
    %9252 = vrot.lane.b32.xlu0 %v8714, 96
    %v9253 = vpop.permute.xlu0 %9252
    %9254 = vrot.lane.b32.xlu0 %v8715, 96
    %v9255 = vpop.permute.xlu0 %9254
    %9256 = vrot.lane.b32.xlu0 %v8716, 96
    %v9257 = vpop.permute.xlu0 %9256
    %9258 = vrot.lane.b32.xlu0 %v8717, 96
    %v9259 = vpop.permute.xlu0 %9258
    %9260 = vrot.lane.b32.xlu0 %v8718, 96
    %v9261 = vpop.permute.xlu0 %9260
    %9262 = vrot.lane.b32.xlu0 %v8719, 96
    %v9263 = vpop.permute.xlu0 %9262
    %9264 = vrot.lane.b32.xlu0 %v8720, 96
    %v9265 = vpop.permute.xlu0 %9264
    %9266 = vrot.lane.b32.xlu0 %v8721, 96
    %v9267 = vpop.permute.xlu0 %9266
    %9268 = vrot.lane.b32.xlu0 %v8722, 96
    %v9269 = vpop.permute.xlu0 %9268
    %9270 = vrot.lane.b32.xlu0 %v8723, 96
    %v9271 = vpop.permute.xlu0 %9270
    %9272 = vrot.lane.b32.xlu0 %v8724, 96
    %v9273 = vpop.permute.xlu0 %9272
    %9274 = vrot.lane.b32.xlu0 %v8725, 96
    %v9275 = vpop.permute.xlu0 %9274
    %9276 = vrot.lane.b32.xlu0 %v8726, 96
    %v9277 = vpop.permute.xlu0 %9276
    %9278 = vrot.lane.b32.xlu0 %v8727, 96
    %v9279 = vpop.permute.xlu0 %9278
    %9280 = vrot.lane.b32.xlu0 %v8728, 96
    %v9281 = vpop.permute.xlu0 %9280
    %9282 = vrot.lane.b32.xlu0 %v8729, 96
    %v9283 = vpop.permute.xlu0 %9282
    %9284 = vrot.lane.b32.xlu0 %v8730, 96
    %v9285 = vpop.permute.xlu0 %9284
    %9286 = vrot.lane.b32.xlu0 %v8731, 96
    %v9287 = vpop.permute.xlu0 %9286
    %9288 = vrot.lane.b32.xlu0 %v8732, 96
    %v9289 = vpop.permute.xlu0 %9288
    %9290 = vrot.lane.b32.xlu0 %v8733, 96
    %v9291 = vpop.permute.xlu0 %9290
    %9292 = vrot.lane.b32.xlu0 %v8734, 96
    %v9293 = vpop.permute.xlu0 %9292
    %9294 = vrot.lane.b32.xlu0 %v8735, 96
    %v9295 = vpop.permute.xlu0 %9294
    %9296 = vrot.lane.b32.xlu0 %v8736, 96
    %v9297 = vpop.permute.xlu0 %9296
    %9298 = vrot.lane.b32.xlu0 %v8737, 96
    %v9299 = vpop.permute.xlu0 %9298
    %9300 = vrot.lane.b32.xlu0 %v8738, 96
    %v9301 = vpop.permute.xlu0 %9300
    %9302 = vrot.lane.b32.xlu0 %v8739, 96
    %v9303 = vpop.permute.xlu0 %9302
    %9304 = vrot.lane.b32.xlu0 %v8740, 96
    %v9305 = vpop.permute.xlu0 %9304
    %9306 = vrot.lane.b32.xlu0 %v8741, 96
    %v9307 = vpop.permute.xlu0 %9306
    %9308 = vrot.lane.b32.xlu0 %v8742, 96
    %v9309 = vpop.permute.xlu0 %9308
    %9310 = vrot.lane.b32.xlu0 %v8743, 96
    %v9311 = vpop.permute.xlu0 %9310
    %9312 = vrot.lane.b32.xlu0 %v8744, 96
    %v9313 = vpop.permute.xlu0 %9312
    %9314 = vrot.lane.b32.xlu0 %v8745, 96
    %v9315 = vpop.permute.xlu0 %9314
    %9316 = vrot.lane.b32.xlu0 %v8746, 96
    %v9317 = vpop.permute.xlu0 %9316
    %9318 = vrot.lane.b32.xlu0 %v8747, 96
    %v9319 = vpop.permute.xlu0 %9318
    %9320 = vrot.lane.b32.xlu0 %v8748, 96
    %v9321 = vpop.permute.xlu0 %9320
    %9322 = vrot.lane.b32.xlu0 %v8749, 96
    %v9323 = vpop.permute.xlu0 %9322
    %9324 = vrot.lane.b32.xlu0 %v8750, 96
    %v9325 = vpop.permute.xlu0 %9324
    %9326 = vrot.lane.b32.xlu0 %v8751, 96
    %v9327 = vpop.permute.xlu0 %9326
    %vm9392 = vcmask 261120
    %9393 = vst.msk [vmem:[#allocation5] sm:$0xff] %vm9392, %v9201
    %9394 = vst.msk [vmem:[#allocation5 + $0x8] sm:$0xff] %vm9392, %v9203
    %9395 = vst.msk [vmem:[#allocation5 + $0x10] sm:$0xff] %vm9392, %v9205
    %9396 = vst.msk [vmem:[#allocation5 + $0x18] sm:$0xff] %vm9392, %v9207
    %9397 = vst.msk [vmem:[#allocation5 + $0x20] sm:$0xff] %vm9392, %v9209
    %9398 = vst.msk [vmem:[#allocation5 + $0x28] sm:$0xff] %vm9392, %v9211
    %9399 = vst.msk [vmem:[#allocation5 + $0x30] sm:$0xff] %vm9392, %v9213
    %9400 = vst.msk [vmem:[#allocation5 + $0x38] sm:$0xff] %vm9392, %v9215
    %9401 = vst.msk [vmem:[#allocation5 + $0x40] sm:$0xff] %vm9392, %v9217
    %9402 = vst.msk [vmem:[#allocation5 + $0x48] sm:$0xff] %vm9392, %v9219
    %9403 = vst.msk [vmem:[#allocation5 + $0x50] sm:$0xff] %vm9392, %v9221
    %9404 = vst.msk [vmem:[#allocation5 + $0x58] sm:$0xff] %vm9392, %v9223
    %9405 = vst.msk [vmem:[#allocation5 + $0x60] sm:$0xff] %vm9392, %v9225
    %9406 = vst.msk [vmem:[#allocation5 + $0x68] sm:$0xff] %vm9392, %v9227
    %9407 = vst.msk [vmem:[#allocation5 + $0x70] sm:$0xff] %vm9392, %v9229
    %9408 = vst.msk [vmem:[#allocation5 + $0x78] sm:$0xff] %vm9392, %v9231
    %9409 = vst.msk [vmem:[#allocation5 + $0x80] sm:$0xff] %vm9392, %v9233
    %9410 = vst.msk [vmem:[#allocation5 + $0x88] sm:$0xff] %vm9392, %v9235
    %9411 = vst.msk [vmem:[#allocation5 + $0x90] sm:$0xff] %vm9392, %v9237
    %9412 = vst.msk [vmem:[#allocation5 + $0x98] sm:$0xff] %vm9392, %v9239
    %9413 = vst.msk [vmem:[#allocation5 + $0xa0] sm:$0xff] %vm9392, %v9241
    %9414 = vst.msk [vmem:[#allocation5 + $0xa8] sm:$0xff] %vm9392, %v9243
    %9415 = vst.msk [vmem:[#allocation5 + $0xb0] sm:$0xff] %vm9392, %v9245
    %9416 = vst.msk [vmem:[#allocation5 + $0xb8] sm:$0xff] %vm9392, %v9247
    %9417 = vst.msk [vmem:[#allocation5 + $0xc0] sm:$0xff] %vm9392, %v9249
    %9418 = vst.msk [vmem:[#allocation5 + $0xc8] sm:$0xff] %vm9392, %v9251
    %9419 = vst.msk [vmem:[#allocation5 + $0xd0] sm:$0xff] %vm9392, %v9253
    %9420 = vst.msk [vmem:[#allocation5 + $0xd8] sm:$0xff] %vm9392, %v9255
    %9421 = vst.msk [vmem:[#allocation5 + $0xe0] sm:$0xff] %vm9392, %v9257
    %9422 = vst.msk [vmem:[#allocation5 + $0xe8] sm:$0xff] %vm9392, %v9259
    %9423 = vst.msk [vmem:[#allocation5 + $0xf0] sm:$0xff] %vm9392, %v9261
    %9424 = vst.msk [vmem:[#allocation5 + $0xf8] sm:$0xff] %vm9392, %v9263
    %9425 = vst.msk [vmem:[#allocation5 + $0x100] sm:$0xff] %vm9392, %v9265
    %9426 = vst.msk [vmem:[#allocation5 + $0x108] sm:$0xff] %vm9392, %v9267
    %9427 = vst.msk [vmem:[#allocation5 + $0x110] sm:$0xff] %vm9392, %v9269
    %9428 = vst.msk [vmem:[#allocation5 + $0x118] sm:$0xff] %vm9392, %v9271
    %9429 = vst.msk [vmem:[#allocation5 + $0x120] sm:$0xff] %vm9392, %v9273
    %9430 = vst.msk [vmem:[#allocation5 + $0x128] sm:$0xff] %vm9392, %v9275
    %9431 = vst.msk [vmem:[#allocation5 + $0x130] sm:$0xff] %vm9392, %v9277
    %9432 = vst.msk [vmem:[#allocation5 + $0x138] sm:$0xff] %vm9392, %v9279
    %9433 = vst.msk [vmem:[#allocation5 + $0x140] sm:$0xff] %vm9392, %v9281
    %9434 = vst.msk [vmem:[#allocation5 + $0x148] sm:$0xff] %vm9392, %v9283
    %9435 = vst.msk [vmem:[#allocation5 + $0x150] sm:$0xff] %vm9392, %v9285
    %9436 = vst.msk [vmem:[#allocation5 + $0x158] sm:$0xff] %vm9392, %v9287
    %9437 = vst.msk [vmem:[#allocation5 + $0x160] sm:$0xff] %vm9392, %v9289
    %9438 = vst.msk [vmem:[#allocation5 + $0x168] sm:$0xff] %vm9392, %v9291
    %9439 = vst.msk [vmem:[#allocation5 + $0x170] sm:$0xff] %vm9392, %v9293
    %9440 = vst.msk [vmem:[#allocation5 + $0x178] sm:$0xff] %vm9392, %v9295
    %9441 = vst.msk [vmem:[#allocation5 + $0x180] sm:$0xff] %vm9392, %v9297
    %9442 = vst.msk [vmem:[#allocation5 + $0x188] sm:$0xff] %vm9392, %v9299
    %9443 = vst.msk [vmem:[#allocation5 + $0x190] sm:$0xff] %vm9392, %v9301
    %9444 = vst.msk [vmem:[#allocation5 + $0x198] sm:$0xff] %vm9392, %v9303
    %9445 = vst.msk [vmem:[#allocation5 + $0x1a0] sm:$0xff] %vm9392, %v9305
    %9446 = vst.msk [vmem:[#allocation5 + $0x1a8] sm:$0xff] %vm9392, %v9307
    %9447 = vst.msk [vmem:[#allocation5 + $0x1b0] sm:$0xff] %vm9392, %v9309
    %9448 = vst.msk [vmem:[#allocation5 + $0x1b8] sm:$0xff] %vm9392, %v9311
    %9449 = vst.msk [vmem:[#allocation5 + $0x1c0] sm:$0xff] %vm9392, %v9313
    %9450 = vst.msk [vmem:[#allocation5 + $0x1c8] sm:$0xff] %vm9392, %v9315
    %9451 = vst.msk [vmem:[#allocation5 + $0x1d0] sm:$0xff] %vm9392, %v9317
    %9452 = vst.msk [vmem:[#allocation5 + $0x1d8] sm:$0xff] %vm9392, %v9319
    %9453 = vst.msk [vmem:[#allocation5 + $0x1e0] sm:$0xff] %vm9392, %v9321
    %9454 = vst.msk [vmem:[#allocation5 + $0x1e8] sm:$0xff] %vm9392, %v9323
    %9455 = vst.msk [vmem:[#allocation5 + $0x1f0] sm:$0xff] %vm9392, %v9325
    %9456 = vst.msk [vmem:[#allocation5 + $0x1f8] sm:$0xff] %vm9392, %v9327
    %9521 = vrot.lane.b32.xlu0 %v9072, 64
    %v9522 = vpop.permute.xlu0 %9521
    %9523 = vrot.lane.b32.xlu0 %v9073, 64
    %v9524 = vpop.permute.xlu0 %9523
    %9525 = vrot.lane.b32.xlu0 %v9074, 64
    %v9526 = vpop.permute.xlu0 %9525
    %9527 = vrot.lane.b32.xlu0 %v9075, 64
    %v9528 = vpop.permute.xlu0 %9527
    %9529 = vrot.lane.b32.xlu0 %v9076, 64
    %v9530 = vpop.permute.xlu0 %9529
    %9531 = vrot.lane.b32.xlu0 %v9077, 64
    %v9532 = vpop.permute.xlu0 %9531
    %9533 = vrot.lane.b32.xlu0 %v9078, 64
    %v9534 = vpop.permute.xlu0 %9533
    %9535 = vrot.lane.b32.xlu0 %v9079, 64
    %v9536 = vpop.permute.xlu0 %9535
    %9537 = vrot.lane.b32.xlu0 %v9080, 64
    %v9538 = vpop.permute.xlu0 %9537
    %9539 = vrot.lane.b32.xlu0 %v9081, 64
    %v9540 = vpop.permute.xlu0 %9539
    %9541 = vrot.lane.b32.xlu0 %v9082, 64
    %v9542 = vpop.permute.xlu0 %9541
    %9543 = vrot.lane.b32.xlu0 %v9083, 64
    %v9544 = vpop.permute.xlu0 %9543
    %9545 = vrot.lane.b32.xlu0 %v9084, 64
    %v9546 = vpop.permute.xlu0 %9545
    %9547 = vrot.lane.b32.xlu0 %v9085, 64
    %v9548 = vpop.permute.xlu0 %9547
    %9549 = vrot.lane.b32.xlu0 %v9086, 64
    %v9550 = vpop.permute.xlu0 %9549
    %9551 = vrot.lane.b32.xlu0 %v9087, 64
    %v9552 = vpop.permute.xlu0 %9551
    %9553 = vrot.lane.b32.xlu0 %v9088, 64
    %v9554 = vpop.permute.xlu0 %9553
    %9555 = vrot.lane.b32.xlu0 %v9089, 64
    %v9556 = vpop.permute.xlu0 %9555
    %9557 = vrot.lane.b32.xlu0 %v9090, 64
    %v9558 = vpop.permute.xlu0 %9557
    %9559 = vrot.lane.b32.xlu0 %v9091, 64
    %v9560 = vpop.permute.xlu0 %9559
    %9561 = vrot.lane.b32.xlu0 %v9092, 64
    %v9562 = vpop.permute.xlu0 %9561
    %9563 = vrot.lane.b32.xlu0 %v9093, 64
    %v9564 = vpop.permute.xlu0 %9563
    %9565 = vrot.lane.b32.xlu0 %v9094, 64
    %v9566 = vpop.permute.xlu0 %9565
    %9567 = vrot.lane.b32.xlu0 %v9095, 64
    %v9568 = vpop.permute.xlu0 %9567
    %9569 = vrot.lane.b32.xlu0 %v9096, 64
    %v9570 = vpop.permute.xlu0 %9569
    %9571 = vrot.lane.b32.xlu0 %v9097, 64
    %v9572 = vpop.permute.xlu0 %9571
    %9573 = vrot.lane.b32.xlu0 %v9098, 64
    %v9574 = vpop.permute.xlu0 %9573
    %9575 = vrot.lane.b32.xlu0 %v9099, 64
    %v9576 = vpop.permute.xlu0 %9575
    %9577 = vrot.lane.b32.xlu0 %v9100, 64
    %v9578 = vpop.permute.xlu0 %9577
    %9579 = vrot.lane.b32.xlu0 %v9101, 64
    %v9580 = vpop.permute.xlu0 %9579
    %9581 = vrot.lane.b32.xlu0 %v9102, 64
    %v9582 = vpop.permute.xlu0 %9581
    %9583 = vrot.lane.b32.xlu0 %v9103, 64
    %v9584 = vpop.permute.xlu0 %9583
    %9585 = vrot.lane.b32.xlu0 %v9104, 64
    %v9586 = vpop.permute.xlu0 %9585
    %9587 = vrot.lane.b32.xlu0 %v9105, 64
    %v9588 = vpop.permute.xlu0 %9587
    %9589 = vrot.lane.b32.xlu0 %v9106, 64
    %v9590 = vpop.permute.xlu0 %9589
    %9591 = vrot.lane.b32.xlu0 %v9107, 64
    %v9592 = vpop.permute.xlu0 %9591
    %9593 = vrot.lane.b32.xlu0 %v9108, 64
    %v9594 = vpop.permute.xlu0 %9593
    %9595 = vrot.lane.b32.xlu0 %v9109, 64
    %v9596 = vpop.permute.xlu0 %9595
    %9597 = vrot.lane.b32.xlu0 %v9110, 64
    %v9598 = vpop.permute.xlu0 %9597
    %9599 = vrot.lane.b32.xlu0 %v9111, 64
    %v9600 = vpop.permute.xlu0 %9599
    %9601 = vrot.lane.b32.xlu0 %v9112, 64
    %v9602 = vpop.permute.xlu0 %9601
    %9603 = vrot.lane.b32.xlu0 %v9113, 64
    %v9604 = vpop.permute.xlu0 %9603
    %9605 = vrot.lane.b32.xlu0 %v9114, 64
    %v9606 = vpop.permute.xlu0 %9605
    %9607 = vrot.lane.b32.xlu0 %v9115, 64
    %v9608 = vpop.permute.xlu0 %9607
    %9609 = vrot.lane.b32.xlu0 %v9116, 64
    %v9610 = vpop.permute.xlu0 %9609
    %9611 = vrot.lane.b32.xlu0 %v9117, 64
    %v9612 = vpop.permute.xlu0 %9611
    %9613 = vrot.lane.b32.xlu0 %v9118, 64
    %v9614 = vpop.permute.xlu0 %9613
    %9615 = vrot.lane.b32.xlu0 %v9119, 64
    %v9616 = vpop.permute.xlu0 %9615
    %9617 = vrot.lane.b32.xlu0 %v9120, 64
    %v9618 = vpop.permute.xlu0 %9617
    %9619 = vrot.lane.b32.xlu0 %v9121, 64
    %v9620 = vpop.permute.xlu0 %9619
    %9621 = vrot.lane.b32.xlu0 %v9122, 64
    %v9622 = vpop.permute.xlu0 %9621
    %9623 = vrot.lane.b32.xlu0 %v9123, 64
    %v9624 = vpop.permute.xlu0 %9623
    %9625 = vrot.lane.b32.xlu0 %v9124, 64
    %v9626 = vpop.permute.xlu0 %9625
    %9627 = vrot.lane.b32.xlu0 %v9125, 64
    %v9628 = vpop.permute.xlu0 %9627
    %9629 = vrot.lane.b32.xlu0 %v9126, 64
    %v9630 = vpop.permute.xlu0 %9629
    %9631 = vrot.lane.b32.xlu0 %v9127, 64
    %v9632 = vpop.permute.xlu0 %9631
    %9633 = vrot.lane.b32.xlu0 %v9128, 64
    %v9634 = vpop.permute.xlu0 %9633
    %9635 = vrot.lane.b32.xlu0 %v9129, 64
    %v9636 = vpop.permute.xlu0 %9635
    %9637 = vrot.lane.b32.xlu0 %v9130, 64
    %v9638 = vpop.permute.xlu0 %9637
    %9639 = vrot.lane.b32.xlu0 %v9131, 64
    %v9640 = vpop.permute.xlu0 %9639
    %9641 = vrot.lane.b32.xlu0 %v9132, 64
    %v9642 = vpop.permute.xlu0 %9641
    %9643 = vrot.lane.b32.xlu0 %v9133, 64
    %v9644 = vpop.permute.xlu0 %9643
    %9645 = vrot.lane.b32.xlu0 %v9134, 64
    %v9646 = vpop.permute.xlu0 %9645
    %9647 = vrot.lane.b32.xlu0 %v9135, 64
    %v9648 = vpop.permute.xlu0 %9647
    %9713 = vst.msk [vmem:[#allocation3] sm:$0xff] %vm9392, %v9522
    %9714 = vst.msk [vmem:[#allocation3 + $0x8] sm:$0xff] %vm9392, %v9524
    %9715 = vst.msk [vmem:[#allocation3 + $0x10] sm:$0xff] %vm9392, %v9526
    %9716 = vst.msk [vmem:[#allocation3 + $0x18] sm:$0xff] %vm9392, %v9528
    %9717 = vst.msk [vmem:[#allocation3 + $0x20] sm:$0xff] %vm9392, %v9530
    %9718 = vst.msk [vmem:[#allocation3 + $0x28] sm:$0xff] %vm9392, %v9532
    %9719 = vst.msk [vmem:[#allocation3 + $0x30] sm:$0xff] %vm9392, %v9534
    %9720 = vst.msk [vmem:[#allocation3 + $0x38] sm:$0xff] %vm9392, %v9536
    %9721 = vst.msk [vmem:[#allocation3 + $0x40] sm:$0xff] %vm9392, %v9538
    %9722 = vst.msk [vmem:[#allocation3 + $0x48] sm:$0xff] %vm9392, %v9540
    %9723 = vst.msk [vmem:[#allocation3 + $0x50] sm:$0xff] %vm9392, %v9542
    %9724 = vst.msk [vmem:[#allocation3 + $0x58] sm:$0xff] %vm9392, %v9544
    %9725 = vst.msk [vmem:[#allocation3 + $0x60] sm:$0xff] %vm9392, %v9546
    %9726 = vst.msk [vmem:[#allocation3 + $0x68] sm:$0xff] %vm9392, %v9548
    %9727 = vst.msk [vmem:[#allocation3 + $0x70] sm:$0xff] %vm9392, %v9550
    %9728 = vst.msk [vmem:[#allocation3 + $0x78] sm:$0xff] %vm9392, %v9552
    %9729 = vst.msk [vmem:[#allocation3 + $0x80] sm:$0xff] %vm9392, %v9554
    %9730 = vst.msk [vmem:[#allocation3 + $0x88] sm:$0xff] %vm9392, %v9556
    %9731 = vst.msk [vmem:[#allocation3 + $0x90] sm:$0xff] %vm9392, %v9558
    %9732 = vst.msk [vmem:[#allocation3 + $0x98] sm:$0xff] %vm9392, %v9560
    %9733 = vst.msk [vmem:[#allocation3 + $0xa0] sm:$0xff] %vm9392, %v9562
    %9734 = vst.msk [vmem:[#allocation3 + $0xa8] sm:$0xff] %vm9392, %v9564
    %9735 = vst.msk [vmem:[#allocation3 + $0xb0] sm:$0xff] %vm9392, %v9566
    %9736 = vst.msk [vmem:[#allocation3 + $0xb8] sm:$0xff] %vm9392, %v9568
    %9737 = vst.msk [vmem:[#allocation3 + $0xc0] sm:$0xff] %vm9392, %v9570
    %9738 = vst.msk [vmem:[#allocation3 + $0xc8] sm:$0xff] %vm9392, %v9572
    %9739 = vst.msk [vmem:[#allocation3 + $0xd0] sm:$0xff] %vm9392, %v9574
    %9740 = vst.msk [vmem:[#allocation3 + $0xd8] sm:$0xff] %vm9392, %v9576
    %9741 = vst.msk [vmem:[#allocation3 + $0xe0] sm:$0xff] %vm9392, %v9578
    %9742 = vst.msk [vmem:[#allocation3 + $0xe8] sm:$0xff] %vm9392, %v9580
    %9743 = vst.msk [vmem:[#allocation3 + $0xf0] sm:$0xff] %vm9392, %v9582
    %9744 = vst.msk [vmem:[#allocation3 + $0xf8] sm:$0xff] %vm9392, %v9584
    %9745 = vst.msk [vmem:[#allocation3 + $0x100] sm:$0xff] %vm9392, %v9586
    %9746 = vst.msk [vmem:[#allocation3 + $0x108] sm:$0xff] %vm9392, %v9588
    %9747 = vst.msk [vmem:[#allocation3 + $0x110] sm:$0xff] %vm9392, %v9590
    %9748 = vst.msk [vmem:[#allocation3 + $0x118] sm:$0xff] %vm9392, %v9592
    %9749 = vst.msk [vmem:[#allocation3 + $0x120] sm:$0xff] %vm9392, %v9594
    %9750 = vst.msk [vmem:[#allocation3 + $0x128] sm:$0xff] %vm9392, %v9596
    %9751 = vst.msk [vmem:[#allocation3 + $0x130] sm:$0xff] %vm9392, %v9598
    %9752 = vst.msk [vmem:[#allocation3 + $0x138] sm:$0xff] %vm9392, %v9600
    %9753 = vst.msk [vmem:[#allocation3 + $0x140] sm:$0xff] %vm9392, %v9602
    %9754 = vst.msk [vmem:[#allocation3 + $0x148] sm:$0xff] %vm9392, %v9604
    %9755 = vst.msk [vmem:[#allocation3 + $0x150] sm:$0xff] %vm9392, %v9606
    %9756 = vst.msk [vmem:[#allocation3 + $0x158] sm:$0xff] %vm9392, %v9608
    %9757 = vst.msk [vmem:[#allocation3 + $0x160] sm:$0xff] %vm9392, %v9610
    %9758 = vst.msk [vmem:[#allocation3 + $0x168] sm:$0xff] %vm9392, %v9612
    %9759 = vst.msk [vmem:[#allocation3 + $0x170] sm:$0xff] %vm9392, %v9614
    %9760 = vst.msk [vmem:[#allocation3 + $0x178] sm:$0xff] %vm9392, %v9616
    %9761 = vst.msk [vmem:[#allocation3 + $0x180] sm:$0xff] %vm9392, %v9618
    %9762 = vst.msk [vmem:[#allocation3 + $0x188] sm:$0xff] %vm9392, %v9620
    %9763 = vst.msk [vmem:[#allocation3 + $0x190] sm:$0xff] %vm9392, %v9622
    %9764 = vst.msk [vmem:[#allocation3 + $0x198] sm:$0xff] %vm9392, %v9624
    %9765 = vst.msk [vmem:[#allocation3 + $0x1a0] sm:$0xff] %vm9392, %v9626
    %9766 = vst.msk [vmem:[#allocation3 + $0x1a8] sm:$0xff] %vm9392, %v9628
    %9767 = vst.msk [vmem:[#allocation3 + $0x1b0] sm:$0xff] %vm9392, %v9630
    %9768 = vst.msk [vmem:[#allocation3 + $0x1b8] sm:$0xff] %vm9392, %v9632
    %9769 = vst.msk [vmem:[#allocation3 + $0x1c0] sm:$0xff] %vm9392, %v9634
    %9770 = vst.msk [vmem:[#allocation3 + $0x1c8] sm:$0xff] %vm9392, %v9636
    %9771 = vst.msk [vmem:[#allocation3 + $0x1d0] sm:$0xff] %vm9392, %v9638
    %9772 = vst.msk [vmem:[#allocation3 + $0x1d8] sm:$0xff] %vm9392, %v9640
    %9773 = vst.msk [vmem:[#allocation3 + $0x1e0] sm:$0xff] %vm9392, %v9642
    %9774 = vst.msk [vmem:[#allocation3 + $0x1e8] sm:$0xff] %vm9392, %v9644
    %9775 = vst.msk [vmem:[#allocation3 + $0x1f0] sm:$0xff] %vm9392, %v9646
    %9776 = vst.msk [vmem:[#allocation3 + $0x1f8] sm:$0xff] %vm9392, %v9648
    // Predicated region
    $region22: #{convlstm_step_pallas.1} parent=1 // pred_check
      _
    $region23: #{convlstm_step_pallas.1} parent=1 // pred_check_branch
      %9778 = sbr.rel (0) target = $region25
    $region24: #{convlstm_step_pallas.1} parent=1 // pred_region
      %s9780 = ssub.s32 8192, 8192
      %9781 = vsyncadd [#allocation4], %s9780
      %s9782 = sshll.u32 [#allocation3], 4
      %s9783 = int_to_ptr.vmem [resolvable:$true] %s9782
      %9788 = dma.vmem_to_hbm [thread:$0]  %s9783, 8192, %s5, [#allocation4], 128, 128, 8
    $region25: #{convlstm_step_pallas.1} parent=1 // pred_fallthru
      _
    // Predicated region
    $region26: #{convlstm_step_pallas.1} parent=1 // pred_check
      _
    $region27: #{convlstm_step_pallas.1} parent=1 // pred_check_branch
      %9790 = sbr.rel (0) target = $region29
    $region28: #{convlstm_step_pallas.1} parent=1 // pred_region
      %s9792 = ssub.s32 8192, 8192
      %9793 = vsyncadd [#allocation6], %s9792
      %s9794 = sshll.u32 [#allocation5], 4
      %s9795 = int_to_ptr.vmem [resolvable:$true] %s9794
      %9800 = dma.vmem_to_hbm [thread:$0]  %s9795, 8192, %s6, [#allocation6], 128, 128, 8
    $region29: #{convlstm_step_pallas.1} parent=1 // pred_fallthru
      _
    // Predicated region
    $region30: #{convlstm_step_pallas.1} parent=1 // pred_check
      _
    $region31: #{convlstm_step_pallas.1} parent=1 // pred_check_branch
      %9802 = sbr.rel (0) target = $region33
    $region32: #{convlstm_step_pallas.1} parent=1 // pred_region
      %9803 = dma.done [#allocation4], 8192
    $region33: #{convlstm_step_pallas.1} parent=1 // pred_fallthru
      _
    // Predicated region
    $region34: #{convlstm_step_pallas.1} parent=1 // pred_check
      _
    $region35: #{convlstm_step_pallas.1} parent=1 // pred_check_branch
      %9805 = sbr.rel (0) target = $region37
    $region36: #{convlstm_step_pallas.1} parent=1 // pred_region
      %9806 = dma.done [#allocation6], 8192
    $region37: #{convlstm_step_pallas.1} parent=1 // pred_fallthru
      _
    %9807 = vsyncpa [#allocation4], 1
    %9808 = vsyncpa [#allocation6], 1

</llo_original>
